<compile_context>
chip_gen: v7x
topology: tpu7x:2x2x1
jax: 0.10.0
libtpu: 0.0.40
codegen_flags: <defaults>
</compile_context>

<pallas_src>
import jax
import jax.numpy as jnp
from jax import lax
from jax.experimental import pallas as pl
from jax.experimental.pallas import tpu as pltpu

EMB = 300   # emb_size
HID = 128   # GRU hidden size per direction (lane-aligned)


# ------------------------- fused GRU + max + linear kernel -------------------------
def _gmp_kernel(x_ref, wih_ref, bih_ref, whh_ref, bhh_ref, w_out_ref, b_out_ref,
                out_ref, gi_scr, m_scr):
    # x_ref    : (L*N, EMB)  bf16  flattened time-major input (row t*N + n)
    # wih_ref  : (EMB, 6H)   bf16  [fwd r,z,n | bwd r,z,n] input weights (transposed)
    # bih_ref  : (1, 6H)     f32
    # whh_ref  : (2H, 6H)    bf16  block-diagonal recurrent weights (fwd | bwd)
    # bhh_ref  : (1, 6H)     f32
    # w_out_ref: (1, 2H)     f32   Linear(2H -> 1) weight row
    # b_out_ref: (1, 1)      f32
    # out_ref  : (L, 1)      f32
    # gi_scr   : (L*N, 6H)   f32   hoisted input projection (both directions)
    # m_scr    : (L, 2H)     f32   per-timestep feature max over the N axis
    L = out_ref.shape[0]
    H = HID
    N = gi_scr.shape[0] // L

    # (1) Hoisted input projection for BOTH directions: one big bf16 MXU matmul
    #     (f32 accumulation) instead of L tiny per-step matmuls.
    gi_scr[...] = (jnp.dot(x_ref[...], wih_ref[...],
                           preferred_element_type=jnp.float32)
                   + bih_ref[...])

    whh = whh_ref[...]                       # (2H, 6H) bf16, block-diagonal
    bhh = bhh_ref[...]                       # (1, 6H)  f32

    # (2) Single serial loop; each iteration advances the forward direction at
    #     timestep t AND the backward direction at timestep L-1-t, sharing one
    #     (N,2H)@(2H,6H) bf16 recurrent matmul. hf/hb live in the loop carry (vregs).
    def step(t, carry):
        hf, hb = carry                       # (N, H) f32 each
        s = L - 1 - t

        rf = pl.multiple_of(t * N, N)
        rb = pl.multiple_of(s * N, N)
        gif = gi_scr[pl.ds(rf, N), 0:3 * H]      # (N, 3H) fwd input gates @ t
        gib = gi_scr[pl.ds(rb, N), 3 * H:6 * H]  # (N, 3H) bwd input gates @ L-1-t

        h_cat = jnp.concatenate([hf, hb], axis=1).astype(jnp.bfloat16)   # (N, 2H)
        gh = jnp.dot(h_cat, whh, preferred_element_type=jnp.float32) + bhh  # (N, 6H)

        # forward direction gates (cols 0:3H of gh)
        r_f = jax.nn.sigmoid(gif[:, 0 * H:1 * H] + gh[:, 0 * H:1 * H])
        z_f = jax.nn.sigmoid(gif[:, 1 * H:2 * H] + gh[:, 1 * H:2 * H])
        n_f = jnp.tanh(gif[:, 2 * H:3 * H] + r_f * gh[:, 2 * H:3 * H])
        hf_new = n_f + z_f * (hf - n_f)

        # backward direction gates (cols 3H:6H of gh)
        r_b = jax.nn.sigmoid(gib[:, 0 * H:1 * H] + gh[:, 3 * H:4 * H])
        z_b = jax.nn.sigmoid(gib[:, 1 * H:2 * H] + gh[:, 4 * H:5 * H])
        n_b = jnp.tanh(gib[:, 2 * H:3 * H] + r_b * gh[:, 5 * H:6 * H])
        hb_new = n_b + z_b * (hb - n_b)

        # per-timestep max over the "dim 1" axis (size N) -> VMEM
        m_scr[pl.ds(t, 1), 0:H] = jnp.max(hf_new, axis=0, keepdims=True)
        m_scr[pl.ds(s, 1), H:2 * H] = jnp.max(hb_new, axis=0, keepdims=True)
        return (hf_new, hb_new)

    h0 = jnp.zeros((N, H), jnp.float32)
    lax.fori_loop(0, L, step, (h0, h0), unroll=True)

    # (3) Output head: Linear(2H -> 1) on the per-timestep maxima.
    #     (max over dim 1 is per-feature, so it commutes with the direction concat.)
    out_ref[...] = (jnp.sum(m_scr[...] * w_out_ref[...], axis=-1, keepdims=True)
                    + b_out_ref[...])


# ------------------------------------ wrapper ---------------------------------------
def gmp_forward(src, p):
    # src: (L, N) int32 token ids; dim 0 is the recurrence axis, dim 1 the axis the
    # max reduces over (matches the PyTorch module with default batch_first=False).
    L, N = src.shape
    # Embedding lookup: data-dependent gather, done as XLA glue (padding_idx row = 0,
    # table pre-stored in bf16 -> no extra convert dispatch per call).
    # TODO(synk): fuse this gather into the kernel via scalar prefetch + manual DMA
    # for production sequence lengths.
    emb = jnp.take(p['embedding'], src, axis=0)           # (L, N, EMB) bf16
    x2d = emb.reshape(L * N, EMB)

    # self.drop (Dropout) -> identity in eval mode.
    return pl.pallas_call(
        _gmp_kernel,
        out_shape=jax.ShapeDtypeStruct((L, 1), jnp.float32),
        scratch_shapes=[
            pltpu.VMEM((L * N, 6 * HID), jnp.float32),    # hoisted input projection
            pltpu.VMEM((L, 2 * HID), jnp.float32),        # per-timestep max features
        ],
        compiler_params=pltpu.CompilerParams(
            vmem_limit_bytes=32 * 1024 * 1024,            # safe on v5e/v6e/v7x
        ),
    )(x2d, p['wih'], p['bih'], p['whh_bd'], p['bhh'], p['w_out'], p['b_out'])


# --------------------------------- parameter setup ----------------------------------
def init_params(key, vocab):
    ks = iter(jax.random.split(key, 16))

    def u(shape, bound):
        return jax.random.uniform(next(ks), shape, jnp.float32, -bound, bound)

    emb = 0.1 * jax.random.normal(next(ks), (vocab, EMB), jnp.float32)
    emb = emb.at[0].set(0.0)                              # padding_idx=0

    kg = 1.0 / jnp.sqrt(jnp.float32(HID))
    kl = 1.0 / jnp.sqrt(jnp.float32(2 * HID))

    # GRU weights stored transposed (x @ W^T -> x @ wih), gate order r,z,n;
    # forward and backward input weights packed side by side: (EMB, 6H).
    wih = jnp.concatenate([u((EMB, 3 * HID), kg), u((EMB, 3 * HID), kg)], axis=1)
    bih = jnp.concatenate([u((1, 3 * HID), kg), u((1, 3 * HID), kg)], axis=1)

    # Recurrent weights packed block-diagonally: rows 0:H (fwd state) feed cols 0:3H
    # (fwd gates), rows H:2H (bwd state) feed cols 3H:6H (bwd gates).
    whh_f = u((HID, 3 * HID), kg)
    whh_b = u((HID, 3 * HID), kg)
    whh_bd = jnp.zeros((2 * HID, 6 * HID), jnp.float32)
    whh_bd = whh_bd.at[0:HID, 0:3 * HID].set(whh_f)
    whh_bd = whh_bd.at[HID:2 * HID, 3 * HID:6 * HID].set(whh_b)
    bhh = jnp.concatenate([u((1, 3 * HID), kg), u((1, 3 * HID), kg)], axis=1)

    return dict(
        embedding=emb.astype(jnp.bfloat16),               # bf16 table (MXU operand dtype)
        wih=wih.astype(jnp.bfloat16), bih=bih,
        whh_bd=whh_bd.astype(jnp.bfloat16), bhh=bhh,
        w_out=u((1, 2 * HID), kl), b_out=u((1, 1), kl),
    )


if __name__ == "__main__":
    # src dim 0 = recurrence axis (16), dim 1 = reduced/"batch-of-the-GRU" axis (8).
    L, N, VOCAB = 16, 8, 50
    key = jax.random.PRNGKey(0)
    k_src, k_par = jax.random.split(key)
    src = jax.random.randint(k_src, (L, N), 0, VOCAB, dtype=jnp.int32)
    params = init_params(k_par, VOCAB)

    # TODO(synk): Dropout is stochastic in train mode; inference (identity) semantics
    # are implemented here.
    fwd = jax.jit(gmp_forward)
    out = jax.block_until_ready(fwd(src, params))

    assert out.shape == (L, 1), out.shape
    assert bool(jnp.all(jnp.isfinite(out)))
    print("KERNEL_OK")
</pallas_src>

<mosaic_0001>
module attributes {stable_mosaic.version = 11 : i64} {
  func.func @_gmp_kernel(%arg0: memref<128x300xbf16, #tpu.memory_space<vmem>>, %arg1: memref<300x768xbf16, #tpu.memory_space<vmem>>, %arg2: memref<1x768xf32, #tpu.memory_space<vmem>>, %arg3: memref<256x768xbf16, #tpu.memory_space<vmem>>, %arg4: memref<1x768xf32, #tpu.memory_space<vmem>>, %arg5: memref<1x256xf32, #tpu.memory_space<vmem>>, %arg6: memref<1x1xf32, #tpu.memory_space<vmem>>, %arg7: memref<16x1xf32, #tpu.memory_space<vmem>>, %arg8: memref<128x768xf32, #tpu.memory_space<vmem>>, %arg9: memref<16x256xf32, #tpu.memory_space<vmem>>) attributes {dimension_semantics = [], scalar_prefetch = 0 : i64, scratch_operands = 2 : i64, tpu.core_type = #tpu.core_type<tc>} {
    %c0 = arith.constant 0 : index
    %c0_0 = arith.constant 0 : index
    %0 = vector.load %arg0[%c0, %c0_0] : memref<128x300xbf16, #tpu.memory_space<vmem>>, vector<128x300xbf16>
    %c0_1 = arith.constant 0 : index
    %c0_2 = arith.constant 0 : index
    %1 = vector.load %arg1[%c0_1, %c0_2] : memref<300x768xbf16, #tpu.memory_space<vmem>>, vector<300x768xbf16>
    %cst = arith.constant dense<0.000000e+00> : vector<128x768xf32>
    %2 = tpu.matmul %0, %1, %cst {dimension_numbers = #tpu.dot_dimension_numbers<[1], [0], [0], [1], [0, 0, 1, 1], [], []>} : vector<128x300xbf16>, vector<300x768xbf16>, vector<128x768xf32> -> vector<128x768xf32>
    %c0_3 = arith.constant 0 : index
    %c0_4 = arith.constant 0 : index
    %3 = vector.load %arg2[%c0_3, %c0_4] : memref<1x768xf32, #tpu.memory_space<vmem>>, vector<1x768xf32>
    %4 = vector.broadcast %3 : vector<1x768xf32> to vector<128x768xf32>
    %5 = arith.addf %2, %4 : vector<128x768xf32>
    %c0_5 = arith.constant 0 : index
    %c0_6 = arith.constant 0 : index
    %6 = vector.load %arg8[%c0_5, %c0_6] : memref<128x768xf32, #tpu.memory_space<vmem>>, vector<128x768xf32>
    tpu.vector_store %arg8[%c0_5, %c0_6], %5 {strides = array<i32>} : memref<128x768xf32, #tpu.memory_space<vmem>>, vector<128x768xf32>,
    %c0_7 = arith.constant 0 : index
    %c0_8 = arith.constant 0 : index
    %7 = vector.load %arg3[%c0_7, %c0_8] : memref<256x768xbf16, #tpu.memory_space<vmem>>, vector<256x768xbf16>
    %c0_9 = arith.constant 0 : index
    %c0_10 = arith.constant 0 : index
    %8 = vector.load %arg4[%c0_9, %c0_10] : memref<1x768xf32, #tpu.memory_space<vmem>>, vector<1x768xf32>
    %cst_11 = arith.constant 0.000000e+00 : f32
    %9 = vector.broadcast %cst_11 : f32 to vector<8x128xf32>
    %c0_i32 = arith.constant 0 : i32
    %c15_i32 = arith.constant 15 : i32
    %10 = arith.subi %c15_i32, %c0_i32 : i32
    %c8_i32 = arith.constant 8 : i32
    %11 = arith.muli %c0_i32, %c8_i32 : i32
    %12 = tpu.assume_multiple %11, 8 : i32
    %c8_i32_12 = arith.constant 8 : i32
    %13 = arith.muli %10, %c8_i32_12 : i32
    %14 = tpu.assume_multiple %13, 8 : i32
    %15 = arith.index_cast %12 : i32 to index
    %c0_13 = arith.constant 0 : index
    %16 = vector.load %arg8[%15, %c0_13] : memref<128x768xf32, #tpu.memory_space<vmem>>, vector<8x384xf32>
    %17 = arith.index_cast %14 : i32 to index
    %c384 = arith.constant 384 : index
    %18 = vector.load %arg8[%17, %c384] : memref<128x768xf32, #tpu.memory_space<vmem>>, vector<8x384xf32>
    %19 = tpu.concatenate %9, %9 in 1 : vector<8x128xf32>, vector<8x128xf32> -> vector<8x256xf32>
    %20 = arith.truncf %19 : vector<8x256xf32> to vector<8x256xbf16>
    %cst_14 = arith.constant dense<0.000000e+00> : vector<8x768xf32>
    %21 = tpu.matmul %20, %7, %cst_14 {dimension_numbers = #tpu.dot_dimension_numbers<[1], [0], [0], [1], [0, 0, 1, 1], [], []>} : vector<8x256xbf16>, vector<256x768xbf16>, vector<8x768xf32> -> vector<8x768xf32>
    %22 = vector.broadcast %8 : vector<1x768xf32> to vector<8x768xf32>
    %23 = arith.addf %21, %22 : vector<8x768xf32>
    %24 = vector.extract_strided_slice %16 {offsets = [0, 0], sizes = [8, 128], strides = [1, 1]} : vector<8x384xf32> to vector<8x128xf32>
    %25 = vector.extract_strided_slice %23 {offsets = [0, 0], sizes = [8, 128], strides = [1, 1]} : vector<8x768xf32> to vector<8x128xf32>
    %26 = arith.addf %24, %25 : vector<8x128xf32>
    %27 = arith.negf %26 : vector<8x128xf32>
    %28 = math.exp %27 : vector<8x128xf32>
    %cst_15 = arith.constant 1.000000e+00 : f32
    %29 = vector.broadcast %cst_15 : f32 to vector<8x128xf32>
    %30 = arith.addf %29, %28 : vector<8x128xf32>
    %31 = arith.divf %29, %30 : vector<8x128xf32>
    %32 = vector.extract_strided_slice %16 {offsets = [0, 128], sizes = [8, 128], strides = [1, 1]} : vector<8x384xf32> to vector<8x128xf32>
    %33 = vector.extract_strided_slice %23 {offsets = [0, 128], sizes = [8, 128], strides = [1, 1]} : vector<8x768xf32> to vector<8x128xf32>
    %34 = arith.addf %32, %33 : vector<8x128xf32>
    %35 = arith.negf %34 : vector<8x128xf32>
    %36 = math.exp %35 : vector<8x128xf32>
    %cst_16 = arith.constant 1.000000e+00 : f32
    %37 = vector.broadcast %cst_16 : f32 to vector<8x128xf32>
    %38 = arith.addf %37, %36 : vector<8x128xf32>
    %39 = arith.divf %37, %38 : vector<8x128xf32>
    %40 = vector.extract_strided_slice %16 {offsets = [0, 256], sizes = [8, 128], strides = [1, 1]} : vector<8x384xf32> to vector<8x128xf32>
    %41 = vector.extract_strided_slice %23 {offsets = [0, 256], sizes = [8, 128], strides = [1, 1]} : vector<8x768xf32> to vector<8x128xf32>
    %42 = arith.mulf %31, %41 : vector<8x128xf32>
    %43 = arith.addf %40, %42 : vector<8x128xf32>
    %44 = math.tanh %43 : vector<8x128xf32>
    %45 = arith.subf %9, %44 : vector<8x128xf32>
    %46 = arith.mulf %39, %45 : vector<8x128xf32>
    %47 = arith.addf %44, %46 : vector<8x128xf32>
    %48 = vector.extract_strided_slice %18 {offsets = [0, 0], sizes = [8, 128], strides = [1, 1]} : vector<8x384xf32> to vector<8x128xf32>
    %49 = vector.extract_strided_slice %23 {offsets = [0, 384], sizes = [8, 128], strides = [1, 1]} : vector<8x768xf32> to vector<8x128xf32>
    %50 = arith.addf %48, %49 : vector<8x128xf32>
    %51 = arith.negf %50 : vector<8x128xf32>
    %52 = math.exp %51 : vector<8x128xf32>
    %cst_17 = arith.constant 1.000000e+00 : f32
    %53 = vector.broadcast %cst_17 : f32 to vector<8x128xf32>
    %54 = arith.addf %53, %52 : vector<8x128xf32>
    %55 = arith.divf %53, %54 : vector<8x128xf32>
    %56 = vector.extract_strided_slice %18 {offsets = [0, 128], sizes = [8, 128], strides = [1, 1]} : vector<8x384xf32> to vector<8x128xf32>
    %57 = vector.extract_strided_slice %23 {offsets = [0, 512], sizes = [8, 128], strides = [1, 1]} : vector<8x768xf32> to vector<8x128xf32>
    %58 = arith.addf %56, %57 : vector<8x128xf32>
    %59 = arith.negf %58 : vector<8x128xf32>
    %60 = math.exp %59 : vector<8x128xf32>
    %cst_18 = arith.constant 1.000000e+00 : f32
    %61 = vector.broadcast %cst_18 : f32 to vector<8x128xf32>
    %62 = arith.addf %61, %60 : vector<8x128xf32>
    %63 = arith.divf %61, %62 : vector<8x128xf32>
    %64 = vector.extract_strided_slice %18 {offsets = [0, 256], sizes = [8, 128], strides = [1, 1]} : vector<8x384xf32> to vector<8x128xf32>
    %65 = vector.extract_strided_slice %23 {offsets = [0, 640], sizes = [8, 128], strides = [1, 1]} : vector<8x768xf32> to vector<8x128xf32>
    %66 = arith.mulf %55, %65 : vector<8x128xf32>
    %67 = arith.addf %64, %66 : vector<8x128xf32>
    %68 = math.tanh %67 : vector<8x128xf32>
    %69 = arith.subf %9, %68 : vector<8x128xf32>
    %70 = arith.mulf %63, %69 : vector<8x128xf32>
    %71 = arith.addf %68, %70 : vector<8x128xf32>
    %cst_19 = arith.constant dense<0xFF800000> : vector<128xf32>
    %72 = vector.multi_reduction <maximumf>, %47, %cst_19 [0] : vector<8x128xf32> to vector<128xf32>
    %73 = vector.shape_cast %72 : vector<128xf32> to vector<1x128xf32>
    %74 = arith.index_cast %c0_i32 : i32 to index
    %c0_20 = arith.constant 0 : index
    %75 = vector.load %arg9[%74, %c0_20] : memref<16x256xf32, #tpu.memory_space<vmem>>, vector<1x128xf32>
    tpu.vector_store %arg9[%74, %c0_20], %73 {strides = array<i32>} : memref<16x256xf32, #tpu.memory_space<vmem>>, vector<1x128xf32>,
    %cst_21 = arith.constant dense<0xFF800000> : vector<128xf32>
    %76 = vector.multi_reduction <maximumf>, %71, %cst_21 [0] : vector<8x128xf32> to vector<128xf32>
    %77 = vector.shape_cast %76 : vector<128xf32> to vector<1x128xf32>
    %78 = arith.index_cast %10 : i32 to index
    %c128 = arith.constant 128 : index
    %79 = vector.load %arg9[%78, %c128] : memref<16x256xf32, #tpu.memory_space<vmem>>, vector<1x128xf32>
    tpu.vector_store %arg9[%78, %c128], %77 {strides = array<i32>} : memref<16x256xf32, #tpu.memory_space<vmem>>, vector<1x128xf32>,
    %c1_i32 = arith.constant 1 : i32
    %c15_i32_22 = arith.constant 15 : i32
    %80 = arith.subi %c15_i32_22, %c1_i32 : i32
    %c8_i32_23 = arith.constant 8 : i32
    %81 = arith.muli %c1_i32, %c8_i32_23 : i32
    %82 = tpu.assume_multiple %81, 8 : i32
    %c8_i32_24 = arith.constant 8 : i32
    %83 = arith.muli %80, %c8_i32_24 : i32
    %84 = tpu.assume_multiple %83, 8 : i32
    %85 = arith.index_cast %82 : i32 to index
    %c0_25 = arith.constant 0 : index
    %86 = vector.load %arg8[%85, %c0_25] : memref<128x768xf32, #tpu.memory_space<vmem>>, vector<8x384xf32>
    %87 = arith.index_cast %84 : i32 to index
    %c384_26 = arith.constant 384 : index
    %88 = vector.load %arg8[%87, %c384_26] : memref<128x768xf32, #tpu.memory_space<vmem>>, vector<8x384xf32>
    %89 = tpu.concatenate %47, %71 in 1 : vector<8x128xf32>, vector<8x128xf32> -> vector<8x256xf32>
    %90 = arith.truncf %89 : vector<8x256xf32> to vector<8x256xbf16>
    %cst_27 = arith.constant dense<0.000000e+00> : vector<8x768xf32>
    %91 = tpu.matmul %90, %7, %cst_27 {dimension_numbers = #tpu.dot_dimension_numbers<[1], [0], [0], [1], [0, 0, 1, 1], [], []>} : vector<8x256xbf16>, vector<256x768xbf16>, vector<8x768xf32> -> vector<8x768xf32>
    %92 = vector.broadcast %8 : vector<1x768xf32> to vector<8x768xf32>
    %93 = arith.addf %91, %92 : vector<8x768xf32>
    %94 = vector.extract_strided_slice %86 {offsets = [0, 0], sizes = [8, 128], strides = [1, 1]} : vector<8x384xf32> to vector<8x128xf32>
    %95 = vector.extract_strided_slice %93 {offsets = [0, 0], sizes = [8, 128], strides = [1, 1]} : vector<8x768xf32> to vector<8x128xf32>
    %96 = arith.addf %94, %95 : vector<8x128xf32>
    %97 = arith.negf %96 : vector<8x128xf32>
    %98 = math.exp %97 : vector<8x128xf32>
    %cst_28 = arith.constant 1.000000e+00 : f32
    %99 = vector.broadcast %cst_28 : f32 to vector<8x128xf32>
    %100 = arith.addf %99, %98 : vector<8x128xf32>
    %101 = arith.divf %99, %100 : vector<8x128xf32>
    %102 = vector.extract_strided_slice %86 {offsets = [0, 128], sizes = [8, 128], strides = [1, 1]} : vector<8x384xf32> to vector<8x128xf32>
    %103 = vector.extract_strided_slice %93 {offsets = [0, 128], sizes = [8, 128], strides = [1, 1]} : vector<8x768xf32> to vector<8x128xf32>
    %104 = arith.addf %102, %103 : vector<8x128xf32>
    %105 = arith.negf %104 : vector<8x128xf32>
    %106 = math.exp %105 : vector<8x128xf32>
    %cst_29 = arith.constant 1.000000e+00 : f32
    %107 = vector.broadcast %cst_29 : f32 to vector<8x128xf32>
    %108 = arith.addf %107, %106 : vector<8x128xf32>
    %109 = arith.divf %107, %108 : vector<8x128xf32>
    %110 = vector.extract_strided_slice %86 {offsets = [0, 256], sizes = [8, 128], strides = [1, 1]} : vector<8x384xf32> to vector<8x128xf32>
    %111 = vector.extract_strided_slice %93 {offsets = [0, 256], sizes = [8, 128], strides = [1, 1]} : vector<8x768xf32> to vector<8x128xf32>
    %112 = arith.mulf %101, %111 : vector<8x128xf32>
    %113 = arith.addf %110, %112 : vector<8x128xf32>
    %114 = math.tanh %113 : vector<8x128xf32>
    %115 = arith.subf %47, %114 : vector<8x128xf32>
    %116 = arith.mulf %109, %115 : vector<8x128xf32>
    %117 = arith.addf %114, %116 : vector<8x128xf32>
    %118 = vector.extract_strided_slice %88 {offsets = [0, 0], sizes = [8, 128], strides = [1, 1]} : vector<8x384xf32> to vector<8x128xf32>
    %119 = vector.extract_strided_slice %93 {offsets = [0, 384], sizes = [8, 128], strides = [1, 1]} : vector<8x768xf32> to vector<8x128xf32>
    %120 = arith.addf %118, %119 : vector<8x128xf32>
    %121 = arith.negf %120 : vector<8x128xf32>
    %122 = math.exp %121 : vector<8x128xf32>
    %cst_30 = arith.constant 1.000000e+00 : f32
    %123 = vector.broadcast %cst_30 : f32 to vector<8x128xf32>
    %124 = arith.addf %123, %122 : vector<8x128xf32>
    %125 = arith.divf %123, %124 : vector<8x128xf32>
    %126 = vector.extract_strided_slice %88 {offsets = [0, 128], sizes = [8, 128], strides = [1, 1]} : vector<8x384xf32> to vector<8x128xf32>
    %127 = vector.extract_strided_slice %93 {offsets = [0, 512], sizes = [8, 128], strides = [1, 1]} : vector<8x768xf32> to vector<8x128xf32>
    %128 = arith.addf %126, %127 : vector<8x128xf32>
    %129 = arith.negf %128 : vector<8x128xf32>
    %130 = math.exp %129 : vector<8x128xf32>
    %cst_31 = arith.constant 1.000000e+00 : f32
    %131 = vector.broadcast %cst_31 : f32 to vector<8x128xf32>
    %132 = arith.addf %131, %130 : vector<8x128xf32>
    %133 = arith.divf %131, %132 : vector<8x128xf32>
    %134 = vector.extract_strided_slice %88 {offsets = [0, 256], sizes = [8, 128], strides = [1, 1]} : vector<8x384xf32> to vector<8x128xf32>
    %135 = vector.extract_strided_slice %93 {offsets = [0, 640], sizes = [8, 128], strides = [1, 1]} : vector<8x768xf32> to vector<8x128xf32>
    %136 = arith.mulf %125, %135 : vector<8x128xf32>
    %137 = arith.addf %134, %136 : vector<8x128xf32>
    %138 = math.tanh %137 : vector<8x128xf32>
    %139 = arith.subf %71, %138 : vector<8x128xf32>
    %140 = arith.mulf %133, %139 : vector<8x128xf32>
    %141 = arith.addf %138, %140 : vector<8x128xf32>
    %cst_32 = arith.constant dense<0xFF800000> : vector<128xf32>
    %142 = vector.multi_reduction <maximumf>, %117, %cst_32 [0] : vector<8x128xf32> to vector<128xf32>
    %143 = vector.shape_cast %142 : vector<128xf32> to vector<1x128xf32>
    %144 = arith.index_cast %c1_i32 : i32 to index
    %c0_33 = arith.constant 0 : index
    %145 = vector.load %arg9[%144, %c0_33] : memref<16x256xf32, #tpu.memory_space<vmem>>, vector<1x128xf32>
    tpu.vector_store %arg9[%144, %c0_33], %143 {strides = array<i32>} : memref<16x256xf32, #tpu.memory_space<vmem>>, vector<1x128xf32>,
    %cst_34 = arith.constant dense<0xFF800000> : vector<128xf32>
    %146 = vector.multi_reduction <maximumf>, %141, %cst_34 [0] : vector<8x128xf32> to vector<128xf32>
    %147 = vector.shape_cast %146 : vector<128xf32> to vector<1x128xf32>
    %148 = arith.index_cast %80 : i32 to index
    %c128_35 = arith.constant 128 : index
    %149 = vector.load %arg9[%148, %c128_35] : memref<16x256xf32, #tpu.memory_space<vmem>>, vector<1x128xf32>
    tpu.vector_store %arg9[%148, %c128_35], %147 {strides = array<i32>} : memref<16x256xf32, #tpu.memory_space<vmem>>, vector<1x128xf32>,
    %c2_i32 = arith.constant 2 : i32
    %c15_i32_36 = arith.constant 15 : i32
    %150 = arith.subi %c15_i32_36, %c2_i32 : i32
    %c8_i32_37 = arith.constant 8 : i32
    %151 = arith.muli %c2_i32, %c8_i32_37 : i32
    %152 = tpu.assume_multiple %151, 8 : i32
    %c8_i32_38 = arith.constant 8 : i32
    %153 = arith.muli %150, %c8_i32_38 : i32
    %154 = tpu.assume_multiple %153, 8 : i32
    %155 = arith.index_cast %152 : i32 to index
    %c0_39 = arith.constant 0 : index
    %156 = vector.load %arg8[%155, %c0_39] : memref<128x768xf32, #tpu.memory_space<vmem>>, vector<8x384xf32>
    %157 = arith.index_cast %154 : i32 to index
    %c384_40 = arith.constant 384 : index
    %158 = vector.load %arg8[%157, %c384_40] : memref<128x768xf32, #tpu.memory_space<vmem>>, vector<8x384xf32>
    %159 = tpu.concatenate %117, %141 in 1 : vector<8x128xf32>, vector<8x128xf32> -> vector<8x256xf32>
    %160 = arith.truncf %159 : vector<8x256xf32> to vector<8x256xbf16>
    %cst_41 = arith.constant dense<0.000000e+00> : vector<8x768xf32>
    %161 = tpu.matmul %160, %7, %cst_41 {dimension_numbers = #tpu.dot_dimension_numbers<[1], [0], [0], [1], [0, 0, 1, 1], [], []>} : vector<8x256xbf16>, vector<256x768xbf16>, vector<8x768xf32> -> vector<8x768xf32>
    %162 = vector.broadcast %8 : vector<1x768xf32> to vector<8x768xf32>
    %163 = arith.addf %161, %162 : vector<8x768xf32>
    %164 = vector.extract_strided_slice %156 {offsets = [0, 0], sizes = [8, 128], strides = [1, 1]} : vector<8x384xf32> to vector<8x128xf32>
    %165 = vector.extract_strided_slice %163 {offsets = [0, 0], sizes = [8, 128], strides = [1, 1]} : vector<8x768xf32> to vector<8x128xf32>
    %166 = arith.addf %164, %165 : vector<8x128xf32>
    %167 = arith.negf %166 : vector<8x128xf32>
    %168 = math.exp %167 : vector<8x128xf32>
    %cst_42 = arith.constant 1.000000e+00 : f32
    %169 = vector.broadcast %cst_42 : f32 to vector<8x128xf32>
    %170 = arith.addf %169, %168 : vector<8x128xf32>
    %171 = arith.divf %169, %170 : vector<8x128xf32>
    %172 = vector.extract_strided_slice %156 {offsets = [0, 128], sizes = [8, 128], strides = [1, 1]} : vector<8x384xf32> to vector<8x128xf32>
    %173 = vector.extract_strided_slice %163 {offsets = [0, 128], sizes = [8, 128], strides = [1, 1]} : vector<8x768xf32> to vector<8x128xf32>
    %174 = arith.addf %172, %173 : vector<8x128xf32>
    %175 = arith.negf %174 : vector<8x128xf32>
    %176 = math.exp %175 : vector<8x128xf32>
    %cst_43 = arith.constant 1.000000e+00 : f32
    %177 = vector.broadcast %cst_43 : f32 to vector<8x128xf32>
    %178 = arith.addf %177, %176 : vector<8x128xf32>
    %179 = arith.divf %177, %178 : vector<8x128xf32>
    %180 = vector.extract_strided_slice %156 {offsets = [0, 256], sizes = [8, 128], strides = [1, 1]} : vector<8x384xf32> to vector<8x128xf32>
    %181 = vector.extract_strided_slice %163 {offsets = [0, 256], sizes = [8, 128], strides = [1, 1]} : vector<8x768xf32> to vector<8x128xf32>
    %182 = arith.mulf %171, %181 : vector<8x128xf32>
    %183 = arith.addf %180, %182 : vector<8x128xf32>
    %184 = math.tanh %183 : vector<8x128xf32>
    %185 = arith.subf %117, %184 : vector<8x128xf32>
    %186 = arith.mulf %179, %185 : vector<8x128xf32>
    %187 = arith.addf %184, %186 : vector<8x128xf32>
    %188 = vector.extract_strided_slice %158 {offsets = [0, 0], sizes = [8, 128], strides = [1, 1]} : vector<8x384xf32> to vector<8x128xf32>
    %189 = vector.extract_strided_slice %163 {offsets = [0, 384], sizes = [8, 128], strides = [1, 1]} : vector<8x768xf32> to vector<8x128xf32>
    %190 = arith.addf %188, %189 : vector<8x128xf32>
    %191 = arith.negf %190 : vector<8x128xf32>
    %192 = math.exp %191 : vector<8x128xf32>
    %cst_44 = arith.constant 1.000000e+00 : f32
    %193 = vector.broadcast %cst_44 : f32 to vector<8x128xf32>
    %194 = arith.addf %193, %192 : vector<8x128xf32>
    %195 = arith.divf %193, %194 : vector<8x128xf32>
    %196 = vector.extract_strided_slice %158 {offsets = [0, 128], sizes = [8, 128], strides = [1, 1]} : vector<8x384xf32> to vector<8x128xf32>
    %197 = vector.extract_strided_slice %163 {offsets = [0, 512], sizes = [8, 128], strides = [1, 1]} : vector<8x768xf32> to vector<8x128xf32>
    %198 = arith.addf %196, %197 : vector<8x128xf32>
    %199 = arith.negf %198 : vector<8x128xf32>
    %200 = math.exp %199 : vector<8x128xf32>
    %cst_45 = arith.constant 1.000000e+00 : f32
    %201 = vector.broadcast %cst_45 : f32 to vector<8x128xf32>
    %202 = arith.addf %201, %200 : vector<8x128xf32>
    %203 = arith.divf %201, %202 : vector<8x128xf32>
    %204 = vector.extract_strided_slice %158 {offsets = [0, 256], sizes = [8, 128], strides = [1, 1]} : vector<8x384xf32> to vector<8x128xf32>
    %205 = vector.extract_strided_slice %163 {offsets = [0, 640], sizes = [8, 128], strides = [1, 1]} : vector<8x768xf32> to vector<8x128xf32>
    %206 = arith.mulf %195, %205 : vector<8x128xf32>
    %207 = arith.addf %204, %206 : vector<8x128xf32>
    %208 = math.tanh %207 : vector<8x128xf32>
    %209 = arith.subf %141, %208 : vector<8x128xf32>
    %210 = arith.mulf %203, %209 : vector<8x128xf32>
    %211 = arith.addf %208, %210 : vector<8x128xf32>
    %cst_46 = arith.constant dense<0xFF800000> : vector<128xf32>
    %212 = vector.multi_reduction <maximumf>, %187, %cst_46 [0] : vector<8x128xf32> to vector<128xf32>
    %213 = vector.shape_cast %212 : vector<128xf32> to vector<1x128xf32>
    %214 = arith.index_cast %c2_i32 : i32 to index
    %c0_47 = arith.constant 0 : index
    %215 = vector.load %arg9[%214, %c0_47] : memref<16x256xf32, #tpu.memory_space<vmem>>, vector<1x128xf32>
    tpu.vector_store %arg9[%214, %c0_47], %213 {strides = array<i32>} : memref<16x256xf32, #tpu.memory_space<vmem>>, vector<1x128xf32>,
    %cst_48 = arith.constant dense<0xFF800000> : vector<128xf32>
    %216 = vector.multi_reduction <maximumf>, %211, %cst_48 [0] : vector<8x128xf32> to vector<128xf32>
    %217 = vector.shape_cast %216 : vector<128xf32> to vector<1x128xf32>
    %218 = arith.index_cast %150 : i32 to index
    %c128_49 = arith.constant 128 : index
    %219 = vector.load %arg9[%218, %c128_49] : memref<16x256xf32, #tpu.memory_space<vmem>>, vector<1x128xf32>
    tpu.vector_store %arg9[%218, %c128_49], %217 {strides = array<i32>} : memref<16x256xf32, #tpu.memory_space<vmem>>, vector<1x128xf32>,
    %c3_i32 = arith.constant 3 : i32
    %c15_i32_50 = arith.constant 15 : i32
    %220 = arith.subi %c15_i32_50, %c3_i32 : i32
    %c8_i32_51 = arith.constant 8 : i32
    %221 = arith.muli %c3_i32, %c8_i32_51 : i32
    %222 = tpu.assume_multiple %221, 8 : i32
    %c8_i32_52 = arith.constant 8 : i32
    %223 = arith.muli %220, %c8_i32_52 : i32
    %224 = tpu.assume_multiple %223, 8 : i32
    %225 = arith.index_cast %222 : i32 to index
    %c0_53 = arith.constant 0 : index
    %226 = vector.load %arg8[%225, %c0_53] : memref<128x768xf32, #tpu.memory_space<vmem>>, vector<8x384xf32>
    %227 = arith.index_cast %224 : i32 to index
    %c384_54 = arith.constant 384 : index
    %228 = vector.load %arg8[%227, %c384_54] : memref<128x768xf32, #tpu.memory_space<vmem>>, vector<8x384xf32>
    %229 = tpu.concatenate %187, %211 in 1 : vector<8x128xf32>, vector<8x128xf32> -> vector<8x256xf32>
    %230 = arith.truncf %229 : vector<8x256xf32> to vector<8x256xbf16>
    %cst_55 = arith.constant dense<0.000000e+00> : vector<8x768xf32>
    %231 = tpu.matmul %230, %7, %cst_55 {dimension_numbers = #tpu.dot_dimension_numbers<[1], [0], [0], [1], [0, 0, 1, 1], [], []>} : vector<8x256xbf16>, vector<256x768xbf16>, vector<8x768xf32> -> vector<8x768xf32>
    %232 = vector.broadcast %8 : vector<1x768xf32> to vector<8x768xf32>
    %233 = arith.addf %231, %232 : vector<8x768xf32>
    %234 = vector.extract_strided_slice %226 {offsets = [0, 0], sizes = [8, 128], strides = [1, 1]} : vector<8x384xf32> to vector<8x128xf32>
    %235 = vector.extract_strided_slice %233 {offsets = [0, 0], sizes = [8, 128], strides = [1, 1]} : vector<8x768xf32> to vector<8x128xf32>
    %236 = arith.addf %234, %235 : vector<8x128xf32>
    %237 = arith.negf %236 : vector<8x128xf32>
    %238 = math.exp %237 : vector<8x128xf32>
    %cst_56 = arith.constant 1.000000e+00 : f32
    %239 = vector.broadcast %cst_56 : f32 to vector<8x128xf32>
    %240 = arith.addf %239, %238 : vector<8x128xf32>
    %241 = arith.divf %239, %240 : vector<8x128xf32>
    %242 = vector.extract_strided_slice %226 {offsets = [0, 128], sizes = [8, 128], strides = [1, 1]} : vector<8x384xf32> to vector<8x128xf32>
    %243 = vector.extract_strided_slice %233 {offsets = [0, 128], sizes = [8, 128], strides = [1, 1]} : vector<8x768xf32> to vector<8x128xf32>
    %244 = arith.addf %242, %243 : vector<8x128xf32>
    %245 = arith.negf %244 : vector<8x128xf32>
    %246 = math.exp %245 : vector<8x128xf32>
    %cst_57 = arith.constant 1.000000e+00 : f32
    %247 = vector.broadcast %cst_57 : f32 to vector<8x128xf32>
    %248 = arith.addf %247, %246 : vector<8x128xf32>
    %249 = arith.divf %247, %248 : vector<8x128xf32>
    %250 = vector.extract_strided_slice %226 {offsets = [0, 256], sizes = [8, 128], strides = [1, 1]} : vector<8x384xf32> to vector<8x128xf32>
    %251 = vector.extract_strided_slice %233 {offsets = [0, 256], sizes = [8, 128], strides = [1, 1]} : vector<8x768xf32> to vector<8x128xf32>
    %252 = arith.mulf %241, %251 : vector<8x128xf32>
    %253 = arith.addf %250, %252 : vector<8x128xf32>
    %254 = math.tanh %253 : vector<8x128xf32>
    %255 = arith.subf %187, %254 : vector<8x128xf32>
    %256 = arith.mulf %249, %255 : vector<8x128xf32>
    %257 = arith.addf %254, %256 : vector<8x128xf32>
    %258 = vector.extract_strided_slice %228 {offsets = [0, 0], sizes = [8, 128], strides = [1, 1]} : vector<8x384xf32> to vector<8x128xf32>
    %259 = vector.extract_strided_slice %233 {offsets = [0, 384], sizes = [8, 128], strides = [1, 1]} : vector<8x768xf32> to vector<8x128xf32>
    %260 = arith.addf %258, %259 : vector<8x128xf32>
    %261 = arith.negf %260 : vector<8x128xf32>
    %262 = math.exp %261 : vector<8x128xf32>
    %cst_58 = arith.constant 1.000000e+00 : f32
    %263 = vector.broadcast %cst_58 : f32 to vector<8x128xf32>
    %264 = arith.addf %263, %262 : vector<8x128xf32>
    %265 = arith.divf %263, %264 : vector<8x128xf32>
    %266 = vector.extract_strided_slice %228 {offsets = [0, 128], sizes = [8, 128], strides = [1, 1]} : vector<8x384xf32> to vector<8x128xf32>
    %267 = vector.extract_strided_slice %233 {offsets = [0, 512], sizes = [8, 128], strides = [1, 1]} : vector<8x768xf32> to vector<8x128xf32>
    %268 = arith.addf %266, %267 : vector<8x128xf32>
    %269 = arith.negf %268 : vector<8x128xf32>
    %270 = math.exp %269 : vector<8x128xf32>
    %cst_59 = arith.constant 1.000000e+00 : f32
    %271 = vector.broadcast %cst_59 : f32 to vector<8x128xf32>
    %272 = arith.addf %271, %270 : vector<8x128xf32>
    %273 = arith.divf %271, %272 : vector<8x128xf32>
    %274 = vector.extract_strided_slice %228 {offsets = [0, 256], sizes = [8, 128], strides = [1, 1]} : vector<8x384xf32> to vector<8x128xf32>
    %275 = vector.extract_strided_slice %233 {offsets = [0, 640], sizes = [8, 128], strides = [1, 1]} : vector<8x768xf32> to vector<8x128xf32>
    %276 = arith.mulf %265, %275 : vector<8x128xf32>
    %277 = arith.addf %274, %276 : vector<8x128xf32>
    %278 = math.tanh %277 : vector<8x128xf32>
    %279 = arith.subf %211, %278 : vector<8x128xf32>
    %280 = arith.mulf %273, %279 : vector<8x128xf32>
    %281 = arith.addf %278, %280 : vector<8x128xf32>
    %cst_60 = arith.constant dense<0xFF800000> : vector<128xf32>
    %282 = vector.multi_reduction <maximumf>, %257, %cst_60 [0] : vector<8x128xf32> to vector<128xf32>
    %283 = vector.shape_cast %282 : vector<128xf32> to vector<1x128xf32>
    %284 = arith.index_cast %c3_i32 : i32 to index
    %c0_61 = arith.constant 0 : index
    %285 = vector.load %arg9[%284, %c0_61] : memref<16x256xf32, #tpu.memory_space<vmem>>, vector<1x128xf32>
    tpu.vector_store %arg9[%284, %c0_61], %283 {strides = array<i32>} : memref<16x256xf32, #tpu.memory_space<vmem>>, vector<1x128xf32>,
    %cst_62 = arith.constant dense<0xFF800000> : vector<128xf32>
    %286 = vector.multi_reduction <maximumf>, %281, %cst_62 [0] : vector<8x128xf32> to vector<128xf32>
    %287 = vector.shape_cast %286 : vector<128xf32> to vector<1x128xf32>
    %288 = arith.index_cast %220 : i32 to index
    %c128_63 = arith.constant 128 : index
    %289 = vector.load %arg9[%288, %c128_63] : memref<16x256xf32, #tpu.memory_space<vmem>>, vector<1x128xf32>
    tpu.vector_store %arg9[%288, %c128_63], %287 {strides = array<i32>} : memref<16x256xf32, #tpu.memory_space<vmem>>, vector<1x128xf32>,
    %c4_i32 = arith.constant 4 : i32
    %c15_i32_64 = arith.constant 15 : i32
    %290 = arith.subi %c15_i32_64, %c4_i32 : i32
    %c8_i32_65 = arith.constant 8 : i32
    %291 = arith.muli %c4_i32, %c8_i32_65 : i32
    %292 = tpu.assume_multiple %291, 8 : i32
    %c8_i32_66 = arith.constant 8 : i32
    %293 = arith.muli %290, %c8_i32_66 : i32
    %294 = tpu.assume_multiple %293, 8 : i32
    %295 = arith.index_cast %292 : i32 to index
    %c0_67 = arith.constant 0 : index
    %296 = vector.load %arg8[%295, %c0_67] : memref<128x768xf32, #tpu.memory_space<vmem>>, vector<8x384xf32>
    %297 = arith.index_cast %294 : i32 to index
    %c384_68 = arith.constant 384 : index
    %298 = vector.load %arg8[%297, %c384_68] : memref<128x768xf32, #tpu.memory_space<vmem>>, vector<8x384xf32>
    %299 = tpu.concatenate %257, %281 in 1 : vector<8x128xf32>, vector<8x128xf32> -> vector<8x256xf32>
    %300 = arith.truncf %299 : vector<8x256xf32> to vector<8x256xbf16>
    %cst_69 = arith.constant dense<0.000000e+00> : vector<8x768xf32>
    %301 = tpu.matmul %300, %7, %cst_69 {dimension_numbers = #tpu.dot_dimension_numbers<[1], [0], [0], [1], [0, 0, 1, 1], [], []>} : vector<8x256xbf16>, vector<256x768xbf16>, vector<8x768xf32> -> vector<8x768xf32>
    %302 = vector.broadcast %8 : vector<1x768xf32> to vector<8x768xf32>
    %303 = arith.addf %301, %302 : vector<8x768xf32>
    %304 = vector.extract_strided_slice %296 {offsets = [0, 0], sizes = [8, 128], strides = [1, 1]} : vector<8x384xf32> to vector<8x128xf32>
    %305 = vector.extract_strided_slice %303 {offsets = [0, 0], sizes = [8, 128], strides = [1, 1]} : vector<8x768xf32> to vector<8x128xf32>
    %306 = arith.addf %304, %305 : vector<8x128xf32>
    %307 = arith.negf %306 : vector<8x128xf32>
    %308 = math.exp %307 : vector<8x128xf32>
    %cst_70 = arith.constant 1.000000e+00 : f32
    %309 = vector.broadcast %cst_70 : f32 to vector<8x128xf32>
    %310 = arith.addf %309, %308 : vector<8x128xf32>
    %311 = arith.divf %309, %310 : vector<8x128xf32>
    %312 = vector.extract_strided_slice %296 {offsets = [0, 128], sizes = [8, 128], strides = [1, 1]} : vector<8x384xf32> to vector<8x128xf32>
    %313 = vector.extract_strided_slice %303 {offsets = [0, 128], sizes = [8, 128], strides = [1, 1]} : vector<8x768xf32> to vector<8x128xf32>
    %314 = arith.addf %312, %313 : vector<8x128xf32>
    %315 = arith.negf %314 : vector<8x128xf32>
    %316 = math.exp %315 : vector<8x128xf32>
    %cst_71 = arith.constant 1.000000e+00 : f32
    %317 = vector.broadcast %cst_71 : f32 to vector<8x128xf32>
    %318 = arith.addf %317, %316 : vector<8x128xf32>
    %319 = arith.divf %317, %318 : vector<8x128xf32>
    %320 = vector.extract_strided_slice %296 {offsets = [0, 256], sizes = [8, 128], strides = [1, 1]} : vector<8x384xf32> to vector<8x128xf32>
    %321 = vector.extract_strided_slice %303 {offsets = [0, 256], sizes = [8, 128], strides = [1, 1]} : vector<8x768xf32> to vector<8x128xf32>
    %322 = arith.mulf %311, %321 : vector<8x128xf32>
    %323 = arith.addf %320, %322 : vector<8x128xf32>
    %324 = math.tanh %323 : vector<8x128xf32>
    %325 = arith.subf %257, %324 : vector<8x128xf32>
    %326 = arith.mulf %319, %325 : vector<8x128xf32>
    %327 = arith.addf %324, %326 : vector<8x128xf32>
    %328 = vector.extract_strided_slice %298 {offsets = [0, 0], sizes = [8, 128], strides = [1, 1]} : vector<8x384xf32> to vector<8x128xf32>
    %329 = vector.extract_strided_slice %303 {offsets = [0, 384], sizes = [8, 128], strides = [1, 1]} : vector<8x768xf32> to vector<8x128xf32>
    %330 = arith.addf %328, %329 : vector<8x128xf32>
    %331 = arith.negf %330 : vector<8x128xf32>
    %332 = math.exp %331 : vector<8x128xf32>
    %cst_72 = arith.constant 1.000000e+00 : f32
    %333 = vector.broadcast %cst_72 : f32 to vector<8x128xf32>
    %334 = arith.addf %333, %332 : vector<8x128xf32>
    %335 = arith.divf %333, %334 : vector<8x128xf32>
    %336 = vector.extract_strided_slice %298 {offsets = [0, 128], sizes = [8, 128], strides = [1, 1]} : vector<8x384xf32> to vector<8x128xf32>
    %337 = vector.extract_strided_slice %303 {offsets = [0, 512], sizes = [8, 128], strides = [1, 1]} : vector<8x768xf32> to vector<8x128xf32>
    %338 = arith.addf %336, %337 : vector<8x128xf32>
    %339 = arith.negf %338 : vector<8x128xf32>
    %340 = math.exp %339 : vector<8x128xf32>
    %cst_73 = arith.constant 1.000000e+00 : f32
    %341 = vector.broadcast %cst_73 : f32 to vector<8x128xf32>
    %342 = arith.addf %341, %340 : vector<8x128xf32>
    %343 = arith.divf %341, %342 : vector<8x128xf32>
    %344 = vector.extract_strided_slice %298 {offsets = [0, 256], sizes = [8, 128], strides = [1, 1]} : vector<8x384xf32> to vector<8x128xf32>
    %345 = vector.extract_strided_slice %303 {offsets = [0, 640], sizes = [8, 128], strides = [1, 1]} : vector<8x768xf32> to vector<8x128xf32>
    %346 = arith.mulf %335, %345 : vector<8x128xf32>
    %347 = arith.addf %344, %346 : vector<8x128xf32>
    %348 = math.tanh %347 : vector<8x128xf32>
    %349 = arith.subf %281, %348 : vector<8x128xf32>
    %350 = arith.mulf %343, %349 : vector<8x128xf32>
    %351 = arith.addf %348, %350 : vector<8x128xf32>
    %cst_74 = arith.constant dense<0xFF800000> : vector<128xf32>
    %352 = vector.multi_reduction <maximumf>, %327, %cst_74 [0] : vector<8x128xf32> to vector<128xf32>
    %353 = vector.shape_cast %352 : vector<128xf32> to vector<1x128xf32>
    %354 = arith.index_cast %c4_i32 : i32 to index
    %c0_75 = arith.constant 0 : index
    %355 = vector.load %arg9[%354, %c0_75] : memref<16x256xf32, #tpu.memory_space<vmem>>, vector<1x128xf32>
    tpu.vector_store %arg9[%354, %c0_75], %353 {strides = array<i32>} : memref<16x256xf32, #tpu.memory_space<vmem>>, vector<1x128xf32>,
    %cst_76 = arith.constant dense<0xFF800000> : vector<128xf32>
    %356 = vector.multi_reduction <maximumf>, %351, %cst_76 [0] : vector<8x128xf32> to vector<128xf32>
    %357 = vector.shape_cast %356 : vector<128xf32> to vector<1x128xf32>
    %358 = arith.index_cast %290 : i32 to index
    %c128_77 = arith.constant 128 : index
    %359 = vector.load %arg9[%358, %c128_77] : memref<16x256xf32, #tpu.memory_space<vmem>>, vector<1x128xf32>
    tpu.vector_store %arg9[%358, %c128_77], %357 {strides = array<i32>} : memref<16x256xf32, #tpu.memory_space<vmem>>, vector<1x128xf32>,
    %c5_i32 = arith.constant 5 : i32
    %c15_i32_78 = arith.constant 15 : i32
    %360 = arith.subi %c15_i32_78, %c5_i32 : i32
    %c8_i32_79 = arith.constant 8 : i32
    %361 = arith.muli %c5_i32, %c8_i32_79 : i32
    %362 = tpu.assume_multiple %361, 8 : i32
    %c8_i32_80 = arith.constant 8 : i32
    %363 = arith.muli %360, %c8_i32_80 : i32
    %364 = tpu.assume_multiple %363, 8 : i32
    %365 = arith.index_cast %362 : i32 to index
    %c0_81 = arith.constant 0 : index
    %366 = vector.load %arg8[%365, %c0_81] : memref<128x768xf32, #tpu.memory_space<vmem>>, vector<8x384xf32>
    %367 = arith.index_cast %364 : i32 to index
    %c384_82 = arith.constant 384 : index
    %368 = vector.load %arg8[%367, %c384_82] : memref<128x768xf32, #tpu.memory_space<vmem>>, vector<8x384xf32>
    %369 = tpu.concatenate %327, %351 in 1 : vector<8x128xf32>, vector<8x128xf32> -> vector<8x256xf32>
    %370 = arith.truncf %369 : vector<8x256xf32> to vector<8x256xbf16>
    %cst_83 = arith.constant dense<0.000000e+00> : vector<8x768xf32>
    %371 = tpu.matmul %370, %7, %cst_83 {dimension_numbers = #tpu.dot_dimension_numbers<[1], [0], [0], [1], [0, 0, 1, 1], [], []>} : vector<8x256xbf16>, vector<256x768xbf16>, vector<8x768xf32> -> vector<8x768xf32>
    %372 = vector.broadcast %8 : vector<1x768xf32> to vector<8x768xf32>
    %373 = arith.addf %371, %372 : vector<8x768xf32>
    %374 = vector.extract_strided_slice %366 {offsets = [0, 0], sizes = [8, 128], strides = [1, 1]} : vector<8x384xf32> to vector<8x128xf32>
    %375 = vector.extract_strided_slice %373 {offsets = [0, 0], sizes = [8, 128], strides = [1, 1]} : vector<8x768xf32> to vector<8x128xf32>
    %376 = arith.addf %374, %375 : vector<8x128xf32>
    %377 = arith.negf %376 : vector<8x128xf32>
    %378 = math.exp %377 : vector<8x128xf32>
    %cst_84 = arith.constant 1.000000e+00 : f32
    %379 = vector.broadcast %cst_84 : f32 to vector<8x128xf32>
    %380 = arith.addf %379, %378 : vector<8x128xf32>
    %381 = arith.divf %379, %380 : vector<8x128xf32>
    %382 = vector.extract_strided_slice %366 {offsets = [0, 128], sizes = [8, 128], strides = [1, 1]} : vector<8x384xf32> to vector<8x128xf32>
    %383 = vector.extract_strided_slice %373 {offsets = [0, 128], sizes = [8, 128], strides = [1, 1]} : vector<8x768xf32> to vector<8x128xf32>
    %384 = arith.addf %382, %383 : vector<8x128xf32>
    %385 = arith.negf %384 : vector<8x128xf32>
    %386 = math.exp %385 : vector<8x128xf32>
    %cst_85 = arith.constant 1.000000e+00 : f32
    %387 = vector.broadcast %cst_85 : f32 to vector<8x128xf32>
    %388 = arith.addf %387, %386 : vector<8x128xf32>
    %389 = arith.divf %387, %388 : vector<8x128xf32>
    %390 = vector.extract_strided_slice %366 {offsets = [0, 256], sizes = [8, 128], strides = [1, 1]} : vector<8x384xf32> to vector<8x128xf32>
    %391 = vector.extract_strided_slice %373 {offsets = [0, 256], sizes = [8, 128], strides = [1, 1]} : vector<8x768xf32> to vector<8x128xf32>
    %392 = arith.mulf %381, %391 : vector<8x128xf32>
    %393 = arith.addf %390, %392 : vector<8x128xf32>
    %394 = math.tanh %393 : vector<8x128xf32>
    %395 = arith.subf %327, %394 : vector<8x128xf32>
    %396 = arith.mulf %389, %395 : vector<8x128xf32>
    %397 = arith.addf %394, %396 : vector<8x128xf32>
    %398 = vector.extract_strided_slice %368 {offsets = [0, 0], sizes = [8, 128], strides = [1, 1]} : vector<8x384xf32> to vector<8x128xf32>
    %399 = vector.extract_strided_slice %373 {offsets = [0, 384], sizes = [8, 128], strides = [1, 1]} : vector<8x768xf32> to vector<8x128xf32>
    %400 = arith.addf %398, %399 : vector<8x128xf32>
    %401 = arith.negf %400 : vector<8x128xf32>
    %402 = math.exp %401 : vector<8x128xf32>
    %cst_86 = arith.constant 1.000000e+00 : f32
    %403 = vector.broadcast %cst_86 : f32 to vector<8x128xf32>
    %404 = arith.addf %403, %402 : vector<8x128xf32>
    %405 = arith.divf %403, %404 : vector<8x128xf32>
    %406 = vector.extract_strided_slice %368 {offsets = [0, 128], sizes = [8, 128], strides = [1, 1]} : vector<8x384xf32> to vector<8x128xf32>
    %407 = vector.extract_strided_slice %373 {offsets = [0, 512], sizes = [8, 128], strides = [1, 1]} : vector<8x768xf32> to vector<8x128xf32>
    %408 = arith.addf %406, %407 : vector<8x128xf32>
    %409 = arith.negf %408 : vector<8x128xf32>
    %410 = math.exp %409 : vector<8x128xf32>
    %cst_87 = arith.constant 1.000000e+00 : f32
    %411 = vector.broadcast %cst_87 : f32 to vector<8x128xf32>
    %412 = arith.addf %411, %410 : vector<8x128xf32>
    %413 = arith.divf %411, %412 : vector<8x128xf32>
    %414 = vector.extract_strided_slice %368 {offsets = [0, 256], sizes = [8, 128], strides = [1, 1]} : vector<8x384xf32> to vector<8x128xf32>
    %415 = vector.extract_strided_slice %373 {offsets = [0, 640], sizes = [8, 128], strides = [1, 1]} : vector<8x768xf32> to vector<8x128xf32>
    %416 = arith.mulf %405, %415 : vector<8x128xf32>
    %417 = arith.addf %414, %416 : vector<8x128xf32>
    %418 = math.tanh %417 : vector<8x128xf32>
    %419 = arith.subf %351, %418 : vector<8x128xf32>
    %420 = arith.mulf %413, %419 : vector<8x128xf32>
    %421 = arith.addf %418, %420 : vector<8x128xf32>
    %cst_88 = arith.constant dense<0xFF800000> : vector<128xf32>
    %422 = vector.multi_reduction <maximumf>, %397, %cst_88 [0] : vector<8x128xf32> to vector<128xf32>
    %423 = vector.shape_cast %422 : vector<128xf32> to vector<1x128xf32>
    %424 = arith.index_cast %c5_i32 : i32 to index
    %c0_89 = arith.constant 0 : index
    %425 = vector.load %arg9[%424, %c0_89] : memref<16x256xf32, #tpu.memory_space<vmem>>, vector<1x128xf32>
    tpu.vector_store %arg9[%424, %c0_89], %423 {strides = array<i32>} : memref<16x256xf32, #tpu.memory_space<vmem>>, vector<1x128xf32>,
    %cst_90 = arith.constant dense<0xFF800000> : vector<128xf32>
    %426 = vector.multi_reduction <maximumf>, %421, %cst_90 [0] : vector<8x128xf32> to vector<128xf32>
    %427 = vector.shape_cast %426 : vector<128xf32> to vector<1x128xf32>
    %428 = arith.index_cast %360 : i32 to index
    %c128_91 = arith.constant 128 : index
    %429 = vector.load %arg9[%428, %c128_91] : memref<16x256xf32, #tpu.memory_space<vmem>>, vector<1x128xf32>
    tpu.vector_store %arg9[%428, %c128_91], %427 {strides = array<i32>} : memref<16x256xf32, #tpu.memory_space<vmem>>, vector<1x128xf32>,
    %c6_i32 = arith.constant 6 : i32
    %c15_i32_92 = arith.constant 15 : i32
    %430 = arith.subi %c15_i32_92, %c6_i32 : i32
    %c8_i32_93 = arith.constant 8 : i32
    %431 = arith.muli %c6_i32, %c8_i32_93 : i32
    %432 = tpu.assume_multiple %431, 8 : i32
    %c8_i32_94 = arith.constant 8 : i32
    %433 = arith.muli %430, %c8_i32_94 : i32
    %434 = tpu.assume_multiple %433, 8 : i32
    %435 = arith.index_cast %432 : i32 to index
    %c0_95 = arith.constant 0 : index
    %436 = vector.load %arg8[%435, %c0_95] : memref<128x768xf32, #tpu.memory_space<vmem>>, vector<8x384xf32>
    %437 = arith.index_cast %434 : i32 to index
    %c384_96 = arith.constant 384 : index
    %438 = vector.load %arg8[%437, %c384_96] : memref<128x768xf32, #tpu.memory_space<vmem>>, vector<8x384xf32>
    %439 = tpu.concatenate %397, %421 in 1 : vector<8x128xf32>, vector<8x128xf32> -> vector<8x256xf32>
    %440 = arith.truncf %439 : vector<8x256xf32> to vector<8x256xbf16>
    %cst_97 = arith.constant dense<0.000000e+00> : vector<8x768xf32>
    %441 = tpu.matmul %440, %7, %cst_97 {dimension_numbers = #tpu.dot_dimension_numbers<[1], [0], [0], [1], [0, 0, 1, 1], [], []>} : vector<8x256xbf16>, vector<256x768xbf16>, vector<8x768xf32> -> vector<8x768xf32>
    %442 = vector.broadcast %8 : vector<1x768xf32> to vector<8x768xf32>
    %443 = arith.addf %441, %442 : vector<8x768xf32>
    %444 = vector.extract_strided_slice %436 {offsets = [0, 0], sizes = [8, 128], strides = [1, 1]} : vector<8x384xf32> to vector<8x128xf32>
    %445 = vector.extract_strided_slice %443 {offsets = [0, 0], sizes = [8, 128], strides = [1, 1]} : vector<8x768xf32> to vector<8x128xf32>
    %446 = arith.addf %444, %445 : vector<8x128xf32>
    %447 = arith.negf %446 : vector<8x128xf32>
    %448 = math.exp %447 : vector<8x128xf32>
    %cst_98 = arith.constant 1.000000e+00 : f32
    %449 = vector.broadcast %cst_98 : f32 to vector<8x128xf32>
    %450 = arith.addf %449, %448 : vector<8x128xf32>
    %451 = arith.divf %449, %450 : vector<8x128xf32>
    %452 = vector.extract_strided_slice %436 {offsets = [0, 128], sizes = [8, 128], strides = [1, 1]} : vector<8x384xf32> to vector<8x128xf32>
    %453 = vector.extract_strided_slice %443 {offsets = [0, 128], sizes = [8, 128], strides = [1, 1]} : vector<8x768xf32> to vector<8x128xf32>
    %454 = arith.addf %452, %453 : vector<8x128xf32>
    %455 = arith.negf %454 : vector<8x128xf32>
    %456 = math.exp %455 : vector<8x128xf32>
    %cst_99 = arith.constant 1.000000e+00 : f32
    %457 = vector.broadcast %cst_99 : f32 to vector<8x128xf32>
    %458 = arith.addf %457, %456 : vector<8x128xf32>
    %459 = arith.divf %457, %458 : vector<8x128xf32>
    %460 = vector.extract_strided_slice %436 {offsets = [0, 256], sizes = [8, 128], strides = [1, 1]} : vector<8x384xf32> to vector<8x128xf32>
    %461 = vector.extract_strided_slice %443 {offsets = [0, 256], sizes = [8, 128], strides = [1, 1]} : vector<8x768xf32> to vector<8x128xf32>
    %462 = arith.mulf %451, %461 : vector<8x128xf32>
    %463 = arith.addf %460, %462 : vector<8x128xf32>
    %464 = math.tanh %463 : vector<8x128xf32>
    %465 = arith.subf %397, %464 : vector<8x128xf32>
    %466 = arith.mulf %459, %465 : vector<8x128xf32>
    %467 = arith.addf %464, %466 : vector<8x128xf32>
    %468 = vector.extract_strided_slice %438 {offsets = [0, 0], sizes = [8, 128], strides = [1, 1]} : vector<8x384xf32> to vector<8x128xf32>
    %469 = vector.extract_strided_slice %443 {offsets = [0, 384], sizes = [8, 128], strides = [1, 1]} : vector<8x768xf32> to vector<8x128xf32>
    %470 = arith.addf %468, %469 : vector<8x128xf32>
    %471 = arith.negf %470 : vector<8x128xf32>
    %472 = math.exp %471 : vector<8x128xf32>
    %cst_100 = arith.constant 1.000000e+00 : f32
    %473 = vector.broadcast %cst_100 : f32 to vector<8x128xf32>
    %474 = arith.addf %473, %472 : vector<8x128xf32>
    %475 = arith.divf %473, %474 : vector<8x128xf32>
    %476 = vector.extract_strided_slice %438 {offsets = [0, 128], sizes = [8, 128], strides = [1, 1]} : vector<8x384xf32> to vector<8x128xf32>
    %477 = vector.extract_strided_slice %443 {offsets = [0, 512], sizes = [8, 128], strides = [1, 1]} : vector<8x768xf32> to vector<8x128xf32>
    %478 = arith.addf %476, %477 : vector<8x128xf32>
    %479 = arith.negf %478 : vector<8x128xf32>
    %480 = math.exp %479 : vector<8x128xf32>
    %cst_101 = arith.constant 1.000000e+00 : f32
    %481 = vector.broadcast %cst_101 : f32 to vector<8x128xf32>
    %482 = arith.addf %481, %480 : vector<8x128xf32>
    %483 = arith.divf %481, %482 : vector<8x128xf32>
    %484 = vector.extract_strided_slice %438 {offsets = [0, 256], sizes = [8, 128], strides = [1, 1]} : vector<8x384xf32> to vector<8x128xf32>
    %485 = vector.extract_strided_slice %443 {offsets = [0, 640], sizes = [8, 128], strides = [1, 1]} : vector<8x768xf32> to vector<8x128xf32>
    %486 = arith.mulf %475, %485 : vector<8x128xf32>
    %487 = arith.addf %484, %486 : vector<8x128xf32>
    %488 = math.tanh %487 : vector<8x128xf32>
    %489 = arith.subf %421, %488 : vector<8x128xf32>
    %490 = arith.mulf %483, %489 : vector<8x128xf32>
    %491 = arith.addf %488, %490 : vector<8x128xf32>
    %cst_102 = arith.constant dense<0xFF800000> : vector<128xf32>
    %492 = vector.multi_reduction <maximumf>, %467, %cst_102 [0] : vector<8x128xf32> to vector<128xf32>
    %493 = vector.shape_cast %492 : vector<128xf32> to vector<1x128xf32>
    %494 = arith.index_cast %c6_i32 : i32 to index
    %c0_103 = arith.constant 0 : index
    %495 = vector.load %arg9[%494, %c0_103] : memref<16x256xf32, #tpu.memory_space<vmem>>, vector<1x128xf32>
    tpu.vector_store %arg9[%494, %c0_103], %493 {strides = array<i32>} : memref<16x256xf32, #tpu.memory_space<vmem>>, vector<1x128xf32>,
    %cst_104 = arith.constant dense<0xFF800000> : vector<128xf32>
    %496 = vector.multi_reduction <maximumf>, %491, %cst_104 [0] : vector<8x128xf32> to vector<128xf32>
    %497 = vector.shape_cast %496 : vector<128xf32> to vector<1x128xf32>
    %498 = arith.index_cast %430 : i32 to index
    %c128_105 = arith.constant 128 : index
    %499 = vector.load %arg9[%498, %c128_105] : memref<16x256xf32, #tpu.memory_space<vmem>>, vector<1x128xf32>
    tpu.vector_store %arg9[%498, %c128_105], %497 {strides = array<i32>} : memref<16x256xf32, #tpu.memory_space<vmem>>, vector<1x128xf32>,
    %c7_i32 = arith.constant 7 : i32
    %c15_i32_106 = arith.constant 15 : i32
    %500 = arith.subi %c15_i32_106, %c7_i32 : i32
    %c8_i32_107 = arith.constant 8 : i32
    %501 = arith.muli %c7_i32, %c8_i32_107 : i32
    %502 = tpu.assume_multiple %501, 8 : i32
    %c8_i32_108 = arith.constant 8 : i32
    %503 = arith.muli %500, %c8_i32_108 : i32
    %504 = tpu.assume_multiple %503, 8 : i32
    %505 = arith.index_cast %502 : i32 to index
    %c0_109 = arith.constant 0 : index
    %506 = vector.load %arg8[%505, %c0_109] : memref<128x768xf32, #tpu.memory_space<vmem>>, vector<8x384xf32>
    %507 = arith.index_cast %504 : i32 to index
    %c384_110 = arith.constant 384 : index
    %508 = vector.load %arg8[%507, %c384_110] : memref<128x768xf32, #tpu.memory_space<vmem>>, vector<8x384xf32>
    %509 = tpu.concatenate %467, %491 in 1 : vector<8x128xf32>, vector<8x128xf32> -> vector<8x256xf32>
    %510 = arith.truncf %509 : vector<8x256xf32> to vector<8x256xbf16>
    %cst_111 = arith.constant dense<0.000000e+00> : vector<8x768xf32>
    %511 = tpu.matmul %510, %7, %cst_111 {dimension_numbers = #tpu.dot_dimension_numbers<[1], [0], [0], [1], [0, 0, 1, 1], [], []>} : vector<8x256xbf16>, vector<256x768xbf16>, vector<8x768xf32> -> vector<8x768xf32>
    %512 = vector.broadcast %8 : vector<1x768xf32> to vector<8x768xf32>
    %513 = arith.addf %511, %512 : vector<8x768xf32>
    %514 = vector.extract_strided_slice %506 {offsets = [0, 0], sizes = [8, 128], strides = [1, 1]} : vector<8x384xf32> to vector<8x128xf32>
    %515 = vector.extract_strided_slice %513 {offsets = [0, 0], sizes = [8, 128], strides = [1, 1]} : vector<8x768xf32> to vector<8x128xf32>
    %516 = arith.addf %514, %515 : vector<8x128xf32>
    %517 = arith.negf %516 : vector<8x128xf32>
    %518 = math.exp %517 : vector<8x128xf32>
    %cst_112 = arith.constant 1.000000e+00 : f32
    %519 = vector.broadcast %cst_112 : f32 to vector<8x128xf32>
    %520 = arith.addf %519, %518 : vector<8x128xf32>
    %521 = arith.divf %519, %520 : vector<8x128xf32>
    %522 = vector.extract_strided_slice %506 {offsets = [0, 128], sizes = [8, 128], strides = [1, 1]} : vector<8x384xf32> to vector<8x128xf32>
    %523 = vector.extract_strided_slice %513 {offsets = [0, 128], sizes = [8, 128], strides = [1, 1]} : vector<8x768xf32> to vector<8x128xf32>
    %524 = arith.addf %522, %523 : vector<8x128xf32>
    %525 = arith.negf %524 : vector<8x128xf32>
    %526 = math.exp %525 : vector<8x128xf32>
    %cst_113 = arith.constant 1.000000e+00 : f32
    %527 = vector.broadcast %cst_113 : f32 to vector<8x128xf32>
    %528 = arith.addf %527, %526 : vector<8x128xf32>
    %529 = arith.divf %527, %528 : vector<8x128xf32>
    %530 = vector.extract_strided_slice %506 {offsets = [0, 256], sizes = [8, 128], strides = [1, 1]} : vector<8x384xf32> to vector<8x128xf32>
    %531 = vector.extract_strided_slice %513 {offsets = [0, 256], sizes = [8, 128], strides = [1, 1]} : vector<8x768xf32> to vector<8x128xf32>
    %532 = arith.mulf %521, %531 : vector<8x128xf32>
    %533 = arith.addf %530, %532 : vector<8x128xf32>
    %534 = math.tanh %533 : vector<8x128xf32>
    %535 = arith.subf %467, %534 : vector<8x128xf32>
    %536 = arith.mulf %529, %535 : vector<8x128xf32>
    %537 = arith.addf %534, %536 : vector<8x128xf32>
    %538 = vector.extract_strided_slice %508 {offsets = [0, 0], sizes = [8, 128], strides = [1, 1]} : vector<8x384xf32> to vector<8x128xf32>
    %539 = vector.extract_strided_slice %513 {offsets = [0, 384], sizes = [8, 128], strides = [1, 1]} : vector<8x768xf32> to vector<8x128xf32>
    %540 = arith.addf %538, %539 : vector<8x128xf32>
    %541 = arith.negf %540 : vector<8x128xf32>
    %542 = math.exp %541 : vector<8x128xf32>
    %cst_114 = arith.constant 1.000000e+00 : f32
    %543 = vector.broadcast %cst_114 : f32 to vector<8x128xf32>
    %544 = arith.addf %543, %542 : vector<8x128xf32>
    %545 = arith.divf %543, %544 : vector<8x128xf32>
    %546 = vector.extract_strided_slice %508 {offsets = [0, 128], sizes = [8, 128], strides = [1, 1]} : vector<8x384xf32> to vector<8x128xf32>
    %547 = vector.extract_strided_slice %513 {offsets = [0, 512], sizes = [8, 128], strides = [1, 1]} : vector<8x768xf32> to vector<8x128xf32>
    %548 = arith.addf %546, %547 : vector<8x128xf32>
    %549 = arith.negf %548 : vector<8x128xf32>
    %550 = math.exp %549 : vector<8x128xf32>
    %cst_115 = arith.constant 1.000000e+00 : f32
    %551 = vector.broadcast %cst_115 : f32 to vector<8x128xf32>
    %552 = arith.addf %551, %550 : vector<8x128xf32>
    %553 = arith.divf %551, %552 : vector<8x128xf32>
    %554 = vector.extract_strided_slice %508 {offsets = [0, 256], sizes = [8, 128], strides = [1, 1]} : vector<8x384xf32> to vector<8x128xf32>
    %555 = vector.extract_strided_slice %513 {offsets = [0, 640], sizes = [8, 128], strides = [1, 1]} : vector<8x768xf32> to vector<8x128xf32>
    %556 = arith.mulf %545, %555 : vector<8x128xf32>
    %557 = arith.addf %554, %556 : vector<8x128xf32>
    %558 = math.tanh %557 : vector<8x128xf32>
    %559 = arith.subf %491, %558 : vector<8x128xf32>
    %560 = arith.mulf %553, %559 : vector<8x128xf32>
    %561 = arith.addf %558, %560 : vector<8x128xf32>
    %cst_116 = arith.constant dense<0xFF800000> : vector<128xf32>
    %562 = vector.multi_reduction <maximumf>, %537, %cst_116 [0] : vector<8x128xf32> to vector<128xf32>
    %563 = vector.shape_cast %562 : vector<128xf32> to vector<1x128xf32>
    %564 = arith.index_cast %c7_i32 : i32 to index
    %c0_117 = arith.constant 0 : index
    %565 = vector.load %arg9[%564, %c0_117] : memref<16x256xf32, #tpu.memory_space<vmem>>, vector<1x128xf32>
    tpu.vector_store %arg9[%564, %c0_117], %563 {strides = array<i32>} : memref<16x256xf32, #tpu.memory_space<vmem>>, vector<1x128xf32>,
    %cst_118 = arith.constant dense<0xFF800000> : vector<128xf32>
    %566 = vector.multi_reduction <maximumf>, %561, %cst_118 [0] : vector<8x128xf32> to vector<128xf32>
    %567 = vector.shape_cast %566 : vector<128xf32> to vector<1x128xf32>
    %568 = arith.index_cast %500 : i32 to index
    %c128_119 = arith.constant 128 : index
    %569 = vector.load %arg9[%568, %c128_119] : memref<16x256xf32, #tpu.memory_space<vmem>>, vector<1x128xf32>
    tpu.vector_store %arg9[%568, %c128_119], %567 {strides = array<i32>} : memref<16x256xf32, #tpu.memory_space<vmem>>, vector<1x128xf32>,
    %c8_i32_120 = arith.constant 8 : i32
    %c15_i32_121 = arith.constant 15 : i32
    %570 = arith.subi %c15_i32_121, %c8_i32_120 : i32
    %c8_i32_122 = arith.constant 8 : i32
    %571 = arith.muli %c8_i32_120, %c8_i32_122 : i32
    %572 = tpu.assume_multiple %571, 8 : i32
    %c8_i32_123 = arith.constant 8 : i32
    %573 = arith.muli %570, %c8_i32_123 : i32
    %574 = tpu.assume_multiple %573, 8 : i32
    %575 = arith.index_cast %572 : i32 to index
    %c0_124 = arith.constant 0 : index
    %576 = vector.load %arg8[%575, %c0_124] : memref<128x768xf32, #tpu.memory_space<vmem>>, vector<8x384xf32>
    %577 = arith.index_cast %574 : i32 to index
    %c384_125 = arith.constant 384 : index
    %578 = vector.load %arg8[%577, %c384_125] : memref<128x768xf32, #tpu.memory_space<vmem>>, vector<8x384xf32>
    %579 = tpu.concatenate %537, %561 in 1 : vector<8x128xf32>, vector<8x128xf32> -> vector<8x256xf32>
    %580 = arith.truncf %579 : vector<8x256xf32> to vector<8x256xbf16>
    %cst_126 = arith.constant dense<0.000000e+00> : vector<8x768xf32>
    %581 = tpu.matmul %580, %7, %cst_126 {dimension_numbers = #tpu.dot_dimension_numbers<[1], [0], [0], [1], [0, 0, 1, 1], [], []>} : vector<8x256xbf16>, vector<256x768xbf16>, vector<8x768xf32> -> vector<8x768xf32>
    %582 = vector.broadcast %8 : vector<1x768xf32> to vector<8x768xf32>
    %583 = arith.addf %581, %582 : vector<8x768xf32>
    %584 = vector.extract_strided_slice %576 {offsets = [0, 0], sizes = [8, 128], strides = [1, 1]} : vector<8x384xf32> to vector<8x128xf32>
    %585 = vector.extract_strided_slice %583 {offsets = [0, 0], sizes = [8, 128], strides = [1, 1]} : vector<8x768xf32> to vector<8x128xf32>
    %586 = arith.addf %584, %585 : vector<8x128xf32>
    %587 = arith.negf %586 : vector<8x128xf32>
    %588 = math.exp %587 : vector<8x128xf32>
    %cst_127 = arith.constant 1.000000e+00 : f32
    %589 = vector.broadcast %cst_127 : f32 to vector<8x128xf32>
    %590 = arith.addf %589, %588 : vector<8x128xf32>
    %591 = arith.divf %589, %590 : vector<8x128xf32>
    %592 = vector.extract_strided_slice %576 {offsets = [0, 128], sizes = [8, 128], strides = [1, 1]} : vector<8x384xf32> to vector<8x128xf32>
    %593 = vector.extract_strided_slice %583 {offsets = [0, 128], sizes = [8, 128], strides = [1, 1]} : vector<8x768xf32> to vector<8x128xf32>
    %594 = arith.addf %592, %593 : vector<8x128xf32>
    %595 = arith.negf %594 : vector<8x128xf32>
    %596 = math.exp %595 : vector<8x128xf32>
    %cst_128 = arith.constant 1.000000e+00 : f32
    %597 = vector.broadcast %cst_128 : f32 to vector<8x128xf32>
    %598 = arith.addf %597, %596 : vector<8x128xf32>
    %599 = arith.divf %597, %598 : vector<8x128xf32>
    %600 = vector.extract_strided_slice %576 {offsets = [0, 256], sizes = [8, 128], strides = [1, 1]} : vector<8x384xf32> to vector<8x128xf32>
    %601 = vector.extract_strided_slice %583 {offsets = [0, 256], sizes = [8, 128], strides = [1, 1]} : vector<8x768xf32> to vector<8x128xf32>
    %602 = arith.mulf %591, %601 : vector<8x128xf32>
    %603 = arith.addf %600, %602 : vector<8x128xf32>
    %604 = math.tanh %603 : vector<8x128xf32>
    %605 = arith.subf %537, %604 : vector<8x128xf32>
    %606 = arith.mulf %599, %605 : vector<8x128xf32>
    %607 = arith.addf %604, %606 : vector<8x128xf32>
    %608 = vector.extract_strided_slice %578 {offsets = [0, 0], sizes = [8, 128], strides = [1, 1]} : vector<8x384xf32> to vector<8x128xf32>
    %609 = vector.extract_strided_slice %583 {offsets = [0, 384], sizes = [8, 128], strides = [1, 1]} : vector<8x768xf32> to vector<8x128xf32>
    %610 = arith.addf %608, %609 : vector<8x128xf32>
    %611 = arith.negf %610 : vector<8x128xf32>
    %612 = math.exp %611 : vector<8x128xf32>
    %cst_129 = arith.constant 1.000000e+00 : f32
    %613 = vector.broadcast %cst_129 : f32 to vector<8x128xf32>
    %614 = arith.addf %613, %612 : vector<8x128xf32>
    %615 = arith.divf %613, %614 : vector<8x128xf32>
    %616 = vector.extract_strided_slice %578 {offsets = [0, 128], sizes = [8, 128], strides = [1, 1]} : vector<8x384xf32> to vector<8x128xf32>
    %617 = vector.extract_strided_slice %583 {offsets = [0, 512], sizes = [8, 128], strides = [1, 1]} : vector<8x768xf32> to vector<8x128xf32>
    %618 = arith.addf %616, %617 : vector<8x128xf32>
    %619 = arith.negf %618 : vector<8x128xf32>
    %620 = math.exp %619 : vector<8x128xf32>
    %cst_130 = arith.constant 1.000000e+00 : f32
    %621 = vector.broadcast %cst_130 : f32 to vector<8x128xf32>
    %622 = arith.addf %621, %620 : vector<8x128xf32>
    %623 = arith.divf %621, %622 : vector<8x128xf32>
    %624 = vector.extract_strided_slice %578 {offsets = [0, 256], sizes = [8, 128], strides = [1, 1]} : vector<8x384xf32> to vector<8x128xf32>
    %625 = vector.extract_strided_slice %583 {offsets = [0, 640], sizes = [8, 128], strides = [1, 1]} : vector<8x768xf32> to vector<8x128xf32>
    %626 = arith.mulf %615, %625 : vector<8x128xf32>
    %627 = arith.addf %624, %626 : vector<8x128xf32>
    %628 = math.tanh %627 : vector<8x128xf32>
    %629 = arith.subf %561, %628 : vector<8x128xf32>
    %630 = arith.mulf %623, %629 : vector<8x128xf32>
    %631 = arith.addf %628, %630 : vector<8x128xf32>
    %cst_131 = arith.constant dense<0xFF800000> : vector<128xf32>
    %632 = vector.multi_reduction <maximumf>, %607, %cst_131 [0] : vector<8x128xf32> to vector<128xf32>
    %633 = vector.shape_cast %632 : vector<128xf32> to vector<1x128xf32>
    %634 = arith.index_cast %c8_i32_120 : i32 to index
    %c0_132 = arith.constant 0 : index
    %635 = vector.load %arg9[%634, %c0_132] : memref<16x256xf32, #tpu.memory_space<vmem>>, vector<1x128xf32>
    tpu.vector_store %arg9[%634, %c0_132], %633 {strides = array<i32>} : memref<16x256xf32, #tpu.memory_space<vmem>>, vector<1x128xf32>,
    %cst_133 = arith.constant dense<0xFF800000> : vector<128xf32>
    %636 = vector.multi_reduction <maximumf>, %631, %cst_133 [0] : vector<8x128xf32> to vector<128xf32>
    %637 = vector.shape_cast %636 : vector<128xf32> to vector<1x128xf32>
    %638 = arith.index_cast %570 : i32 to index
    %c128_134 = arith.constant 128 : index
    %639 = vector.load %arg9[%638, %c128_134] : memref<16x256xf32, #tpu.memory_space<vmem>>, vector<1x128xf32>
    tpu.vector_store %arg9[%638, %c128_134], %637 {strides = array<i32>} : memref<16x256xf32, #tpu.memory_space<vmem>>, vector<1x128xf32>,
    %c9_i32 = arith.constant 9 : i32
    %c15_i32_135 = arith.constant 15 : i32
    %640 = arith.subi %c15_i32_135, %c9_i32 : i32
    %c8_i32_136 = arith.constant 8 : i32
    %641 = arith.muli %c9_i32, %c8_i32_136 : i32
    %642 = tpu.assume_multiple %641, 8 : i32
    %c8_i32_137 = arith.constant 8 : i32
    %643 = arith.muli %640, %c8_i32_137 : i32
    %644 = tpu.assume_multiple %643, 8 : i32
    %645 = arith.index_cast %642 : i32 to index
    %c0_138 = arith.constant 0 : index
    %646 = vector.load %arg8[%645, %c0_138] : memref<128x768xf32, #tpu.memory_space<vmem>>, vector<8x384xf32>
    %647 = arith.index_cast %644 : i32 to index
    %c384_139 = arith.constant 384 : index
    %648 = vector.load %arg8[%647, %c384_139] : memref<128x768xf32, #tpu.memory_space<vmem>>, vector<8x384xf32>
    %649 = tpu.concatenate %607, %631 in 1 : vector<8x128xf32>, vector<8x128xf32> -> vector<8x256xf32>
    %650 = arith.truncf %649 : vector<8x256xf32> to vector<8x256xbf16>
    %cst_140 = arith.constant dense<0.000000e+00> : vector<8x768xf32>
    %651 = tpu.matmul %650, %7, %cst_140 {dimension_numbers = #tpu.dot_dimension_numbers<[1], [0], [0], [1], [0, 0, 1, 1], [], []>} : vector<8x256xbf16>, vector<256x768xbf16>, vector<8x768xf32> -> vector<8x768xf32>
    %652 = vector.broadcast %8 : vector<1x768xf32> to vector<8x768xf32>
    %653 = arith.addf %651, %652 : vector<8x768xf32>
    %654 = vector.extract_strided_slice %646 {offsets = [0, 0], sizes = [8, 128], strides = [1, 1]} : vector<8x384xf32> to vector<8x128xf32>
    %655 = vector.extract_strided_slice %653 {offsets = [0, 0], sizes = [8, 128], strides = [1, 1]} : vector<8x768xf32> to vector<8x128xf32>
    %656 = arith.addf %654, %655 : vector<8x128xf32>
    %657 = arith.negf %656 : vector<8x128xf32>
    %658 = math.exp %657 : vector<8x128xf32>
    %cst_141 = arith.constant 1.000000e+00 : f32
    %659 = vector.broadcast %cst_141 : f32 to vector<8x128xf32>
    %660 = arith.addf %659, %658 : vector<8x128xf32>
    %661 = arith.divf %659, %660 : vector<8x128xf32>
    %662 = vector.extract_strided_slice %646 {offsets = [0, 128], sizes = [8, 128], strides = [1, 1]} : vector<8x384xf32> to vector<8x128xf32>
    %663 = vector.extract_strided_slice %653 {offsets = [0, 128], sizes = [8, 128], strides = [1, 1]} : vector<8x768xf32> to vector<8x128xf32>
    %664 = arith.addf %662, %663 : vector<8x128xf32>
    %665 = arith.negf %664 : vector<8x128xf32>
    %666 = math.exp %665 : vector<8x128xf32>
    %cst_142 = arith.constant 1.000000e+00 : f32
    %667 = vector.broadcast %cst_142 : f32 to vector<8x128xf32>
    %668 = arith.addf %667, %666 : vector<8x128xf32>
    %669 = arith.divf %667, %668 : vector<8x128xf32>
    %670 = vector.extract_strided_slice %646 {offsets = [0, 256], sizes = [8, 128], strides = [1, 1]} : vector<8x384xf32> to vector<8x128xf32>
    %671 = vector.extract_strided_slice %653 {offsets = [0, 256], sizes = [8, 128], strides = [1, 1]} : vector<8x768xf32> to vector<8x128xf32>
    %672 = arith.mulf %661, %671 : vector<8x128xf32>
    %673 = arith.addf %670, %672 : vector<8x128xf32>
    %674 = math.tanh %673 : vector<8x128xf32>
    %675 = arith.subf %607, %674 : vector<8x128xf32>
    %676 = arith.mulf %669, %675 : vector<8x128xf32>
    %677 = arith.addf %674, %676 : vector<8x128xf32>
    %678 = vector.extract_strided_slice %648 {offsets = [0, 0], sizes = [8, 128], strides = [1, 1]} : vector<8x384xf32> to vector<8x128xf32>
    %679 = vector.extract_strided_slice %653 {offsets = [0, 384], sizes = [8, 128], strides = [1, 1]} : vector<8x768xf32> to vector<8x128xf32>
    %680 = arith.addf %678, %679 : vector<8x128xf32>
    %681 = arith.negf %680 : vector<8x128xf32>
    %682 = math.exp %681 : vector<8x128xf32>
    %cst_143 = arith.constant 1.000000e+00 : f32
    %683 = vector.broadcast %cst_143 : f32 to vector<8x128xf32>
    %684 = arith.addf %683, %682 : vector<8x128xf32>
    %685 = arith.divf %683, %684 : vector<8x128xf32>
    %686 = vector.extract_strided_slice %648 {offsets = [0, 128], sizes = [8, 128], strides = [1, 1]} : vector<8x384xf32> to vector<8x128xf32>
    %687 = vector.extract_strided_slice %653 {offsets = [0, 512], sizes = [8, 128], strides = [1, 1]} : vector<8x768xf32> to vector<8x128xf32>
    %688 = arith.addf %686, %687 : vector<8x128xf32>
    %689 = arith.negf %688 : vector<8x128xf32>
    %690 = math.exp %689 : vector<8x128xf32>
    %cst_144 = arith.constant 1.000000e+00 : f32
    %691 = vector.broadcast %cst_144 : f32 to vector<8x128xf32>
    %692 = arith.addf %691, %690 : vector<8x128xf32>
    %693 = arith.divf %691, %692 : vector<8x128xf32>
    %694 = vector.extract_strided_slice %648 {offsets = [0, 256], sizes = [8, 128], strides = [1, 1]} : vector<8x384xf32> to vector<8x128xf32>
    %695 = vector.extract_strided_slice %653 {offsets = [0, 640], sizes = [8, 128], strides = [1, 1]} : vector<8x768xf32> to vector<8x128xf32>
    %696 = arith.mulf %685, %695 : vector<8x128xf32>
    %697 = arith.addf %694, %696 : vector<8x128xf32>
    %698 = math.tanh %697 : vector<8x128xf32>
    %699 = arith.subf %631, %698 : vector<8x128xf32>
    %700 = arith.mulf %693, %699 : vector<8x128xf32>
    %701 = arith.addf %698, %700 : vector<8x128xf32>
    %cst_145 = arith.constant dense<0xFF800000> : vector<128xf32>
    %702 = vector.multi_reduction <maximumf>, %677, %cst_145 [0] : vector<8x128xf32> to vector<128xf32>
    %703 = vector.shape_cast %702 : vector<128xf32> to vector<1x128xf32>
    %704 = arith.index_cast %c9_i32 : i32 to index
    %c0_146 = arith.constant 0 : index
    %705 = vector.load %arg9[%704, %c0_146] : memref<16x256xf32, #tpu.memory_space<vmem>>, vector<1x128xf32>
    tpu.vector_store %arg9[%704, %c0_146], %703 {strides = array<i32>} : memref<16x256xf32, #tpu.memory_space<vmem>>, vector<1x128xf32>,
    %cst_147 = arith.constant dense<0xFF800000> : vector<128xf32>
    %706 = vector.multi_reduction <maximumf>, %701, %cst_147 [0] : vector<8x128xf32> to vector<128xf32>
    %707 = vector.shape_cast %706 : vector<128xf32> to vector<1x128xf32>
    %708 = arith.index_cast %640 : i32 to index
    %c128_148 = arith.constant 128 : index
    %709 = vector.load %arg9[%708, %c128_148] : memref<16x256xf32, #tpu.memory_space<vmem>>, vector<1x128xf32>
    tpu.vector_store %arg9[%708, %c128_148], %707 {strides = array<i32>} : memref<16x256xf32, #tpu.memory_space<vmem>>, vector<1x128xf32>,
    %c10_i32 = arith.constant 10 : i32
    %c15_i32_149 = arith.constant 15 : i32
    %710 = arith.subi %c15_i32_149, %c10_i32 : i32
    %c8_i32_150 = arith.constant 8 : i32
    %711 = arith.muli %c10_i32, %c8_i32_150 : i32
    %712 = tpu.assume_multiple %711, 8 : i32
    %c8_i32_151 = arith.constant 8 : i32
    %713 = arith.muli %710, %c8_i32_151 : i32
    %714 = tpu.assume_multiple %713, 8 : i32
    %715 = arith.index_cast %712 : i32 to index
    %c0_152 = arith.constant 0 : index
    %716 = vector.load %arg8[%715, %c0_152] : memref<128x768xf32, #tpu.memory_space<vmem>>, vector<8x384xf32>
    %717 = arith.index_cast %714 : i32 to index
    %c384_153 = arith.constant 384 : index
    %718 = vector.load %arg8[%717, %c384_153] : memref<128x768xf32, #tpu.memory_space<vmem>>, vector<8x384xf32>
    %719 = tpu.concatenate %677, %701 in 1 : vector<8x128xf32>, vector<8x128xf32> -> vector<8x256xf32>
    %720 = arith.truncf %719 : vector<8x256xf32> to vector<8x256xbf16>
    %cst_154 = arith.constant dense<0.000000e+00> : vector<8x768xf32>
    %721 = tpu.matmul %720, %7, %cst_154 {dimension_numbers = #tpu.dot_dimension_numbers<[1], [0], [0], [1], [0, 0, 1, 1], [], []>} : vector<8x256xbf16>, vector<256x768xbf16>, vector<8x768xf32> -> vector<8x768xf32>
    %722 = vector.broadcast %8 : vector<1x768xf32> to vector<8x768xf32>
    %723 = arith.addf %721, %722 : vector<8x768xf32>
    %724 = vector.extract_strided_slice %716 {offsets = [0, 0], sizes = [8, 128], strides = [1, 1]} : vector<8x384xf32> to vector<8x128xf32>
    %725 = vector.extract_strided_slice %723 {offsets = [0, 0], sizes = [8, 128], strides = [1, 1]} : vector<8x768xf32> to vector<8x128xf32>
    %726 = arith.addf %724, %725 : vector<8x128xf32>
    %727 = arith.negf %726 : vector<8x128xf32>
    %728 = math.exp %727 : vector<8x128xf32>
    %cst_155 = arith.constant 1.000000e+00 : f32
    %729 = vector.broadcast %cst_155 : f32 to vector<8x128xf32>
    %730 = arith.addf %729, %728 : vector<8x128xf32>
    %731 = arith.divf %729, %730 : vector<8x128xf32>
    %732 = vector.extract_strided_slice %716 {offsets = [0, 128], sizes = [8, 128], strides = [1, 1]} : vector<8x384xf32> to vector<8x128xf32>
    %733 = vector.extract_strided_slice %723 {offsets = [0, 128], sizes = [8, 128], strides = [1, 1]} : vector<8x768xf32> to vector<8x128xf32>
    %734 = arith.addf %732, %733 : vector<8x128xf32>
    %735 = arith.negf %734 : vector<8x128xf32>
    %736 = math.exp %735 : vector<8x128xf32>
    %cst_156 = arith.constant 1.000000e+00 : f32
    %737 = vector.broadcast %cst_156 : f32 to vector<8x128xf32>
    %738 = arith.addf %737, %736 : vector<8x128xf32>
    %739 = arith.divf %737, %738 : vector<8x128xf32>
    %740 = vector.extract_strided_slice %716 {offsets = [0, 256], sizes = [8, 128], strides = [1, 1]} : vector<8x384xf32> to vector<8x128xf32>
    %741 = vector.extract_strided_slice %723 {offsets = [0, 256], sizes = [8, 128], strides = [1, 1]} : vector<8x768xf32> to vector<8x128xf32>
    %742 = arith.mulf %731, %741 : vector<8x128xf32>
    %743 = arith.addf %740, %742 : vector<8x128xf32>
    %744 = math.tanh %743 : vector<8x128xf32>
    %745 = arith.subf %677, %744 : vector<8x128xf32>
    %746 = arith.mulf %739, %745 : vector<8x128xf32>
    %747 = arith.addf %744, %746 : vector<8x128xf32>
    %748 = vector.extract_strided_slice %718 {offsets = [0, 0], sizes = [8, 128], strides = [1, 1]} : vector<8x384xf32> to vector<8x128xf32>
    %749 = vector.extract_strided_slice %723 {offsets = [0, 384], sizes = [8, 128], strides = [1, 1]} : vector<8x768xf32> to vector<8x128xf32>
    %750 = arith.addf %748, %749 : vector<8x128xf32>
    %751 = arith.negf %750 : vector<8x128xf32>
    %752 = math.exp %751 : vector<8x128xf32>
    %cst_157 = arith.constant 1.000000e+00 : f32
    %753 = vector.broadcast %cst_157 : f32 to vector<8x128xf32>
    %754 = arith.addf %753, %752 : vector<8x128xf32>
    %755 = arith.divf %753, %754 : vector<8x128xf32>
    %756 = vector.extract_strided_slice %718 {offsets = [0, 128], sizes = [8, 128], strides = [1, 1]} : vector<8x384xf32> to vector<8x128xf32>
    %757 = vector.extract_strided_slice %723 {offsets = [0, 512], sizes = [8, 128], strides = [1, 1]} : vector<8x768xf32> to vector<8x128xf32>
    %758 = arith.addf %756, %757 : vector<8x128xf32>
    %759 = arith.negf %758 : vector<8x128xf32>
    %760 = math.exp %759 : vector<8x128xf32>
    %cst_158 = arith.constant 1.000000e+00 : f32
    %761 = vector.broadcast %cst_158 : f32 to vector<8x128xf32>
    %762 = arith.addf %761, %760 : vector<8x128xf32>
    %763 = arith.divf %761, %762 : vector<8x128xf32>
    %764 = vector.extract_strided_slice %718 {offsets = [0, 256], sizes = [8, 128], strides = [1, 1]} : vector<8x384xf32> to vector<8x128xf32>
    %765 = vector.extract_strided_slice %723 {offsets = [0, 640], sizes = [8, 128], strides = [1, 1]} : vector<8x768xf32> to vector<8x128xf32>
    %766 = arith.mulf %755, %765 : vector<8x128xf32>
    %767 = arith.addf %764, %766 : vector<8x128xf32>
    %768 = math.tanh %767 : vector<8x128xf32>
    %769 = arith.subf %701, %768 : vector<8x128xf32>
    %770 = arith.mulf %763, %769 : vector<8x128xf32>
    %771 = arith.addf %768, %770 : vector<8x128xf32>
    %cst_159 = arith.constant dense<0xFF800000> : vector<128xf32>
    %772 = vector.multi_reduction <maximumf>, %747, %cst_159 [0] : vector<8x128xf32> to vector<128xf32>
    %773 = vector.shape_cast %772 : vector<128xf32> to vector<1x128xf32>
    %774 = arith.index_cast %c10_i32 : i32 to index
    %c0_160 = arith.constant 0 : index
    %775 = vector.load %arg9[%774, %c0_160] : memref<16x256xf32, #tpu.memory_space<vmem>>, vector<1x128xf32>
    tpu.vector_store %arg9[%774, %c0_160], %773 {strides = array<i32>} : memref<16x256xf32, #tpu.memory_space<vmem>>, vector<1x128xf32>,
    %cst_161 = arith.constant dense<0xFF800000> : vector<128xf32>
    %776 = vector.multi_reduction <maximumf>, %771, %cst_161 [0] : vector<8x128xf32> to vector<128xf32>
    %777 = vector.shape_cast %776 : vector<128xf32> to vector<1x128xf32>
    %778 = arith.index_cast %710 : i32 to index
    %c128_162 = arith.constant 128 : index
    %779 = vector.load %arg9[%778, %c128_162] : memref<16x256xf32, #tpu.memory_space<vmem>>, vector<1x128xf32>
    tpu.vector_store %arg9[%778, %c128_162], %777 {strides = array<i32>} : memref<16x256xf32, #tpu.memory_space<vmem>>, vector<1x128xf32>,
    %c11_i32 = arith.constant 11 : i32
    %c15_i32_163 = arith.constant 15 : i32
    %780 = arith.subi %c15_i32_163, %c11_i32 : i32
    %c8_i32_164 = arith.constant 8 : i32
    %781 = arith.muli %c11_i32, %c8_i32_164 : i32
    %782 = tpu.assume_multiple %781, 8 : i32
    %c8_i32_165 = arith.constant 8 : i32
    %783 = arith.muli %780, %c8_i32_165 : i32
    %784 = tpu.assume_multiple %783, 8 : i32
    %785 = arith.index_cast %782 : i32 to index
    %c0_166 = arith.constant 0 : index
    %786 = vector.load %arg8[%785, %c0_166] : memref<128x768xf32, #tpu.memory_space<vmem>>, vector<8x384xf32>
    %787 = arith.index_cast %784 : i32 to index
    %c384_167 = arith.constant 384 : index
    %788 = vector.load %arg8[%787, %c384_167] : memref<128x768xf32, #tpu.memory_space<vmem>>, vector<8x384xf32>
    %789 = tpu.concatenate %747, %771 in 1 : vector<8x128xf32>, vector<8x128xf32> -> vector<8x256xf32>
    %790 = arith.truncf %789 : vector<8x256xf32> to vector<8x256xbf16>
    %cst_168 = arith.constant dense<0.000000e+00> : vector<8x768xf32>
    %791 = tpu.matmul %790, %7, %cst_168 {dimension_numbers = #tpu.dot_dimension_numbers<[1], [0], [0], [1], [0, 0, 1, 1], [], []>} : vector<8x256xbf16>, vector<256x768xbf16>, vector<8x768xf32> -> vector<8x768xf32>
    %792 = vector.broadcast %8 : vector<1x768xf32> to vector<8x768xf32>
    %793 = arith.addf %791, %792 : vector<8x768xf32>
    %794 = vector.extract_strided_slice %786 {offsets = [0, 0], sizes = [8, 128], strides = [1, 1]} : vector<8x384xf32> to vector<8x128xf32>
    %795 = vector.extract_strided_slice %793 {offsets = [0, 0], sizes = [8, 128], strides = [1, 1]} : vector<8x768xf32> to vector<8x128xf32>
    %796 = arith.addf %794, %795 : vector<8x128xf32>
    %797 = arith.negf %796 : vector<8x128xf32>
    %798 = math.exp %797 : vector<8x128xf32>
    %cst_169 = arith.constant 1.000000e+00 : f32
    %799 = vector.broadcast %cst_169 : f32 to vector<8x128xf32>
    %800 = arith.addf %799, %798 : vector<8x128xf32>
    %801 = arith.divf %799, %800 : vector<8x128xf32>
    %802 = vector.extract_strided_slice %786 {offsets = [0, 128], sizes = [8, 128], strides = [1, 1]} : vector<8x384xf32> to vector<8x128xf32>
    %803 = vector.extract_strided_slice %793 {offsets = [0, 128], sizes = [8, 128], strides = [1, 1]} : vector<8x768xf32> to vector<8x128xf32>
    %804 = arith.addf %802, %803 : vector<8x128xf32>
    %805 = arith.negf %804 : vector<8x128xf32>
    %806 = math.exp %805 : vector<8x128xf32>
    %cst_170 = arith.constant 1.000000e+00 : f32
    %807 = vector.broadcast %cst_170 : f32 to vector<8x128xf32>
    %808 = arith.addf %807, %806 : vector<8x128xf32>
    %809 = arith.divf %807, %808 : vector<8x128xf32>
    %810 = vector.extract_strided_slice %786 {offsets = [0, 256], sizes = [8, 128], strides = [1, 1]} : vector<8x384xf32> to vector<8x128xf32>
    %811 = vector.extract_strided_slice %793 {offsets = [0, 256], sizes = [8, 128], strides = [1, 1]} : vector<8x768xf32> to vector<8x128xf32>
    %812 = arith.mulf %801, %811 : vector<8x128xf32>
    %813 = arith.addf %810, %812 : vector<8x128xf32>
    %814 = math.tanh %813 : vector<8x128xf32>
    %815 = arith.subf %747, %814 : vector<8x128xf32>
    %816 = arith.mulf %809, %815 : vector<8x128xf32>
    %817 = arith.addf %814, %816 : vector<8x128xf32>
    %818 = vector.extract_strided_slice %788 {offsets = [0, 0], sizes = [8, 128], strides = [1, 1]} : vector<8x384xf32> to vector<8x128xf32>
    %819 = vector.extract_strided_slice %793 {offsets = [0, 384], sizes = [8, 128], strides = [1, 1]} : vector<8x768xf32> to vector<8x128xf32>
    %820 = arith.addf %818, %819 : vector<8x128xf32>
    %821 = arith.negf %820 : vector<8x128xf32>
    %822 = math.exp %821 : vector<8x128xf32>
    %cst_171 = arith.constant 1.000000e+00 : f32
    %823 = vector.broadcast %cst_171 : f32 to vector<8x128xf32>
    %824 = arith.addf %823, %822 : vector<8x128xf32>
    %825 = arith.divf %823, %824 : vector<8x128xf32>
    %826 = vector.extract_strided_slice %788 {offsets = [0, 128], sizes = [8, 128], strides = [1, 1]} : vector<8x384xf32> to vector<8x128xf32>
    %827 = vector.extract_strided_slice %793 {offsets = [0, 512], sizes = [8, 128], strides = [1, 1]} : vector<8x768xf32> to vector<8x128xf32>
    %828 = arith.addf %826, %827 : vector<8x128xf32>
    %829 = arith.negf %828 : vector<8x128xf32>
    %830 = math.exp %829 : vector<8x128xf32>
    %cst_172 = arith.constant 1.000000e+00 : f32
    %831 = vector.broadcast %cst_172 : f32 to vector<8x128xf32>
    %832 = arith.addf %831, %830 : vector<8x128xf32>
    %833 = arith.divf %831, %832 : vector<8x128xf32>
    %834 = vector.extract_strided_slice %788 {offsets = [0, 256], sizes = [8, 128], strides = [1, 1]} : vector<8x384xf32> to vector<8x128xf32>
    %835 = vector.extract_strided_slice %793 {offsets = [0, 640], sizes = [8, 128], strides = [1, 1]} : vector<8x768xf32> to vector<8x128xf32>
    %836 = arith.mulf %825, %835 : vector<8x128xf32>
    %837 = arith.addf %834, %836 : vector<8x128xf32>
    %838 = math.tanh %837 : vector<8x128xf32>
    %839 = arith.subf %771, %838 : vector<8x128xf32>
    %840 = arith.mulf %833, %839 : vector<8x128xf32>
    %841 = arith.addf %838, %840 : vector<8x128xf32>
    %cst_173 = arith.constant dense<0xFF800000> : vector<128xf32>
    %842 = vector.multi_reduction <maximumf>, %817, %cst_173 [0] : vector<8x128xf32> to vector<128xf32>
    %843 = vector.shape_cast %842 : vector<128xf32> to vector<1x128xf32>
    %844 = arith.index_cast %c11_i32 : i32 to index
    %c0_174 = arith.constant 0 : index
    %845 = vector.load %arg9[%844, %c0_174] : memref<16x256xf32, #tpu.memory_space<vmem>>, vector<1x128xf32>
    tpu.vector_store %arg9[%844, %c0_174], %843 {strides = array<i32>} : memref<16x256xf32, #tpu.memory_space<vmem>>, vector<1x128xf32>,
    %cst_175 = arith.constant dense<0xFF800000> : vector<128xf32>
    %846 = vector.multi_reduction <maximumf>, %841, %cst_175 [0] : vector<8x128xf32> to vector<128xf32>
    %847 = vector.shape_cast %846 : vector<128xf32> to vector<1x128xf32>
    %848 = arith.index_cast %780 : i32 to index
    %c128_176 = arith.constant 128 : index
    %849 = vector.load %arg9[%848, %c128_176] : memref<16x256xf32, #tpu.memory_space<vmem>>, vector<1x128xf32>
    tpu.vector_store %arg9[%848, %c128_176], %847 {strides = array<i32>} : memref<16x256xf32, #tpu.memory_space<vmem>>, vector<1x128xf32>,
    %c12_i32 = arith.constant 12 : i32
    %c15_i32_177 = arith.constant 15 : i32
    %850 = arith.subi %c15_i32_177, %c12_i32 : i32
    %c8_i32_178 = arith.constant 8 : i32
    %851 = arith.muli %c12_i32, %c8_i32_178 : i32
    %852 = tpu.assume_multiple %851, 8 : i32
    %c8_i32_179 = arith.constant 8 : i32
    %853 = arith.muli %850, %c8_i32_179 : i32
    %854 = tpu.assume_multiple %853, 8 : i32
    %855 = arith.index_cast %852 : i32 to index
    %c0_180 = arith.constant 0 : index
    %856 = vector.load %arg8[%855, %c0_180] : memref<128x768xf32, #tpu.memory_space<vmem>>, vector<8x384xf32>
    %857 = arith.index_cast %854 : i32 to index
    %c384_181 = arith.constant 384 : index
    %858 = vector.load %arg8[%857, %c384_181] : memref<128x768xf32, #tpu.memory_space<vmem>>, vector<8x384xf32>
    %859 = tpu.concatenate %817, %841 in 1 : vector<8x128xf32>, vector<8x128xf32> -> vector<8x256xf32>
    %860 = arith.truncf %859 : vector<8x256xf32> to vector<8x256xbf16>
    %cst_182 = arith.constant dense<0.000000e+00> : vector<8x768xf32>
    %861 = tpu.matmul %860, %7, %cst_182 {dimension_numbers = #tpu.dot_dimension_numbers<[1], [0], [0], [1], [0, 0, 1, 1], [], []>} : vector<8x256xbf16>, vector<256x768xbf16>, vector<8x768xf32> -> vector<8x768xf32>
    %862 = vector.broadcast %8 : vector<1x768xf32> to vector<8x768xf32>
    %863 = arith.addf %861, %862 : vector<8x768xf32>
    %864 = vector.extract_strided_slice %856 {offsets = [0, 0], sizes = [8, 128], strides = [1, 1]} : vector<8x384xf32> to vector<8x128xf32>
    %865 = vector.extract_strided_slice %863 {offsets = [0, 0], sizes = [8, 128], strides = [1, 1]} : vector<8x768xf32> to vector<8x128xf32>
    %866 = arith.addf %864, %865 : vector<8x128xf32>
    %867 = arith.negf %866 : vector<8x128xf32>
    %868 = math.exp %867 : vector<8x128xf32>
    %cst_183 = arith.constant 1.000000e+00 : f32
    %869 = vector.broadcast %cst_183 : f32 to vector<8x128xf32>
    %870 = arith.addf %869, %868 : vector<8x128xf32>
    %871 = arith.divf %869, %870 : vector<8x128xf32>
    %872 = vector.extract_strided_slice %856 {offsets = [0, 128], sizes = [8, 128], strides = [1, 1]} : vector<8x384xf32> to vector<8x128xf32>
    %873 = vector.extract_strided_slice %863 {offsets = [0, 128], sizes = [8, 128], strides = [1, 1]} : vector<8x768xf32> to vector<8x128xf32>
    %874 = arith.addf %872, %873 : vector<8x128xf32>
    %875 = arith.negf %874 : vector<8x128xf32>
    %876 = math.exp %875 : vector<8x128xf32>
    %cst_184 = arith.constant 1.000000e+00 : f32
    %877 = vector.broadcast %cst_184 : f32 to vector<8x128xf32>
    %878 = arith.addf %877, %876 : vector<8x128xf32>
    %879 = arith.divf %877, %878 : vector<8x128xf32>
    %880 = vector.extract_strided_slice %856 {offsets = [0, 256], sizes = [8, 128], strides = [1, 1]} : vector<8x384xf32> to vector<8x128xf32>
    %881 = vector.extract_strided_slice %863 {offsets = [0, 256], sizes = [8, 128], strides = [1, 1]} : vector<8x768xf32> to vector<8x128xf32>
    %882 = arith.mulf %871, %881 : vector<8x128xf32>
    %883 = arith.addf %880, %882 : vector<8x128xf32>
    %884 = math.tanh %883 : vector<8x128xf32>
    %885 = arith.subf %817, %884 : vector<8x128xf32>
    %886 = arith.mulf %879, %885 : vector<8x128xf32>
    %887 = arith.addf %884, %886 : vector<8x128xf32>
    %888 = vector.extract_strided_slice %858 {offsets = [0, 0], sizes = [8, 128], strides = [1, 1]} : vector<8x384xf32> to vector<8x128xf32>
    %889 = vector.extract_strided_slice %863 {offsets = [0, 384], sizes = [8, 128], strides = [1, 1]} : vector<8x768xf32> to vector<8x128xf32>
    %890 = arith.addf %888, %889 : vector<8x128xf32>
    %891 = arith.negf %890 : vector<8x128xf32>
    %892 = math.exp %891 : vector<8x128xf32>
    %cst_185 = arith.constant 1.000000e+00 : f32
    %893 = vector.broadcast %cst_185 : f32 to vector<8x128xf32>
    %894 = arith.addf %893, %892 : vector<8x128xf32>
    %895 = arith.divf %893, %894 : vector<8x128xf32>
    %896 = vector.extract_strided_slice %858 {offsets = [0, 128], sizes = [8, 128], strides = [1, 1]} : vector<8x384xf32> to vector<8x128xf32>
    %897 = vector.extract_strided_slice %863 {offsets = [0, 512], sizes = [8, 128], strides = [1, 1]} : vector<8x768xf32> to vector<8x128xf32>
    %898 = arith.addf %896, %897 : vector<8x128xf32>
    %899 = arith.negf %898 : vector<8x128xf32>
    %900 = math.exp %899 : vector<8x128xf32>
    %cst_186 = arith.constant 1.000000e+00 : f32
    %901 = vector.broadcast %cst_186 : f32 to vector<8x128xf32>
    %902 = arith.addf %901, %900 : vector<8x128xf32>
    %903 = arith.divf %901, %902 : vector<8x128xf32>
    %904 = vector.extract_strided_slice %858 {offsets = [0, 256], sizes = [8, 128], strides = [1, 1]} : vector<8x384xf32> to vector<8x128xf32>
    %905 = vector.extract_strided_slice %863 {offsets = [0, 640], sizes = [8, 128], strides = [1, 1]} : vector<8x768xf32> to vector<8x128xf32>
    %906 = arith.mulf %895, %905 : vector<8x128xf32>
    %907 = arith.addf %904, %906 : vector<8x128xf32>
    %908 = math.tanh %907 : vector<8x128xf32>
    %909 = arith.subf %841, %908 : vector<8x128xf32>
    %910 = arith.mulf %903, %909 : vector<8x128xf32>
    %911 = arith.addf %908, %910 : vector<8x128xf32>
    %cst_187 = arith.constant dense<0xFF800000> : vector<128xf32>
    %912 = vector.multi_reduction <maximumf>, %887, %cst_187 [0] : vector<8x128xf32> to vector<128xf32>
    %913 = vector.shape_cast %912 : vector<128xf32> to vector<1x128xf32>
    %914 = arith.index_cast %c12_i32 : i32 to index
    %c0_188 = arith.constant 0 : index
    %915 = vector.load %arg9[%914, %c0_188] : memref<16x256xf32, #tpu.memory_space<vmem>>, vector<1x128xf32>
    tpu.vector_store %arg9[%914, %c0_188], %913 {strides = array<i32>} : memref<16x256xf32, #tpu.memory_space<vmem>>, vector<1x128xf32>,
    %cst_189 = arith.constant dense<0xFF800000> : vector<128xf32>
    %916 = vector.multi_reduction <maximumf>, %911, %cst_189 [0] : vector<8x128xf32> to vector<128xf32>
    %917 = vector.shape_cast %916 : vector<128xf32> to vector<1x128xf32>
    %918 = arith.index_cast %850 : i32 to index
    %c128_190 = arith.constant 128 : index
    %919 = vector.load %arg9[%918, %c128_190] : memref<16x256xf32, #tpu.memory_space<vmem>>, vector<1x128xf32>
    tpu.vector_store %arg9[%918, %c128_190], %917 {strides = array<i32>} : memref<16x256xf32, #tpu.memory_space<vmem>>, vector<1x128xf32>,
    %c13_i32 = arith.constant 13 : i32
    %c15_i32_191 = arith.constant 15 : i32
    %920 = arith.subi %c15_i32_191, %c13_i32 : i32
    %c8_i32_192 = arith.constant 8 : i32
    %921 = arith.muli %c13_i32, %c8_i32_192 : i32
    %922 = tpu.assume_multiple %921, 8 : i32
    %c8_i32_193 = arith.constant 8 : i32
    %923 = arith.muli %920, %c8_i32_193 : i32
    %924 = tpu.assume_multiple %923, 8 : i32
    %925 = arith.index_cast %922 : i32 to index
    %c0_194 = arith.constant 0 : index
    %926 = vector.load %arg8[%925, %c0_194] : memref<128x768xf32, #tpu.memory_space<vmem>>, vector<8x384xf32>
    %927 = arith.index_cast %924 : i32 to index
    %c384_195 = arith.constant 384 : index
    %928 = vector.load %arg8[%927, %c384_195] : memref<128x768xf32, #tpu.memory_space<vmem>>, vector<8x384xf32>
    %929 = tpu.concatenate %887, %911 in 1 : vector<8x128xf32>, vector<8x128xf32> -> vector<8x256xf32>
    %930 = arith.truncf %929 : vector<8x256xf32> to vector<8x256xbf16>
    %cst_196 = arith.constant dense<0.000000e+00> : vector<8x768xf32>
    %931 = tpu.matmul %930, %7, %cst_196 {dimension_numbers = #tpu.dot_dimension_numbers<[1], [0], [0], [1], [0, 0, 1, 1], [], []>} : vector<8x256xbf16>, vector<256x768xbf16>, vector<8x768xf32> -> vector<8x768xf32>
    %932 = vector.broadcast %8 : vector<1x768xf32> to vector<8x768xf32>
    %933 = arith.addf %931, %932 : vector<8x768xf32>
    %934 = vector.extract_strided_slice %926 {offsets = [0, 0], sizes = [8, 128], strides = [1, 1]} : vector<8x384xf32> to vector<8x128xf32>
    %935 = vector.extract_strided_slice %933 {offsets = [0, 0], sizes = [8, 128], strides = [1, 1]} : vector<8x768xf32> to vector<8x128xf32>
    %936 = arith.addf %934, %935 : vector<8x128xf32>
    %937 = arith.negf %936 : vector<8x128xf32>
    %938 = math.exp %937 : vector<8x128xf32>
    %cst_197 = arith.constant 1.000000e+00 : f32
    %939 = vector.broadcast %cst_197 : f32 to vector<8x128xf32>
    %940 = arith.addf %939, %938 : vector<8x128xf32>
    %941 = arith.divf %939, %940 : vector<8x128xf32>
    %942 = vector.extract_strided_slice %926 {offsets = [0, 128], sizes = [8, 128], strides = [1, 1]} : vector<8x384xf32> to vector<8x128xf32>
    %943 = vector.extract_strided_slice %933 {offsets = [0, 128], sizes = [8, 128], strides = [1, 1]} : vector<8x768xf32> to vector<8x128xf32>
    %944 = arith.addf %942, %943 : vector<8x128xf32>
    %945 = arith.negf %944 : vector<8x128xf32>
    %946 = math.exp %945 : vector<8x128xf32>
    %cst_198 = arith.constant 1.000000e+00 : f32
    %947 = vector.broadcast %cst_198 : f32 to vector<8x128xf32>
    %948 = arith.addf %947, %946 : vector<8x128xf32>
    %949 = arith.divf %947, %948 : vector<8x128xf32>
    %950 = vector.extract_strided_slice %926 {offsets = [0, 256], sizes = [8, 128], strides = [1, 1]} : vector<8x384xf32> to vector<8x128xf32>
    %951 = vector.extract_strided_slice %933 {offsets = [0, 256], sizes = [8, 128], strides = [1, 1]} : vector<8x768xf32> to vector<8x128xf32>
    %952 = arith.mulf %941, %951 : vector<8x128xf32>
    %953 = arith.addf %950, %952 : vector<8x128xf32>
    %954 = math.tanh %953 : vector<8x128xf32>
    %955 = arith.subf %887, %954 : vector<8x128xf32>
    %956 = arith.mulf %949, %955 : vector<8x128xf32>
    %957 = arith.addf %954, %956 : vector<8x128xf32>
    %958 = vector.extract_strided_slice %928 {offsets = [0, 0], sizes = [8, 128], strides = [1, 1]} : vector<8x384xf32> to vector<8x128xf32>
    %959 = vector.extract_strided_slice %933 {offsets = [0, 384], sizes = [8, 128], strides = [1, 1]} : vector<8x768xf32> to vector<8x128xf32>
    %960 = arith.addf %958, %959 : vector<8x128xf32>
    %961 = arith.negf %960 : vector<8x128xf32>
    %962 = math.exp %961 : vector<8x128xf32>
    %cst_199 = arith.constant 1.000000e+00 : f32
    %963 = vector.broadcast %cst_199 : f32 to vector<8x128xf32>
    %964 = arith.addf %963, %962 : vector<8x128xf32>
    %965 = arith.divf %963, %964 : vector<8x128xf32>
    %966 = vector.extract_strided_slice %928 {offsets = [0, 128], sizes = [8, 128], strides = [1, 1]} : vector<8x384xf32> to vector<8x128xf32>
    %967 = vector.extract_strided_slice %933 {offsets = [0, 512], sizes = [8, 128], strides = [1, 1]} : vector<8x768xf32> to vector<8x128xf32>
    %968 = arith.addf %966, %967 : vector<8x128xf32>
    %969 = arith.negf %968 : vector<8x128xf32>
    %970 = math.exp %969 : vector<8x128xf32>
    %cst_200 = arith.constant 1.000000e+00 : f32
    %971 = vector.broadcast %cst_200 : f32 to vector<8x128xf32>
    %972 = arith.addf %971, %970 : vector<8x128xf32>
    %973 = arith.divf %971, %972 : vector<8x128xf32>
    %974 = vector.extract_strided_slice %928 {offsets = [0, 256], sizes = [8, 128], strides = [1, 1]} : vector<8x384xf32> to vector<8x128xf32>
    %975 = vector.extract_strided_slice %933 {offsets = [0, 640], sizes = [8, 128], strides = [1, 1]} : vector<8x768xf32> to vector<8x128xf32>
    %976 = arith.mulf %965, %975 : vector<8x128xf32>
    %977 = arith.addf %974, %976 : vector<8x128xf32>
    %978 = math.tanh %977 : vector<8x128xf32>
    %979 = arith.subf %911, %978 : vector<8x128xf32>
    %980 = arith.mulf %973, %979 : vector<8x128xf32>
    %981 = arith.addf %978, %980 : vector<8x128xf32>
    %cst_201 = arith.constant dense<0xFF800000> : vector<128xf32>
    %982 = vector.multi_reduction <maximumf>, %957, %cst_201 [0] : vector<8x128xf32> to vector<128xf32>
    %983 = vector.shape_cast %982 : vector<128xf32> to vector<1x128xf32>
    %984 = arith.index_cast %c13_i32 : i32 to index
    %c0_202 = arith.constant 0 : index
    %985 = vector.load %arg9[%984, %c0_202] : memref<16x256xf32, #tpu.memory_space<vmem>>, vector<1x128xf32>
    tpu.vector_store %arg9[%984, %c0_202], %983 {strides = array<i32>} : memref<16x256xf32, #tpu.memory_space<vmem>>, vector<1x128xf32>,
    %cst_203 = arith.constant dense<0xFF800000> : vector<128xf32>
    %986 = vector.multi_reduction <maximumf>, %981, %cst_203 [0] : vector<8x128xf32> to vector<128xf32>
    %987 = vector.shape_cast %986 : vector<128xf32> to vector<1x128xf32>
    %988 = arith.index_cast %920 : i32 to index
    %c128_204 = arith.constant 128 : index
    %989 = vector.load %arg9[%988, %c128_204] : memref<16x256xf32, #tpu.memory_space<vmem>>, vector<1x128xf32>
    tpu.vector_store %arg9[%988, %c128_204], %987 {strides = array<i32>} : memref<16x256xf32, #tpu.memory_space<vmem>>, vector<1x128xf32>,
    %c14_i32 = arith.constant 14 : i32
    %c15_i32_205 = arith.constant 15 : i32
    %990 = arith.subi %c15_i32_205, %c14_i32 : i32
    %c8_i32_206 = arith.constant 8 : i32
    %991 = arith.muli %c14_i32, %c8_i32_206 : i32
    %992 = tpu.assume_multiple %991, 8 : i32
    %c8_i32_207 = arith.constant 8 : i32
    %993 = arith.muli %990, %c8_i32_207 : i32
    %994 = tpu.assume_multiple %993, 8 : i32
    %995 = arith.index_cast %992 : i32 to index
    %c0_208 = arith.constant 0 : index
    %996 = vector.load %arg8[%995, %c0_208] : memref<128x768xf32, #tpu.memory_space<vmem>>, vector<8x384xf32>
    %997 = arith.index_cast %994 : i32 to index
    %c384_209 = arith.constant 384 : index
    %998 = vector.load %arg8[%997, %c384_209] : memref<128x768xf32, #tpu.memory_space<vmem>>, vector<8x384xf32>
    %999 = tpu.concatenate %957, %981 in 1 : vector<8x128xf32>, vector<8x128xf32> -> vector<8x256xf32>
    %1000 = arith.truncf %999 : vector<8x256xf32> to vector<8x256xbf16>
    %cst_210 = arith.constant dense<0.000000e+00> : vector<8x768xf32>
    %1001 = tpu.matmul %1000, %7, %cst_210 {dimension_numbers = #tpu.dot_dimension_numbers<[1], [0], [0], [1], [0, 0, 1, 1], [], []>} : vector<8x256xbf16>, vector<256x768xbf16>, vector<8x768xf32> -> vector<8x768xf32>
    %1002 = vector.broadcast %8 : vector<1x768xf32> to vector<8x768xf32>
    %1003 = arith.addf %1001, %1002 : vector<8x768xf32>
    %1004 = vector.extract_strided_slice %996 {offsets = [0, 0], sizes = [8, 128], strides = [1, 1]} : vector<8x384xf32> to vector<8x128xf32>
    %1005 = vector.extract_strided_slice %1003 {offsets = [0, 0], sizes = [8, 128], strides = [1, 1]} : vector<8x768xf32> to vector<8x128xf32>
    %1006 = arith.addf %1004, %1005 : vector<8x128xf32>
    %1007 = arith.negf %1006 : vector<8x128xf32>
    %1008 = math.exp %1007 : vector<8x128xf32>
    %cst_211 = arith.constant 1.000000e+00 : f32
    %1009 = vector.broadcast %cst_211 : f32 to vector<8x128xf32>
    %1010 = arith.addf %1009, %1008 : vector<8x128xf32>
    %1011 = arith.divf %1009, %1010 : vector<8x128xf32>
    %1012 = vector.extract_strided_slice %996 {offsets = [0, 128], sizes = [8, 128], strides = [1, 1]} : vector<8x384xf32> to vector<8x128xf32>
    %1013 = vector.extract_strided_slice %1003 {offsets = [0, 128], sizes = [8, 128], strides = [1, 1]} : vector<8x768xf32> to vector<8x128xf32>
    %1014 = arith.addf %1012, %1013 : vector<8x128xf32>
    %1015 = arith.negf %1014 : vector<8x128xf32>
    %1016 = math.exp %1015 : vector<8x128xf32>
    %cst_212 = arith.constant 1.000000e+00 : f32
    %1017 = vector.broadcast %cst_212 : f32 to vector<8x128xf32>
    %1018 = arith.addf %1017, %1016 : vector<8x128xf32>
    %1019 = arith.divf %1017, %1018 : vector<8x128xf32>
    %1020 = vector.extract_strided_slice %996 {offsets = [0, 256], sizes = [8, 128], strides = [1, 1]} : vector<8x384xf32> to vector<8x128xf32>
    %1021 = vector.extract_strided_slice %1003 {offsets = [0, 256], sizes = [8, 128], strides = [1, 1]} : vector<8x768xf32> to vector<8x128xf32>
    %1022 = arith.mulf %1011, %1021 : vector<8x128xf32>
    %1023 = arith.addf %1020, %1022 : vector<8x128xf32>
    %1024 = math.tanh %1023 : vector<8x128xf32>
    %1025 = arith.subf %957, %1024 : vector<8x128xf32>
    %1026 = arith.mulf %1019, %1025 : vector<8x128xf32>
    %1027 = arith.addf %1024, %1026 : vector<8x128xf32>
    %1028 = vector.extract_strided_slice %998 {offsets = [0, 0], sizes = [8, 128], strides = [1, 1]} : vector<8x384xf32> to vector<8x128xf32>
    %1029 = vector.extract_strided_slice %1003 {offsets = [0, 384], sizes = [8, 128], strides = [1, 1]} : vector<8x768xf32> to vector<8x128xf32>
    %1030 = arith.addf %1028, %1029 : vector<8x128xf32>
    %1031 = arith.negf %1030 : vector<8x128xf32>
    %1032 = math.exp %1031 : vector<8x128xf32>
    %cst_213 = arith.constant 1.000000e+00 : f32
    %1033 = vector.broadcast %cst_213 : f32 to vector<8x128xf32>
    %1034 = arith.addf %1033, %1032 : vector<8x128xf32>
    %1035 = arith.divf %1033, %1034 : vector<8x128xf32>
    %1036 = vector.extract_strided_slice %998 {offsets = [0, 128], sizes = [8, 128], strides = [1, 1]} : vector<8x384xf32> to vector<8x128xf32>
    %1037 = vector.extract_strided_slice %1003 {offsets = [0, 512], sizes = [8, 128], strides = [1, 1]} : vector<8x768xf32> to vector<8x128xf32>
    %1038 = arith.addf %1036, %1037 : vector<8x128xf32>
    %1039 = arith.negf %1038 : vector<8x128xf32>
    %1040 = math.exp %1039 : vector<8x128xf32>
    %cst_214 = arith.constant 1.000000e+00 : f32
    %1041 = vector.broadcast %cst_214 : f32 to vector<8x128xf32>
    %1042 = arith.addf %1041, %1040 : vector<8x128xf32>
    %1043 = arith.divf %1041, %1042 : vector<8x128xf32>
    %1044 = vector.extract_strided_slice %998 {offsets = [0, 256], sizes = [8, 128], strides = [1, 1]} : vector<8x384xf32> to vector<8x128xf32>
    %1045 = vector.extract_strided_slice %1003 {offsets = [0, 640], sizes = [8, 128], strides = [1, 1]} : vector<8x768xf32> to vector<8x128xf32>
    %1046 = arith.mulf %1035, %1045 : vector<8x128xf32>
    %1047 = arith.addf %1044, %1046 : vector<8x128xf32>
    %1048 = math.tanh %1047 : vector<8x128xf32>
    %1049 = arith.subf %981, %1048 : vector<8x128xf32>
    %1050 = arith.mulf %1043, %1049 : vector<8x128xf32>
    %1051 = arith.addf %1048, %1050 : vector<8x128xf32>
    %cst_215 = arith.constant dense<0xFF800000> : vector<128xf32>
    %1052 = vector.multi_reduction <maximumf>, %1027, %cst_215 [0] : vector<8x128xf32> to vector<128xf32>
    %1053 = vector.shape_cast %1052 : vector<128xf32> to vector<1x128xf32>
    %1054 = arith.index_cast %c14_i32 : i32 to index
    %c0_216 = arith.constant 0 : index
    %1055 = vector.load %arg9[%1054, %c0_216] : memref<16x256xf32, #tpu.memory_space<vmem>>, vector<1x128xf32>
    tpu.vector_store %arg9[%1054, %c0_216], %1053 {strides = array<i32>} : memref<16x256xf32, #tpu.memory_space<vmem>>, vector<1x128xf32>,
    %cst_217 = arith.constant dense<0xFF800000> : vector<128xf32>
    %1056 = vector.multi_reduction <maximumf>, %1051, %cst_217 [0] : vector<8x128xf32> to vector<128xf32>
    %1057 = vector.shape_cast %1056 : vector<128xf32> to vector<1x128xf32>
    %1058 = arith.index_cast %990 : i32 to index
    %c128_218 = arith.constant 128 : index
    %1059 = vector.load %arg9[%1058, %c128_218] : memref<16x256xf32, #tpu.memory_space<vmem>>, vector<1x128xf32>
    tpu.vector_store %arg9[%1058, %c128_218], %1057 {strides = array<i32>} : memref<16x256xf32, #tpu.memory_space<vmem>>, vector<1x128xf32>,
    %c15_i32_219 = arith.constant 15 : i32
    %c15_i32_220 = arith.constant 15 : i32
    %1060 = arith.subi %c15_i32_220, %c15_i32_219 : i32
    %c8_i32_221 = arith.constant 8 : i32
    %1061 = arith.muli %c15_i32_219, %c8_i32_221 : i32
    %1062 = tpu.assume_multiple %1061, 8 : i32
    %c8_i32_222 = arith.constant 8 : i32
    %1063 = arith.muli %1060, %c8_i32_222 : i32
    %1064 = tpu.assume_multiple %1063, 8 : i32
    %1065 = arith.index_cast %1062 : i32 to index
    %c0_223 = arith.constant 0 : index
    %1066 = vector.load %arg8[%1065, %c0_223] : memref<128x768xf32, #tpu.memory_space<vmem>>, vector<8x384xf32>
    %1067 = arith.index_cast %1064 : i32 to index
    %c384_224 = arith.constant 384 : index
    %1068 = vector.load %arg8[%1067, %c384_224] : memref<128x768xf32, #tpu.memory_space<vmem>>, vector<8x384xf32>
    %1069 = tpu.concatenate %1027, %1051 in 1 : vector<8x128xf32>, vector<8x128xf32> -> vector<8x256xf32>
    %1070 = arith.truncf %1069 : vector<8x256xf32> to vector<8x256xbf16>
    %cst_225 = arith.constant dense<0.000000e+00> : vector<8x768xf32>
    %1071 = tpu.matmul %1070, %7, %cst_225 {dimension_numbers = #tpu.dot_dimension_numbers<[1], [0], [0], [1], [0, 0, 1, 1], [], []>} : vector<8x256xbf16>, vector<256x768xbf16>, vector<8x768xf32> -> vector<8x768xf32>
    %1072 = vector.broadcast %8 : vector<1x768xf32> to vector<8x768xf32>
    %1073 = arith.addf %1071, %1072 : vector<8x768xf32>
    %1074 = vector.extract_strided_slice %1066 {offsets = [0, 0], sizes = [8, 128], strides = [1, 1]} : vector<8x384xf32> to vector<8x128xf32>
    %1075 = vector.extract_strided_slice %1073 {offsets = [0, 0], sizes = [8, 128], strides = [1, 1]} : vector<8x768xf32> to vector<8x128xf32>
    %1076 = arith.addf %1074, %1075 : vector<8x128xf32>
    %1077 = arith.negf %1076 : vector<8x128xf32>
    %1078 = math.exp %1077 : vector<8x128xf32>
    %cst_226 = arith.constant 1.000000e+00 : f32
    %1079 = vector.broadcast %cst_226 : f32 to vector<8x128xf32>
    %1080 = arith.addf %1079, %1078 : vector<8x128xf32>
    %1081 = arith.divf %1079, %1080 : vector<8x128xf32>
    %1082 = vector.extract_strided_slice %1066 {offsets = [0, 128], sizes = [8, 128], strides = [1, 1]} : vector<8x384xf32> to vector<8x128xf32>
    %1083 = vector.extract_strided_slice %1073 {offsets = [0, 128], sizes = [8, 128], strides = [1, 1]} : vector<8x768xf32> to vector<8x128xf32>
    %1084 = arith.addf %1082, %1083 : vector<8x128xf32>
    %1085 = arith.negf %1084 : vector<8x128xf32>
    %1086 = math.exp %1085 : vector<8x128xf32>
    %cst_227 = arith.constant 1.000000e+00 : f32
    %1087 = vector.broadcast %cst_227 : f32 to vector<8x128xf32>
    %1088 = arith.addf %1087, %1086 : vector<8x128xf32>
    %1089 = arith.divf %1087, %1088 : vector<8x128xf32>
    %1090 = vector.extract_strided_slice %1066 {offsets = [0, 256], sizes = [8, 128], strides = [1, 1]} : vector<8x384xf32> to vector<8x128xf32>
    %1091 = vector.extract_strided_slice %1073 {offsets = [0, 256], sizes = [8, 128], strides = [1, 1]} : vector<8x768xf32> to vector<8x128xf32>
    %1092 = arith.mulf %1081, %1091 : vector<8x128xf32>
    %1093 = arith.addf %1090, %1092 : vector<8x128xf32>
    %1094 = math.tanh %1093 : vector<8x128xf32>
    %1095 = arith.subf %1027, %1094 : vector<8x128xf32>
    %1096 = arith.mulf %1089, %1095 : vector<8x128xf32>
    %1097 = arith.addf %1094, %1096 : vector<8x128xf32>
    %1098 = vector.extract_strided_slice %1068 {offsets = [0, 0], sizes = [8, 128], strides = [1, 1]} : vector<8x384xf32> to vector<8x128xf32>
    %1099 = vector.extract_strided_slice %1073 {offsets = [0, 384], sizes = [8, 128], strides = [1, 1]} : vector<8x768xf32> to vector<8x128xf32>
    %1100 = arith.addf %1098, %1099 : vector<8x128xf32>
    %1101 = arith.negf %1100 : vector<8x128xf32>
    %1102 = math.exp %1101 : vector<8x128xf32>
    %cst_228 = arith.constant 1.000000e+00 : f32
    %1103 = vector.broadcast %cst_228 : f32 to vector<8x128xf32>
    %1104 = arith.addf %1103, %1102 : vector<8x128xf32>
    %1105 = arith.divf %1103, %1104 : vector<8x128xf32>
    %1106 = vector.extract_strided_slice %1068 {offsets = [0, 128], sizes = [8, 128], strides = [1, 1]} : vector<8x384xf32> to vector<8x128xf32>
    %1107 = vector.extract_strided_slice %1073 {offsets = [0, 512], sizes = [8, 128], strides = [1, 1]} : vector<8x768xf32> to vector<8x128xf32>
    %1108 = arith.addf %1106, %1107 : vector<8x128xf32>
    %1109 = arith.negf %1108 : vector<8x128xf32>
    %1110 = math.exp %1109 : vector<8x128xf32>
    %cst_229 = arith.constant 1.000000e+00 : f32
    %1111 = vector.broadcast %cst_229 : f32 to vector<8x128xf32>
    %1112 = arith.addf %1111, %1110 : vector<8x128xf32>
    %1113 = arith.divf %1111, %1112 : vector<8x128xf32>
    %1114 = vector.extract_strided_slice %1068 {offsets = [0, 256], sizes = [8, 128], strides = [1, 1]} : vector<8x384xf32> to vector<8x128xf32>
    %1115 = vector.extract_strided_slice %1073 {offsets = [0, 640], sizes = [8, 128], strides = [1, 1]} : vector<8x768xf32> to vector<8x128xf32>
    %1116 = arith.mulf %1105, %1115 : vector<8x128xf32>
    %1117 = arith.addf %1114, %1116 : vector<8x128xf32>
    %1118 = math.tanh %1117 : vector<8x128xf32>
    %1119 = arith.subf %1051, %1118 : vector<8x128xf32>
    %1120 = arith.mulf %1113, %1119 : vector<8x128xf32>
    %1121 = arith.addf %1118, %1120 : vector<8x128xf32>
    %cst_230 = arith.constant dense<0xFF800000> : vector<128xf32>
    %1122 = vector.multi_reduction <maximumf>, %1097, %cst_230 [0] : vector<8x128xf32> to vector<128xf32>
    %1123 = vector.shape_cast %1122 : vector<128xf32> to vector<1x128xf32>
    %1124 = arith.index_cast %c15_i32_219 : i32 to index
    %c0_231 = arith.constant 0 : index
    %1125 = vector.load %arg9[%1124, %c0_231] : memref<16x256xf32, #tpu.memory_space<vmem>>, vector<1x128xf32>
    tpu.vector_store %arg9[%1124, %c0_231], %1123 {strides = array<i32>} : memref<16x256xf32, #tpu.memory_space<vmem>>, vector<1x128xf32>,
    %cst_232 = arith.constant dense<0xFF800000> : vector<128xf32>
    %1126 = vector.multi_reduction <maximumf>, %1121, %cst_232 [0] : vector<8x128xf32> to vector<128xf32>
    %1127 = vector.shape_cast %1126 : vector<128xf32> to vector<1x128xf32>
    %1128 = arith.index_cast %1060 : i32 to index
    %c128_233 = arith.constant 128 : index
    %1129 = vector.load %arg9[%1128, %c128_233] : memref<16x256xf32, #tpu.memory_space<vmem>>, vector<1x128xf32>
    tpu.vector_store %arg9[%1128, %c128_233], %1127 {strides = array<i32>} : memref<16x256xf32, #tpu.memory_space<vmem>>, vector<1x128xf32>,
    %c16_i32 = arith.constant 16 : i32
    %c0_234 = arith.constant 0 : index
    %c0_235 = arith.constant 0 : index
    %1130 = vector.load %arg9[%c0_234, %c0_235] : memref<16x256xf32, #tpu.memory_space<vmem>>, vector<16x256xf32>
    %c0_236 = arith.constant 0 : index
    %c0_237 = arith.constant 0 : index
    %1131 = vector.load %arg5[%c0_236, %c0_237] : memref<1x256xf32, #tpu.memory_space<vmem>>, vector<1x256xf32>
    %1132 = vector.broadcast %1131 : vector<1x256xf32> to vector<16x256xf32>
    %1133 = arith.mulf %1130, %1132 : vector<16x256xf32>
    %cst_238 = arith.constant dense<0.000000e+00> : vector<16xf32>
    %1134 = vector.multi_reduction <add>, %1133, %cst_238 [1] : vector<16x256xf32> to vector<16xf32>
    %1135 = vector.shape_cast %1134 : vector<16xf32> to vector<16x1xf32>
    %c0_239 = arith.constant 0 : index
    %c0_240 = arith.constant 0 : index
    %1136 = vector.load %arg6[%c0_239, %c0_240] : memref<1x1xf32, #tpu.memory_space<vmem>>, vector<1x1xf32>
    %1137 = vector.broadcast %1136 : vector<1x1xf32> to vector<16x1xf32>
    %1138 = arith.addf %1135, %1137 : vector<16x1xf32>
    %c0_241 = arith.constant 0 : index
    %c0_242 = arith.constant 0 : index
    %1139 = vector.load %arg7[%c0_241, %c0_242] : memref<16x1xf32, #tpu.memory_space<vmem>>, vector<16x1xf32>
    tpu.vector_store %arg7[%c0_241, %c0_242], %1138 {strides = array<i32>} : memref<16x1xf32, #tpu.memory_space<vmem>>, vector<16x1xf32>,
    return
  }
}

</mosaic_0001>

<llo_original>
// kernel: gmp_forward.1
$region0: #{gmp_forward.1}
  #allocation0 [shape = 'u32[]', space=smem, size = 0x4, offset = 0x4, fixed_abs, tag = 'smem constant byte address 0x4 - core index']
  #allocation1 [shape = 'u32[144,128]{1,0:T(1,128)}', space=vmem, size = 0x12000, scoped, tag = 'internal scratch']
  #allocation2 [shape = 'f32[128,768]{1,0:T(8,128)}', space=vmem, size = 0x60000, scoped, tag = 'scratch operand']
  #allocation3 [shape = 'f32[16,256]{1,0:T(8,128)}', space=vmem, size = 0x4000, scoped, tag = 'scratch operand']
  #allocation4 [shape = 'f32[1,1]{1,0:T(1,128)S(1)}', space=vmem, size = 0x200, scoped, tag = 'scoped memory for gmp_forward.1']
  %s0 = inlined_call_operand.vmem [shape: bf16[128,300], index: 0, kind: input, shape index: {}]
  %s1 = inlined_call_operand.vmem [shape: bf16[300,768], index: 1, kind: input, shape index: {}]
  %s2 = inlined_call_operand.vmem [shape: f32[1,768], index: 2, kind: input, shape index: {}]
  %s3 = inlined_call_operand.vmem [shape: bf16[256,768], index: 3, kind: input, shape index: {}]
  %s4 = inlined_call_operand.vmem [shape: f32[1,768], index: 4, kind: input, shape index: {}]
  %s5 = inlined_call_operand.vmem [shape: f32[1,256], index: 5, kind: input, shape index: {}]
  %s6 = inlined_call_operand.<no memory space> [shape: f32[1,1], index: 6, kind: input, shape index: {}]
  %s7 = inlined_call_operand.vmem [shape: f32[16,1], index: 7, kind: output, shape index: {}]
  %s8 = sld [smem:[#allocation0]]
  $region38: #{gmp_forward.1} parent=0
    _
  %s10 = ssub.s32 1, %s8
  %s11 = scalar_select 0, %s10, %s8
  %v12 = vstv %s6
  %13 = vst [vmem:[#allocation4] sm:$0x1] %v12
  // Predicated region
  $region2: #{gmp_forward.1} parent=0 // pred_check
    _
  $region3: #{gmp_forward.1} parent=0 // pred_check_branch
    %15 = sbr.rel (0) target = $region5
  $region4: #{gmp_forward.1} parent=0 // pred_region
    _
  $region5: #{gmp_forward.1} parent=0 // pred_fallthru
    _
  // Predicated region
  $region6: #{gmp_forward.1} parent=0 // pred_check
    _
  $region7: #{gmp_forward.1} parent=0 // pred_check_branch
    %17 = sbr.rel (0) target = $region9
  $region8: #{gmp_forward.1} parent=0 // pred_region
    _
  $region9: #{gmp_forward.1} parent=0 // pred_fallthru
    _
  // Predicated region
  $region10: #{gmp_forward.1} parent=0 // pred_check
    _
  $region11: #{gmp_forward.1} parent=0 // pred_check_branch
    %19 = sbr.rel (0) target = $region13
  $region12: #{gmp_forward.1} parent=0 // pred_region
    _
  $region13: #{gmp_forward.1} parent=0 // pred_fallthru
    _
  // Predicated region
  $region14: #{gmp_forward.1} parent=0 // pred_check
    _
  $region15: #{gmp_forward.1} parent=0 // pred_check_branch
    %21 = sbr.rel (0) target = $region17
  $region16: #{gmp_forward.1} parent=0 // pred_region
    _
  $region17: #{gmp_forward.1} parent=0 // pred_fallthru
    _
  // Predicated region
  $region18: #{gmp_forward.1} parent=0 // pred_check
    _
  $region19: #{gmp_forward.1} parent=0 // pred_check_branch
    %23 = sbr.rel (0) target = $region21
  $region20: #{gmp_forward.1} parent=0 // pred_region
    _
  $region21: #{gmp_forward.1} parent=0 // pred_fallthru
    _
  // Predicated region
  $region22: #{gmp_forward.1} parent=0 // pred_check
    _
  $region23: #{gmp_forward.1} parent=0 // pred_check_branch
    %25 = sbr.rel (0) target = $region25
  $region24: #{gmp_forward.1} parent=0 // pred_region
    _
  $region25: #{gmp_forward.1} parent=0 // pred_fallthru
    _
  // Predicated region
  $region26: #{gmp_forward.1} parent=0 // pred_check
    _
  $region27: #{gmp_forward.1} parent=0 // pred_check_branch
    %27 = sbr.rel (0) target = $region29
  $region28: #{gmp_forward.1} parent=0 // pred_region
    _
  $region29: #{gmp_forward.1} parent=0 // pred_fallthru
    _
  %v29 = vld [vmem:[%s0] sm:$0xff]
  %v30 = vld [vmem:[%s0 + $0x8] sm:$0xf]
  %v31 = vld [vmem:[%s0 + $0xc] sm:$0xff]
  %v32 = vld [vmem:[%s0 + $0x14] sm:$0xf]
  %v33 = vld [vmem:[%s0 + $0x18] sm:$0xff]
  %v34 = vld [vmem:[%s0 + $0x20] sm:$0xf]
  %v35 = vld [vmem:[%s0 + $0x24] sm:$0xff]
  %v36 = vld [vmem:[%s0 + $0x2c] sm:$0xf]
  %v37 = vld [vmem:[%s0 + $0x30] sm:$0xff]
  %v38 = vld [vmem:[%s0 + $0x38] sm:$0xf]
  %v39 = vld [vmem:[%s0 + $0x3c] sm:$0xff]
  %v40 = vld [vmem:[%s0 + $0x44] sm:$0xf]
  %v41 = vld [vmem:[%s0 + $0x48] sm:$0xff]
  %v42 = vld [vmem:[%s0 + $0x50] sm:$0xf]
  %v43 = vld [vmem:[%s0 + $0x54] sm:$0xff]
  %v44 = vld [vmem:[%s0 + $0x5c] sm:$0xf]
  %v45 = vld [vmem:[%s0 + $0x60] sm:$0xff]
  %v46 = vld [vmem:[%s0 + $0x68] sm:$0xf]
  %v47 = vld [vmem:[%s0 + $0x6c] sm:$0xff]
  %v48 = vld [vmem:[%s0 + $0x74] sm:$0xf]
  %v49 = vld [vmem:[%s0 + $0x78] sm:$0xff]
  %v50 = vld [vmem:[%s0 + $0x80] sm:$0xf]
  %v51 = vld [vmem:[%s0 + $0x84] sm:$0xff]
  %v52 = vld [vmem:[%s0 + $0x8c] sm:$0xf]
  %v53 = vld [vmem:[%s0 + $0x90] sm:$0xff]
  %v54 = vld [vmem:[%s0 + $0x98] sm:$0xf]
  %v55 = vld [vmem:[%s0 + $0x9c] sm:$0xff]
  %v56 = vld [vmem:[%s0 + $0xa4] sm:$0xf]
  %v57 = vld [vmem:[%s0 + $0xa8] sm:$0xff]
  %v58 = vld [vmem:[%s0 + $0xb0] sm:$0xf]
  %v59 = vld [vmem:[%s0 + $0xb4] sm:$0xff]
  %v60 = vld [vmem:[%s0 + $0xbc] sm:$0xf]
  %v61 = vld [vmem:[%s1] sm:$0xff]
  %v62 = vld [vmem:[%s1 + $0x8] sm:$0xff]
  %v63 = vld [vmem:[%s1 + $0x10] sm:$0xff]
  %v64 = vld [vmem:[%s1 + $0x18] sm:$0xff]
  %v65 = vld [vmem:[%s1 + $0x20] sm:$0xff]
  %v66 = vld [vmem:[%s1 + $0x28] sm:$0xff]
  %v67 = vld [vmem:[%s1 + $0x30] sm:$0xff]
  %v68 = vld [vmem:[%s1 + $0x38] sm:$0xff]
  %v69 = vld [vmem:[%s1 + $0x40] sm:$0xff]
  %v70 = vld [vmem:[%s1 + $0x48] sm:$0xff]
  %v71 = vld [vmem:[%s1 + $0x50] sm:$0xff]
  %v72 = vld [vmem:[%s1 + $0x58] sm:$0xff]
  %v73 = vld [vmem:[%s1 + $0x60] sm:$0xff]
  %v74 = vld [vmem:[%s1 + $0x68] sm:$0xff]
  %v75 = vld [vmem:[%s1 + $0x70] sm:$0xff]
  %v76 = vld [vmem:[%s1 + $0x78] sm:$0xff]
  %v77 = vld [vmem:[%s1 + $0x80] sm:$0xff]
  %v78 = vld [vmem:[%s1 + $0x88] sm:$0xff]
  %v79 = vld [vmem:[%s1 + $0x90] sm:$0xff]
  %v80 = vld [vmem:[%s1 + $0x98] sm:$0xff]
  %v81 = vld [vmem:[%s1 + $0xa0] sm:$0xff]
  %v82 = vld [vmem:[%s1 + $0xa8] sm:$0xff]
  %v83 = vld [vmem:[%s1 + $0xb0] sm:$0xff]
  %v84 = vld [vmem:[%s1 + $0xb8] sm:$0xff]
  %v85 = vld [vmem:[%s1 + $0xc0] sm:$0xff]
  %v86 = vld [vmem:[%s1 + $0xc8] sm:$0xff]
  %v87 = vld [vmem:[%s1 + $0xd0] sm:$0xff]
  %v88 = vld [vmem:[%s1 + $0xd8] sm:$0xff]
  %v89 = vld [vmem:[%s1 + $0xe0] sm:$0xff]
  %v90 = vld [vmem:[%s1 + $0xe8] sm:$0xff]
  %v91 = vld [vmem:[%s1 + $0xf0] sm:$0xff]
  %v92 = vld [vmem:[%s1 + $0xf8] sm:$0xff]
  %v93 = vld [vmem:[%s1 + $0x100] sm:$0xff]
  %v94 = vld [vmem:[%s1 + $0x108] sm:$0xff]
  %v95 = vld [vmem:[%s1 + $0x110] sm:$0xff]
  %v96 = vld [vmem:[%s1 + $0x118] sm:$0xff]
  %v97 = vld [vmem:[%s1 + $0x120] sm:$0xff]
  %v98 = vld [vmem:[%s1 + $0x128] sm:$0xff]
  %v99 = vld [vmem:[%s1 + $0x130] sm:$0xff]
  %v100 = vld [vmem:[%s1 + $0x138] sm:$0xff]
  %v101 = vld [vmem:[%s1 + $0x140] sm:$0xff]
  %v102 = vld [vmem:[%s1 + $0x148] sm:$0xff]
  %v103 = vld [vmem:[%s1 + $0x150] sm:$0xff]
  %v104 = vld [vmem:[%s1 + $0x158] sm:$0xff]
  %v105 = vld [vmem:[%s1 + $0x160] sm:$0xff]
  %v106 = vld [vmem:[%s1 + $0x168] sm:$0xff]
  %v107 = vld [vmem:[%s1 + $0x170] sm:$0xff]
  %v108 = vld [vmem:[%s1 + $0x178] sm:$0xff]
  %v109 = vld [vmem:[%s1 + $0x180] sm:$0xff]
  %v110 = vld [vmem:[%s1 + $0x188] sm:$0xff]
  %v111 = vld [vmem:[%s1 + $0x190] sm:$0xff]
  %v112 = vld [vmem:[%s1 + $0x198] sm:$0xff]
  %v113 = vld [vmem:[%s1 + $0x1a0] sm:$0xff]
  %v114 = vld [vmem:[%s1 + $0x1a8] sm:$0xff]
  %v115 = vld [vmem:[%s1 + $0x1b0] sm:$0xff]
  %v116 = vld [vmem:[%s1 + $0x1b8] sm:$0xff]
  %v117 = vld [vmem:[%s1 + $0x1c0] sm:$0xff]
  %v118 = vld [vmem:[%s1 + $0x1c8] sm:$0xff]
  %v119 = vld [vmem:[%s1 + $0x1d0] sm:$0xff]
  %v120 = vld [vmem:[%s1 + $0x1d8] sm:$0xff]
  %v121 = vld [vmem:[%s1 + $0x1e0] sm:$0xff]
  %v122 = vld [vmem:[%s1 + $0x1e8] sm:$0xff]
  %v123 = vld [vmem:[%s1 + $0x1f0] sm:$0xff]
  %v124 = vld [vmem:[%s1 + $0x1f8] sm:$0xff]
  %v125 = vld [vmem:[%s1 + $0x200] sm:$0xff]
  %v126 = vld [vmem:[%s1 + $0x208] sm:$0xff]
  %v127 = vld [vmem:[%s1 + $0x210] sm:$0xff]
  %v128 = vld [vmem:[%s1 + $0x218] sm:$0xff]
  %v129 = vld [vmem:[%s1 + $0x220] sm:$0xff]
  %v130 = vld [vmem:[%s1 + $0x228] sm:$0xff]
  %v131 = vld [vmem:[%s1 + $0x230] sm:$0xff]
  %v132 = vld [vmem:[%s1 + $0x238] sm:$0xff]
  %v133 = vld [vmem:[%s1 + $0x240] sm:$0xff]
  %v134 = vld [vmem:[%s1 + $0x248] sm:$0xff]
  %v135 = vld [vmem:[%s1 + $0x250] sm:$0xff]
  %v136 = vld [vmem:[%s1 + $0x258] sm:$0xff]
  %v137 = vld [vmem:[%s1 + $0x260] sm:$0xff]
  %v138 = vld [vmem:[%s1 + $0x268] sm:$0xff]
  %v139 = vld [vmem:[%s1 + $0x270] sm:$0xff]
  %v140 = vld [vmem:[%s1 + $0x278] sm:$0xff]
  %v141 = vld [vmem:[%s1 + $0x280] sm:$0xff]
  %v142 = vld [vmem:[%s1 + $0x288] sm:$0xff]
  %v143 = vld [vmem:[%s1 + $0x290] sm:$0xff]
  %v144 = vld [vmem:[%s1 + $0x298] sm:$0xff]
  %v145 = vld [vmem:[%s1 + $0x2a0] sm:$0xff]
  %v146 = vld [vmem:[%s1 + $0x2a8] sm:$0xff]
  %v147 = vld [vmem:[%s1 + $0x2b0] sm:$0xff]
  %v148 = vld [vmem:[%s1 + $0x2b8] sm:$0xff]
  %v149 = vld [vmem:[%s1 + $0x2c0] sm:$0xff]
  %v150 = vld [vmem:[%s1 + $0x2c8] sm:$0xff]
  %v151 = vld [vmem:[%s1 + $0x2d0] sm:$0xff]
  %v152 = vld [vmem:[%s1 + $0x2d8] sm:$0xff]
  %v153 = vld [vmem:[%s1 + $0x2e0] sm:$0xff]
  %v154 = vld [vmem:[%s1 + $0x2e8] sm:$0xff]
  %v155 = vld [vmem:[%s1 + $0x2f0] sm:$0xff]
  %v156 = vld [vmem:[%s1 + $0x2f8] sm:$0xff]
  %v157 = vld [vmem:[%s1 + $0x300] sm:$0xff]
  %v158 = vld [vmem:[%s1 + $0x308] sm:$0xff]
  %v159 = vld [vmem:[%s1 + $0x310] sm:$0xff]
  %v160 = vld [vmem:[%s1 + $0x318] sm:$0xff]
  %v161 = vld [vmem:[%s1 + $0x320] sm:$0xff]
  %v162 = vld [vmem:[%s1 + $0x328] sm:$0xff]
  %v163 = vld [vmem:[%s1 + $0x330] sm:$0xff]
  %v164 = vld [vmem:[%s1 + $0x338] sm:$0xff]
  %v165 = vld [vmem:[%s1 + $0x340] sm:$0xff]
  %v166 = vld [vmem:[%s1 + $0x348] sm:$0xff]
  %v167 = vld [vmem:[%s1 + $0x350] sm:$0xff]
  %v168 = vld [vmem:[%s1 + $0x358] sm:$0xff]
  %v169 = vld [vmem:[%s1 + $0x360] sm:$0xff]
  %v170 = vld [vmem:[%s1 + $0x368] sm:$0xff]
  %v171 = vld [vmem:[%s1 + $0x370] sm:$0xff]
  %v172 = vld [vmem:[%s1 + $0x378] sm:$0x33]
  %v173 = vld [vmem:[%s1 + $0x380] sm:$0x33]
  %v174 = vld [vmem:[%s1 + $0x388] sm:$0x33]
  %v175 = vld [vmem:[%s2] sm:$0x3f]
  %v177 = vlaneseq
  %v178 = vshrl.u32 %v177, 7
  %v179 = vsub.s32 0, %v178
  %v180 = vrot.slane %v175, %v179
  %v181 = vlaneseq
  %v182 = vshrl.u32 %v181, 7
  %v183 = vsub.s32 1, %v182
  %v184 = vrot.slane %v175, %v183
  %v185 = vlaneseq
  %v186 = vshrl.u32 %v185, 7
  %v187 = vsub.s32 2, %v186
  %v188 = vrot.slane %v175, %v187
  %v189 = vlaneseq
  %v190 = vshrl.u32 %v189, 7
  %v191 = vsub.s32 3, %v190
  %v192 = vrot.slane %v175, %v191
  %v193 = vlaneseq
  %v194 = vshrl.u32 %v193, 7
  %v195 = vsub.s32 4, %v194
  %v196 = vrot.slane %v175, %v195
  %v197 = vlaneseq
  %v198 = vshrl.u32 %v197, 7
  %v199 = vsub.s32 5, %v198
  %v200 = vrot.slane %v175, %v199
  %v239 = vunpack.c.l.b16 %v29
  %v240 = vunpack.c.h.b16 %v29
  %v241 = vunpack.c.l.b16 %v30
  %v242 = vunpack.c.l.b16 %v31
  %v243 = vunpack.c.h.b16 %v31
  %v244 = vunpack.c.l.b16 %v32
  %v245 = vunpack.c.l.b16 %v33
  %v246 = vunpack.c.h.b16 %v33
  %v247 = vunpack.c.l.b16 %v34
  %v248 = vunpack.c.l.b16 %v35
  %v249 = vunpack.c.h.b16 %v35
  %v250 = vunpack.c.l.b16 %v36
  %v251 = vunpack.c.l.b16 %v37
  %v252 = vunpack.c.h.b16 %v37
  %v253 = vunpack.c.l.b16 %v38
  %v254 = vunpack.c.l.b16 %v39
  %v255 = vunpack.c.h.b16 %v39
  %v256 = vunpack.c.l.b16 %v40
  %v257 = vunpack.c.l.b16 %v41
  %v258 = vunpack.c.h.b16 %v41
  %v259 = vunpack.c.l.b16 %v42
  %v260 = vunpack.c.l.b16 %v43
  %v261 = vunpack.c.h.b16 %v43
  %v262 = vunpack.c.l.b16 %v44
  %v263 = vunpack.c.l.b16 %v45
  %v264 = vunpack.c.h.b16 %v45
  %v265 = vunpack.c.l.b16 %v46
  %v266 = vunpack.c.l.b16 %v47
  %v267 = vunpack.c.h.b16 %v47
  %v268 = vunpack.c.l.b16 %v48
  %v269 = vunpack.c.l.b16 %v49
  %v270 = vunpack.c.h.b16 %v49
  %v271 = vunpack.c.l.b16 %v50
  %v272 = vunpack.c.l.b16 %v51
  %v273 = vunpack.c.h.b16 %v51
  %v274 = vunpack.c.l.b16 %v52
  %v275 = vunpack.c.l.b16 %v53
  %v276 = vunpack.c.h.b16 %v53
  %v277 = vunpack.c.l.b16 %v54
  %v278 = vunpack.c.l.b16 %v55
  %v279 = vunpack.c.h.b16 %v55
  %v280 = vunpack.c.l.b16 %v56
  %v281 = vunpack.c.l.b16 %v57
  %v282 = vunpack.c.h.b16 %v57
  %v283 = vunpack.c.l.b16 %v58
  %v284 = vunpack.c.l.b16 %v59
  %v285 = vunpack.c.h.b16 %v59
  %v286 = vunpack.c.l.b16 %v60
  %v287 = vpack.c.b16 %v242, %v239
  %v288 = vpack.c.b16 %v243, %v240
  %v289 = vpack.c.b16 %v244, %v241
  %v290 = vpack.c.b16 %v248, %v245
  %v291 = vpack.c.b16 %v249, %v246
  %v292 = vpack.c.b16 %v250, %v247
  %v293 = vpack.c.b16 %v254, %v251
  %v294 = vpack.c.b16 %v255, %v252
  %v295 = vpack.c.b16 %v256, %v253
  %v296 = vpack.c.b16 %v260, %v257
  %v297 = vpack.c.b16 %v261, %v258
  %v298 = vpack.c.b16 %v262, %v259
  %v299 = vpack.c.b16 %v266, %v263
  %v300 = vpack.c.b16 %v267, %v264
  %v301 = vpack.c.b16 %v268, %v265
  %v302 = vpack.c.b16 %v272, %v269
  %v303 = vpack.c.b16 %v273, %v270
  %v304 = vpack.c.b16 %v274, %v271
  %v305 = vpack.c.b16 %v278, %v275
  %v306 = vpack.c.b16 %v279, %v276
  %v307 = vpack.c.b16 %v280, %v277
  %v308 = vpack.c.b16 %v284, %v281
  %v309 = vpack.c.b16 %v285, %v282
  %v310 = vpack.c.b16 %v286, %v283
  %v441 = vunpack.c.l.b16 %v61
  %v442 = vunpack.c.h.b16 %v61
  %v443 = vunpack.c.l.b16 %v62
  %v444 = vunpack.c.h.b16 %v62
  %v445 = vunpack.c.l.b16 %v63
  %v446 = vunpack.c.h.b16 %v63
  %v447 = vunpack.c.l.b16 %v64
  %v448 = vunpack.c.h.b16 %v64
  %v449 = vunpack.c.l.b16 %v65
  %v450 = vunpack.c.h.b16 %v65
  %v451 = vunpack.c.l.b16 %v66
  %v452 = vunpack.c.h.b16 %v66
  %v453 = vunpack.c.l.b16 %v67
  %v454 = vunpack.c.h.b16 %v67
  %v455 = vunpack.c.l.b16 %v68
  %v456 = vunpack.c.h.b16 %v68
  %v457 = vunpack.c.l.b16 %v69
  %v458 = vunpack.c.h.b16 %v69
  %v459 = vunpack.c.l.b16 %v70
  %v460 = vunpack.c.h.b16 %v70
  %v461 = vunpack.c.l.b16 %v71
  %v462 = vunpack.c.h.b16 %v71
  %v463 = vunpack.c.l.b16 %v72
  %v464 = vunpack.c.h.b16 %v72
  %v465 = vunpack.c.l.b16 %v73
  %v466 = vunpack.c.h.b16 %v73
  %v467 = vunpack.c.l.b16 %v74
  %v468 = vunpack.c.h.b16 %v74
  %v469 = vunpack.c.l.b16 %v75
  %v470 = vunpack.c.h.b16 %v75
  %v471 = vunpack.c.l.b16 %v76
  %v472 = vunpack.c.h.b16 %v76
  %v473 = vunpack.c.l.b16 %v77
  %v474 = vunpack.c.h.b16 %v77
  %v475 = vunpack.c.l.b16 %v78
  %v476 = vunpack.c.h.b16 %v78
  %v477 = vunpack.c.l.b16 %v79
  %v478 = vunpack.c.h.b16 %v79
  %v479 = vunpack.c.l.b16 %v80
  %v480 = vunpack.c.h.b16 %v80
  %v481 = vunpack.c.l.b16 %v81
  %v482 = vunpack.c.h.b16 %v81
  %v483 = vunpack.c.l.b16 %v82
  %v484 = vunpack.c.h.b16 %v82
  %v485 = vunpack.c.l.b16 %v83
  %v486 = vunpack.c.h.b16 %v83
  %v487 = vunpack.c.l.b16 %v84
  %v488 = vunpack.c.h.b16 %v84
  %v489 = vunpack.c.l.b16 %v85
  %v490 = vunpack.c.h.b16 %v85
  %v491 = vunpack.c.l.b16 %v86
  %v492 = vunpack.c.h.b16 %v86
  %v493 = vunpack.c.l.b16 %v87
  %v494 = vunpack.c.h.b16 %v87
  %v495 = vunpack.c.l.b16 %v88
  %v496 = vunpack.c.h.b16 %v88
  %v497 = vunpack.c.l.b16 %v89
  %v498 = vunpack.c.h.b16 %v89
  %v499 = vunpack.c.l.b16 %v90
  %v500 = vunpack.c.h.b16 %v90
  %v501 = vunpack.c.l.b16 %v91
  %v502 = vunpack.c.h.b16 %v91
  %v503 = vunpack.c.l.b16 %v92
  %v504 = vunpack.c.h.b16 %v92
  %v505 = vunpack.c.l.b16 %v93
  %v506 = vunpack.c.h.b16 %v93
  %v507 = vunpack.c.l.b16 %v94
  %v508 = vunpack.c.h.b16 %v94
  %v509 = vunpack.c.l.b16 %v95
  %v510 = vunpack.c.h.b16 %v95
  %v511 = vunpack.c.l.b16 %v96
  %v512 = vunpack.c.h.b16 %v96
  %v513 = vunpack.c.l.b16 %v97
  %v514 = vunpack.c.h.b16 %v97
  %v515 = vunpack.c.l.b16 %v98
  %v516 = vunpack.c.h.b16 %v98
  %v517 = vunpack.c.l.b16 %v99
  %v518 = vunpack.c.h.b16 %v99
  %v519 = vunpack.c.l.b16 %v100
  %v520 = vunpack.c.h.b16 %v100
  %v521 = vunpack.c.l.b16 %v101
  %v522 = vunpack.c.h.b16 %v101
  %v523 = vunpack.c.l.b16 %v102
  %v524 = vunpack.c.h.b16 %v102
  %v525 = vunpack.c.l.b16 %v103
  %v526 = vunpack.c.h.b16 %v103
  %v527 = vunpack.c.l.b16 %v104
  %v528 = vunpack.c.h.b16 %v104
  %v529 = vunpack.c.l.b16 %v105
  %v530 = vunpack.c.h.b16 %v105
  %v531 = vunpack.c.l.b16 %v106
  %v532 = vunpack.c.h.b16 %v106
  %v533 = vunpack.c.l.b16 %v107
  %v534 = vunpack.c.h.b16 %v107
  %v535 = vunpack.c.l.b16 %v108
  %v536 = vunpack.c.h.b16 %v108
  %v537 = vunpack.c.l.b16 %v109
  %v538 = vunpack.c.h.b16 %v109
  %v539 = vunpack.c.l.b16 %v110
  %v540 = vunpack.c.h.b16 %v110
  %v541 = vunpack.c.l.b16 %v111
  %v542 = vunpack.c.h.b16 %v111
  %v543 = vunpack.c.l.b16 %v112
  %v544 = vunpack.c.h.b16 %v112
  %v545 = vunpack.c.l.b16 %v113
  %v546 = vunpack.c.h.b16 %v113
  %v547 = vunpack.c.l.b16 %v114
  %v548 = vunpack.c.h.b16 %v114
  %v549 = vunpack.c.l.b16 %v115
  %v550 = vunpack.c.h.b16 %v115
  %v551 = vunpack.c.l.b16 %v116
  %v552 = vunpack.c.h.b16 %v116
  %v553 = vunpack.c.l.b16 %v117
  %v554 = vunpack.c.h.b16 %v117
  %v555 = vunpack.c.l.b16 %v118
  %v556 = vunpack.c.h.b16 %v118
  %v557 = vunpack.c.l.b16 %v119
  %v558 = vunpack.c.h.b16 %v119
  %v559 = vunpack.c.l.b16 %v120
  %v560 = vunpack.c.h.b16 %v120
  %v561 = vunpack.c.l.b16 %v121
  %v562 = vunpack.c.h.b16 %v121
  %v563 = vunpack.c.l.b16 %v122
  %v564 = vunpack.c.h.b16 %v122
  %v565 = vunpack.c.l.b16 %v123
  %v566 = vunpack.c.h.b16 %v123
  %v567 = vunpack.c.l.b16 %v124
  %v568 = vunpack.c.h.b16 %v124
  %v569 = vunpack.c.l.b16 %v125
  %v570 = vunpack.c.h.b16 %v125
  %v571 = vunpack.c.l.b16 %v126
  %v572 = vunpack.c.h.b16 %v126
  %v573 = vunpack.c.l.b16 %v127
  %v574 = vunpack.c.h.b16 %v127
  %v575 = vunpack.c.l.b16 %v128
  %v576 = vunpack.c.h.b16 %v128
  %v577 = vunpack.c.l.b16 %v129
  %v578 = vunpack.c.h.b16 %v129
  %v579 = vunpack.c.l.b16 %v130
  %v580 = vunpack.c.h.b16 %v130
  %v581 = vunpack.c.l.b16 %v131
  %v582 = vunpack.c.h.b16 %v131
  %v583 = vunpack.c.l.b16 %v132
  %v584 = vunpack.c.h.b16 %v132
  %v585 = vunpack.c.l.b16 %v133
  %v586 = vunpack.c.h.b16 %v133
  %v587 = vunpack.c.l.b16 %v134
  %v588 = vunpack.c.h.b16 %v134
  %v589 = vunpack.c.l.b16 %v135
  %v590 = vunpack.c.h.b16 %v135
  %v591 = vunpack.c.l.b16 %v136
  %v592 = vunpack.c.h.b16 %v136
  %v593 = vunpack.c.l.b16 %v137
  %v594 = vunpack.c.h.b16 %v137
  %v595 = vunpack.c.l.b16 %v138
  %v596 = vunpack.c.h.b16 %v138
  %v597 = vunpack.c.l.b16 %v139
  %v598 = vunpack.c.h.b16 %v139
  %v599 = vunpack.c.l.b16 %v140
  %v600 = vunpack.c.h.b16 %v140
  %v601 = vunpack.c.l.b16 %v141
  %v602 = vunpack.c.h.b16 %v141
  %v603 = vunpack.c.l.b16 %v142
  %v604 = vunpack.c.h.b16 %v142
  %v605 = vunpack.c.l.b16 %v143
  %v606 = vunpack.c.h.b16 %v143
  %v607 = vunpack.c.l.b16 %v144
  %v608 = vunpack.c.h.b16 %v144
  %v609 = vunpack.c.l.b16 %v145
  %v610 = vunpack.c.h.b16 %v145
  %v611 = vunpack.c.l.b16 %v146
  %v612 = vunpack.c.h.b16 %v146
  %v613 = vunpack.c.l.b16 %v147
  %v614 = vunpack.c.h.b16 %v147
  %v615 = vunpack.c.l.b16 %v148
  %v616 = vunpack.c.h.b16 %v148
  %v617 = vunpack.c.l.b16 %v149
  %v618 = vunpack.c.h.b16 %v149
  %v619 = vunpack.c.l.b16 %v150
  %v620 = vunpack.c.h.b16 %v150
  %v621 = vunpack.c.l.b16 %v151
  %v622 = vunpack.c.h.b16 %v151
  %v623 = vunpack.c.l.b16 %v152
  %v624 = vunpack.c.h.b16 %v152
  %v625 = vunpack.c.l.b16 %v153
  %v626 = vunpack.c.h.b16 %v153
  %v627 = vunpack.c.l.b16 %v154
  %v628 = vunpack.c.h.b16 %v154
  %v629 = vunpack.c.l.b16 %v155
  %v630 = vunpack.c.h.b16 %v155
  %v631 = vunpack.c.l.b16 %v156
  %v632 = vunpack.c.h.b16 %v156
  %v633 = vunpack.c.l.b16 %v157
  %v634 = vunpack.c.h.b16 %v157
  %v635 = vunpack.c.l.b16 %v158
  %v636 = vunpack.c.h.b16 %v158
  %v637 = vunpack.c.l.b16 %v159
  %v638 = vunpack.c.h.b16 %v159
  %v639 = vunpack.c.l.b16 %v160
  %v640 = vunpack.c.h.b16 %v160
  %v641 = vunpack.c.l.b16 %v161
  %v642 = vunpack.c.h.b16 %v161
  %v643 = vunpack.c.l.b16 %v162
  %v644 = vunpack.c.h.b16 %v162
  %v645 = vunpack.c.l.b16 %v163
  %v646 = vunpack.c.h.b16 %v163
  %v647 = vunpack.c.l.b16 %v164
  %v648 = vunpack.c.h.b16 %v164
  %v649 = vunpack.c.l.b16 %v165
  %v650 = vunpack.c.h.b16 %v165
  %v651 = vunpack.c.l.b16 %v166
  %v652 = vunpack.c.h.b16 %v166
  %v653 = vunpack.c.l.b16 %v167
  %v654 = vunpack.c.h.b16 %v167
  %v655 = vunpack.c.l.b16 %v168
  %v656 = vunpack.c.h.b16 %v168
  %v657 = vunpack.c.l.b16 %v169
  %v658 = vunpack.c.h.b16 %v169
  %v659 = vunpack.c.l.b16 %v170
  %v660 = vunpack.c.h.b16 %v170
  %v661 = vunpack.c.l.b16 %v171
  %v662 = vunpack.c.h.b16 %v171
  %v663 = vunpack.c.l.b16 %v172
  %v664 = vunpack.c.h.b16 %v172
  %v665 = vunpack.c.l.b16 %v173
  %v666 = vunpack.c.h.b16 %v173
  %v667 = vunpack.c.l.b16 %v174
  %v668 = vunpack.c.h.b16 %v174
  %v669 = vpack.c.b16 %v447, %v441
  %v670 = vpack.c.b16 %v448, %v442
  %v671 = vpack.c.b16 %v449, %v443
  %v672 = vpack.c.b16 %v450, %v444
  %v673 = vpack.c.b16 %v451, %v445
  %v674 = vpack.c.b16 %v452, %v446
  %v675 = vpack.c.b16 %v459, %v453
  %v676 = vpack.c.b16 %v460, %v454
  %v677 = vpack.c.b16 %v461, %v455
  %v678 = vpack.c.b16 %v462, %v456
  %v679 = vpack.c.b16 %v463, %v457
  %v680 = vpack.c.b16 %v464, %v458
  %v681 = vpack.c.b16 %v471, %v465
  %v682 = vpack.c.b16 %v472, %v466
  %v683 = vpack.c.b16 %v473, %v467
  %v684 = vpack.c.b16 %v474, %v468
  %v685 = vpack.c.b16 %v475, %v469
  %v686 = vpack.c.b16 %v476, %v470
  %v687 = vpack.c.b16 %v483, %v477
  %v688 = vpack.c.b16 %v484, %v478
  %v689 = vpack.c.b16 %v485, %v479
  %v690 = vpack.c.b16 %v486, %v480
  %v691 = vpack.c.b16 %v487, %v481
  %v692 = vpack.c.b16 %v488, %v482
  %v693 = vpack.c.b16 %v495, %v489
  %v694 = vpack.c.b16 %v496, %v490
  %v695 = vpack.c.b16 %v497, %v491
  %v696 = vpack.c.b16 %v498, %v492
  %v697 = vpack.c.b16 %v499, %v493
  %v698 = vpack.c.b16 %v500, %v494
  %v699 = vpack.c.b16 %v507, %v501
  %v700 = vpack.c.b16 %v508, %v502
  %v701 = vpack.c.b16 %v509, %v503
  %v702 = vpack.c.b16 %v510, %v504
  %v703 = vpack.c.b16 %v511, %v505
  %v704 = vpack.c.b16 %v512, %v506
  %v705 = vpack.c.b16 %v519, %v513
  %v706 = vpack.c.b16 %v520, %v514
  %v707 = vpack.c.b16 %v521, %v515
  %v708 = vpack.c.b16 %v522, %v516
  %v709 = vpack.c.b16 %v523, %v517
  %v710 = vpack.c.b16 %v524, %v518
  %v711 = vpack.c.b16 %v531, %v525
  %v712 = vpack.c.b16 %v532, %v526
  %v713 = vpack.c.b16 %v533, %v527
  %v714 = vpack.c.b16 %v534, %v528
  %v715 = vpack.c.b16 %v535, %v529
  %v716 = vpack.c.b16 %v536, %v530
  %v717 = vpack.c.b16 %v543, %v537
  %v718 = vpack.c.b16 %v544, %v538
  %v719 = vpack.c.b16 %v545, %v539
  %v720 = vpack.c.b16 %v546, %v540
  %v721 = vpack.c.b16 %v547, %v541
  %v722 = vpack.c.b16 %v548, %v542
  %v723 = vpack.c.b16 %v555, %v549
  %v724 = vpack.c.b16 %v556, %v550
  %v725 = vpack.c.b16 %v557, %v551
  %v726 = vpack.c.b16 %v558, %v552
  %v727 = vpack.c.b16 %v559, %v553
  %v728 = vpack.c.b16 %v560, %v554
  %v729 = vpack.c.b16 %v567, %v561
  %v730 = vpack.c.b16 %v568, %v562
  %v731 = vpack.c.b16 %v569, %v563
  %v732 = vpack.c.b16 %v570, %v564
  %v733 = vpack.c.b16 %v571, %v565
  %v734 = vpack.c.b16 %v572, %v566
  %v735 = vpack.c.b16 %v579, %v573
  %v736 = vpack.c.b16 %v580, %v574
  %v737 = vpack.c.b16 %v581, %v575
  %v738 = vpack.c.b16 %v582, %v576
  %v739 = vpack.c.b16 %v583, %v577
  %v740 = vpack.c.b16 %v584, %v578
  %v741 = vpack.c.b16 %v591, %v585
  %v742 = vpack.c.b16 %v592, %v586
  %v743 = vpack.c.b16 %v593, %v587
  %v744 = vpack.c.b16 %v594, %v588
  %v745 = vpack.c.b16 %v595, %v589
  %v746 = vpack.c.b16 %v596, %v590
  %v747 = vpack.c.b16 %v603, %v597
  %v748 = vpack.c.b16 %v604, %v598
  %v749 = vpack.c.b16 %v605, %v599
  %v750 = vpack.c.b16 %v606, %v600
  %v751 = vpack.c.b16 %v607, %v601
  %v752 = vpack.c.b16 %v608, %v602
  %v753 = vpack.c.b16 %v615, %v609
  %v754 = vpack.c.b16 %v616, %v610
  %v755 = vpack.c.b16 %v617, %v611
  %v756 = vpack.c.b16 %v618, %v612
  %v757 = vpack.c.b16 %v619, %v613
  %v758 = vpack.c.b16 %v620, %v614
  %v759 = vpack.c.b16 %v627, %v621
  %v760 = vpack.c.b16 %v628, %v622
  %v761 = vpack.c.b16 %v629, %v623
  %v762 = vpack.c.b16 %v630, %v624
  %v763 = vpack.c.b16 %v631, %v625
  %v764 = vpack.c.b16 %v632, %v626
  %v765 = vpack.c.b16 %v639, %v633
  %v766 = vpack.c.b16 %v640, %v634
  %v767 = vpack.c.b16 %v641, %v635
  %v768 = vpack.c.b16 %v642, %v636
  %v769 = vpack.c.b16 %v643, %v637
  %v770 = vpack.c.b16 %v644, %v638
  %v771 = vpack.c.b16 %v651, %v645
  %v772 = vpack.c.b16 %v652, %v646
  %v773 = vpack.c.b16 %v653, %v647
  %v774 = vpack.c.b16 %v654, %v648
  %v775 = vpack.c.b16 %v655, %v649
  %v776 = vpack.c.b16 %v656, %v650
  %v777 = vpack.c.b16 %v663, %v657
  %v778 = vpack.c.b16 %v664, %v658
  %v779 = vpack.c.b16 %v665, %v659
  %v780 = vpack.c.b16 %v666, %v660
  %v781 = vpack.c.b16 %v667, %v661
  %v782 = vpack.c.b16 %v668, %v662
  %vm891 = vcmask 359424
  %v893 = vsel %vm891, %v289, 0
  %v896 = vsel %vm891, %v292, 0
  %v899 = vsel %vm891, %v295, 0
  %v902 = vsel %vm891, %v298, 0
  %v905 = vsel %vm891, %v301, 0
  %v908 = vsel %vm891, %v304, 0
  %v911 = vsel %vm891, %v307, 0
  %v914 = vsel %vm891, %v310, 0
  %vm916 = vcmask 1045504
  %v918 = vsel %vm916, %v777, 0
  %v921 = vsel %vm916, %v778, 0
  %v924 = vsel %vm916, %v779, 0
  %v927 = vsel %vm916, %v780, 0
  %v930 = vsel %vm916, %v781, 0
  %v933 = vsel %vm916, %v782, 0
  %935 = vmatprep.subr.bf16.mxu0 %v670
  %936 = vmatpush1.bf16.msra.mxu0 %v669
  %937 = vmatprep.subr.bf16.mxu0 %v676
  %938 = vmatpush1.bf16.msra.mxu0 %v675
  %939 = vmatprep.subr.bf16.mxu0 %v682
  %940 = vmatpush1.bf16.msra.mxu0 %v681
  %941 = vmatprep.subr.bf16.mxu0 %v688
  %942 = vmatpush1.bf16.msra.mxu0 %v687
  %943 = vmatprep.subr.bf16.mxu0 %v694
  %944 = vmatpush1.bf16.msra.mxu0 %v693
  %945 = vmatprep.subr.bf16.mxu0 %v700
  %946 = vmatpush1.bf16.msra.mxu0 %v699
  %947 = vmatprep.subr.bf16.mxu0 %v706
  %948 = vmatpush1.bf16.msra.mxu0 %v705
  %949 = vmatprep.subr.bf16.mxu0 %v712
  %950 = vmatpush1.bf16.msra.mxu0 %v711
  %951 = vmatprep.subr.bf16.mxu0 %v718
  %952 = vmatpush1.bf16.msra.mxu0 %v717
  %953 = vmatprep.subr.bf16.mxu0 %v724
  %954 = vmatpush1.bf16.msra.mxu0 %v723
  %955 = vmatprep.subr.bf16.mxu0 %v730
  %956 = vmatpush1.bf16.msra.mxu0 %v729
  %957 = vmatprep.subr.bf16.mxu0 %v736
  %958 = vmatpush1.bf16.msra.mxu0 %v735
  %959 = vmatprep.subr.bf16.mxu0 %v742
  %960 = vmatpush1.bf16.msra.mxu0 %v741
  %961 = vmatprep.subr.bf16.mxu0 %v748
  %962 = vmatpush1.bf16.msra.mxu0 %v747
  %963 = vmatprep.subr.bf16.mxu0 %v754
  %964 = vmatpush1.bf16.msra.mxu0 %v753
  %965 = vmatprep.subr.bf16.mxu0 %v760
  %966 = vmatpush1.bf16.msra.mxu0 %v759
  %967 = vmatprep.mubr.bf16.mxu0 %v288
  %968 = vmatmul.mubr.bf16.gmra.mrb[0].mxu0 %v287
  %v969 = vpop.f32.mrb[0].mxu0
  %v970 = vadd.f32 %v180, %v969
  %v971 = vpop.f32.mrb[0].mxu0
  %v972 = vadd.f32 %v184, %v971
  %v973 = vpop.f32.mrb[0].mxu0
  %v974 = vadd.f32 %v180, %v973
  %v975 = vpop.f32.mrb[0].mxu0
  %v976 = vadd.f32 %v184, %v975
  %977 = vmatprep.mubr.bf16.mxu0 %v291
  %978 = vmatmul.mubr.bf16.gmra.mrb[0].mxu0 %v290
  %v979 = vpop.f32.mrb[0].mxu0
  %v980 = vadd.f32 %v180, %v979
  %v981 = vpop.f32.mrb[0].mxu0
  %v982 = vadd.f32 %v184, %v981
  %v983 = vpop.f32.mrb[0].mxu0
  %v984 = vadd.f32 %v180, %v983
  %v985 = vpop.f32.mrb[0].mxu0
  %v986 = vadd.f32 %v184, %v985
  %987 = vmatprep.mubr.bf16.mxu0 %v294
  %988 = vmatmul.mubr.bf16.gmra.mrb[0].mxu0 %v293
  %v989 = vpop.f32.mrb[0].mxu0
  %v990 = vadd.f32 %v180, %v989
  %v991 = vpop.f32.mrb[0].mxu0
  %v992 = vadd.f32 %v184, %v991
  %v993 = vpop.f32.mrb[0].mxu0
  %v994 = vadd.f32 %v180, %v993
  %v995 = vpop.f32.mrb[0].mxu0
  %v996 = vadd.f32 %v184, %v995
  %997 = vmatprep.mubr.bf16.mxu0 %v297
  %998 = vmatmul.mubr.bf16.gmra.mrb[0].mxu0 %v296
  %v999 = vpop.f32.mrb[0].mxu0
  %v1000 = vadd.f32 %v180, %v999
  %v1001 = vpop.f32.mrb[0].mxu0
  %v1002 = vadd.f32 %v184, %v1001
  %v1003 = vpop.f32.mrb[0].mxu0
  %v1004 = vadd.f32 %v180, %v1003
  %v1005 = vpop.f32.mrb[0].mxu0
  %v1006 = vadd.f32 %v184, %v1005
  %1007 = vmatprep.mubr.bf16.mxu0 %v300
  %1008 = vmatmul.mubr.bf16.gmra.mrb[0].mxu0 %v299
  %v1009 = vpop.f32.mrb[0].mxu0
  %v1010 = vadd.f32 %v180, %v1009
  %v1011 = vpop.f32.mrb[0].mxu0
  %v1012 = vadd.f32 %v184, %v1011
  %v1013 = vpop.f32.mrb[0].mxu0
  %v1014 = vadd.f32 %v180, %v1013
  %v1015 = vpop.f32.mrb[0].mxu0
  %v1016 = vadd.f32 %v184, %v1015
  %1017 = vmatprep.mubr.bf16.mxu0 %v303
  %1018 = vmatmul.mubr.bf16.gmra.mrb[0].mxu0 %v302
  %v1019 = vpop.f32.mrb[0].mxu0
  %v1020 = vadd.f32 %v180, %v1019
  %v1021 = vpop.f32.mrb[0].mxu0
  %v1022 = vadd.f32 %v184, %v1021
  %v1023 = vpop.f32.mrb[0].mxu0
  %v1024 = vadd.f32 %v180, %v1023
  %v1025 = vpop.f32.mrb[0].mxu0
  %v1026 = vadd.f32 %v184, %v1025
  %1027 = vmatprep.mubr.bf16.mxu0 %v306
  %1028 = vmatmul.mubr.bf16.gmra.mrb[0].mxu0 %v305
  %v1029 = vpop.f32.mrb[0].mxu0
  %v1030 = vadd.f32 %v180, %v1029
  %v1031 = vpop.f32.mrb[0].mxu0
  %v1032 = vadd.f32 %v184, %v1031
  %v1033 = vpop.f32.mrb[0].mxu0
  %v1034 = vadd.f32 %v180, %v1033
  %v1035 = vpop.f32.mrb[0].mxu0
  %v1036 = vadd.f32 %v184, %v1035
  %1037 = vmatprep.mubr.bf16.mxu0 %v309
  %1038 = vmatmul.mubr.bf16.gmra.mrb[0].mxu0 %v308
  %v1039 = vpop.f32.mrb[0].mxu0
  %v1040 = vadd.f32 %v180, %v1039
  %v1041 = vpop.f32.mrb[0].mxu0
  %v1042 = vadd.f32 %v184, %v1041
  %v1043 = vpop.f32.mrb[0].mxu0
  %v1044 = vadd.f32 %v180, %v1043
  %v1045 = vpop.f32.mrb[0].mxu0
  %v1046 = vadd.f32 %v184, %v1045
  %1047 = vdwg.mxu0
  %1048 = vmatprep.subr.bf16.mxu0 %v766
  %1049 = vmatpush1.bf16.msra.mxu0 %v765
  %1050 = vmatprep.subr.bf16.mxu0 %v772
  %1051 = vmatpush1.bf16.msra.mxu0 %v771
  %1052 = vmatprep.subr.bf16.mxu0 %v921
  %1053 = vmatpush1.bf16.msra.mxu0 %v918
  %1054 = vmatprep.subr.bf16.mxu0 0
  %1055 = vmatpush1.bf16.msra.mxu0 0
  %1056 = vmatprep.subr.bf16.mxu0 0
  %1057 = vmatpush1.bf16.msra.mxu0 0
  %1058 = vmatprep.subr.bf16.mxu0 0
  %1059 = vmatpush1.bf16.msra.mxu0 0
  %1060 = vmatprep.subr.bf16.mxu0 0
  %1061 = vmatpush1.bf16.msra.mxu0 0
  %1062 = vmatprep.subr.bf16.mxu0 0
  %1063 = vmatpush1.bf16.msra.mxu0 0
  %1064 = vmatprep.subr.bf16.mxu0 0
  %1065 = vmatpush1.bf16.msra.mxu0 0
  %1066 = vmatprep.subr.bf16.mxu0 0
  %1067 = vmatpush1.bf16.msra.mxu0 0
  %1068 = vmatprep.subr.bf16.mxu0 0
  %1069 = vmatpush1.bf16.msra.mxu0 0
  %1070 = vmatprep.subr.bf16.mxu0 0
  %1071 = vmatpush1.bf16.msra.mxu0 0
  %1072 = vmatprep.subr.bf16.mxu0 0
  %1073 = vmatpush1.bf16.msra.mxu0 0
  %1074 = vmatprep.subr.bf16.mxu0 0
  %1075 = vmatpush1.bf16.msra.mxu0 0
  %1076 = vmatprep.subr.bf16.mxu0 0
  %1077 = vmatpush1.bf16.msra.mxu0 0
  %1078 = vmatprep.subr.bf16.mxu0 0
  %1079 = vmatpush1.bf16.msra.mxu0 0
  %1080 = vmatprep.mubr.bf16.mxu0 0
  %1081 = vmatmul.mubr.bf16.gmra.mrb[0].mxu0 %v893
  %v1082 = vpop.f32.mrb[0].mxu0
  %v1083 = vadd.f32 %v970, %v1082
  %v1084 = vpop.f32.mrb[0].mxu0
  %v1085 = vadd.f32 %v972, %v1084
  %v1086 = vpop.f32.mrb[0].mxu0
  %v1087 = vadd.f32 %v974, %v1086
  %v1088 = vpop.f32.mrb[0].mxu0
  %v1089 = vadd.f32 %v976, %v1088
  %1090 = vmatprep.mubr.bf16.mxu0 0
  %1091 = vmatmul.mubr.bf16.gmra.mrb[0].mxu0 %v896
  %v1092 = vpop.f32.mrb[0].mxu0
  %v1093 = vadd.f32 %v980, %v1092
  %v1094 = vpop.f32.mrb[0].mxu0
  %v1095 = vadd.f32 %v982, %v1094
  %v1096 = vpop.f32.mrb[0].mxu0
  %v1097 = vadd.f32 %v984, %v1096
  %v1098 = vpop.f32.mrb[0].mxu0
  %v1099 = vadd.f32 %v986, %v1098
  %1100 = vmatprep.mubr.bf16.mxu0 0
  %1101 = vmatmul.mubr.bf16.gmra.mrb[0].mxu0 %v899
  %v1102 = vpop.f32.mrb[0].mxu0
  %v1103 = vadd.f32 %v990, %v1102
  %v1104 = vpop.f32.mrb[0].mxu0
  %v1105 = vadd.f32 %v992, %v1104
  %v1106 = vpop.f32.mrb[0].mxu0
  %v1107 = vadd.f32 %v994, %v1106
  %v1108 = vpop.f32.mrb[0].mxu0
  %v1109 = vadd.f32 %v996, %v1108
  %1110 = vmatprep.mubr.bf16.mxu0 0
  %1111 = vmatmul.mubr.bf16.gmra.mrb[0].mxu0 %v902
  %v1112 = vpop.f32.mrb[0].mxu0
  %v1113 = vadd.f32 %v1000, %v1112
  %v1114 = vpop.f32.mrb[0].mxu0
  %v1115 = vadd.f32 %v1002, %v1114
  %v1116 = vpop.f32.mrb[0].mxu0
  %v1117 = vadd.f32 %v1004, %v1116
  %v1118 = vpop.f32.mrb[0].mxu0
  %v1119 = vadd.f32 %v1006, %v1118
  %1120 = vmatprep.mubr.bf16.mxu0 0
  %1121 = vmatmul.mubr.bf16.gmra.mrb[0].mxu0 %v905
  %v1122 = vpop.f32.mrb[0].mxu0
  %v1123 = vadd.f32 %v1010, %v1122
  %v1124 = vpop.f32.mrb[0].mxu0
  %v1125 = vadd.f32 %v1012, %v1124
  %v1126 = vpop.f32.mrb[0].mxu0
  %v1127 = vadd.f32 %v1014, %v1126
  %v1128 = vpop.f32.mrb[0].mxu0
  %v1129 = vadd.f32 %v1016, %v1128
  %1130 = vmatprep.mubr.bf16.mxu0 0
  %1131 = vmatmul.mubr.bf16.gmra.mrb[0].mxu0 %v908
  %v1132 = vpop.f32.mrb[0].mxu0
  %v1133 = vadd.f32 %v1020, %v1132
  %v1134 = vpop.f32.mrb[0].mxu0
  %v1135 = vadd.f32 %v1022, %v1134
  %v1136 = vpop.f32.mrb[0].mxu0
  %v1137 = vadd.f32 %v1024, %v1136
  %v1138 = vpop.f32.mrb[0].mxu0
  %v1139 = vadd.f32 %v1026, %v1138
  %1140 = vmatprep.mubr.bf16.mxu0 0
  %1141 = vmatmul.mubr.bf16.gmra.mrb[0].mxu0 %v911
  %v1142 = vpop.f32.mrb[0].mxu0
  %v1143 = vadd.f32 %v1030, %v1142
  %v1144 = vpop.f32.mrb[0].mxu0
  %v1145 = vadd.f32 %v1032, %v1144
  %v1146 = vpop.f32.mrb[0].mxu0
  %v1147 = vadd.f32 %v1034, %v1146
  %v1148 = vpop.f32.mrb[0].mxu0
  %v1149 = vadd.f32 %v1036, %v1148
  %1150 = vmatprep.mubr.bf16.mxu0 0
  %1151 = vmatmul.mubr.bf16.gmra.mrb[0].mxu0 %v914
  %v1152 = vpop.f32.mrb[0].mxu0
  %v1153 = vadd.f32 %v1040, %v1152
  %v1154 = vpop.f32.mrb[0].mxu0
  %v1155 = vadd.f32 %v1042, %v1154
  %v1156 = vpop.f32.mrb[0].mxu0
  %v1157 = vadd.f32 %v1044, %v1156
  %v1158 = vpop.f32.mrb[0].mxu0
  %v1159 = vadd.f32 %v1046, %v1158
  %1160 = vdwg.mxu0
  %1161 = vmatprep.subr.bf16.mxu0 %v672
  %1162 = vmatpush1.bf16.msra.mxu0 %v671
  %1163 = vmatprep.subr.bf16.mxu0 %v678
  %1164 = vmatpush1.bf16.msra.mxu0 %v677
  %1165 = vmatprep.subr.bf16.mxu0 %v684
  %1166 = vmatpush1.bf16.msra.mxu0 %v683
  %1167 = vmatprep.subr.bf16.mxu0 %v690
  %1168 = vmatpush1.bf16.msra.mxu0 %v689
  %1169 = vmatprep.subr.bf16.mxu0 %v696
  %1170 = vmatpush1.bf16.msra.mxu0 %v695
  %1171 = vmatprep.subr.bf16.mxu0 %v702
  %1172 = vmatpush1.bf16.msra.mxu0 %v701
  %1173 = vmatprep.subr.bf16.mxu0 %v708
  %1174 = vmatpush1.bf16.msra.mxu0 %v707
  %1175 = vmatprep.subr.bf16.mxu0 %v714
  %1176 = vmatpush1.bf16.msra.mxu0 %v713
  %1177 = vmatprep.subr.bf16.mxu0 %v720
  %1178 = vmatpush1.bf16.msra.mxu0 %v719
  %1179 = vmatprep.subr.bf16.mxu0 %v726
  %1180 = vmatpush1.bf16.msra.mxu0 %v725
  %1181 = vmatprep.subr.bf16.mxu0 %v732
  %1182 = vmatpush1.bf16.msra.mxu0 %v731
  %1183 = vmatprep.subr.bf16.mxu0 %v738
  %1184 = vmatpush1.bf16.msra.mxu0 %v737
  %1185 = vmatprep.subr.bf16.mxu0 %v744
  %1186 = vmatpush1.bf16.msra.mxu0 %v743
  %1187 = vmatprep.subr.bf16.mxu0 %v750
  %1188 = vmatpush1.bf16.msra.mxu0 %v749
  %1189 = vmatprep.subr.bf16.mxu0 %v756
  %1190 = vmatpush1.bf16.msra.mxu0 %v755
  %1191 = vmatprep.subr.bf16.mxu0 %v762
  %1192 = vmatpush1.bf16.msra.mxu0 %v761
  %1193 = vmatprep.mubr.bf16.mxu0 %v288
  %1194 = vmatmul.mubr.bf16.gmra.mrb[0].mxu0 %v287
  %v1195 = vpop.f32.mrb[0].mxu0
  %v1196 = vadd.f32 %v188, %v1195
  %v1197 = vpop.f32.mrb[0].mxu0
  %v1198 = vadd.f32 %v192, %v1197
  %v1199 = vpop.f32.mrb[0].mxu0
  %v1200 = vadd.f32 %v188, %v1199
  %v1201 = vpop.f32.mrb[0].mxu0
  %v1202 = vadd.f32 %v192, %v1201
  %1203 = vmatprep.mubr.bf16.mxu0 %v291
  %1204 = vmatmul.mubr.bf16.gmra.mrb[0].mxu0 %v290
  %v1205 = vpop.f32.mrb[0].mxu0
  %v1206 = vadd.f32 %v188, %v1205
  %v1207 = vpop.f32.mrb[0].mxu0
  %v1208 = vadd.f32 %v192, %v1207
  %v1209 = vpop.f32.mrb[0].mxu0
  %v1210 = vadd.f32 %v188, %v1209
  %v1211 = vpop.f32.mrb[0].mxu0
  %v1212 = vadd.f32 %v192, %v1211
  %1213 = vmatprep.mubr.bf16.mxu0 %v294
  %1214 = vmatmul.mubr.bf16.gmra.mrb[0].mxu0 %v293
  %v1215 = vpop.f32.mrb[0].mxu0
  %v1216 = vadd.f32 %v188, %v1215
  %v1217 = vpop.f32.mrb[0].mxu0
  %v1218 = vadd.f32 %v192, %v1217
  %v1219 = vpop.f32.mrb[0].mxu0
  %v1220 = vadd.f32 %v188, %v1219
  %v1221 = vpop.f32.mrb[0].mxu0
  %v1222 = vadd.f32 %v192, %v1221
  %1223 = vmatprep.mubr.bf16.mxu0 %v297
  %1224 = vmatmul.mubr.bf16.gmra.mrb[0].mxu0 %v296
  %v1225 = vpop.f32.mrb[0].mxu0
  %v1226 = vadd.f32 %v188, %v1225
  %v1227 = vpop.f32.mrb[0].mxu0
  %v1228 = vadd.f32 %v192, %v1227
  %v1229 = vpop.f32.mrb[0].mxu0
  %v1230 = vadd.f32 %v188, %v1229
  %v1231 = vpop.f32.mrb[0].mxu0
  %v1232 = vadd.f32 %v192, %v1231
  %1233 = vmatprep.mubr.bf16.mxu0 %v300
  %1234 = vmatmul.mubr.bf16.gmra.mrb[0].mxu0 %v299
  %v1235 = vpop.f32.mrb[0].mxu0
  %v1236 = vadd.f32 %v188, %v1235
  %v1237 = vpop.f32.mrb[0].mxu0
  %v1238 = vadd.f32 %v192, %v1237
  %v1239 = vpop.f32.mrb[0].mxu0
  %v1240 = vadd.f32 %v188, %v1239
  %v1241 = vpop.f32.mrb[0].mxu0
  %v1242 = vadd.f32 %v192, %v1241
  %1243 = vmatprep.mubr.bf16.mxu0 %v303
  %1244 = vmatmul.mubr.bf16.gmra.mrb[0].mxu0 %v302
  %v1245 = vpop.f32.mrb[0].mxu0
  %v1246 = vadd.f32 %v188, %v1245
  %v1247 = vpop.f32.mrb[0].mxu0
  %v1248 = vadd.f32 %v192, %v1247
  %v1249 = vpop.f32.mrb[0].mxu0
  %v1250 = vadd.f32 %v188, %v1249
  %v1251 = vpop.f32.mrb[0].mxu0
  %v1252 = vadd.f32 %v192, %v1251
  %1253 = vmatprep.mubr.bf16.mxu0 %v306
  %1254 = vmatmul.mubr.bf16.gmra.mrb[0].mxu0 %v305
  %v1255 = vpop.f32.mrb[0].mxu0
  %v1256 = vadd.f32 %v188, %v1255
  %v1257 = vpop.f32.mrb[0].mxu0
  %v1258 = vadd.f32 %v192, %v1257
  %v1259 = vpop.f32.mrb[0].mxu0
  %v1260 = vadd.f32 %v188, %v1259
  %v1261 = vpop.f32.mrb[0].mxu0
  %v1262 = vadd.f32 %v192, %v1261
  %1263 = vmatprep.mubr.bf16.mxu0 %v309
  %1264 = vmatmul.mubr.bf16.gmra.mrb[0].mxu0 %v308
  %v1265 = vpop.f32.mrb[0].mxu0
  %v1266 = vadd.f32 %v188, %v1265
  %v1267 = vpop.f32.mrb[0].mxu0
  %v1268 = vadd.f32 %v192, %v1267
  %v1269 = vpop.f32.mrb[0].mxu0
  %v1270 = vadd.f32 %v188, %v1269
  %v1271 = vpop.f32.mrb[0].mxu0
  %v1272 = vadd.f32 %v192, %v1271
  %1273 = vdwg.mxu0
  %1274 = vmatprep.subr.bf16.mxu0 %v768
  %1275 = vmatpush1.bf16.msra.mxu0 %v767
  %1276 = vmatprep.subr.bf16.mxu0 %v774
  %1277 = vmatpush1.bf16.msra.mxu0 %v773
  %1278 = vmatprep.subr.bf16.mxu0 %v927
  %1279 = vmatpush1.bf16.msra.mxu0 %v924
  %1280 = vmatprep.subr.bf16.mxu0 0
  %1281 = vmatpush1.bf16.msra.mxu0 0
  %1282 = vmatprep.subr.bf16.mxu0 0
  %1283 = vmatpush1.bf16.msra.mxu0 0
  %1284 = vmatprep.subr.bf16.mxu0 0
  %1285 = vmatpush1.bf16.msra.mxu0 0
  %1286 = vmatprep.subr.bf16.mxu0 0
  %1287 = vmatpush1.bf16.msra.mxu0 0
  %1288 = vmatprep.subr.bf16.mxu0 0
  %1289 = vmatpush1.bf16.msra.mxu0 0
  %1290 = vmatprep.subr.bf16.mxu0 0
  %1291 = vmatpush1.bf16.msra.mxu0 0
  %1292 = vmatprep.subr.bf16.mxu0 0
  %1293 = vmatpush1.bf16.msra.mxu0 0
  %1294 = vmatprep.subr.bf16.mxu0 0
  %1295 = vmatpush1.bf16.msra.mxu0 0
  %1296 = vmatprep.subr.bf16.mxu0 0
  %1297 = vmatpush1.bf16.msra.mxu0 0
  %1298 = vmatprep.subr.bf16.mxu0 0
  %1299 = vmatpush1.bf16.msra.mxu0 0
  %1300 = vmatprep.subr.bf16.mxu0 0
  %1301 = vmatpush1.bf16.msra.mxu0 0
  %1302 = vmatprep.subr.bf16.mxu0 0
  %1303 = vmatpush1.bf16.msra.mxu0 0
  %1304 = vmatprep.subr.bf16.mxu0 0
  %1305 = vmatpush1.bf16.msra.mxu0 0
  %1306 = vmatprep.mubr.bf16.mxu0 0
  %1307 = vmatmul.mubr.bf16.gmra.mrb[0].mxu0 %v893
  %v1308 = vpop.f32.mrb[0].mxu0
  %v1309 = vadd.f32 %v1196, %v1308
  %v1310 = vpop.f32.mrb[0].mxu0
  %v1311 = vadd.f32 %v1198, %v1310
  %v1312 = vpop.f32.mrb[0].mxu0
  %v1313 = vadd.f32 %v1200, %v1312
  %v1314 = vpop.f32.mrb[0].mxu0
  %v1315 = vadd.f32 %v1202, %v1314
  %1316 = vmatprep.mubr.bf16.mxu0 0
  %1317 = vmatmul.mubr.bf16.gmra.mrb[0].mxu0 %v896
  %v1318 = vpop.f32.mrb[0].mxu0
  %v1319 = vadd.f32 %v1206, %v1318
  %v1320 = vpop.f32.mrb[0].mxu0
  %v1321 = vadd.f32 %v1208, %v1320
  %v1322 = vpop.f32.mrb[0].mxu0
  %v1323 = vadd.f32 %v1210, %v1322
  %v1324 = vpop.f32.mrb[0].mxu0
  %v1325 = vadd.f32 %v1212, %v1324
  %1326 = vmatprep.mubr.bf16.mxu0 0
  %1327 = vmatmul.mubr.bf16.gmra.mrb[0].mxu0 %v899
  %v1328 = vpop.f32.mrb[0].mxu0
  %v1329 = vadd.f32 %v1216, %v1328
  %v1330 = vpop.f32.mrb[0].mxu0
  %v1331 = vadd.f32 %v1218, %v1330
  %v1332 = vpop.f32.mrb[0].mxu0
  %v1333 = vadd.f32 %v1220, %v1332
  %v1334 = vpop.f32.mrb[0].mxu0
  %v1335 = vadd.f32 %v1222, %v1334
  %1336 = vmatprep.mubr.bf16.mxu0 0
  %1337 = vmatmul.mubr.bf16.gmra.mrb[0].mxu0 %v902
  %v1338 = vpop.f32.mrb[0].mxu0
  %v1339 = vadd.f32 %v1226, %v1338
  %v1340 = vpop.f32.mrb[0].mxu0
  %v1341 = vadd.f32 %v1228, %v1340
  %v1342 = vpop.f32.mrb[0].mxu0
  %v1343 = vadd.f32 %v1230, %v1342
  %v1344 = vpop.f32.mrb[0].mxu0
  %v1345 = vadd.f32 %v1232, %v1344
  %1346 = vmatprep.mubr.bf16.mxu0 0
  %1347 = vmatmul.mubr.bf16.gmra.mrb[0].mxu0 %v905
  %v1348 = vpop.f32.mrb[0].mxu0
  %v1349 = vadd.f32 %v1236, %v1348
  %v1350 = vpop.f32.mrb[0].mxu0
  %v1351 = vadd.f32 %v1238, %v1350
  %v1352 = vpop.f32.mrb[0].mxu0
  %v1353 = vadd.f32 %v1240, %v1352
  %v1354 = vpop.f32.mrb[0].mxu0
  %v1355 = vadd.f32 %v1242, %v1354
  %1356 = vmatprep.mubr.bf16.mxu0 0
  %1357 = vmatmul.mubr.bf16.gmra.mrb[0].mxu0 %v908
  %v1358 = vpop.f32.mrb[0].mxu0
  %v1359 = vadd.f32 %v1246, %v1358
  %v1360 = vpop.f32.mrb[0].mxu0
  %v1361 = vadd.f32 %v1248, %v1360
  %v1362 = vpop.f32.mrb[0].mxu0
  %v1363 = vadd.f32 %v1250, %v1362
  %v1364 = vpop.f32.mrb[0].mxu0
  %v1365 = vadd.f32 %v1252, %v1364
  %1366 = vmatprep.mubr.bf16.mxu0 0
  %1367 = vmatmul.mubr.bf16.gmra.mrb[0].mxu0 %v911
  %v1368 = vpop.f32.mrb[0].mxu0
  %v1369 = vadd.f32 %v1256, %v1368
  %v1370 = vpop.f32.mrb[0].mxu0
  %v1371 = vadd.f32 %v1258, %v1370
  %v1372 = vpop.f32.mrb[0].mxu0
  %v1373 = vadd.f32 %v1260, %v1372
  %v1374 = vpop.f32.mrb[0].mxu0
  %v1375 = vadd.f32 %v1262, %v1374
  %1376 = vmatprep.mubr.bf16.mxu0 0
  %1377 = vmatmul.mubr.bf16.gmra.mrb[0].mxu0 %v914
  %v1378 = vpop.f32.mrb[0].mxu0
  %v1379 = vadd.f32 %v1266, %v1378
  %v1380 = vpop.f32.mrb[0].mxu0
  %v1381 = vadd.f32 %v1268, %v1380
  %v1382 = vpop.f32.mrb[0].mxu0
  %v1383 = vadd.f32 %v1270, %v1382
  %v1384 = vpop.f32.mrb[0].mxu0
  %v1385 = vadd.f32 %v1272, %v1384
  %1386 = vdwg.mxu0
  %1387 = vmatprep.subr.bf16.mxu0 %v674
  %1388 = vmatpush1.bf16.msra.mxu0 %v673
  %1389 = vmatprep.subr.bf16.mxu0 %v680
  %1390 = vmatpush1.bf16.msra.mxu0 %v679
  %1391 = vmatprep.subr.bf16.mxu0 %v686
  %1392 = vmatpush1.bf16.msra.mxu0 %v685
  %1393 = vmatprep.subr.bf16.mxu0 %v692
  %1394 = vmatpush1.bf16.msra.mxu0 %v691
  %1395 = vmatprep.subr.bf16.mxu0 %v698
  %1396 = vmatpush1.bf16.msra.mxu0 %v697
  %1397 = vmatprep.subr.bf16.mxu0 %v704
  %1398 = vmatpush1.bf16.msra.mxu0 %v703
  %1399 = vmatprep.subr.bf16.mxu0 %v710
  %1400 = vmatpush1.bf16.msra.mxu0 %v709
  %1401 = vmatprep.subr.bf16.mxu0 %v716
  %1402 = vmatpush1.bf16.msra.mxu0 %v715
  %1403 = vmatprep.subr.bf16.mxu0 %v722
  %1404 = vmatpush1.bf16.msra.mxu0 %v721
  %1405 = vmatprep.subr.bf16.mxu0 %v728
  %1406 = vmatpush1.bf16.msra.mxu0 %v727
  %1407 = vmatprep.subr.bf16.mxu0 %v734
  %1408 = vmatpush1.bf16.msra.mxu0 %v733
  %1409 = vmatprep.subr.bf16.mxu0 %v740
  %1410 = vmatpush1.bf16.msra.mxu0 %v739
  %1411 = vmatprep.subr.bf16.mxu0 %v746
  %1412 = vmatpush1.bf16.msra.mxu0 %v745
  %1413 = vmatprep.subr.bf16.mxu0 %v752
  %1414 = vmatpush1.bf16.msra.mxu0 %v751
  %1415 = vmatprep.subr.bf16.mxu0 %v758
  %1416 = vmatpush1.bf16.msra.mxu0 %v757
  %1417 = vmatprep.subr.bf16.mxu0 %v764
  %1418 = vmatpush1.bf16.msra.mxu0 %v763
  %1419 = vmatprep.mubr.bf16.mxu0 %v288
  %1420 = vmatmul.mubr.bf16.gmra.mrb[0].mxu0 %v287
  %v1421 = vpop.f32.mrb[0].mxu0
  %v1422 = vadd.f32 %v196, %v1421
  %v1423 = vpop.f32.mrb[0].mxu0
  %v1424 = vadd.f32 %v200, %v1423
  %v1425 = vpop.f32.mrb[0].mxu0
  %v1426 = vadd.f32 %v196, %v1425
  %v1427 = vpop.f32.mrb[0].mxu0
  %v1428 = vadd.f32 %v200, %v1427
  %1429 = vmatprep.mubr.bf16.mxu0 %v291
  %1430 = vmatmul.mubr.bf16.gmra.mrb[0].mxu0 %v290
  %v1431 = vpop.f32.mrb[0].mxu0
  %v1432 = vadd.f32 %v196, %v1431
  %v1433 = vpop.f32.mrb[0].mxu0
  %v1434 = vadd.f32 %v200, %v1433
  %v1435 = vpop.f32.mrb[0].mxu0
  %v1436 = vadd.f32 %v196, %v1435
  %v1437 = vpop.f32.mrb[0].mxu0
  %v1438 = vadd.f32 %v200, %v1437
  %1439 = vmatprep.mubr.bf16.mxu0 %v294
  %1440 = vmatmul.mubr.bf16.gmra.mrb[0].mxu0 %v293
  %v1441 = vpop.f32.mrb[0].mxu0
  %v1442 = vadd.f32 %v196, %v1441
  %v1443 = vpop.f32.mrb[0].mxu0
  %v1444 = vadd.f32 %v200, %v1443
  %v1445 = vpop.f32.mrb[0].mxu0
  %v1446 = vadd.f32 %v196, %v1445
  %v1447 = vpop.f32.mrb[0].mxu0
  %v1448 = vadd.f32 %v200, %v1447
  %1449 = vmatprep.mubr.bf16.mxu0 %v297
  %1450 = vmatmul.mubr.bf16.gmra.mrb[0].mxu0 %v296
  %v1451 = vpop.f32.mrb[0].mxu0
  %v1452 = vadd.f32 %v196, %v1451
  %v1453 = vpop.f32.mrb[0].mxu0
  %v1454 = vadd.f32 %v200, %v1453
  %v1455 = vpop.f32.mrb[0].mxu0
  %v1456 = vadd.f32 %v196, %v1455
  %v1457 = vpop.f32.mrb[0].mxu0
  %v1458 = vadd.f32 %v200, %v1457
  %1459 = vmatprep.mubr.bf16.mxu0 %v300
  %1460 = vmatmul.mubr.bf16.gmra.mrb[0].mxu0 %v299
  %v1461 = vpop.f32.mrb[0].mxu0
  %v1462 = vadd.f32 %v196, %v1461
  %v1463 = vpop.f32.mrb[0].mxu0
  %v1464 = vadd.f32 %v200, %v1463
  %v1465 = vpop.f32.mrb[0].mxu0
  %v1466 = vadd.f32 %v196, %v1465
  %v1467 = vpop.f32.mrb[0].mxu0
  %v1468 = vadd.f32 %v200, %v1467
  %1469 = vmatprep.mubr.bf16.mxu0 %v303
  %1470 = vmatmul.mubr.bf16.gmra.mrb[0].mxu0 %v302
  %v1471 = vpop.f32.mrb[0].mxu0
  %v1472 = vadd.f32 %v196, %v1471
  %v1473 = vpop.f32.mrb[0].mxu0
  %v1474 = vadd.f32 %v200, %v1473
  %v1475 = vpop.f32.mrb[0].mxu0
  %v1476 = vadd.f32 %v196, %v1475
  %v1477 = vpop.f32.mrb[0].mxu0
  %v1478 = vadd.f32 %v200, %v1477
  %1479 = vmatprep.mubr.bf16.mxu0 %v306
  %1480 = vmatmul.mubr.bf16.gmra.mrb[0].mxu0 %v305
  %v1481 = vpop.f32.mrb[0].mxu0
  %v1482 = vadd.f32 %v196, %v1481
  %v1483 = vpop.f32.mrb[0].mxu0
  %v1484 = vadd.f32 %v200, %v1483
  %v1485 = vpop.f32.mrb[0].mxu0
  %v1486 = vadd.f32 %v196, %v1485
  %v1487 = vpop.f32.mrb[0].mxu0
  %v1488 = vadd.f32 %v200, %v1487
  %1489 = vmatprep.mubr.bf16.mxu0 %v309
  %1490 = vmatmul.mubr.bf16.gmra.mrb[0].mxu0 %v308
  %v1491 = vpop.f32.mrb[0].mxu0
  %v1492 = vadd.f32 %v196, %v1491
  %v1493 = vpop.f32.mrb[0].mxu0
  %v1494 = vadd.f32 %v200, %v1493
  %v1495 = vpop.f32.mrb[0].mxu0
  %v1496 = vadd.f32 %v196, %v1495
  %v1497 = vpop.f32.mrb[0].mxu0
  %v1498 = vadd.f32 %v200, %v1497
  %1499 = vdwg.mxu0
  %1500 = vmatprep.subr.bf16.mxu0 %v770
  %1501 = vmatpush1.bf16.msra.mxu0 %v769
  %1502 = vmatprep.subr.bf16.mxu0 %v776
  %1503 = vmatpush1.bf16.msra.mxu0 %v775
  %1504 = vmatprep.subr.bf16.mxu0 %v933
  %1505 = vmatpush1.bf16.msra.mxu0 %v930
  %1506 = vmatprep.subr.bf16.mxu0 0
  %1507 = vmatpush1.bf16.msra.mxu0 0
  %1508 = vmatprep.subr.bf16.mxu0 0
  %1509 = vmatpush1.bf16.msra.mxu0 0
  %1510 = vmatprep.subr.bf16.mxu0 0
  %1511 = vmatpush1.bf16.msra.mxu0 0
  %1512 = vmatprep.subr.bf16.mxu0 0
  %1513 = vmatpush1.bf16.msra.mxu0 0
  %1514 = vmatprep.subr.bf16.mxu0 0
  %1515 = vmatpush1.bf16.msra.mxu0 0
  %1516 = vmatprep.subr.bf16.mxu0 0
  %1517 = vmatpush1.bf16.msra.mxu0 0
  %1518 = vmatprep.subr.bf16.mxu0 0
  %1519 = vmatpush1.bf16.msra.mxu0 0
  %1520 = vmatprep.subr.bf16.mxu0 0
  %1521 = vmatpush1.bf16.msra.mxu0 0
  %1522 = vmatprep.subr.bf16.mxu0 0
  %1523 = vmatpush1.bf16.msra.mxu0 0
  %1524 = vmatprep.subr.bf16.mxu0 0
  %1525 = vmatpush1.bf16.msra.mxu0 0
  %1526 = vmatprep.subr.bf16.mxu0 0
  %1527 = vmatpush1.bf16.msra.mxu0 0
  %1528 = vmatprep.subr.bf16.mxu0 0
  %1529 = vmatpush1.bf16.msra.mxu0 0
  %1530 = vmatprep.subr.bf16.mxu0 0
  %1531 = vmatpush1.bf16.msra.mxu0 0
  %1532 = vmatprep.mubr.bf16.mxu0 0
  %1533 = vmatmul.mubr.bf16.gmra.mrb[0].mxu0 %v893
  %v1534 = vpop.f32.mrb[0].mxu0
  %v1535 = vadd.f32 %v1422, %v1534
  %v1536 = vpop.f32.mrb[0].mxu0
  %v1537 = vadd.f32 %v1424, %v1536
  %v1538 = vpop.f32.mrb[0].mxu0
  %v1539 = vadd.f32 %v1426, %v1538
  %v1540 = vpop.f32.mrb[0].mxu0
  %v1541 = vadd.f32 %v1428, %v1540
  %1542 = vmatprep.mubr.bf16.mxu0 0
  %1543 = vmatmul.mubr.bf16.gmra.mrb[0].mxu0 %v896
  %v1544 = vpop.f32.mrb[0].mxu0
  %v1545 = vadd.f32 %v1432, %v1544
  %v1546 = vpop.f32.mrb[0].mxu0
  %v1547 = vadd.f32 %v1434, %v1546
  %v1548 = vpop.f32.mrb[0].mxu0
  %v1549 = vadd.f32 %v1436, %v1548
  %v1550 = vpop.f32.mrb[0].mxu0
  %v1551 = vadd.f32 %v1438, %v1550
  %1552 = vmatprep.mubr.bf16.mxu0 0
  %1553 = vmatmul.mubr.bf16.gmra.mrb[0].mxu0 %v899
  %v1554 = vpop.f32.mrb[0].mxu0
  %v1555 = vadd.f32 %v1442, %v1554
  %v1556 = vpop.f32.mrb[0].mxu0
  %v1557 = vadd.f32 %v1444, %v1556
  %v1558 = vpop.f32.mrb[0].mxu0
  %v1559 = vadd.f32 %v1446, %v1558
  %v1560 = vpop.f32.mrb[0].mxu0
  %v1561 = vadd.f32 %v1448, %v1560
  %1562 = vmatprep.mubr.bf16.mxu0 0
  %1563 = vmatmul.mubr.bf16.gmra.mrb[0].mxu0 %v902
  %v1564 = vpop.f32.mrb[0].mxu0
  %v1565 = vadd.f32 %v1452, %v1564
  %v1566 = vpop.f32.mrb[0].mxu0
  %v1567 = vadd.f32 %v1454, %v1566
  %v1568 = vpop.f32.mrb[0].mxu0
  %v1569 = vadd.f32 %v1456, %v1568
  %v1570 = vpop.f32.mrb[0].mxu0
  %v1571 = vadd.f32 %v1458, %v1570
  %1572 = vmatprep.mubr.bf16.mxu0 0
  %1573 = vmatmul.mubr.bf16.gmra.mrb[0].mxu0 %v905
  %v1574 = vpop.f32.mrb[0].mxu0
  %v1575 = vadd.f32 %v1462, %v1574
  %v1576 = vpop.f32.mrb[0].mxu0
  %v1577 = vadd.f32 %v1464, %v1576
  %v1578 = vpop.f32.mrb[0].mxu0
  %v1579 = vadd.f32 %v1466, %v1578
  %v1580 = vpop.f32.mrb[0].mxu0
  %v1581 = vadd.f32 %v1468, %v1580
  %1582 = vmatprep.mubr.bf16.mxu0 0
  %1583 = vmatmul.mubr.bf16.gmra.mrb[0].mxu0 %v908
  %v1584 = vpop.f32.mrb[0].mxu0
  %v1585 = vadd.f32 %v1472, %v1584
  %v1586 = vpop.f32.mrb[0].mxu0
  %v1587 = vadd.f32 %v1474, %v1586
  %v1588 = vpop.f32.mrb[0].mxu0
  %v1589 = vadd.f32 %v1476, %v1588
  %v1590 = vpop.f32.mrb[0].mxu0
  %v1591 = vadd.f32 %v1478, %v1590
  %1592 = vmatprep.mubr.bf16.mxu0 0
  %1593 = vmatmul.mubr.bf16.gmra.mrb[0].mxu0 %v911
  %v1594 = vpop.f32.mrb[0].mxu0
  %v1595 = vadd.f32 %v1482, %v1594
  %v1596 = vpop.f32.mrb[0].mxu0
  %v1597 = vadd.f32 %v1484, %v1596
  %v1598 = vpop.f32.mrb[0].mxu0
  %v1599 = vadd.f32 %v1486, %v1598
  %v1600 = vpop.f32.mrb[0].mxu0
  %v1601 = vadd.f32 %v1488, %v1600
  %1602 = vmatprep.mubr.bf16.mxu0 0
  %1603 = vmatmul.mubr.bf16.gmra.mrb[0].mxu0 %v914
  %v1604 = vpop.f32.mrb[0].mxu0
  %v1605 = vadd.f32 %v1492, %v1604
  %v1606 = vpop.f32.mrb[0].mxu0
  %v1607 = vadd.f32 %v1494, %v1606
  %v1608 = vpop.f32.mrb[0].mxu0
  %v1609 = vadd.f32 %v1496, %v1608
  %v1610 = vpop.f32.mrb[0].mxu0
  %v1611 = vadd.f32 %v1498, %v1610
  %1612 = vdwg.mxu0
  %1613 = vst [vmem:[#allocation2] sm:$0xff] %v1083
  %1614 = vst [vmem:[#allocation2 + $0x8] sm:$0xff] %v1085
  %1615 = vst [vmem:[#allocation2 + $0x10] sm:$0xff] %v1309
  %1616 = vst [vmem:[#allocation2 + $0x18] sm:$0xff] %v1311
  %1617 = vst [vmem:[#allocation2 + $0x20] sm:$0xff] %v1535
  %1618 = vst [vmem:[#allocation2 + $0x28] sm:$0xff] %v1537
  %1619 = vst [vmem:[#allocation2 + $0x30] sm:$0xff] %v1087
  %1620 = vst [vmem:[#allocation2 + $0x38] sm:$0xff] %v1089
  %1621 = vst [vmem:[#allocation2 + $0x40] sm:$0xff] %v1313
  %1622 = vst [vmem:[#allocation2 + $0x48] sm:$0xff] %v1315
  %1623 = vst [vmem:[#allocation2 + $0x50] sm:$0xff] %v1539
  %1624 = vst [vmem:[#allocation2 + $0x58] sm:$0xff] %v1541
  %1625 = vst [vmem:[#allocation2 + $0x60] sm:$0xff] %v1093
  %1626 = vst [vmem:[#allocation2 + $0x68] sm:$0xff] %v1095
  %1627 = vst [vmem:[#allocation2 + $0x70] sm:$0xff] %v1319
  %1628 = vst [vmem:[#allocation2 + $0x78] sm:$0xff] %v1321
  %1629 = vst [vmem:[#allocation2 + $0x80] sm:$0xff] %v1545
  %1630 = vst [vmem:[#allocation2 + $0x88] sm:$0xff] %v1547
  %1631 = vst [vmem:[#allocation2 + $0x90] sm:$0xff] %v1097
  %1632 = vst [vmem:[#allocation2 + $0x98] sm:$0xff] %v1099
  %1633 = vst [vmem:[#allocation2 + $0xa0] sm:$0xff] %v1323
  %1634 = vst [vmem:[#allocation2 + $0xa8] sm:$0xff] %v1325
  %1635 = vst [vmem:[#allocation2 + $0xb0] sm:$0xff] %v1549
  %1636 = vst [vmem:[#allocation2 + $0xb8] sm:$0xff] %v1551
  %1637 = vst [vmem:[#allocation2 + $0xc0] sm:$0xff] %v1103
  %1638 = vst [vmem:[#allocation2 + $0xc8] sm:$0xff] %v1105
  %1639 = vst [vmem:[#allocation2 + $0xd0] sm:$0xff] %v1329
  %1640 = vst [vmem:[#allocation2 + $0xd8] sm:$0xff] %v1331
  %1641 = vst [vmem:[#allocation2 + $0xe0] sm:$0xff] %v1555
  %1642 = vst [vmem:[#allocation2 + $0xe8] sm:$0xff] %v1557
  %1643 = vst [vmem:[#allocation2 + $0xf0] sm:$0xff] %v1107
  %1644 = vst [vmem:[#allocation2 + $0xf8] sm:$0xff] %v1109
  %1645 = vst [vmem:[#allocation2 + $0x100] sm:$0xff] %v1333
  %1646 = vst [vmem:[#allocation2 + $0x108] sm:$0xff] %v1335
  %1647 = vst [vmem:[#allocation2 + $0x110] sm:$0xff] %v1559
  %1648 = vst [vmem:[#allocation2 + $0x118] sm:$0xff] %v1561
  %1649 = vst [vmem:[#allocation2 + $0x120] sm:$0xff] %v1113
  %1650 = vst [vmem:[#allocation2 + $0x128] sm:$0xff] %v1115
  %1651 = vst [vmem:[#allocation2 + $0x130] sm:$0xff] %v1339
  %1652 = vst [vmem:[#allocation2 + $0x138] sm:$0xff] %v1341
  %1653 = vst [vmem:[#allocation2 + $0x140] sm:$0xff] %v1565
  %1654 = vst [vmem:[#allocation2 + $0x148] sm:$0xff] %v1567
  %1655 = vst [vmem:[#allocation2 + $0x150] sm:$0xff] %v1117
  %1656 = vst [vmem:[#allocation2 + $0x158] sm:$0xff] %v1119
  %1657 = vst [vmem:[#allocation2 + $0x160] sm:$0xff] %v1343
  %1658 = vst [vmem:[#allocation2 + $0x168] sm:$0xff] %v1345
  %1659 = vst [vmem:[#allocation2 + $0x170] sm:$0xff] %v1569
  %1660 = vst [vmem:[#allocation2 + $0x178] sm:$0xff] %v1571
  %1661 = vst [vmem:[#allocation2 + $0x180] sm:$0xff] %v1123
  %1662 = vst [vmem:[#allocation2 + $0x188] sm:$0xff] %v1125
  %1663 = vst [vmem:[#allocation2 + $0x190] sm:$0xff] %v1349
  %1664 = vst [vmem:[#allocation2 + $0x198] sm:$0xff] %v1351
  %1665 = vst [vmem:[#allocation2 + $0x1a0] sm:$0xff] %v1575
  %1666 = vst [vmem:[#allocation2 + $0x1a8] sm:$0xff] %v1577
  %1667 = vst [vmem:[#allocation2 + $0x1b0] sm:$0xff] %v1127
  %1668 = vst [vmem:[#allocation2 + $0x1b8] sm:$0xff] %v1129
  %1669 = vst [vmem:[#allocation2 + $0x1c0] sm:$0xff] %v1353
  %1670 = vst [vmem:[#allocation2 + $0x1c8] sm:$0xff] %v1355
  %1671 = vst [vmem:[#allocation2 + $0x1d0] sm:$0xff] %v1579
  %1672 = vst [vmem:[#allocation2 + $0x1d8] sm:$0xff] %v1581
  %1673 = vst [vmem:[#allocation2 + $0x1e0] sm:$0xff] %v1133
  %1674 = vst [vmem:[#allocation2 + $0x1e8] sm:$0xff] %v1135
  %1675 = vst [vmem:[#allocation2 + $0x1f0] sm:$0xff] %v1359
  %1676 = vst [vmem:[#allocation2 + $0x1f8] sm:$0xff] %v1361
  %1677 = vst [vmem:[#allocation2 + $0x200] sm:$0xff] %v1585
  %1678 = vst [vmem:[#allocation2 + $0x208] sm:$0xff] %v1587
  %1679 = vst [vmem:[#allocation2 + $0x210] sm:$0xff] %v1137
  %1680 = vst [vmem:[#allocation2 + $0x218] sm:$0xff] %v1139
  %1681 = vst [vmem:[#allocation2 + $0x220] sm:$0xff] %v1363
  %1682 = vst [vmem:[#allocation2 + $0x228] sm:$0xff] %v1365
  %1683 = vst [vmem:[#allocation2 + $0x230] sm:$0xff] %v1589
  %1684 = vst [vmem:[#allocation2 + $0x238] sm:$0xff] %v1591
  %1685 = vst [vmem:[#allocation2 + $0x240] sm:$0xff] %v1143
  %1686 = vst [vmem:[#allocation2 + $0x248] sm:$0xff] %v1145
  %1687 = vst [vmem:[#allocation2 + $0x250] sm:$0xff] %v1369
  %1688 = vst [vmem:[#allocation2 + $0x258] sm:$0xff] %v1371
  %1689 = vst [vmem:[#allocation2 + $0x260] sm:$0xff] %v1595
  %1690 = vst [vmem:[#allocation2 + $0x268] sm:$0xff] %v1597
  %1691 = vst [vmem:[#allocation2 + $0x270] sm:$0xff] %v1147
  %1692 = vst [vmem:[#allocation2 + $0x278] sm:$0xff] %v1149
  %1693 = vst [vmem:[#allocation2 + $0x280] sm:$0xff] %v1373
  %1694 = vst [vmem:[#allocation2 + $0x288] sm:$0xff] %v1375
  %1695 = vst [vmem:[#allocation2 + $0x290] sm:$0xff] %v1599
  %1696 = vst [vmem:[#allocation2 + $0x298] sm:$0xff] %v1601
  %1697 = vst [vmem:[#allocation2 + $0x2a0] sm:$0xff] %v1153
  %1698 = vst [vmem:[#allocation2 + $0x2a8] sm:$0xff] %v1155
  %1699 = vst [vmem:[#allocation2 + $0x2b0] sm:$0xff] %v1379
  %1700 = vst [vmem:[#allocation2 + $0x2b8] sm:$0xff] %v1381
  %1701 = vst [vmem:[#allocation2 + $0x2c0] sm:$0xff] %v1605
  %1702 = vst [vmem:[#allocation2 + $0x2c8] sm:$0xff] %v1607
  %1703 = vst [vmem:[#allocation2 + $0x2d0] sm:$0xff] %v1157
  %1704 = vst [vmem:[#allocation2 + $0x2d8] sm:$0xff] %v1159
  %1705 = vst [vmem:[#allocation2 + $0x2e0] sm:$0xff] %v1383
  %1706 = vst [vmem:[#allocation2 + $0x2e8] sm:$0xff] %v1385
  %1707 = vst [vmem:[#allocation2 + $0x2f0] sm:$0xff] %v1609
  %1708 = vst [vmem:[#allocation2 + $0x2f8] sm:$0xff] %v1611
  %v1709 = vld [vmem:[%s3] sm:$0xff]
  %v1710 = vld [vmem:[%s3 + $0x8] sm:$0xff]
  %v1711 = vld [vmem:[%s3 + $0x10] sm:$0xff]
  %v1712 = vld [vmem:[%s3 + $0x18] sm:$0xff]
  %v1713 = vld [vmem:[%s3 + $0x20] sm:$0xff]
  %v1714 = vld [vmem:[%s3 + $0x28] sm:$0xff]
  %v1715 = vld [vmem:[%s3 + $0x30] sm:$0xff]
  %v1716 = vld [vmem:[%s3 + $0x38] sm:$0xff]
  %v1717 = vld [vmem:[%s3 + $0x40] sm:$0xff]
  %v1718 = vld [vmem:[%s3 + $0x48] sm:$0xff]
  %v1719 = vld [vmem:[%s3 + $0x50] sm:$0xff]
  %v1720 = vld [vmem:[%s3 + $0x58] sm:$0xff]
  %v1721 = vld [vmem:[%s3 + $0x60] sm:$0xff]
  %v1722 = vld [vmem:[%s3 + $0x68] sm:$0xff]
  %v1723 = vld [vmem:[%s3 + $0x70] sm:$0xff]
  %v1724 = vld [vmem:[%s3 + $0x78] sm:$0xff]
  %v1725 = vld [vmem:[%s3 + $0x80] sm:$0xff]
  %v1726 = vld [vmem:[%s3 + $0x88] sm:$0xff]
  %v1727 = vld [vmem:[%s3 + $0x90] sm:$0xff]
  %v1728 = vld [vmem:[%s3 + $0x98] sm:$0xff]
  %v1729 = vld [vmem:[%s3 + $0xa0] sm:$0xff]
  %v1730 = vld [vmem:[%s3 + $0xa8] sm:$0xff]
  %v1731 = vld [vmem:[%s3 + $0xb0] sm:$0xff]
  %v1732 = vld [vmem:[%s3 + $0xb8] sm:$0xff]
  %v1733 = vld [vmem:[%s3 + $0xc0] sm:$0xff]
  %v1734 = vld [vmem:[%s3 + $0xc8] sm:$0xff]
  %v1735 = vld [vmem:[%s3 + $0xd0] sm:$0xff]
  %v1736 = vld [vmem:[%s3 + $0xd8] sm:$0xff]
  %v1737 = vld [vmem:[%s3 + $0xe0] sm:$0xff]
  %v1738 = vld [vmem:[%s3 + $0xe8] sm:$0xff]
  %v1739 = vld [vmem:[%s3 + $0xf0] sm:$0xff]
  %v1740 = vld [vmem:[%s3 + $0xf8] sm:$0xff]
  %v1741 = vld [vmem:[%s3 + $0x100] sm:$0xff]
  %v1742 = vld [vmem:[%s3 + $0x108] sm:$0xff]
  %v1743 = vld [vmem:[%s3 + $0x110] sm:$0xff]
  %v1744 = vld [vmem:[%s3 + $0x118] sm:$0xff]
  %v1745 = vld [vmem:[%s3 + $0x120] sm:$0xff]
  %v1746 = vld [vmem:[%s3 + $0x128] sm:$0xff]
  %v1747 = vld [vmem:[%s3 + $0x130] sm:$0xff]
  %v1748 = vld [vmem:[%s3 + $0x138] sm:$0xff]
  %v1749 = vld [vmem:[%s3 + $0x140] sm:$0xff]
  %v1750 = vld [vmem:[%s3 + $0x148] sm:$0xff]
  %v1751 = vld [vmem:[%s3 + $0x150] sm:$0xff]
  %v1752 = vld [vmem:[%s3 + $0x158] sm:$0xff]
  %v1753 = vld [vmem:[%s3 + $0x160] sm:$0xff]
  %v1754 = vld [vmem:[%s3 + $0x168] sm:$0xff]
  %v1755 = vld [vmem:[%s3 + $0x170] sm:$0xff]
  %v1756 = vld [vmem:[%s3 + $0x178] sm:$0xff]
  %v1757 = vld [vmem:[%s3 + $0x180] sm:$0xff]
  %v1758 = vld [vmem:[%s3 + $0x188] sm:$0xff]
  %v1759 = vld [vmem:[%s3 + $0x190] sm:$0xff]
  %v1760 = vld [vmem:[%s3 + $0x198] sm:$0xff]
  %v1761 = vld [vmem:[%s3 + $0x1a0] sm:$0xff]
  %v1762 = vld [vmem:[%s3 + $0x1a8] sm:$0xff]
  %v1763 = vld [vmem:[%s3 + $0x1b0] sm:$0xff]
  %v1764 = vld [vmem:[%s3 + $0x1b8] sm:$0xff]
  %v1765 = vld [vmem:[%s3 + $0x1c0] sm:$0xff]
  %v1766 = vld [vmem:[%s3 + $0x1c8] sm:$0xff]
  %v1767 = vld [vmem:[%s3 + $0x1d0] sm:$0xff]
  %v1768 = vld [vmem:[%s3 + $0x1d8] sm:$0xff]
  %v1769 = vld [vmem:[%s3 + $0x1e0] sm:$0xff]
  %v1770 = vld [vmem:[%s3 + $0x1e8] sm:$0xff]
  %v1771 = vld [vmem:[%s3 + $0x1f0] sm:$0xff]
  %v1772 = vld [vmem:[%s3 + $0x1f8] sm:$0xff]
  %v1773 = vld [vmem:[%s3 + $0x200] sm:$0xff]
  %v1774 = vld [vmem:[%s3 + $0x208] sm:$0xff]
  %v1775 = vld [vmem:[%s3 + $0x210] sm:$0xff]
  %v1776 = vld [vmem:[%s3 + $0x218] sm:$0xff]
  %v1777 = vld [vmem:[%s3 + $0x220] sm:$0xff]
  %v1778 = vld [vmem:[%s3 + $0x228] sm:$0xff]
  %v1779 = vld [vmem:[%s3 + $0x230] sm:$0xff]
  %v1780 = vld [vmem:[%s3 + $0x238] sm:$0xff]
  %v1781 = vld [vmem:[%s3 + $0x240] sm:$0xff]
  %v1782 = vld [vmem:[%s3 + $0x248] sm:$0xff]
  %v1783 = vld [vmem:[%s3 + $0x250] sm:$0xff]
  %v1784 = vld [vmem:[%s3 + $0x258] sm:$0xff]
  %v1785 = vld [vmem:[%s3 + $0x260] sm:$0xff]
  %v1786 = vld [vmem:[%s3 + $0x268] sm:$0xff]
  %v1787 = vld [vmem:[%s3 + $0x270] sm:$0xff]
  %v1788 = vld [vmem:[%s3 + $0x278] sm:$0xff]
  %v1789 = vld [vmem:[%s3 + $0x280] sm:$0xff]
  %v1790 = vld [vmem:[%s3 + $0x288] sm:$0xff]
  %v1791 = vld [vmem:[%s3 + $0x290] sm:$0xff]
  %v1792 = vld [vmem:[%s3 + $0x298] sm:$0xff]
  %v1793 = vld [vmem:[%s3 + $0x2a0] sm:$0xff]
  %v1794 = vld [vmem:[%s3 + $0x2a8] sm:$0xff]
  %v1795 = vld [vmem:[%s3 + $0x2b0] sm:$0xff]
  %v1796 = vld [vmem:[%s3 + $0x2b8] sm:$0xff]
  %v1797 = vld [vmem:[%s3 + $0x2c0] sm:$0xff]
  %v1798 = vld [vmem:[%s3 + $0x2c8] sm:$0xff]
  %v1799 = vld [vmem:[%s3 + $0x2d0] sm:$0xff]
  %v1800 = vld [vmem:[%s3 + $0x2d8] sm:$0xff]
  %v1801 = vld [vmem:[%s3 + $0x2e0] sm:$0xff]
  %v1802 = vld [vmem:[%s3 + $0x2e8] sm:$0xff]
  %v1803 = vld [vmem:[%s3 + $0x2f0] sm:$0xff]
  %v1804 = vld [vmem:[%s3 + $0x2f8] sm:$0xff]
  %v1805 = vld [vmem:[%s4] sm:$0x3f]
  %s1806 = smul.u32 0, 6
  %s1807 = smul.addr %s1806, 8
  %s1808 = scalar_lea.vmem [#allocation2], %s1807
  %v1809 = vld [vmem:[%s1808] sm:$0xff]
  %v1810 = vld [vmem:[%s1808 + $0x8] sm:$0xff]
  %v1811 = vld [vmem:[%s1808 + $0x10] sm:$0xff]
  %s1812 = smul.u32 15, 6
  %s1813 = smul.addr %s1812, 8
  %s1814 = scalar_lea.vmem [#allocation2], %s1813
  %v1815 = vld [vmem:[%s1814 + $0x18] sm:$0xff]
  %v1816 = vld [vmem:[%s1814 + $0x20] sm:$0xff]
  %v1817 = vld [vmem:[%s1814 + $0x28] sm:$0xff]
  %v1818 = vpack.c.bf16 0.0, 0.0
  %v1820 = vlaneseq
  %v1821 = vshrl.u32 %v1820, 7
  %v1822 = vsub.s32 0, %v1821
  %v1823 = vrot.slane %v1805, %v1822
  %v1824 = vlaneseq
  %v1825 = vshrl.u32 %v1824, 7
  %v1826 = vsub.s32 1, %v1825
  %v1827 = vrot.slane %v1805, %v1826
  %v1828 = vlaneseq
  %v1829 = vshrl.u32 %v1828, 7
  %v1830 = vsub.s32 2, %v1829
  %v1831 = vrot.slane %v1805, %v1830
  %v1832 = vlaneseq
  %v1833 = vshrl.u32 %v1832, 7
  %v1834 = vsub.s32 3, %v1833
  %v1835 = vrot.slane %v1805, %v1834
  %v1836 = vlaneseq
  %v1837 = vshrl.u32 %v1836, 7
  %v1838 = vsub.s32 4, %v1837
  %v1839 = vrot.slane %v1805, %v1838
  %v1840 = vlaneseq
  %v1841 = vshrl.u32 %v1840, 7
  %v1842 = vsub.s32 5, %v1841
  %v1843 = vrot.slane %v1805, %v1842
  %v1946 = vunpack.c.l.b16 %v1709
  %v1947 = vunpack.c.h.b16 %v1709
  %v1948 = vunpack.c.l.b16 %v1710
  %v1949 = vunpack.c.h.b16 %v1710
  %v1950 = vunpack.c.l.b16 %v1711
  %v1951 = vunpack.c.h.b16 %v1711
  %v1952 = vunpack.c.l.b16 %v1712
  %v1953 = vunpack.c.h.b16 %v1712
  %v1954 = vunpack.c.l.b16 %v1713
  %v1955 = vunpack.c.h.b16 %v1713
  %v1956 = vunpack.c.l.b16 %v1714
  %v1957 = vunpack.c.h.b16 %v1714
  %v1958 = vunpack.c.l.b16 %v1715
  %v1959 = vunpack.c.h.b16 %v1715
  %v1960 = vunpack.c.l.b16 %v1716
  %v1961 = vunpack.c.h.b16 %v1716
  %v1962 = vunpack.c.l.b16 %v1717
  %v1963 = vunpack.c.h.b16 %v1717
  %v1964 = vunpack.c.l.b16 %v1718
  %v1965 = vunpack.c.h.b16 %v1718
  %v1966 = vunpack.c.l.b16 %v1719
  %v1967 = vunpack.c.h.b16 %v1719
  %v1968 = vunpack.c.l.b16 %v1720
  %v1969 = vunpack.c.h.b16 %v1720
  %v1970 = vunpack.c.l.b16 %v1721
  %v1971 = vunpack.c.h.b16 %v1721
  %v1972 = vunpack.c.l.b16 %v1722
  %v1973 = vunpack.c.h.b16 %v1722
  %v1974 = vunpack.c.l.b16 %v1723
  %v1975 = vunpack.c.h.b16 %v1723
  %v1976 = vunpack.c.l.b16 %v1724
  %v1977 = vunpack.c.h.b16 %v1724
  %v1978 = vunpack.c.l.b16 %v1725
  %v1979 = vunpack.c.h.b16 %v1725
  %v1980 = vunpack.c.l.b16 %v1726
  %v1981 = vunpack.c.h.b16 %v1726
  %v1982 = vunpack.c.l.b16 %v1727
  %v1983 = vunpack.c.h.b16 %v1727
  %v1984 = vunpack.c.l.b16 %v1728
  %v1985 = vunpack.c.h.b16 %v1728
  %v1986 = vunpack.c.l.b16 %v1729
  %v1987 = vunpack.c.h.b16 %v1729
  %v1988 = vunpack.c.l.b16 %v1730
  %v1989 = vunpack.c.h.b16 %v1730
  %v1990 = vunpack.c.l.b16 %v1731
  %v1991 = vunpack.c.h.b16 %v1731
  %v1992 = vunpack.c.l.b16 %v1732
  %v1993 = vunpack.c.h.b16 %v1732
  %v1994 = vunpack.c.l.b16 %v1733
  %v1995 = vunpack.c.h.b16 %v1733
  %v1996 = vunpack.c.l.b16 %v1734
  %v1997 = vunpack.c.h.b16 %v1734
  %v1998 = vunpack.c.l.b16 %v1735
  %v1999 = vunpack.c.h.b16 %v1735
  %v2000 = vunpack.c.l.b16 %v1736
  %v2001 = vunpack.c.h.b16 %v1736
  %v2002 = vunpack.c.l.b16 %v1737
  %v2003 = vunpack.c.h.b16 %v1737
  %v2004 = vunpack.c.l.b16 %v1738
  %v2005 = vunpack.c.h.b16 %v1738
  %v2006 = vunpack.c.l.b16 %v1739
  %v2007 = vunpack.c.h.b16 %v1739
  %v2008 = vunpack.c.l.b16 %v1740
  %v2009 = vunpack.c.h.b16 %v1740
  %v2010 = vunpack.c.l.b16 %v1741
  %v2011 = vunpack.c.h.b16 %v1741
  %v2012 = vunpack.c.l.b16 %v1742
  %v2013 = vunpack.c.h.b16 %v1742
  %v2014 = vunpack.c.l.b16 %v1743
  %v2015 = vunpack.c.h.b16 %v1743
  %v2016 = vunpack.c.l.b16 %v1744
  %v2017 = vunpack.c.h.b16 %v1744
  %v2018 = vunpack.c.l.b16 %v1745
  %v2019 = vunpack.c.h.b16 %v1745
  %v2020 = vunpack.c.l.b16 %v1746
  %v2021 = vunpack.c.h.b16 %v1746
  %v2022 = vunpack.c.l.b16 %v1747
  %v2023 = vunpack.c.h.b16 %v1747
  %v2024 = vunpack.c.l.b16 %v1748
  %v2025 = vunpack.c.h.b16 %v1748
  %v2026 = vunpack.c.l.b16 %v1749
  %v2027 = vunpack.c.h.b16 %v1749
  %v2028 = vunpack.c.l.b16 %v1750
  %v2029 = vunpack.c.h.b16 %v1750
  %v2030 = vunpack.c.l.b16 %v1751
  %v2031 = vunpack.c.h.b16 %v1751
  %v2032 = vunpack.c.l.b16 %v1752
  %v2033 = vunpack.c.h.b16 %v1752
  %v2034 = vunpack.c.l.b16 %v1753
  %v2035 = vunpack.c.h.b16 %v1753
  %v2036 = vunpack.c.l.b16 %v1754
  %v2037 = vunpack.c.h.b16 %v1754
  %v2038 = vunpack.c.l.b16 %v1755
  %v2039 = vunpack.c.h.b16 %v1755
  %v2040 = vunpack.c.l.b16 %v1756
  %v2041 = vunpack.c.h.b16 %v1756
  %v2042 = vunpack.c.l.b16 %v1757
  %v2043 = vunpack.c.h.b16 %v1757
  %v2044 = vunpack.c.l.b16 %v1758
  %v2045 = vunpack.c.h.b16 %v1758
  %v2046 = vunpack.c.l.b16 %v1759
  %v2047 = vunpack.c.h.b16 %v1759
  %v2048 = vunpack.c.l.b16 %v1760
  %v2049 = vunpack.c.h.b16 %v1760
  %v2050 = vunpack.c.l.b16 %v1761
  %v2051 = vunpack.c.h.b16 %v1761
  %v2052 = vunpack.c.l.b16 %v1762
  %v2053 = vunpack.c.h.b16 %v1762
  %v2054 = vunpack.c.l.b16 %v1763
  %v2055 = vunpack.c.h.b16 %v1763
  %v2056 = vunpack.c.l.b16 %v1764
  %v2057 = vunpack.c.h.b16 %v1764
  %v2058 = vunpack.c.l.b16 %v1765
  %v2059 = vunpack.c.h.b16 %v1765
  %v2060 = vunpack.c.l.b16 %v1766
  %v2061 = vunpack.c.h.b16 %v1766
  %v2062 = vunpack.c.l.b16 %v1767
  %v2063 = vunpack.c.h.b16 %v1767
  %v2064 = vunpack.c.l.b16 %v1768
  %v2065 = vunpack.c.h.b16 %v1768
  %v2066 = vunpack.c.l.b16 %v1769
  %v2067 = vunpack.c.h.b16 %v1769
  %v2068 = vunpack.c.l.b16 %v1770
  %v2069 = vunpack.c.h.b16 %v1770
  %v2070 = vunpack.c.l.b16 %v1771
  %v2071 = vunpack.c.h.b16 %v1771
  %v2072 = vunpack.c.l.b16 %v1772
  %v2073 = vunpack.c.h.b16 %v1772
  %v2074 = vunpack.c.l.b16 %v1773
  %v2075 = vunpack.c.h.b16 %v1773
  %v2076 = vunpack.c.l.b16 %v1774
  %v2077 = vunpack.c.h.b16 %v1774
  %v2078 = vunpack.c.l.b16 %v1775
  %v2079 = vunpack.c.h.b16 %v1775
  %v2080 = vunpack.c.l.b16 %v1776
  %v2081 = vunpack.c.h.b16 %v1776
  %v2082 = vunpack.c.l.b16 %v1777
  %v2083 = vunpack.c.h.b16 %v1777
  %v2084 = vunpack.c.l.b16 %v1778
  %v2085 = vunpack.c.h.b16 %v1778
  %v2086 = vunpack.c.l.b16 %v1779
  %v2087 = vunpack.c.h.b16 %v1779
  %v2088 = vunpack.c.l.b16 %v1780
  %v2089 = vunpack.c.h.b16 %v1780
  %v2090 = vunpack.c.l.b16 %v1781
  %v2091 = vunpack.c.h.b16 %v1781
  %v2092 = vunpack.c.l.b16 %v1782
  %v2093 = vunpack.c.h.b16 %v1782
  %v2094 = vunpack.c.l.b16 %v1783
  %v2095 = vunpack.c.h.b16 %v1783
  %v2096 = vunpack.c.l.b16 %v1784
  %v2097 = vunpack.c.h.b16 %v1784
  %v2098 = vunpack.c.l.b16 %v1785
  %v2099 = vunpack.c.h.b16 %v1785
  %v2100 = vunpack.c.l.b16 %v1786
  %v2101 = vunpack.c.h.b16 %v1786
  %v2102 = vunpack.c.l.b16 %v1787
  %v2103 = vunpack.c.h.b16 %v1787
  %v2104 = vunpack.c.l.b16 %v1788
  %v2105 = vunpack.c.h.b16 %v1788
  %v2106 = vunpack.c.l.b16 %v1789
  %v2107 = vunpack.c.h.b16 %v1789
  %v2108 = vunpack.c.l.b16 %v1790
  %v2109 = vunpack.c.h.b16 %v1790
  %v2110 = vunpack.c.l.b16 %v1791
  %v2111 = vunpack.c.h.b16 %v1791
  %v2112 = vunpack.c.l.b16 %v1792
  %v2113 = vunpack.c.h.b16 %v1792
  %v2114 = vunpack.c.l.b16 %v1793
  %v2115 = vunpack.c.h.b16 %v1793
  %v2116 = vunpack.c.l.b16 %v1794
  %v2117 = vunpack.c.h.b16 %v1794
  %v2118 = vunpack.c.l.b16 %v1795
  %v2119 = vunpack.c.h.b16 %v1795
  %v2120 = vunpack.c.l.b16 %v1796
  %v2121 = vunpack.c.h.b16 %v1796
  %v2122 = vunpack.c.l.b16 %v1797
  %v2123 = vunpack.c.h.b16 %v1797
  %v2124 = vunpack.c.l.b16 %v1798
  %v2125 = vunpack.c.h.b16 %v1798
  %v2126 = vunpack.c.l.b16 %v1799
  %v2127 = vunpack.c.h.b16 %v1799
  %v2128 = vunpack.c.l.b16 %v1800
  %v2129 = vunpack.c.h.b16 %v1800
  %v2130 = vunpack.c.l.b16 %v1801
  %v2131 = vunpack.c.h.b16 %v1801
  %v2132 = vunpack.c.l.b16 %v1802
  %v2133 = vunpack.c.h.b16 %v1802
  %v2134 = vunpack.c.l.b16 %v1803
  %v2135 = vunpack.c.h.b16 %v1803
  %v2136 = vunpack.c.l.b16 %v1804
  %v2137 = vunpack.c.h.b16 %v1804
  %v2138 = vpack.c.b16 %v1952, %v1946
  %v2139 = vpack.c.b16 %v1953, %v1947
  %v2140 = vpack.c.b16 %v1954, %v1948
  %v2141 = vpack.c.b16 %v1955, %v1949
  %v2142 = vpack.c.b16 %v1956, %v1950
  %v2143 = vpack.c.b16 %v1957, %v1951
  %v2144 = vpack.c.b16 %v1964, %v1958
  %v2145 = vpack.c.b16 %v1965, %v1959
  %v2146 = vpack.c.b16 %v1966, %v1960
  %v2147 = vpack.c.b16 %v1967, %v1961
  %v2148 = vpack.c.b16 %v1968, %v1962
  %v2149 = vpack.c.b16 %v1969, %v1963
  %v2150 = vpack.c.b16 %v1976, %v1970
  %v2151 = vpack.c.b16 %v1977, %v1971
  %v2152 = vpack.c.b16 %v1978, %v1972
  %v2153 = vpack.c.b16 %v1979, %v1973
  %v2154 = vpack.c.b16 %v1980, %v1974
  %v2155 = vpack.c.b16 %v1981, %v1975
  %v2156 = vpack.c.b16 %v1988, %v1982
  %v2157 = vpack.c.b16 %v1989, %v1983
  %v2158 = vpack.c.b16 %v1990, %v1984
  %v2159 = vpack.c.b16 %v1991, %v1985
  %v2160 = vpack.c.b16 %v1992, %v1986
  %v2161 = vpack.c.b16 %v1993, %v1987
  %v2162 = vpack.c.b16 %v2000, %v1994
  %v2163 = vpack.c.b16 %v2001, %v1995
  %v2164 = vpack.c.b16 %v2002, %v1996
  %v2165 = vpack.c.b16 %v2003, %v1997
  %v2166 = vpack.c.b16 %v2004, %v1998
  %v2167 = vpack.c.b16 %v2005, %v1999
  %v2168 = vpack.c.b16 %v2012, %v2006
  %v2169 = vpack.c.b16 %v2013, %v2007
  %v2170 = vpack.c.b16 %v2014, %v2008
  %v2171 = vpack.c.b16 %v2015, %v2009
  %v2172 = vpack.c.b16 %v2016, %v2010
  %v2173 = vpack.c.b16 %v2017, %v2011
  %v2174 = vpack.c.b16 %v2024, %v2018
  %v2175 = vpack.c.b16 %v2025, %v2019
  %v2176 = vpack.c.b16 %v2026, %v2020
  %v2177 = vpack.c.b16 %v2027, %v2021
  %v2178 = vpack.c.b16 %v2028, %v2022
  %v2179 = vpack.c.b16 %v2029, %v2023
  %v2180 = vpack.c.b16 %v2036, %v2030
  %v2181 = vpack.c.b16 %v2037, %v2031
  %v2182 = vpack.c.b16 %v2038, %v2032
  %v2183 = vpack.c.b16 %v2039, %v2033
  %v2184 = vpack.c.b16 %v2040, %v2034
  %v2185 = vpack.c.b16 %v2041, %v2035
  %v2186 = vpack.c.b16 %v2048, %v2042
  %v2187 = vpack.c.b16 %v2049, %v2043
  %v2188 = vpack.c.b16 %v2050, %v2044
  %v2189 = vpack.c.b16 %v2051, %v2045
  %v2190 = vpack.c.b16 %v2052, %v2046
  %v2191 = vpack.c.b16 %v2053, %v2047
  %v2192 = vpack.c.b16 %v2060, %v2054
  %v2193 = vpack.c.b16 %v2061, %v2055
  %v2194 = vpack.c.b16 %v2062, %v2056
  %v2195 = vpack.c.b16 %v2063, %v2057
  %v2196 = vpack.c.b16 %v2064, %v2058
  %v2197 = vpack.c.b16 %v2065, %v2059
  %v2198 = vpack.c.b16 %v2072, %v2066
  %v2199 = vpack.c.b16 %v2073, %v2067
  %v2200 = vpack.c.b16 %v2074, %v2068
  %v2201 = vpack.c.b16 %v2075, %v2069
  %v2202 = vpack.c.b16 %v2076, %v2070
  %v2203 = vpack.c.b16 %v2077, %v2071
  %v2204 = vpack.c.b16 %v2084, %v2078
  %v2205 = vpack.c.b16 %v2085, %v2079
  %v2206 = vpack.c.b16 %v2086, %v2080
  %v2207 = vpack.c.b16 %v2087, %v2081
  %v2208 = vpack.c.b16 %v2088, %v2082
  %v2209 = vpack.c.b16 %v2089, %v2083
  %v2210 = vpack.c.b16 %v2096, %v2090
  %v2211 = vpack.c.b16 %v2097, %v2091
  %v2212 = vpack.c.b16 %v2098, %v2092
  %v2213 = vpack.c.b16 %v2099, %v2093
  %v2214 = vpack.c.b16 %v2100, %v2094
  %v2215 = vpack.c.b16 %v2101, %v2095
  %v2216 = vpack.c.b16 %v2108, %v2102
  %v2217 = vpack.c.b16 %v2109, %v2103
  %v2218 = vpack.c.b16 %v2110, %v2104
  %v2219 = vpack.c.b16 %v2111, %v2105
  %v2220 = vpack.c.b16 %v2112, %v2106
  %v2221 = vpack.c.b16 %v2113, %v2107
  %v2222 = vpack.c.b16 %v2120, %v2114
  %v2223 = vpack.c.b16 %v2121, %v2115
  %v2224 = vpack.c.b16 %v2122, %v2116
  %v2225 = vpack.c.b16 %v2123, %v2117
  %v2226 = vpack.c.b16 %v2124, %v2118
  %v2227 = vpack.c.b16 %v2125, %v2119
  %v2228 = vpack.c.b16 %v2132, %v2126
  %v2229 = vpack.c.b16 %v2133, %v2127
  %v2230 = vpack.c.b16 %v2134, %v2128
  %v2231 = vpack.c.b16 %v2135, %v2129
  %v2232 = vpack.c.b16 %v2136, %v2130
  %v2233 = vpack.c.b16 %v2137, %v2131
  %2330 = vmatprep.subr.bf16.mxu0 %v2139
  %2331 = vmatpush1.bf16.msra.mxu0 %v2138
  %2332 = vmatprep.subr.bf16.mxu0 %v2145
  %2333 = vmatpush1.bf16.msra.mxu0 %v2144
  %2334 = vmatprep.subr.bf16.mxu0 %v2151
  %2335 = vmatpush1.bf16.msra.mxu0 %v2150
  %2336 = vmatprep.subr.bf16.mxu0 %v2157
  %2337 = vmatpush1.bf16.msra.mxu0 %v2156
  %2338 = vmatprep.subr.bf16.mxu0 %v2163
  %2339 = vmatpush1.bf16.msra.mxu0 %v2162
  %2340 = vmatprep.subr.bf16.mxu0 %v2169
  %2341 = vmatpush1.bf16.msra.mxu0 %v2168
  %2342 = vmatprep.subr.bf16.mxu0 %v2175
  %2343 = vmatpush1.bf16.msra.mxu0 %v2174
  %2344 = vmatprep.subr.bf16.mxu0 %v2181
  %2345 = vmatpush1.bf16.msra.mxu0 %v2180
  %2346 = vmatprep.subr.bf16.mxu0 %v2187
  %2347 = vmatpush1.bf16.msra.mxu0 %v2186
  %2348 = vmatprep.subr.bf16.mxu0 %v2193
  %2349 = vmatpush1.bf16.msra.mxu0 %v2192
  %2350 = vmatprep.subr.bf16.mxu0 %v2199
  %2351 = vmatpush1.bf16.msra.mxu0 %v2198
  %2352 = vmatprep.subr.bf16.mxu0 %v2205
  %2353 = vmatpush1.bf16.msra.mxu0 %v2204
  %2354 = vmatprep.subr.bf16.mxu0 %v2211
  %2355 = vmatpush1.bf16.msra.mxu0 %v2210
  %2356 = vmatprep.subr.bf16.mxu0 %v2217
  %2357 = vmatpush1.bf16.msra.mxu0 %v2216
  %2358 = vmatprep.subr.bf16.mxu0 %v2223
  %2359 = vmatpush1.bf16.msra.mxu0 %v2222
  %2360 = vmatprep.subr.bf16.mxu0 %v2229
  %2361 = vmatpush1.bf16.msra.mxu0 %v2228
  %2362 = vmatprep.mubr.bf16.mxu0 %v1818
  %2363 = vmatmul.mubr.bf16.gmra.mrb[0].mxu0 %v1818
  %v2364 = vpop.f32.mrb[0].mxu0
  %v2365 = vadd.f32 %v1823, %v2364
  %v2366 = vpop.f32.mrb[0].mxu0
  %v2367 = vadd.f32 %v1827, %v2366
  %v2368 = vpop.f32.mrb[0].mxu0
  %v2369 = vpop.f32.mrb[0].mxu0
  %2370 = vdwg.mxu0
  %2371 = vmatprep.subr.bf16.mxu0 %v2141
  %2372 = vmatpush1.bf16.msra.mxu0 %v2140
  %2373 = vmatprep.subr.bf16.mxu0 %v2147
  %2374 = vmatpush1.bf16.msra.mxu0 %v2146
  %2375 = vmatprep.subr.bf16.mxu0 %v2153
  %2376 = vmatpush1.bf16.msra.mxu0 %v2152
  %2377 = vmatprep.subr.bf16.mxu0 %v2159
  %2378 = vmatpush1.bf16.msra.mxu0 %v2158
  %2379 = vmatprep.subr.bf16.mxu0 %v2165
  %2380 = vmatpush1.bf16.msra.mxu0 %v2164
  %2381 = vmatprep.subr.bf16.mxu0 %v2171
  %2382 = vmatpush1.bf16.msra.mxu0 %v2170
  %2383 = vmatprep.subr.bf16.mxu0 %v2177
  %2384 = vmatpush1.bf16.msra.mxu0 %v2176
  %2385 = vmatprep.subr.bf16.mxu0 %v2183
  %2386 = vmatpush1.bf16.msra.mxu0 %v2182
  %2387 = vmatprep.subr.bf16.mxu0 %v2189
  %2388 = vmatpush1.bf16.msra.mxu0 %v2188
  %2389 = vmatprep.subr.bf16.mxu0 %v2195
  %2390 = vmatpush1.bf16.msra.mxu0 %v2194
  %2391 = vmatprep.subr.bf16.mxu0 %v2201
  %2392 = vmatpush1.bf16.msra.mxu0 %v2200
  %2393 = vmatprep.subr.bf16.mxu0 %v2207
  %2394 = vmatpush1.bf16.msra.mxu0 %v2206
  %2395 = vmatprep.subr.bf16.mxu0 %v2213
  %2396 = vmatpush1.bf16.msra.mxu0 %v2212
  %2397 = vmatprep.subr.bf16.mxu0 %v2219
  %2398 = vmatpush1.bf16.msra.mxu0 %v2218
  %2399 = vmatprep.subr.bf16.mxu0 %v2225
  %2400 = vmatpush1.bf16.msra.mxu0 %v2224
  %2401 = vmatprep.subr.bf16.mxu0 %v2231
  %2402 = vmatpush1.bf16.msra.mxu0 %v2230
  %2403 = vmatprep.mubr.bf16.mxu0 %v1818
  %2404 = vmatmul.mubr.bf16.gmra.mrb[0].mxu0 %v1818
  %v2405 = vpop.f32.mrb[0].mxu0
  %v2406 = vadd.f32 %v1831, %v2405
  %v2407 = vpop.f32.mrb[0].mxu0
  %v2408 = vadd.f32 %v1835, %v2407
  %v2409 = vpop.f32.mrb[0].mxu0
  %v2410 = vpop.f32.mrb[0].mxu0
  %2411 = vdwg.mxu0
  %2412 = vmatprep.subr.bf16.mxu0 %v2143
  %2413 = vmatpush1.bf16.msra.mxu0 %v2142
  %2414 = vmatprep.subr.bf16.mxu0 %v2149
  %2415 = vmatpush1.bf16.msra.mxu0 %v2148
  %2416 = vmatprep.subr.bf16.mxu0 %v2155
  %2417 = vmatpush1.bf16.msra.mxu0 %v2154
  %2418 = vmatprep.subr.bf16.mxu0 %v2161
  %2419 = vmatpush1.bf16.msra.mxu0 %v2160
  %2420 = vmatprep.subr.bf16.mxu0 %v2167
  %2421 = vmatpush1.bf16.msra.mxu0 %v2166
  %2422 = vmatprep.subr.bf16.mxu0 %v2173
  %2423 = vmatpush1.bf16.msra.mxu0 %v2172
  %2424 = vmatprep.subr.bf16.mxu0 %v2179
  %2425 = vmatpush1.bf16.msra.mxu0 %v2178
  %2426 = vmatprep.subr.bf16.mxu0 %v2185
  %2427 = vmatpush1.bf16.msra.mxu0 %v2184
  %2428 = vmatprep.subr.bf16.mxu0 %v2191
  %2429 = vmatpush1.bf16.msra.mxu0 %v2190
  %2430 = vmatprep.subr.bf16.mxu0 %v2197
  %2431 = vmatpush1.bf16.msra.mxu0 %v2196
  %2432 = vmatprep.subr.bf16.mxu0 %v2203
  %2433 = vmatpush1.bf16.msra.mxu0 %v2202
  %2434 = vmatprep.subr.bf16.mxu0 %v2209
  %2435 = vmatpush1.bf16.msra.mxu0 %v2208
  %2436 = vmatprep.subr.bf16.mxu0 %v2215
  %2437 = vmatpush1.bf16.msra.mxu0 %v2214
  %2438 = vmatprep.subr.bf16.mxu0 %v2221
  %2439 = vmatpush1.bf16.msra.mxu0 %v2220
  %2440 = vmatprep.subr.bf16.mxu0 %v2227
  %2441 = vmatpush1.bf16.msra.mxu0 %v2226
  %2442 = vmatprep.subr.bf16.mxu0 %v2233
  %2443 = vmatpush1.bf16.msra.mxu0 %v2232
  %2444 = vmatprep.mubr.bf16.mxu0 %v1818
  %2445 = vmatmul.mubr.bf16.gmra.mrb[0].mxu0 %v1818
  %v2446 = vpop.f32.mrb[0].mxu0
  %v2447 = vadd.f32 %v1839, %v2446
  %v2448 = vpop.f32.mrb[0].mxu0
  %v2449 = vadd.f32 %v1843, %v2448
  %v2450 = vpop.f32.mrb[0].mxu0
  %v2451 = vpop.f32.mrb[0].mxu0
  %2452 = vdwg.mxu0
  %v2453 = vadd.f32 %v1809, %v2365
  %v2454 = vxor.u32 %v2453, 2147483648
  %v2455 = vmul.f32 %v2454, 1.442695
  %v2456 = vpow.pop %v2455
  %v2457 = vadd.f32 %v2456, 1.0
  %v2458 = vrcp.pop %v2457
  %v2459 = vmul.f32 1.0, %v2458
  %v2460 = vadd.f32 %v1810, %v2367
  %v2461 = vxor.u32 %v2460, 2147483648
  %v2462 = vmul.f32 %v2461, 1.442695
  %v2463 = vpow.pop %v2462
  %v2464 = vadd.f32 %v2463, 1.0
  %v2465 = vrcp.pop %v2464
  %v2466 = vmul.f32 1.0, %v2465
  %v2467 = vmul.f32 %v2459, %v2406
  %v2468 = vadd.f32 %v1811, %v2467
  %v2469 = vtanh.pop %v2468
  %v2470 = vsub.f32 0.0, %v2469
  %v2471 = vmul.f32 %v2466, %v2470
  %v2472 = vadd.f32 %v2469, %v2471
  %v2473 = vadd.f32 %v1815, %v2408
  %v2474 = vxor.u32 %v2473, 2147483648
  %v2475 = vmul.f32 %v2474, 1.442695
  %v2476 = vpow.pop %v2475
  %v2477 = vadd.f32 %v2476, 1.0
  %v2478 = vrcp.pop %v2477
  %v2479 = vmul.f32 1.0, %v2478
  %v2480 = vadd.f32 %v1816, %v2447
  %v2481 = vxor.u32 %v2480, 2147483648
  %v2482 = vmul.f32 %v2481, 1.442695
  %v2483 = vpow.pop %v2482
  %v2484 = vadd.f32 %v2483, 1.0
  %v2485 = vrcp.pop %v2484
  %v2486 = vmul.f32 1.0, %v2485
  %v2487 = vmul.f32 %v2479, %v2449
  %v2488 = vadd.f32 %v1817, %v2487
  %v2489 = vtanh.pop %v2488
  %v2490 = vsub.f32 0.0, %v2489
  %v2491 = vmul.f32 %v2486, %v2490
  %v2492 = vadd.f32 %v2489, %v2491
  %v2493 = vrot.slane %v2472, 4
  %v2494 = vmax.f32 %v2472, %v2493
  %v2495 = vrot.slane %v2494, 2
  %v2496 = vmax.f32 %v2494, %v2495
  %v2497 = vrot.slane %v2496, 1
  %v2498 = vmax.f32 %v2496, %v2497
  %2499 = vst [vmem:[#allocation3] sm:$0x1] %v2498
  %v2500 = vrot.slane %v2492, 4
  %v2501 = vmax.f32 %v2492, %v2500
  %v2502 = vrot.slane %v2501, 2
  %v2503 = vmax.f32 %v2501, %v2502
  %v2504 = vrot.slane %v2503, 1
  %v2505 = vmax.f32 %v2503, %v2504
  %2506 = vst [vmem:[#allocation3 + $0x1f] sm:$0x1] %v2505
  %s2507 = smul.u32 1, 6
  %s2508 = smul.addr %s2507, 8
  %s2509 = scalar_lea.vmem [#allocation2], %s2508
  %v2510 = vld [vmem:[%s2509] sm:$0xff]
  %v2511 = vld [vmem:[%s2509 + $0x8] sm:$0xff]
  %v2512 = vld [vmem:[%s2509 + $0x10] sm:$0xff]
  %s2513 = smul.u32 14, 6
  %s2514 = smul.addr %s2513, 8
  %s2515 = scalar_lea.vmem [#allocation2], %s2514
  %v2516 = vld [vmem:[%s2515 + $0x18] sm:$0xff]
  %v2517 = vld [vmem:[%s2515 + $0x20] sm:$0xff]
  %v2518 = vld [vmem:[%s2515 + $0x28] sm:$0xff]
  %v2519 = vpack.c.bf16 %v2472, %v2472
  %v2520 = vpack.c.bf16 %v2492, %v2492
  %2521 = vmatprep.subr.bf16.mxu0 %v2139
  %2522 = vmatpush1.bf16.msra.mxu0 %v2138
  %2523 = vmatprep.subr.bf16.mxu0 %v2145
  %2524 = vmatpush1.bf16.msra.mxu0 %v2144
  %2525 = vmatprep.subr.bf16.mxu0 %v2151
  %2526 = vmatpush1.bf16.msra.mxu0 %v2150
  %2527 = vmatprep.subr.bf16.mxu0 %v2157
  %2528 = vmatpush1.bf16.msra.mxu0 %v2156
  %2529 = vmatprep.subr.bf16.mxu0 %v2163
  %2530 = vmatpush1.bf16.msra.mxu0 %v2162
  %2531 = vmatprep.subr.bf16.mxu0 %v2169
  %2532 = vmatpush1.bf16.msra.mxu0 %v2168
  %2533 = vmatprep.subr.bf16.mxu0 %v2175
  %2534 = vmatpush1.bf16.msra.mxu0 %v2174
  %2535 = vmatprep.subr.bf16.mxu0 %v2181
  %2536 = vmatpush1.bf16.msra.mxu0 %v2180
  %2537 = vmatprep.subr.bf16.mxu0 %v2187
  %2538 = vmatpush1.bf16.msra.mxu0 %v2186
  %2539 = vmatprep.subr.bf16.mxu0 %v2193
  %2540 = vmatpush1.bf16.msra.mxu0 %v2192
  %2541 = vmatprep.subr.bf16.mxu0 %v2199
  %2542 = vmatpush1.bf16.msra.mxu0 %v2198
  %2543 = vmatprep.subr.bf16.mxu0 %v2205
  %2544 = vmatpush1.bf16.msra.mxu0 %v2204
  %2545 = vmatprep.subr.bf16.mxu0 %v2211
  %2546 = vmatpush1.bf16.msra.mxu0 %v2210
  %2547 = vmatprep.subr.bf16.mxu0 %v2217
  %2548 = vmatpush1.bf16.msra.mxu0 %v2216
  %2549 = vmatprep.subr.bf16.mxu0 %v2223
  %2550 = vmatpush1.bf16.msra.mxu0 %v2222
  %2551 = vmatprep.subr.bf16.mxu0 %v2229
  %2552 = vmatpush1.bf16.msra.mxu0 %v2228
  %2553 = vmatprep.mubr.bf16.mxu0 %v2520
  %2554 = vmatmul.mubr.bf16.gmra.mrb[0].mxu0 %v2519
  %v2555 = vpop.f32.mrb[0].mxu0
  %v2556 = vadd.f32 %v1823, %v2555
  %v2557 = vpop.f32.mrb[0].mxu0
  %v2558 = vadd.f32 %v1827, %v2557
  %v2559 = vpop.f32.mrb[0].mxu0
  %v2560 = vpop.f32.mrb[0].mxu0
  %2561 = vdwg.mxu0
  %2562 = vmatprep.subr.bf16.mxu0 %v2141
  %2563 = vmatpush1.bf16.msra.mxu0 %v2140
  %2564 = vmatprep.subr.bf16.mxu0 %v2147
  %2565 = vmatpush1.bf16.msra.mxu0 %v2146
  %2566 = vmatprep.subr.bf16.mxu0 %v2153
  %2567 = vmatpush1.bf16.msra.mxu0 %v2152
  %2568 = vmatprep.subr.bf16.mxu0 %v2159
  %2569 = vmatpush1.bf16.msra.mxu0 %v2158
  %2570 = vmatprep.subr.bf16.mxu0 %v2165
  %2571 = vmatpush1.bf16.msra.mxu0 %v2164
  %2572 = vmatprep.subr.bf16.mxu0 %v2171
  %2573 = vmatpush1.bf16.msra.mxu0 %v2170
  %2574 = vmatprep.subr.bf16.mxu0 %v2177
  %2575 = vmatpush1.bf16.msra.mxu0 %v2176
  %2576 = vmatprep.subr.bf16.mxu0 %v2183
  %2577 = vmatpush1.bf16.msra.mxu0 %v2182
  %2578 = vmatprep.subr.bf16.mxu0 %v2189
  %2579 = vmatpush1.bf16.msra.mxu0 %v2188
  %2580 = vmatprep.subr.bf16.mxu0 %v2195
  %2581 = vmatpush1.bf16.msra.mxu0 %v2194
  %2582 = vmatprep.subr.bf16.mxu0 %v2201
  %2583 = vmatpush1.bf16.msra.mxu0 %v2200
  %2584 = vmatprep.subr.bf16.mxu0 %v2207
  %2585 = vmatpush1.bf16.msra.mxu0 %v2206
  %2586 = vmatprep.subr.bf16.mxu0 %v2213
  %2587 = vmatpush1.bf16.msra.mxu0 %v2212
  %2588 = vmatprep.subr.bf16.mxu0 %v2219
  %2589 = vmatpush1.bf16.msra.mxu0 %v2218
  %2590 = vmatprep.subr.bf16.mxu0 %v2225
  %2591 = vmatpush1.bf16.msra.mxu0 %v2224
  %2592 = vmatprep.subr.bf16.mxu0 %v2231
  %2593 = vmatpush1.bf16.msra.mxu0 %v2230
  %2594 = vmatprep.mubr.bf16.mxu0 %v2520
  %2595 = vmatmul.mubr.bf16.gmra.mrb[0].mxu0 %v2519
  %v2596 = vpop.f32.mrb[0].mxu0
  %v2597 = vadd.f32 %v1831, %v2596
  %v2598 = vpop.f32.mrb[0].mxu0
  %v2599 = vadd.f32 %v1835, %v2598
  %v2600 = vpop.f32.mrb[0].mxu0
  %v2601 = vpop.f32.mrb[0].mxu0
  %2602 = vdwg.mxu0
  %2603 = vmatprep.subr.bf16.mxu0 %v2143
  %2604 = vmatpush1.bf16.msra.mxu0 %v2142
  %2605 = vmatprep.subr.bf16.mxu0 %v2149
  %2606 = vmatpush1.bf16.msra.mxu0 %v2148
  %2607 = vmatprep.subr.bf16.mxu0 %v2155
  %2608 = vmatpush1.bf16.msra.mxu0 %v2154
  %2609 = vmatprep.subr.bf16.mxu0 %v2161
  %2610 = vmatpush1.bf16.msra.mxu0 %v2160
  %2611 = vmatprep.subr.bf16.mxu0 %v2167
  %2612 = vmatpush1.bf16.msra.mxu0 %v2166
  %2613 = vmatprep.subr.bf16.mxu0 %v2173
  %2614 = vmatpush1.bf16.msra.mxu0 %v2172
  %2615 = vmatprep.subr.bf16.mxu0 %v2179
  %2616 = vmatpush1.bf16.msra.mxu0 %v2178
  %2617 = vmatprep.subr.bf16.mxu0 %v2185
  %2618 = vmatpush1.bf16.msra.mxu0 %v2184
  %2619 = vmatprep.subr.bf16.mxu0 %v2191
  %2620 = vmatpush1.bf16.msra.mxu0 %v2190
  %2621 = vmatprep.subr.bf16.mxu0 %v2197
  %2622 = vmatpush1.bf16.msra.mxu0 %v2196
  %2623 = vmatprep.subr.bf16.mxu0 %v2203
  %2624 = vmatpush1.bf16.msra.mxu0 %v2202
  %2625 = vmatprep.subr.bf16.mxu0 %v2209
  %2626 = vmatpush1.bf16.msra.mxu0 %v2208
  %2627 = vmatprep.subr.bf16.mxu0 %v2215
  %2628 = vmatpush1.bf16.msra.mxu0 %v2214
  %2629 = vmatprep.subr.bf16.mxu0 %v2221
  %2630 = vmatpush1.bf16.msra.mxu0 %v2220
  %2631 = vmatprep.subr.bf16.mxu0 %v2227
  %2632 = vmatpush1.bf16.msra.mxu0 %v2226
  %2633 = vmatprep.subr.bf16.mxu0 %v2233
  %2634 = vmatpush1.bf16.msra.mxu0 %v2232
  %2635 = vmatprep.mubr.bf16.mxu0 %v2520
  %2636 = vmatmul.mubr.bf16.gmra.mrb[0].mxu0 %v2519
  %v2637 = vpop.f32.mrb[0].mxu0
  %v2638 = vadd.f32 %v1839, %v2637
  %v2639 = vpop.f32.mrb[0].mxu0
  %v2640 = vadd.f32 %v1843, %v2639
  %v2641 = vpop.f32.mrb[0].mxu0
  %v2642 = vpop.f32.mrb[0].mxu0
  %2643 = vdwg.mxu0
  %v2644 = vadd.f32 %v2510, %v2556
  %v2645 = vxor.u32 %v2644, 2147483648
  %v2646 = vmul.f32 %v2645, 1.442695
  %v2647 = vpow.pop %v2646
  %v2648 = vadd.f32 %v2647, 1.0
  %v2649 = vrcp.pop %v2648
  %v2650 = vmul.f32 1.0, %v2649
  %v2651 = vadd.f32 %v2511, %v2558
  %v2652 = vxor.u32 %v2651, 2147483648
  %v2653 = vmul.f32 %v2652, 1.442695
  %v2654 = vpow.pop %v2653
  %v2655 = vadd.f32 %v2654, 1.0
  %v2656 = vrcp.pop %v2655
  %v2657 = vmul.f32 1.0, %v2656
  %v2658 = vmul.f32 %v2650, %v2597
  %v2659 = vadd.f32 %v2512, %v2658
  %v2660 = vtanh.pop %v2659
  %v2661 = vsub.f32 %v2472, %v2660
  %v2662 = vmul.f32 %v2657, %v2661
  %v2663 = vadd.f32 %v2660, %v2662
  %v2664 = vadd.f32 %v2516, %v2599
  %v2665 = vxor.u32 %v2664, 2147483648
  %v2666 = vmul.f32 %v2665, 1.442695
  %v2667 = vpow.pop %v2666
  %v2668 = vadd.f32 %v2667, 1.0
  %v2669 = vrcp.pop %v2668
  %v2670 = vmul.f32 1.0, %v2669
  %v2671 = vadd.f32 %v2517, %v2638
  %v2672 = vxor.u32 %v2671, 2147483648
  %v2673 = vmul.f32 %v2672, 1.442695
  %v2674 = vpow.pop %v2673
  %v2675 = vadd.f32 %v2674, 1.0
  %v2676 = vrcp.pop %v2675
  %v2677 = vmul.f32 1.0, %v2676
  %v2678 = vmul.f32 %v2670, %v2640
  %v2679 = vadd.f32 %v2518, %v2678
  %v2680 = vtanh.pop %v2679
  %v2681 = vsub.f32 %v2492, %v2680
  %v2682 = vmul.f32 %v2677, %v2681
  %v2683 = vadd.f32 %v2680, %v2682
  %v2684 = vrot.slane %v2663, 4
  %v2685 = vmax.f32 %v2663, %v2684
  %v2686 = vrot.slane %v2685, 2
  %v2687 = vmax.f32 %v2685, %v2686
  %v2688 = vrot.slane %v2687, 1
  %v2689 = vmax.f32 %v2687, %v2688
  %2690 = vst [vmem:[#allocation3 + $0x1] sm:$0x1] %v2689
  %v2691 = vrot.slane %v2683, 4
  %v2692 = vmax.f32 %v2683, %v2691
  %v2693 = vrot.slane %v2692, 2
  %v2694 = vmax.f32 %v2692, %v2693
  %v2695 = vrot.slane %v2694, 1
  %v2696 = vmax.f32 %v2694, %v2695
  %2697 = vst [vmem:[#allocation3 + $0x1e] sm:$0x1] %v2696
  %s2698 = smul.u32 2, 6
  %s2699 = smul.addr %s2698, 8
  %s2700 = scalar_lea.vmem [#allocation2], %s2699
  %v2701 = vld [vmem:[%s2700] sm:$0xff]
  %v2702 = vld [vmem:[%s2700 + $0x8] sm:$0xff]
  %v2703 = vld [vmem:[%s2700 + $0x10] sm:$0xff]
  %s2704 = smul.u32 13, 6
  %s2705 = smul.addr %s2704, 8
  %s2706 = scalar_lea.vmem [#allocation2], %s2705
  %v2707 = vld [vmem:[%s2706 + $0x18] sm:$0xff]
  %v2708 = vld [vmem:[%s2706 + $0x20] sm:$0xff]
  %v2709 = vld [vmem:[%s2706 + $0x28] sm:$0xff]
  %v2710 = vpack.c.bf16 %v2663, %v2663
  %v2711 = vpack.c.bf16 %v2683, %v2683
  %2712 = vmatprep.subr.bf16.mxu0 %v2139
  %2713 = vmatpush1.bf16.msra.mxu0 %v2138
  %2714 = vmatprep.subr.bf16.mxu0 %v2145
  %2715 = vmatpush1.bf16.msra.mxu0 %v2144
  %2716 = vmatprep.subr.bf16.mxu0 %v2151
  %2717 = vmatpush1.bf16.msra.mxu0 %v2150
  %2718 = vmatprep.subr.bf16.mxu0 %v2157
  %2719 = vmatpush1.bf16.msra.mxu0 %v2156
  %2720 = vmatprep.subr.bf16.mxu0 %v2163
  %2721 = vmatpush1.bf16.msra.mxu0 %v2162
  %2722 = vmatprep.subr.bf16.mxu0 %v2169
  %2723 = vmatpush1.bf16.msra.mxu0 %v2168
  %2724 = vmatprep.subr.bf16.mxu0 %v2175
  %2725 = vmatpush1.bf16.msra.mxu0 %v2174
  %2726 = vmatprep.subr.bf16.mxu0 %v2181
  %2727 = vmatpush1.bf16.msra.mxu0 %v2180
  %2728 = vmatprep.subr.bf16.mxu0 %v2187
  %2729 = vmatpush1.bf16.msra.mxu0 %v2186
  %2730 = vmatprep.subr.bf16.mxu0 %v2193
  %2731 = vmatpush1.bf16.msra.mxu0 %v2192
  %2732 = vmatprep.subr.bf16.mxu0 %v2199
  %2733 = vmatpush1.bf16.msra.mxu0 %v2198
  %2734 = vmatprep.subr.bf16.mxu0 %v2205
  %2735 = vmatpush1.bf16.msra.mxu0 %v2204
  %2736 = vmatprep.subr.bf16.mxu0 %v2211
  %2737 = vmatpush1.bf16.msra.mxu0 %v2210
  %2738 = vmatprep.subr.bf16.mxu0 %v2217
  %2739 = vmatpush1.bf16.msra.mxu0 %v2216
  %2740 = vmatprep.subr.bf16.mxu0 %v2223
  %2741 = vmatpush1.bf16.msra.mxu0 %v2222
  %2742 = vmatprep.subr.bf16.mxu0 %v2229
  %2743 = vmatpush1.bf16.msra.mxu0 %v2228
  %2744 = vmatprep.mubr.bf16.mxu0 %v2711
  %2745 = vmatmul.mubr.bf16.gmra.mrb[0].mxu0 %v2710
  %v2746 = vpop.f32.mrb[0].mxu0
  %v2747 = vadd.f32 %v1823, %v2746
  %v2748 = vpop.f32.mrb[0].mxu0
  %v2749 = vadd.f32 %v1827, %v2748
  %v2750 = vpop.f32.mrb[0].mxu0
  %v2751 = vpop.f32.mrb[0].mxu0
  %2752 = vdwg.mxu0
  %2753 = vmatprep.subr.bf16.mxu0 %v2141
  %2754 = vmatpush1.bf16.msra.mxu0 %v2140
  %2755 = vmatprep.subr.bf16.mxu0 %v2147
  %2756 = vmatpush1.bf16.msra.mxu0 %v2146
  %2757 = vmatprep.subr.bf16.mxu0 %v2153
  %2758 = vmatpush1.bf16.msra.mxu0 %v2152
  %2759 = vmatprep.subr.bf16.mxu0 %v2159
  %2760 = vmatpush1.bf16.msra.mxu0 %v2158
  %2761 = vmatprep.subr.bf16.mxu0 %v2165
  %2762 = vmatpush1.bf16.msra.mxu0 %v2164
  %2763 = vmatprep.subr.bf16.mxu0 %v2171
  %2764 = vmatpush1.bf16.msra.mxu0 %v2170
  %2765 = vmatprep.subr.bf16.mxu0 %v2177
  %2766 = vmatpush1.bf16.msra.mxu0 %v2176
  %2767 = vmatprep.subr.bf16.mxu0 %v2183
  %2768 = vmatpush1.bf16.msra.mxu0 %v2182
  %2769 = vmatprep.subr.bf16.mxu0 %v2189
  %2770 = vmatpush1.bf16.msra.mxu0 %v2188
  %2771 = vmatprep.subr.bf16.mxu0 %v2195
  %2772 = vmatpush1.bf16.msra.mxu0 %v2194
  %2773 = vmatprep.subr.bf16.mxu0 %v2201
  %2774 = vmatpush1.bf16.msra.mxu0 %v2200
  %2775 = vmatprep.subr.bf16.mxu0 %v2207
  %2776 = vmatpush1.bf16.msra.mxu0 %v2206
  %2777 = vmatprep.subr.bf16.mxu0 %v2213
  %2778 = vmatpush1.bf16.msra.mxu0 %v2212
  %2779 = vmatprep.subr.bf16.mxu0 %v2219
  %2780 = vmatpush1.bf16.msra.mxu0 %v2218
  %2781 = vmatprep.subr.bf16.mxu0 %v2225
  %2782 = vmatpush1.bf16.msra.mxu0 %v2224
  %2783 = vmatprep.subr.bf16.mxu0 %v2231
  %2784 = vmatpush1.bf16.msra.mxu0 %v2230
  %2785 = vmatprep.mubr.bf16.mxu0 %v2711
  %2786 = vmatmul.mubr.bf16.gmra.mrb[0].mxu0 %v2710
  %v2787 = vpop.f32.mrb[0].mxu0
  %v2788 = vadd.f32 %v1831, %v2787
  %v2789 = vpop.f32.mrb[0].mxu0
  %v2790 = vadd.f32 %v1835, %v2789
  %v2791 = vpop.f32.mrb[0].mxu0
  %v2792 = vpop.f32.mrb[0].mxu0
  %2793 = vdwg.mxu0
  %2794 = vmatprep.subr.bf16.mxu0 %v2143
  %2795 = vmatpush1.bf16.msra.mxu0 %v2142
  %2796 = vmatprep.subr.bf16.mxu0 %v2149
  %2797 = vmatpush1.bf16.msra.mxu0 %v2148
  %2798 = vmatprep.subr.bf16.mxu0 %v2155
  %2799 = vmatpush1.bf16.msra.mxu0 %v2154
  %2800 = vmatprep.subr.bf16.mxu0 %v2161
  %2801 = vmatpush1.bf16.msra.mxu0 %v2160
  %2802 = vmatprep.subr.bf16.mxu0 %v2167
  %2803 = vmatpush1.bf16.msra.mxu0 %v2166
  %2804 = vmatprep.subr.bf16.mxu0 %v2173
  %2805 = vmatpush1.bf16.msra.mxu0 %v2172
  %2806 = vmatprep.subr.bf16.mxu0 %v2179
  %2807 = vmatpush1.bf16.msra.mxu0 %v2178
  %2808 = vmatprep.subr.bf16.mxu0 %v2185
  %2809 = vmatpush1.bf16.msra.mxu0 %v2184
  %2810 = vmatprep.subr.bf16.mxu0 %v2191
  %2811 = vmatpush1.bf16.msra.mxu0 %v2190
  %2812 = vmatprep.subr.bf16.mxu0 %v2197
  %2813 = vmatpush1.bf16.msra.mxu0 %v2196
  %2814 = vmatprep.subr.bf16.mxu0 %v2203
  %2815 = vmatpush1.bf16.msra.mxu0 %v2202
  %2816 = vmatprep.subr.bf16.mxu0 %v2209
  %2817 = vmatpush1.bf16.msra.mxu0 %v2208
  %2818 = vmatprep.subr.bf16.mxu0 %v2215
  %2819 = vmatpush1.bf16.msra.mxu0 %v2214
  %2820 = vmatprep.subr.bf16.mxu0 %v2221
  %2821 = vmatpush1.bf16.msra.mxu0 %v2220
  %2822 = vmatprep.subr.bf16.mxu0 %v2227
  %2823 = vmatpush1.bf16.msra.mxu0 %v2226
  %2824 = vmatprep.subr.bf16.mxu0 %v2233
  %2825 = vmatpush1.bf16.msra.mxu0 %v2232
  %2826 = vmatprep.mubr.bf16.mxu0 %v2711
  %2827 = vmatmul.mubr.bf16.gmra.mrb[0].mxu0 %v2710
  %v2828 = vpop.f32.mrb[0].mxu0
  %v2829 = vadd.f32 %v1839, %v2828
  %v2830 = vpop.f32.mrb[0].mxu0
  %v2831 = vadd.f32 %v1843, %v2830
  %v2832 = vpop.f32.mrb[0].mxu0
  %v2833 = vpop.f32.mrb[0].mxu0
  %2834 = vdwg.mxu0
  %v2835 = vadd.f32 %v2701, %v2747
  %v2836 = vxor.u32 %v2835, 2147483648
  %v2837 = vmul.f32 %v2836, 1.442695
  %v2838 = vpow.pop %v2837
  %v2839 = vadd.f32 %v2838, 1.0
  %v2840 = vrcp.pop %v2839
  %v2841 = vmul.f32 1.0, %v2840
  %v2842 = vadd.f32 %v2702, %v2749
  %v2843 = vxor.u32 %v2842, 2147483648
  %v2844 = vmul.f32 %v2843, 1.442695
  %v2845 = vpow.pop %v2844
  %v2846 = vadd.f32 %v2845, 1.0
  %v2847 = vrcp.pop %v2846
  %v2848 = vmul.f32 1.0, %v2847
  %v2849 = vmul.f32 %v2841, %v2788
  %v2850 = vadd.f32 %v2703, %v2849
  %v2851 = vtanh.pop %v2850
  %v2852 = vsub.f32 %v2663, %v2851
  %v2853 = vmul.f32 %v2848, %v2852
  %v2854 = vadd.f32 %v2851, %v2853
  %v2855 = vadd.f32 %v2707, %v2790
  %v2856 = vxor.u32 %v2855, 2147483648
  %v2857 = vmul.f32 %v2856, 1.442695
  %v2858 = vpow.pop %v2857
  %v2859 = vadd.f32 %v2858, 1.0
  %v2860 = vrcp.pop %v2859
  %v2861 = vmul.f32 1.0, %v2860
  %v2862 = vadd.f32 %v2708, %v2829
  %v2863 = vxor.u32 %v2862, 2147483648
  %v2864 = vmul.f32 %v2863, 1.442695
  %v2865 = vpow.pop %v2864
  %v2866 = vadd.f32 %v2865, 1.0
  %v2867 = vrcp.pop %v2866
  %v2868 = vmul.f32 1.0, %v2867
  %v2869 = vmul.f32 %v2861, %v2831
  %v2870 = vadd.f32 %v2709, %v2869
  %v2871 = vtanh.pop %v2870
  %v2872 = vsub.f32 %v2683, %v2871
  %v2873 = vmul.f32 %v2868, %v2872
  %v2874 = vadd.f32 %v2871, %v2873
  %v2875 = vrot.slane %v2854, 4
  %v2876 = vmax.f32 %v2854, %v2875
  %v2877 = vrot.slane %v2876, 2
  %v2878 = vmax.f32 %v2876, %v2877
  %v2879 = vrot.slane %v2878, 1
  %v2880 = vmax.f32 %v2878, %v2879
  %2881 = vst [vmem:[#allocation3 + $0x2] sm:$0x1] %v2880
  %v2882 = vrot.slane %v2874, 4
  %v2883 = vmax.f32 %v2874, %v2882
  %v2884 = vrot.slane %v2883, 2
  %v2885 = vmax.f32 %v2883, %v2884
  %v2886 = vrot.slane %v2885, 1
  %v2887 = vmax.f32 %v2885, %v2886
  %2888 = vst [vmem:[#allocation3 + $0x1d] sm:$0x1] %v2887
  %s2889 = smul.u32 3, 6
  %s2890 = smul.addr %s2889, 8
  %s2891 = scalar_lea.vmem [#allocation2], %s2890
  %v2892 = vld [vmem:[%s2891] sm:$0xff]
  %v2893 = vld [vmem:[%s2891 + $0x8] sm:$0xff]
  %v2894 = vld [vmem:[%s2891 + $0x10] sm:$0xff]
  %s2895 = smul.u32 12, 6
  %s2896 = smul.addr %s2895, 8
  %s2897 = scalar_lea.vmem [#allocation2], %s2896
  %v2898 = vld [vmem:[%s2897 + $0x18] sm:$0xff]
  %v2899 = vld [vmem:[%s2897 + $0x20] sm:$0xff]
  %v2900 = vld [vmem:[%s2897 + $0x28] sm:$0xff]
  %v2901 = vpack.c.bf16 %v2854, %v2854
  %v2902 = vpack.c.bf16 %v2874, %v2874
  %2903 = vmatprep.subr.bf16.mxu0 %v2139
  %2904 = vmatpush1.bf16.msra.mxu0 %v2138
  %2905 = vmatprep.subr.bf16.mxu0 %v2145
  %2906 = vmatpush1.bf16.msra.mxu0 %v2144
  %2907 = vmatprep.subr.bf16.mxu0 %v2151
  %2908 = vmatpush1.bf16.msra.mxu0 %v2150
  %2909 = vmatprep.subr.bf16.mxu0 %v2157
  %2910 = vmatpush1.bf16.msra.mxu0 %v2156
  %2911 = vmatprep.subr.bf16.mxu0 %v2163
  %2912 = vmatpush1.bf16.msra.mxu0 %v2162
  %2913 = vmatprep.subr.bf16.mxu0 %v2169
  %2914 = vmatpush1.bf16.msra.mxu0 %v2168
  %2915 = vmatprep.subr.bf16.mxu0 %v2175
  %2916 = vmatpush1.bf16.msra.mxu0 %v2174
  %2917 = vmatprep.subr.bf16.mxu0 %v2181
  %2918 = vmatpush1.bf16.msra.mxu0 %v2180
  %2919 = vmatprep.subr.bf16.mxu0 %v2187
  %2920 = vmatpush1.bf16.msra.mxu0 %v2186
  %2921 = vmatprep.subr.bf16.mxu0 %v2193
  %2922 = vmatpush1.bf16.msra.mxu0 %v2192
  %2923 = vmatprep.subr.bf16.mxu0 %v2199
  %2924 = vmatpush1.bf16.msra.mxu0 %v2198
  %2925 = vmatprep.subr.bf16.mxu0 %v2205
  %2926 = vmatpush1.bf16.msra.mxu0 %v2204
  %2927 = vmatprep.subr.bf16.mxu0 %v2211
  %2928 = vmatpush1.bf16.msra.mxu0 %v2210
  %2929 = vmatprep.subr.bf16.mxu0 %v2217
  %2930 = vmatpush1.bf16.msra.mxu0 %v2216
  %2931 = vmatprep.subr.bf16.mxu0 %v2223
  %2932 = vmatpush1.bf16.msra.mxu0 %v2222
  %2933 = vmatprep.subr.bf16.mxu0 %v2229
  %2934 = vmatpush1.bf16.msra.mxu0 %v2228
  %2935 = vmatprep.mubr.bf16.mxu0 %v2902
  %2936 = vmatmul.mubr.bf16.gmra.mrb[0].mxu0 %v2901
  %v2937 = vpop.f32.mrb[0].mxu0
  %v2938 = vadd.f32 %v1823, %v2937
  %v2939 = vpop.f32.mrb[0].mxu0
  %v2940 = vadd.f32 %v1827, %v2939
  %v2941 = vpop.f32.mrb[0].mxu0
  %v2942 = vpop.f32.mrb[0].mxu0
  %2943 = vdwg.mxu0
  %2944 = vmatprep.subr.bf16.mxu0 %v2141
  %2945 = vmatpush1.bf16.msra.mxu0 %v2140
  %2946 = vmatprep.subr.bf16.mxu0 %v2147
  %2947 = vmatpush1.bf16.msra.mxu0 %v2146
  %2948 = vmatprep.subr.bf16.mxu0 %v2153
  %2949 = vmatpush1.bf16.msra.mxu0 %v2152
  %2950 = vmatprep.subr.bf16.mxu0 %v2159
  %2951 = vmatpush1.bf16.msra.mxu0 %v2158
  %2952 = vmatprep.subr.bf16.mxu0 %v2165
  %2953 = vmatpush1.bf16.msra.mxu0 %v2164
  %2954 = vmatprep.subr.bf16.mxu0 %v2171
  %2955 = vmatpush1.bf16.msra.mxu0 %v2170
  %2956 = vmatprep.subr.bf16.mxu0 %v2177
  %2957 = vmatpush1.bf16.msra.mxu0 %v2176
  %2958 = vmatprep.subr.bf16.mxu0 %v2183
  %2959 = vmatpush1.bf16.msra.mxu0 %v2182
  %2960 = vmatprep.subr.bf16.mxu0 %v2189
  %2961 = vmatpush1.bf16.msra.mxu0 %v2188
  %2962 = vmatprep.subr.bf16.mxu0 %v2195
  %2963 = vmatpush1.bf16.msra.mxu0 %v2194
  %2964 = vmatprep.subr.bf16.mxu0 %v2201
  %2965 = vmatpush1.bf16.msra.mxu0 %v2200
  %2966 = vmatprep.subr.bf16.mxu0 %v2207
  %2967 = vmatpush1.bf16.msra.mxu0 %v2206
  %2968 = vmatprep.subr.bf16.mxu0 %v2213
  %2969 = vmatpush1.bf16.msra.mxu0 %v2212
  %2970 = vmatprep.subr.bf16.mxu0 %v2219
  %2971 = vmatpush1.bf16.msra.mxu0 %v2218
  %2972 = vmatprep.subr.bf16.mxu0 %v2225
  %2973 = vmatpush1.bf16.msra.mxu0 %v2224
  %2974 = vmatprep.subr.bf16.mxu0 %v2231
  %2975 = vmatpush1.bf16.msra.mxu0 %v2230
  %2976 = vmatprep.mubr.bf16.mxu0 %v2902
  %2977 = vmatmul.mubr.bf16.gmra.mrb[0].mxu0 %v2901
  %v2978 = vpop.f32.mrb[0].mxu0
  %v2979 = vadd.f32 %v1831, %v2978
  %v2980 = vpop.f32.mrb[0].mxu0
  %v2981 = vadd.f32 %v1835, %v2980
  %v2982 = vpop.f32.mrb[0].mxu0
  %v2983 = vpop.f32.mrb[0].mxu0
  %2984 = vdwg.mxu0
  %2985 = vmatprep.subr.bf16.mxu0 %v2143
  %2986 = vmatpush1.bf16.msra.mxu0 %v2142
  %2987 = vmatprep.subr.bf16.mxu0 %v2149
  %2988 = vmatpush1.bf16.msra.mxu0 %v2148
  %2989 = vmatprep.subr.bf16.mxu0 %v2155
  %2990 = vmatpush1.bf16.msra.mxu0 %v2154
  %2991 = vmatprep.subr.bf16.mxu0 %v2161
  %2992 = vmatpush1.bf16.msra.mxu0 %v2160
  %2993 = vmatprep.subr.bf16.mxu0 %v2167
  %2994 = vmatpush1.bf16.msra.mxu0 %v2166
  %2995 = vmatprep.subr.bf16.mxu0 %v2173
  %2996 = vmatpush1.bf16.msra.mxu0 %v2172
  %2997 = vmatprep.subr.bf16.mxu0 %v2179
  %2998 = vmatpush1.bf16.msra.mxu0 %v2178
  %2999 = vmatprep.subr.bf16.mxu0 %v2185
  %3000 = vmatpush1.bf16.msra.mxu0 %v2184
  %3001 = vmatprep.subr.bf16.mxu0 %v2191
  %3002 = vmatpush1.bf16.msra.mxu0 %v2190
  %3003 = vmatprep.subr.bf16.mxu0 %v2197
  %3004 = vmatpush1.bf16.msra.mxu0 %v2196
  %3005 = vmatprep.subr.bf16.mxu0 %v2203
  %3006 = vmatpush1.bf16.msra.mxu0 %v2202
  %3007 = vmatprep.subr.bf16.mxu0 %v2209
  %3008 = vmatpush1.bf16.msra.mxu0 %v2208
  %3009 = vmatprep.subr.bf16.mxu0 %v2215
  %3010 = vmatpush1.bf16.msra.mxu0 %v2214
  %3011 = vmatprep.subr.bf16.mxu0 %v2221
  %3012 = vmatpush1.bf16.msra.mxu0 %v2220
  %3013 = vmatprep.subr.bf16.mxu0 %v2227
  %3014 = vmatpush1.bf16.msra.mxu0 %v2226
  %3015 = vmatprep.subr.bf16.mxu0 %v2233
  %3016 = vmatpush1.bf16.msra.mxu0 %v2232
  %3017 = vmatprep.mubr.bf16.mxu0 %v2902
  %3018 = vmatmul.mubr.bf16.gmra.mrb[0].mxu0 %v2901
  %v3019 = vpop.f32.mrb[0].mxu0
  %v3020 = vadd.f32 %v1839, %v3019
  %v3021 = vpop.f32.mrb[0].mxu0
  %v3022 = vadd.f32 %v1843, %v3021
  %v3023 = vpop.f32.mrb[0].mxu0
  %v3024 = vpop.f32.mrb[0].mxu0
  %3025 = vdwg.mxu0
  %v3026 = vadd.f32 %v2892, %v2938
  %v3027 = vxor.u32 %v3026, 2147483648
  %v3028 = vmul.f32 %v3027, 1.442695
  %v3029 = vpow.pop %v3028
  %v3030 = vadd.f32 %v3029, 1.0
  %v3031 = vrcp.pop %v3030
  %v3032 = vmul.f32 1.0, %v3031
  %v3033 = vadd.f32 %v2893, %v2940
  %v3034 = vxor.u32 %v3033, 2147483648
  %v3035 = vmul.f32 %v3034, 1.442695
  %v3036 = vpow.pop %v3035
  %v3037 = vadd.f32 %v3036, 1.0
  %v3038 = vrcp.pop %v3037
  %v3039 = vmul.f32 1.0, %v3038
  %v3040 = vmul.f32 %v3032, %v2979
  %v3041 = vadd.f32 %v2894, %v3040
  %v3042 = vtanh.pop %v3041
  %v3043 = vsub.f32 %v2854, %v3042
  %v3044 = vmul.f32 %v3039, %v3043
  %v3045 = vadd.f32 %v3042, %v3044
  %v3046 = vadd.f32 %v2898, %v2981
  %v3047 = vxor.u32 %v3046, 2147483648
  %v3048 = vmul.f32 %v3047, 1.442695
  %v3049 = vpow.pop %v3048
  %v3050 = vadd.f32 %v3049, 1.0
  %v3051 = vrcp.pop %v3050
  %v3052 = vmul.f32 1.0, %v3051
  %v3053 = vadd.f32 %v2899, %v3020
  %v3054 = vxor.u32 %v3053, 2147483648
  %v3055 = vmul.f32 %v3054, 1.442695
  %v3056 = vpow.pop %v3055
  %v3057 = vadd.f32 %v3056, 1.0
  %v3058 = vrcp.pop %v3057
  %v3059 = vmul.f32 1.0, %v3058
  %v3060 = vmul.f32 %v3052, %v3022
  %v3061 = vadd.f32 %v2900, %v3060
  %v3062 = vtanh.pop %v3061
  %v3063 = vsub.f32 %v2874, %v3062
  %v3064 = vmul.f32 %v3059, %v3063
  %v3065 = vadd.f32 %v3062, %v3064
  %v3066 = vrot.slane %v3045, 4
  %v3067 = vmax.f32 %v3045, %v3066
  %v3068 = vrot.slane %v3067, 2
  %v3069 = vmax.f32 %v3067, %v3068
  %v3070 = vrot.slane %v3069, 1
  %v3071 = vmax.f32 %v3069, %v3070
  %3072 = vst [vmem:[#allocation3 + $0x3] sm:$0x1] %v3071
  %v3073 = vrot.slane %v3065, 4
  %v3074 = vmax.f32 %v3065, %v3073
  %v3075 = vrot.slane %v3074, 2
  %v3076 = vmax.f32 %v3074, %v3075
  %v3077 = vrot.slane %v3076, 1
  %v3078 = vmax.f32 %v3076, %v3077
  %3079 = vst [vmem:[#allocation3 + $0x1c] sm:$0x1] %v3078
  %s3080 = smul.u32 4, 6
  %s3081 = smul.addr %s3080, 8
  %s3082 = scalar_lea.vmem [#allocation2], %s3081
  %v3083 = vld [vmem:[%s3082] sm:$0xff]
  %v3084 = vld [vmem:[%s3082 + $0x8] sm:$0xff]
  %v3085 = vld [vmem:[%s3082 + $0x10] sm:$0xff]
  %s3086 = smul.u32 11, 6
  %s3087 = smul.addr %s3086, 8
  %s3088 = scalar_lea.vmem [#allocation2], %s3087
  %v3089 = vld [vmem:[%s3088 + $0x18] sm:$0xff]
  %v3090 = vld [vmem:[%s3088 + $0x20] sm:$0xff]
  %v3091 = vld [vmem:[%s3088 + $0x28] sm:$0xff]
  %v3092 = vpack.c.bf16 %v3045, %v3045
  %v3093 = vpack.c.bf16 %v3065, %v3065
  %3094 = vmatprep.subr.bf16.mxu0 %v2139
  %3095 = vmatpush1.bf16.msra.mxu0 %v2138
  %3096 = vmatprep.subr.bf16.mxu0 %v2145
  %3097 = vmatpush1.bf16.msra.mxu0 %v2144
  %3098 = vmatprep.subr.bf16.mxu0 %v2151
  %3099 = vmatpush1.bf16.msra.mxu0 %v2150
  %3100 = vmatprep.subr.bf16.mxu0 %v2157
  %3101 = vmatpush1.bf16.msra.mxu0 %v2156
  %3102 = vmatprep.subr.bf16.mxu0 %v2163
  %3103 = vmatpush1.bf16.msra.mxu0 %v2162
  %3104 = vmatprep.subr.bf16.mxu0 %v2169
  %3105 = vmatpush1.bf16.msra.mxu0 %v2168
  %3106 = vmatprep.subr.bf16.mxu0 %v2175
  %3107 = vmatpush1.bf16.msra.mxu0 %v2174
  %3108 = vmatprep.subr.bf16.mxu0 %v2181
  %3109 = vmatpush1.bf16.msra.mxu0 %v2180
  %3110 = vmatprep.subr.bf16.mxu0 %v2187
  %3111 = vmatpush1.bf16.msra.mxu0 %v2186
  %3112 = vmatprep.subr.bf16.mxu0 %v2193
  %3113 = vmatpush1.bf16.msra.mxu0 %v2192
  %3114 = vmatprep.subr.bf16.mxu0 %v2199
  %3115 = vmatpush1.bf16.msra.mxu0 %v2198
  %3116 = vmatprep.subr.bf16.mxu0 %v2205
  %3117 = vmatpush1.bf16.msra.mxu0 %v2204
  %3118 = vmatprep.subr.bf16.mxu0 %v2211
  %3119 = vmatpush1.bf16.msra.mxu0 %v2210
  %3120 = vmatprep.subr.bf16.mxu0 %v2217
  %3121 = vmatpush1.bf16.msra.mxu0 %v2216
  %3122 = vmatprep.subr.bf16.mxu0 %v2223
  %3123 = vmatpush1.bf16.msra.mxu0 %v2222
  %3124 = vmatprep.subr.bf16.mxu0 %v2229
  %3125 = vmatpush1.bf16.msra.mxu0 %v2228
  %3126 = vmatprep.mubr.bf16.mxu0 %v3093
  %3127 = vmatmul.mubr.bf16.gmra.mrb[0].mxu0 %v3092
  %v3128 = vpop.f32.mrb[0].mxu0
  %v3129 = vadd.f32 %v1823, %v3128
  %v3130 = vpop.f32.mrb[0].mxu0
  %v3131 = vadd.f32 %v1827, %v3130
  %v3132 = vpop.f32.mrb[0].mxu0
  %v3133 = vpop.f32.mrb[0].mxu0
  %3134 = vdwg.mxu0
  %3135 = vmatprep.subr.bf16.mxu0 %v2141
  %3136 = vmatpush1.bf16.msra.mxu0 %v2140
  %3137 = vmatprep.subr.bf16.mxu0 %v2147
  %3138 = vmatpush1.bf16.msra.mxu0 %v2146
  %3139 = vmatprep.subr.bf16.mxu0 %v2153
  %3140 = vmatpush1.bf16.msra.mxu0 %v2152
  %3141 = vmatprep.subr.bf16.mxu0 %v2159
  %3142 = vmatpush1.bf16.msra.mxu0 %v2158
  %3143 = vmatprep.subr.bf16.mxu0 %v2165
  %3144 = vmatpush1.bf16.msra.mxu0 %v2164
  %3145 = vmatprep.subr.bf16.mxu0 %v2171
  %3146 = vmatpush1.bf16.msra.mxu0 %v2170
  %3147 = vmatprep.subr.bf16.mxu0 %v2177
  %3148 = vmatpush1.bf16.msra.mxu0 %v2176
  %3149 = vmatprep.subr.bf16.mxu0 %v2183
  %3150 = vmatpush1.bf16.msra.mxu0 %v2182
  %3151 = vmatprep.subr.bf16.mxu0 %v2189
  %3152 = vmatpush1.bf16.msra.mxu0 %v2188
  %3153 = vmatprep.subr.bf16.mxu0 %v2195
  %3154 = vmatpush1.bf16.msra.mxu0 %v2194
  %3155 = vmatprep.subr.bf16.mxu0 %v2201
  %3156 = vmatpush1.bf16.msra.mxu0 %v2200
  %3157 = vmatprep.subr.bf16.mxu0 %v2207
  %3158 = vmatpush1.bf16.msra.mxu0 %v2206
  %3159 = vmatprep.subr.bf16.mxu0 %v2213
  %3160 = vmatpush1.bf16.msra.mxu0 %v2212
  %3161 = vmatprep.subr.bf16.mxu0 %v2219
  %3162 = vmatpush1.bf16.msra.mxu0 %v2218
  %3163 = vmatprep.subr.bf16.mxu0 %v2225
  %3164 = vmatpush1.bf16.msra.mxu0 %v2224
  %3165 = vmatprep.subr.bf16.mxu0 %v2231
  %3166 = vmatpush1.bf16.msra.mxu0 %v2230
  %3167 = vmatprep.mubr.bf16.mxu0 %v3093
  %3168 = vmatmul.mubr.bf16.gmra.mrb[0].mxu0 %v3092
  %v3169 = vpop.f32.mrb[0].mxu0
  %v3170 = vadd.f32 %v1831, %v3169
  %v3171 = vpop.f32.mrb[0].mxu0
  %v3172 = vadd.f32 %v1835, %v3171
  %v3173 = vpop.f32.mrb[0].mxu0
  %v3174 = vpop.f32.mrb[0].mxu0
  %3175 = vdwg.mxu0
  %3176 = vmatprep.subr.bf16.mxu0 %v2143
  %3177 = vmatpush1.bf16.msra.mxu0 %v2142
  %3178 = vmatprep.subr.bf16.mxu0 %v2149
  %3179 = vmatpush1.bf16.msra.mxu0 %v2148
  %3180 = vmatprep.subr.bf16.mxu0 %v2155
  %3181 = vmatpush1.bf16.msra.mxu0 %v2154
  %3182 = vmatprep.subr.bf16.mxu0 %v2161
  %3183 = vmatpush1.bf16.msra.mxu0 %v2160
  %3184 = vmatprep.subr.bf16.mxu0 %v2167
  %3185 = vmatpush1.bf16.msra.mxu0 %v2166
  %3186 = vmatprep.subr.bf16.mxu0 %v2173
  %3187 = vmatpush1.bf16.msra.mxu0 %v2172
  %3188 = vmatprep.subr.bf16.mxu0 %v2179
  %3189 = vmatpush1.bf16.msra.mxu0 %v2178
  %3190 = vmatprep.subr.bf16.mxu0 %v2185
  %3191 = vmatpush1.bf16.msra.mxu0 %v2184
  %3192 = vmatprep.subr.bf16.mxu0 %v2191
  %3193 = vmatpush1.bf16.msra.mxu0 %v2190
  %3194 = vmatprep.subr.bf16.mxu0 %v2197
  %3195 = vmatpush1.bf16.msra.mxu0 %v2196
  %3196 = vmatprep.subr.bf16.mxu0 %v2203
  %3197 = vmatpush1.bf16.msra.mxu0 %v2202
  %3198 = vmatprep.subr.bf16.mxu0 %v2209
  %3199 = vmatpush1.bf16.msra.mxu0 %v2208
  %3200 = vmatprep.subr.bf16.mxu0 %v2215
  %3201 = vmatpush1.bf16.msra.mxu0 %v2214
  %3202 = vmatprep.subr.bf16.mxu0 %v2221
  %3203 = vmatpush1.bf16.msra.mxu0 %v2220
  %3204 = vmatprep.subr.bf16.mxu0 %v2227
  %3205 = vmatpush1.bf16.msra.mxu0 %v2226
  %3206 = vmatprep.subr.bf16.mxu0 %v2233
  %3207 = vmatpush1.bf16.msra.mxu0 %v2232
  %3208 = vmatprep.mubr.bf16.mxu0 %v3093
  %3209 = vmatmul.mubr.bf16.gmra.mrb[0].mxu0 %v3092
  %v3210 = vpop.f32.mrb[0].mxu0
  %v3211 = vadd.f32 %v1839, %v3210
  %v3212 = vpop.f32.mrb[0].mxu0
  %v3213 = vadd.f32 %v1843, %v3212
  %v3214 = vpop.f32.mrb[0].mxu0
  %v3215 = vpop.f32.mrb[0].mxu0
  %3216 = vdwg.mxu0
  %v3217 = vadd.f32 %v3083, %v3129
  %v3218 = vxor.u32 %v3217, 2147483648
  %v3219 = vmul.f32 %v3218, 1.442695
  %v3220 = vpow.pop %v3219
  %v3221 = vadd.f32 %v3220, 1.0
  %v3222 = vrcp.pop %v3221
  %v3223 = vmul.f32 1.0, %v3222
  %v3224 = vadd.f32 %v3084, %v3131
  %v3225 = vxor.u32 %v3224, 2147483648
  %v3226 = vmul.f32 %v3225, 1.442695
  %v3227 = vpow.pop %v3226
  %v3228 = vadd.f32 %v3227, 1.0
  %v3229 = vrcp.pop %v3228
  %v3230 = vmul.f32 1.0, %v3229
  %v3231 = vmul.f32 %v3223, %v3170
  %v3232 = vadd.f32 %v3085, %v3231
  %v3233 = vtanh.pop %v3232
  %v3234 = vsub.f32 %v3045, %v3233
  %v3235 = vmul.f32 %v3230, %v3234
  %v3236 = vadd.f32 %v3233, %v3235
  %v3237 = vadd.f32 %v3089, %v3172
  %v3238 = vxor.u32 %v3237, 2147483648
  %v3239 = vmul.f32 %v3238, 1.442695
  %v3240 = vpow.pop %v3239
  %v3241 = vadd.f32 %v3240, 1.0
  %v3242 = vrcp.pop %v3241
  %v3243 = vmul.f32 1.0, %v3242
  %v3244 = vadd.f32 %v3090, %v3211
  %v3245 = vxor.u32 %v3244, 2147483648
  %v3246 = vmul.f32 %v3245, 1.442695
  %v3247 = vpow.pop %v3246
  %v3248 = vadd.f32 %v3247, 1.0
  %v3249 = vrcp.pop %v3248
  %v3250 = vmul.f32 1.0, %v3249
  %v3251 = vmul.f32 %v3243, %v3213
  %v3252 = vadd.f32 %v3091, %v3251
  %v3253 = vtanh.pop %v3252
  %v3254 = vsub.f32 %v3065, %v3253
  %v3255 = vmul.f32 %v3250, %v3254
  %v3256 = vadd.f32 %v3253, %v3255
  %v3257 = vrot.slane %v3236, 4
  %v3258 = vmax.f32 %v3236, %v3257
  %v3259 = vrot.slane %v3258, 2
  %v3260 = vmax.f32 %v3258, %v3259
  %v3261 = vrot.slane %v3260, 1
  %v3262 = vmax.f32 %v3260, %v3261
  %3263 = vst [vmem:[#allocation3 + $0x4] sm:$0x1] %v3262
  %v3264 = vrot.slane %v3256, 4
  %v3265 = vmax.f32 %v3256, %v3264
  %v3266 = vrot.slane %v3265, 2
  %v3267 = vmax.f32 %v3265, %v3266
  %v3268 = vrot.slane %v3267, 1
  %v3269 = vmax.f32 %v3267, %v3268
  %3270 = vst [vmem:[#allocation3 + $0x1b] sm:$0x1] %v3269
  %s3271 = smul.u32 5, 6
  %s3272 = smul.addr %s3271, 8
  %s3273 = scalar_lea.vmem [#allocation2], %s3272
  %v3274 = vld [vmem:[%s3273] sm:$0xff]
  %v3275 = vld [vmem:[%s3273 + $0x8] sm:$0xff]
  %v3276 = vld [vmem:[%s3273 + $0x10] sm:$0xff]
  %s3277 = smul.u32 10, 6
  %s3278 = smul.addr %s3277, 8
  %s3279 = scalar_lea.vmem [#allocation2], %s3278
  %v3280 = vld [vmem:[%s3279 + $0x18] sm:$0xff]
  %v3281 = vld [vmem:[%s3279 + $0x20] sm:$0xff]
  %v3282 = vld [vmem:[%s3279 + $0x28] sm:$0xff]
  %v3283 = vpack.c.bf16 %v3236, %v3236
  %v3284 = vpack.c.bf16 %v3256, %v3256
  %3285 = vmatprep.subr.bf16.mxu0 %v2139
  %3286 = vmatpush1.bf16.msra.mxu0 %v2138
  %3287 = vmatprep.subr.bf16.mxu0 %v2145
  %3288 = vmatpush1.bf16.msra.mxu0 %v2144
  %3289 = vmatprep.subr.bf16.mxu0 %v2151
  %3290 = vmatpush1.bf16.msra.mxu0 %v2150
  %3291 = vmatprep.subr.bf16.mxu0 %v2157
  %3292 = vmatpush1.bf16.msra.mxu0 %v2156
  %3293 = vmatprep.subr.bf16.mxu0 %v2163
  %3294 = vmatpush1.bf16.msra.mxu0 %v2162
  %3295 = vmatprep.subr.bf16.mxu0 %v2169
  %3296 = vmatpush1.bf16.msra.mxu0 %v2168
  %3297 = vmatprep.subr.bf16.mxu0 %v2175
  %3298 = vmatpush1.bf16.msra.mxu0 %v2174
  %3299 = vmatprep.subr.bf16.mxu0 %v2181
  %3300 = vmatpush1.bf16.msra.mxu0 %v2180
  %3301 = vmatprep.subr.bf16.mxu0 %v2187
  %3302 = vmatpush1.bf16.msra.mxu0 %v2186
  %3303 = vmatprep.subr.bf16.mxu0 %v2193
  %3304 = vmatpush1.bf16.msra.mxu0 %v2192
  %3305 = vmatprep.subr.bf16.mxu0 %v2199
  %3306 = vmatpush1.bf16.msra.mxu0 %v2198
  %3307 = vmatprep.subr.bf16.mxu0 %v2205
  %3308 = vmatpush1.bf16.msra.mxu0 %v2204
  %3309 = vmatprep.subr.bf16.mxu0 %v2211
  %3310 = vmatpush1.bf16.msra.mxu0 %v2210
  %3311 = vmatprep.subr.bf16.mxu0 %v2217
  %3312 = vmatpush1.bf16.msra.mxu0 %v2216
  %3313 = vmatprep.subr.bf16.mxu0 %v2223
  %3314 = vmatpush1.bf16.msra.mxu0 %v2222
  %3315 = vmatprep.subr.bf16.mxu0 %v2229
  %3316 = vmatpush1.bf16.msra.mxu0 %v2228
  %3317 = vmatprep.mubr.bf16.mxu0 %v3284
  %3318 = vmatmul.mubr.bf16.gmra.mrb[0].mxu0 %v3283
  %v3319 = vpop.f32.mrb[0].mxu0
  %v3320 = vadd.f32 %v1823, %v3319
  %v3321 = vpop.f32.mrb[0].mxu0
  %v3322 = vadd.f32 %v1827, %v3321
  %v3323 = vpop.f32.mrb[0].mxu0
  %v3324 = vpop.f32.mrb[0].mxu0
  %3325 = vdwg.mxu0
  %3326 = vmatprep.subr.bf16.mxu0 %v2141
  %3327 = vmatpush1.bf16.msra.mxu0 %v2140
  %3328 = vmatprep.subr.bf16.mxu0 %v2147
  %3329 = vmatpush1.bf16.msra.mxu0 %v2146
  %3330 = vmatprep.subr.bf16.mxu0 %v2153
  %3331 = vmatpush1.bf16.msra.mxu0 %v2152
  %3332 = vmatprep.subr.bf16.mxu0 %v2159
  %3333 = vmatpush1.bf16.msra.mxu0 %v2158
  %3334 = vmatprep.subr.bf16.mxu0 %v2165
  %3335 = vmatpush1.bf16.msra.mxu0 %v2164
  %3336 = vmatprep.subr.bf16.mxu0 %v2171
  %3337 = vmatpush1.bf16.msra.mxu0 %v2170
  %3338 = vmatprep.subr.bf16.mxu0 %v2177
  %3339 = vmatpush1.bf16.msra.mxu0 %v2176
  %3340 = vmatprep.subr.bf16.mxu0 %v2183
  %3341 = vmatpush1.bf16.msra.mxu0 %v2182
  %3342 = vmatprep.subr.bf16.mxu0 %v2189
  %3343 = vmatpush1.bf16.msra.mxu0 %v2188
  %3344 = vmatprep.subr.bf16.mxu0 %v2195
  %3345 = vmatpush1.bf16.msra.mxu0 %v2194
  %3346 = vmatprep.subr.bf16.mxu0 %v2201
  %3347 = vmatpush1.bf16.msra.mxu0 %v2200
  %3348 = vmatprep.subr.bf16.mxu0 %v2207
  %3349 = vmatpush1.bf16.msra.mxu0 %v2206
  %3350 = vmatprep.subr.bf16.mxu0 %v2213
  %3351 = vmatpush1.bf16.msra.mxu0 %v2212
  %3352 = vmatprep.subr.bf16.mxu0 %v2219
  %3353 = vmatpush1.bf16.msra.mxu0 %v2218
  %3354 = vmatprep.subr.bf16.mxu0 %v2225
  %3355 = vmatpush1.bf16.msra.mxu0 %v2224
  %3356 = vmatprep.subr.bf16.mxu0 %v2231
  %3357 = vmatpush1.bf16.msra.mxu0 %v2230
  %3358 = vmatprep.mubr.bf16.mxu0 %v3284
  %3359 = vmatmul.mubr.bf16.gmra.mrb[0].mxu0 %v3283
  %v3360 = vpop.f32.mrb[0].mxu0
  %v3361 = vadd.f32 %v1831, %v3360
  %v3362 = vpop.f32.mrb[0].mxu0
  %v3363 = vadd.f32 %v1835, %v3362
  %v3364 = vpop.f32.mrb[0].mxu0
  %v3365 = vpop.f32.mrb[0].mxu0
  %3366 = vdwg.mxu0
  %3367 = vmatprep.subr.bf16.mxu0 %v2143
  %3368 = vmatpush1.bf16.msra.mxu0 %v2142
  %3369 = vmatprep.subr.bf16.mxu0 %v2149
  %3370 = vmatpush1.bf16.msra.mxu0 %v2148
  %3371 = vmatprep.subr.bf16.mxu0 %v2155
  %3372 = vmatpush1.bf16.msra.mxu0 %v2154
  %3373 = vmatprep.subr.bf16.mxu0 %v2161
  %3374 = vmatpush1.bf16.msra.mxu0 %v2160
  %3375 = vmatprep.subr.bf16.mxu0 %v2167
  %3376 = vmatpush1.bf16.msra.mxu0 %v2166
  %3377 = vmatprep.subr.bf16.mxu0 %v2173
  %3378 = vmatpush1.bf16.msra.mxu0 %v2172
  %3379 = vmatprep.subr.bf16.mxu0 %v2179
  %3380 = vmatpush1.bf16.msra.mxu0 %v2178
  %3381 = vmatprep.subr.bf16.mxu0 %v2185
  %3382 = vmatpush1.bf16.msra.mxu0 %v2184
  %3383 = vmatprep.subr.bf16.mxu0 %v2191
  %3384 = vmatpush1.bf16.msra.mxu0 %v2190
  %3385 = vmatprep.subr.bf16.mxu0 %v2197
  %3386 = vmatpush1.bf16.msra.mxu0 %v2196
  %3387 = vmatprep.subr.bf16.mxu0 %v2203
  %3388 = vmatpush1.bf16.msra.mxu0 %v2202
  %3389 = vmatprep.subr.bf16.mxu0 %v2209
  %3390 = vmatpush1.bf16.msra.mxu0 %v2208
  %3391 = vmatprep.subr.bf16.mxu0 %v2215
  %3392 = vmatpush1.bf16.msra.mxu0 %v2214
  %3393 = vmatprep.subr.bf16.mxu0 %v2221
  %3394 = vmatpush1.bf16.msra.mxu0 %v2220
  %3395 = vmatprep.subr.bf16.mxu0 %v2227
  %3396 = vmatpush1.bf16.msra.mxu0 %v2226
  %3397 = vmatprep.subr.bf16.mxu0 %v2233
  %3398 = vmatpush1.bf16.msra.mxu0 %v2232
  %3399 = vmatprep.mubr.bf16.mxu0 %v3284
  %3400 = vmatmul.mubr.bf16.gmra.mrb[0].mxu0 %v3283
  %v3401 = vpop.f32.mrb[0].mxu0
  %v3402 = vadd.f32 %v1839, %v3401
  %v3403 = vpop.f32.mrb[0].mxu0
  %v3404 = vadd.f32 %v1843, %v3403
  %v3405 = vpop.f32.mrb[0].mxu0
  %v3406 = vpop.f32.mrb[0].mxu0
  %3407 = vdwg.mxu0
  %v3408 = vadd.f32 %v3274, %v3320
  %v3409 = vxor.u32 %v3408, 2147483648
  %v3410 = vmul.f32 %v3409, 1.442695
  %v3411 = vpow.pop %v3410
  %v3412 = vadd.f32 %v3411, 1.0
  %v3413 = vrcp.pop %v3412
  %v3414 = vmul.f32 1.0, %v3413
  %v3415 = vadd.f32 %v3275, %v3322
  %v3416 = vxor.u32 %v3415, 2147483648
  %v3417 = vmul.f32 %v3416, 1.442695
  %v3418 = vpow.pop %v3417
  %v3419 = vadd.f32 %v3418, 1.0
  %v3420 = vrcp.pop %v3419
  %v3421 = vmul.f32 1.0, %v3420
  %v3422 = vmul.f32 %v3414, %v3361
  %v3423 = vadd.f32 %v3276, %v3422
  %v3424 = vtanh.pop %v3423
  %v3425 = vsub.f32 %v3236, %v3424
  %v3426 = vmul.f32 %v3421, %v3425
  %v3427 = vadd.f32 %v3424, %v3426
  %v3428 = vadd.f32 %v3280, %v3363
  %v3429 = vxor.u32 %v3428, 2147483648
  %v3430 = vmul.f32 %v3429, 1.442695
  %v3431 = vpow.pop %v3430
  %v3432 = vadd.f32 %v3431, 1.0
  %v3433 = vrcp.pop %v3432
  %v3434 = vmul.f32 1.0, %v3433
  %v3435 = vadd.f32 %v3281, %v3402
  %v3436 = vxor.u32 %v3435, 2147483648
  %v3437 = vmul.f32 %v3436, 1.442695
  %v3438 = vpow.pop %v3437
  %v3439 = vadd.f32 %v3438, 1.0
  %v3440 = vrcp.pop %v3439
  %v3441 = vmul.f32 1.0, %v3440
  %v3442 = vmul.f32 %v3434, %v3404
  %v3443 = vadd.f32 %v3282, %v3442
  %v3444 = vtanh.pop %v3443
  %v3445 = vsub.f32 %v3256, %v3444
  %v3446 = vmul.f32 %v3441, %v3445
  %v3447 = vadd.f32 %v3444, %v3446
  %v3448 = vrot.slane %v3427, 4
  %v3449 = vmax.f32 %v3427, %v3448
  %v3450 = vrot.slane %v3449, 2
  %v3451 = vmax.f32 %v3449, %v3450
  %v3452 = vrot.slane %v3451, 1
  %v3453 = vmax.f32 %v3451, %v3452
  %3454 = vst [vmem:[#allocation3 + $0x5] sm:$0x1] %v3453
  %v3455 = vrot.slane %v3447, 4
  %v3456 = vmax.f32 %v3447, %v3455
  %v3457 = vrot.slane %v3456, 2
  %v3458 = vmax.f32 %v3456, %v3457
  %v3459 = vrot.slane %v3458, 1
  %v3460 = vmax.f32 %v3458, %v3459
  %3461 = vst [vmem:[#allocation3 + $0x1a] sm:$0x1] %v3460
  %s3462 = smul.u32 6, 6
  %s3463 = smul.addr %s3462, 8
  %s3464 = scalar_lea.vmem [#allocation2], %s3463
  %v3465 = vld [vmem:[%s3464] sm:$0xff]
  %v3466 = vld [vmem:[%s3464 + $0x8] sm:$0xff]
  %v3467 = vld [vmem:[%s3464 + $0x10] sm:$0xff]
  %s3468 = smul.u32 9, 6
  %s3469 = smul.addr %s3468, 8
  %s3470 = scalar_lea.vmem [#allocation2], %s3469
  %v3471 = vld [vmem:[%s3470 + $0x18] sm:$0xff]
  %v3472 = vld [vmem:[%s3470 + $0x20] sm:$0xff]
  %v3473 = vld [vmem:[%s3470 + $0x28] sm:$0xff]
  %v3474 = vpack.c.bf16 %v3427, %v3427
  %v3475 = vpack.c.bf16 %v3447, %v3447
  %3476 = vmatprep.subr.bf16.mxu0 %v2139
  %3477 = vmatpush1.bf16.msra.mxu0 %v2138
  %3478 = vmatprep.subr.bf16.mxu0 %v2145
  %3479 = vmatpush1.bf16.msra.mxu0 %v2144
  %3480 = vmatprep.subr.bf16.mxu0 %v2151
  %3481 = vmatpush1.bf16.msra.mxu0 %v2150
  %3482 = vmatprep.subr.bf16.mxu0 %v2157
  %3483 = vmatpush1.bf16.msra.mxu0 %v2156
  %3484 = vmatprep.subr.bf16.mxu0 %v2163
  %3485 = vmatpush1.bf16.msra.mxu0 %v2162
  %3486 = vmatprep.subr.bf16.mxu0 %v2169
  %3487 = vmatpush1.bf16.msra.mxu0 %v2168
  %3488 = vmatprep.subr.bf16.mxu0 %v2175
  %3489 = vmatpush1.bf16.msra.mxu0 %v2174
  %3490 = vmatprep.subr.bf16.mxu0 %v2181
  %3491 = vmatpush1.bf16.msra.mxu0 %v2180
  %3492 = vmatprep.subr.bf16.mxu0 %v2187
  %3493 = vmatpush1.bf16.msra.mxu0 %v2186
  %3494 = vmatprep.subr.bf16.mxu0 %v2193
  %3495 = vmatpush1.bf16.msra.mxu0 %v2192
  %3496 = vmatprep.subr.bf16.mxu0 %v2199
  %3497 = vmatpush1.bf16.msra.mxu0 %v2198
  %3498 = vmatprep.subr.bf16.mxu0 %v2205
  %3499 = vmatpush1.bf16.msra.mxu0 %v2204
  %3500 = vmatprep.subr.bf16.mxu0 %v2211
  %3501 = vmatpush1.bf16.msra.mxu0 %v2210
  %3502 = vmatprep.subr.bf16.mxu0 %v2217
  %3503 = vmatpush1.bf16.msra.mxu0 %v2216
  %3504 = vmatprep.subr.bf16.mxu0 %v2223
  %3505 = vmatpush1.bf16.msra.mxu0 %v2222
  %3506 = vmatprep.subr.bf16.mxu0 %v2229
  %3507 = vmatpush1.bf16.msra.mxu0 %v2228
  %3508 = vmatprep.mubr.bf16.mxu0 %v3475
  %3509 = vmatmul.mubr.bf16.gmra.mrb[0].mxu0 %v3474
  %v3510 = vpop.f32.mrb[0].mxu0
  %v3511 = vadd.f32 %v1823, %v3510
  %v3512 = vpop.f32.mrb[0].mxu0
  %v3513 = vadd.f32 %v1827, %v3512
  %v3514 = vpop.f32.mrb[0].mxu0
  %v3515 = vpop.f32.mrb[0].mxu0
  %3516 = vdwg.mxu0
  %3517 = vmatprep.subr.bf16.mxu0 %v2141
  %3518 = vmatpush1.bf16.msra.mxu0 %v2140
  %3519 = vmatprep.subr.bf16.mxu0 %v2147
  %3520 = vmatpush1.bf16.msra.mxu0 %v2146
  %3521 = vmatprep.subr.bf16.mxu0 %v2153
  %3522 = vmatpush1.bf16.msra.mxu0 %v2152
  %3523 = vmatprep.subr.bf16.mxu0 %v2159
  %3524 = vmatpush1.bf16.msra.mxu0 %v2158
  %3525 = vmatprep.subr.bf16.mxu0 %v2165
  %3526 = vmatpush1.bf16.msra.mxu0 %v2164
  %3527 = vmatprep.subr.bf16.mxu0 %v2171
  %3528 = vmatpush1.bf16.msra.mxu0 %v2170
  %3529 = vmatprep.subr.bf16.mxu0 %v2177
  %3530 = vmatpush1.bf16.msra.mxu0 %v2176
  %3531 = vmatprep.subr.bf16.mxu0 %v2183
  %3532 = vmatpush1.bf16.msra.mxu0 %v2182
  %3533 = vmatprep.subr.bf16.mxu0 %v2189
  %3534 = vmatpush1.bf16.msra.mxu0 %v2188
  %3535 = vmatprep.subr.bf16.mxu0 %v2195
  %3536 = vmatpush1.bf16.msra.mxu0 %v2194
  %3537 = vmatprep.subr.bf16.mxu0 %v2201
  %3538 = vmatpush1.bf16.msra.mxu0 %v2200
  %3539 = vmatprep.subr.bf16.mxu0 %v2207
  %3540 = vmatpush1.bf16.msra.mxu0 %v2206
  %3541 = vmatprep.subr.bf16.mxu0 %v2213
  %3542 = vmatpush1.bf16.msra.mxu0 %v2212
  %3543 = vmatprep.subr.bf16.mxu0 %v2219
  %3544 = vmatpush1.bf16.msra.mxu0 %v2218
  %3545 = vmatprep.subr.bf16.mxu0 %v2225
  %3546 = vmatpush1.bf16.msra.mxu0 %v2224
  %3547 = vmatprep.subr.bf16.mxu0 %v2231
  %3548 = vmatpush1.bf16.msra.mxu0 %v2230
  %3549 = vmatprep.mubr.bf16.mxu0 %v3475
  %3550 = vmatmul.mubr.bf16.gmra.mrb[0].mxu0 %v3474
  %v3551 = vpop.f32.mrb[0].mxu0
  %v3552 = vadd.f32 %v1831, %v3551
  %v3553 = vpop.f32.mrb[0].mxu0
  %v3554 = vadd.f32 %v1835, %v3553
  %v3555 = vpop.f32.mrb[0].mxu0
  %v3556 = vpop.f32.mrb[0].mxu0
  %3557 = vdwg.mxu0
  %3558 = vmatprep.subr.bf16.mxu0 %v2143
  %3559 = vmatpush1.bf16.msra.mxu0 %v2142
  %3560 = vmatprep.subr.bf16.mxu0 %v2149
  %3561 = vmatpush1.bf16.msra.mxu0 %v2148
  %3562 = vmatprep.subr.bf16.mxu0 %v2155
  %3563 = vmatpush1.bf16.msra.mxu0 %v2154
  %3564 = vmatprep.subr.bf16.mxu0 %v2161
  %3565 = vmatpush1.bf16.msra.mxu0 %v2160
  %3566 = vmatprep.subr.bf16.mxu0 %v2167
  %3567 = vmatpush1.bf16.msra.mxu0 %v2166
  %3568 = vmatprep.subr.bf16.mxu0 %v2173
  %3569 = vmatpush1.bf16.msra.mxu0 %v2172
  %3570 = vmatprep.subr.bf16.mxu0 %v2179
  %3571 = vmatpush1.bf16.msra.mxu0 %v2178
  %3572 = vmatprep.subr.bf16.mxu0 %v2185
  %3573 = vmatpush1.bf16.msra.mxu0 %v2184
  %3574 = vmatprep.subr.bf16.mxu0 %v2191
  %3575 = vmatpush1.bf16.msra.mxu0 %v2190
  %3576 = vmatprep.subr.bf16.mxu0 %v2197
  %3577 = vmatpush1.bf16.msra.mxu0 %v2196
  %3578 = vmatprep.subr.bf16.mxu0 %v2203
  %3579 = vmatpush1.bf16.msra.mxu0 %v2202
  %3580 = vmatprep.subr.bf16.mxu0 %v2209
  %3581 = vmatpush1.bf16.msra.mxu0 %v2208
  %3582 = vmatprep.subr.bf16.mxu0 %v2215
  %3583 = vmatpush1.bf16.msra.mxu0 %v2214
  %3584 = vmatprep.subr.bf16.mxu0 %v2221
  %3585 = vmatpush1.bf16.msra.mxu0 %v2220
  %3586 = vmatprep.subr.bf16.mxu0 %v2227
  %3587 = vmatpush1.bf16.msra.mxu0 %v2226
  %3588 = vmatprep.subr.bf16.mxu0 %v2233
  %3589 = vmatpush1.bf16.msra.mxu0 %v2232
  %3590 = vmatprep.mubr.bf16.mxu0 %v3475
  %3591 = vmatmul.mubr.bf16.gmra.mrb[0].mxu0 %v3474
  %v3592 = vpop.f32.mrb[0].mxu0
  %v3593 = vadd.f32 %v1839, %v3592
  %v3594 = vpop.f32.mrb[0].mxu0
  %v3595 = vadd.f32 %v1843, %v3594
  %v3596 = vpop.f32.mrb[0].mxu0
  %v3597 = vpop.f32.mrb[0].mxu0
  %3598 = vdwg.mxu0
  %v3599 = vadd.f32 %v3465, %v3511
  %v3600 = vxor.u32 %v3599, 2147483648
  %v3601 = vmul.f32 %v3600, 1.442695
  %v3602 = vpow.pop %v3601
  %v3603 = vadd.f32 %v3602, 1.0
  %v3604 = vrcp.pop %v3603
  %v3605 = vmul.f32 1.0, %v3604
  %v3606 = vadd.f32 %v3466, %v3513
  %v3607 = vxor.u32 %v3606, 2147483648
  %v3608 = vmul.f32 %v3607, 1.442695
  %v3609 = vpow.pop %v3608
  %v3610 = vadd.f32 %v3609, 1.0
  %v3611 = vrcp.pop %v3610
  %v3612 = vmul.f32 1.0, %v3611
  %v3613 = vmul.f32 %v3605, %v3552
  %v3614 = vadd.f32 %v3467, %v3613
  %v3615 = vtanh.pop %v3614
  %v3616 = vsub.f32 %v3427, %v3615
  %v3617 = vmul.f32 %v3612, %v3616
  %v3618 = vadd.f32 %v3615, %v3617
  %v3619 = vadd.f32 %v3471, %v3554
  %v3620 = vxor.u32 %v3619, 2147483648
  %v3621 = vmul.f32 %v3620, 1.442695
  %v3622 = vpow.pop %v3621
  %v3623 = vadd.f32 %v3622, 1.0
  %v3624 = vrcp.pop %v3623
  %v3625 = vmul.f32 1.0, %v3624
  %v3626 = vadd.f32 %v3472, %v3593
  %v3627 = vxor.u32 %v3626, 2147483648
  %v3628 = vmul.f32 %v3627, 1.442695
  %v3629 = vpow.pop %v3628
  %v3630 = vadd.f32 %v3629, 1.0
  %v3631 = vrcp.pop %v3630
  %v3632 = vmul.f32 1.0, %v3631
  %v3633 = vmul.f32 %v3625, %v3595
  %v3634 = vadd.f32 %v3473, %v3633
  %v3635 = vtanh.pop %v3634
  %v3636 = vsub.f32 %v3447, %v3635
  %v3637 = vmul.f32 %v3632, %v3636
  %v3638 = vadd.f32 %v3635, %v3637
  %v3639 = vrot.slane %v3618, 4
  %v3640 = vmax.f32 %v3618, %v3639
  %v3641 = vrot.slane %v3640, 2
  %v3642 = vmax.f32 %v3640, %v3641
  %v3643 = vrot.slane %v3642, 1
  %v3644 = vmax.f32 %v3642, %v3643
  %3645 = vst [vmem:[#allocation3 + $0x6] sm:$0x1] %v3644
  %v3646 = vrot.slane %v3638, 4
  %v3647 = vmax.f32 %v3638, %v3646
  %v3648 = vrot.slane %v3647, 2
  %v3649 = vmax.f32 %v3647, %v3648
  %v3650 = vrot.slane %v3649, 1
  %v3651 = vmax.f32 %v3649, %v3650
  %3652 = vst [vmem:[#allocation3 + $0x19] sm:$0x1] %v3651
  %s3653 = smul.u32 7, 6
  %s3654 = smul.addr %s3653, 8
  %s3655 = scalar_lea.vmem [#allocation2], %s3654
  %v3656 = vld [vmem:[%s3655] sm:$0xff]
  %v3657 = vld [vmem:[%s3655 + $0x8] sm:$0xff]
  %v3658 = vld [vmem:[%s3655 + $0x10] sm:$0xff]
  %s3659 = smul.u32 8, 6
  %s3660 = smul.addr %s3659, 8
  %s3661 = scalar_lea.vmem [#allocation2], %s3660
  %v3662 = vld [vmem:[%s3661 + $0x18] sm:$0xff]
  %v3663 = vld [vmem:[%s3661 + $0x20] sm:$0xff]
  %v3664 = vld [vmem:[%s3661 + $0x28] sm:$0xff]
  %v3665 = vpack.c.bf16 %v3618, %v3618
  %v3666 = vpack.c.bf16 %v3638, %v3638
  %3667 = vmatprep.subr.bf16.mxu0 %v2139
  %3668 = vmatpush1.bf16.msra.mxu0 %v2138
  %3669 = vmatprep.subr.bf16.mxu0 %v2145
  %3670 = vmatpush1.bf16.msra.mxu0 %v2144
  %3671 = vmatprep.subr.bf16.mxu0 %v2151
  %3672 = vmatpush1.bf16.msra.mxu0 %v2150
  %3673 = vmatprep.subr.bf16.mxu0 %v2157
  %3674 = vmatpush1.bf16.msra.mxu0 %v2156
  %3675 = vmatprep.subr.bf16.mxu0 %v2163
  %3676 = vmatpush1.bf16.msra.mxu0 %v2162
  %3677 = vmatprep.subr.bf16.mxu0 %v2169
  %3678 = vmatpush1.bf16.msra.mxu0 %v2168
  %3679 = vmatprep.subr.bf16.mxu0 %v2175
  %3680 = vmatpush1.bf16.msra.mxu0 %v2174
  %3681 = vmatprep.subr.bf16.mxu0 %v2181
  %3682 = vmatpush1.bf16.msra.mxu0 %v2180
  %3683 = vmatprep.subr.bf16.mxu0 %v2187
  %3684 = vmatpush1.bf16.msra.mxu0 %v2186
  %3685 = vmatprep.subr.bf16.mxu0 %v2193
  %3686 = vmatpush1.bf16.msra.mxu0 %v2192
  %3687 = vmatprep.subr.bf16.mxu0 %v2199
  %3688 = vmatpush1.bf16.msra.mxu0 %v2198
  %3689 = vmatprep.subr.bf16.mxu0 %v2205
  %3690 = vmatpush1.bf16.msra.mxu0 %v2204
  %3691 = vmatprep.subr.bf16.mxu0 %v2211
  %3692 = vmatpush1.bf16.msra.mxu0 %v2210
  %3693 = vmatprep.subr.bf16.mxu0 %v2217
  %3694 = vmatpush1.bf16.msra.mxu0 %v2216
  %3695 = vmatprep.subr.bf16.mxu0 %v2223
  %3696 = vmatpush1.bf16.msra.mxu0 %v2222
  %3697 = vmatprep.subr.bf16.mxu0 %v2229
  %3698 = vmatpush1.bf16.msra.mxu0 %v2228
  %3699 = vmatprep.mubr.bf16.mxu0 %v3666
  %3700 = vmatmul.mubr.bf16.gmra.mrb[0].mxu0 %v3665
  %v3701 = vpop.f32.mrb[0].mxu0
  %v3702 = vadd.f32 %v1823, %v3701
  %v3703 = vpop.f32.mrb[0].mxu0
  %v3704 = vadd.f32 %v1827, %v3703
  %v3705 = vpop.f32.mrb[0].mxu0
  %v3706 = vpop.f32.mrb[0].mxu0
  %3707 = vdwg.mxu0
  %3708 = vmatprep.subr.bf16.mxu0 %v2141
  %3709 = vmatpush1.bf16.msra.mxu0 %v2140
  %3710 = vmatprep.subr.bf16.mxu0 %v2147
  %3711 = vmatpush1.bf16.msra.mxu0 %v2146
  %3712 = vmatprep.subr.bf16.mxu0 %v2153
  %3713 = vmatpush1.bf16.msra.mxu0 %v2152
  %3714 = vmatprep.subr.bf16.mxu0 %v2159
  %3715 = vmatpush1.bf16.msra.mxu0 %v2158
  %3716 = vmatprep.subr.bf16.mxu0 %v2165
  %3717 = vmatpush1.bf16.msra.mxu0 %v2164
  %3718 = vmatprep.subr.bf16.mxu0 %v2171
  %3719 = vmatpush1.bf16.msra.mxu0 %v2170
  %3720 = vmatprep.subr.bf16.mxu0 %v2177
  %3721 = vmatpush1.bf16.msra.mxu0 %v2176
  %3722 = vmatprep.subr.bf16.mxu0 %v2183
  %3723 = vmatpush1.bf16.msra.mxu0 %v2182
  %3724 = vmatprep.subr.bf16.mxu0 %v2189
  %3725 = vmatpush1.bf16.msra.mxu0 %v2188
  %3726 = vmatprep.subr.bf16.mxu0 %v2195
  %3727 = vmatpush1.bf16.msra.mxu0 %v2194
  %3728 = vmatprep.subr.bf16.mxu0 %v2201
  %3729 = vmatpush1.bf16.msra.mxu0 %v2200
  %3730 = vmatprep.subr.bf16.mxu0 %v2207
  %3731 = vmatpush1.bf16.msra.mxu0 %v2206
  %3732 = vmatprep.subr.bf16.mxu0 %v2213
  %3733 = vmatpush1.bf16.msra.mxu0 %v2212
  %3734 = vmatprep.subr.bf16.mxu0 %v2219
  %3735 = vmatpush1.bf16.msra.mxu0 %v2218
  %3736 = vmatprep.subr.bf16.mxu0 %v2225
  %3737 = vmatpush1.bf16.msra.mxu0 %v2224
  %3738 = vmatprep.subr.bf16.mxu0 %v2231
  %3739 = vmatpush1.bf16.msra.mxu0 %v2230
  %3740 = vmatprep.mubr.bf16.mxu0 %v3666
  %3741 = vmatmul.mubr.bf16.gmra.mrb[0].mxu0 %v3665
  %v3742 = vpop.f32.mrb[0].mxu0
  %v3743 = vadd.f32 %v1831, %v3742
  %v3744 = vpop.f32.mrb[0].mxu0
  %v3745 = vadd.f32 %v1835, %v3744
  %v3746 = vpop.f32.mrb[0].mxu0
  %v3747 = vpop.f32.mrb[0].mxu0
  %3748 = vdwg.mxu0
  %3749 = vmatprep.subr.bf16.mxu0 %v2143
  %3750 = vmatpush1.bf16.msra.mxu0 %v2142
  %3751 = vmatprep.subr.bf16.mxu0 %v2149
  %3752 = vmatpush1.bf16.msra.mxu0 %v2148
  %3753 = vmatprep.subr.bf16.mxu0 %v2155
  %3754 = vmatpush1.bf16.msra.mxu0 %v2154
  %3755 = vmatprep.subr.bf16.mxu0 %v2161
  %3756 = vmatpush1.bf16.msra.mxu0 %v2160
  %3757 = vmatprep.subr.bf16.mxu0 %v2167
  %3758 = vmatpush1.bf16.msra.mxu0 %v2166
  %3759 = vmatprep.subr.bf16.mxu0 %v2173
  %3760 = vmatpush1.bf16.msra.mxu0 %v2172
  %3761 = vmatprep.subr.bf16.mxu0 %v2179
  %3762 = vmatpush1.bf16.msra.mxu0 %v2178
  %3763 = vmatprep.subr.bf16.mxu0 %v2185
  %3764 = vmatpush1.bf16.msra.mxu0 %v2184
  %3765 = vmatprep.subr.bf16.mxu0 %v2191
  %3766 = vmatpush1.bf16.msra.mxu0 %v2190
  %3767 = vmatprep.subr.bf16.mxu0 %v2197
  %3768 = vmatpush1.bf16.msra.mxu0 %v2196
  %3769 = vmatprep.subr.bf16.mxu0 %v2203
  %3770 = vmatpush1.bf16.msra.mxu0 %v2202
  %3771 = vmatprep.subr.bf16.mxu0 %v2209
  %3772 = vmatpush1.bf16.msra.mxu0 %v2208
  %3773 = vmatprep.subr.bf16.mxu0 %v2215
  %3774 = vmatpush1.bf16.msra.mxu0 %v2214
  %3775 = vmatprep.subr.bf16.mxu0 %v2221
  %3776 = vmatpush1.bf16.msra.mxu0 %v2220
  %3777 = vmatprep.subr.bf16.mxu0 %v2227
  %3778 = vmatpush1.bf16.msra.mxu0 %v2226
  %3779 = vmatprep.subr.bf16.mxu0 %v2233
  %3780 = vmatpush1.bf16.msra.mxu0 %v2232
  %3781 = vmatprep.mubr.bf16.mxu0 %v3666
  %3782 = vmatmul.mubr.bf16.gmra.mrb[0].mxu0 %v3665
  %v3783 = vpop.f32.mrb[0].mxu0
  %v3784 = vadd.f32 %v1839, %v3783
  %v3785 = vpop.f32.mrb[0].mxu0
  %v3786 = vadd.f32 %v1843, %v3785
  %v3787 = vpop.f32.mrb[0].mxu0
  %v3788 = vpop.f32.mrb[0].mxu0
  %3789 = vdwg.mxu0
  %v3790 = vadd.f32 %v3656, %v3702
  %v3791 = vxor.u32 %v3790, 2147483648
  %v3792 = vmul.f32 %v3791, 1.442695
  %v3793 = vpow.pop %v3792
  %v3794 = vadd.f32 %v3793, 1.0
  %v3795 = vrcp.pop %v3794
  %v3796 = vmul.f32 1.0, %v3795
  %v3797 = vadd.f32 %v3657, %v3704
  %v3798 = vxor.u32 %v3797, 2147483648
  %v3799 = vmul.f32 %v3798, 1.442695
  %v3800 = vpow.pop %v3799
  %v3801 = vadd.f32 %v3800, 1.0
  %v3802 = vrcp.pop %v3801
  %v3803 = vmul.f32 1.0, %v3802
  %v3804 = vmul.f32 %v3796, %v3743
  %v3805 = vadd.f32 %v3658, %v3804
  %v3806 = vtanh.pop %v3805
  %v3807 = vsub.f32 %v3618, %v3806
  %v3808 = vmul.f32 %v3803, %v3807
  %v3809 = vadd.f32 %v3806, %v3808
  %v3810 = vadd.f32 %v3662, %v3745
  %v3811 = vxor.u32 %v3810, 2147483648
  %v3812 = vmul.f32 %v3811, 1.442695
  %v3813 = vpow.pop %v3812
  %v3814 = vadd.f32 %v3813, 1.0
  %v3815 = vrcp.pop %v3814
  %v3816 = vmul.f32 1.0, %v3815
  %v3817 = vadd.f32 %v3663, %v3784
  %v3818 = vxor.u32 %v3817, 2147483648
  %v3819 = vmul.f32 %v3818, 1.442695
  %v3820 = vpow.pop %v3819
  %v3821 = vadd.f32 %v3820, 1.0
  %v3822 = vrcp.pop %v3821
  %v3823 = vmul.f32 1.0, %v3822
  %v3824 = vmul.f32 %v3816, %v3786
  %v3825 = vadd.f32 %v3664, %v3824
  %v3826 = vtanh.pop %v3825
  %v3827 = vsub.f32 %v3638, %v3826
  %v3828 = vmul.f32 %v3823, %v3827
  %v3829 = vadd.f32 %v3826, %v3828
  %v3830 = vrot.slane %v3809, 4
  %v3831 = vmax.f32 %v3809, %v3830
  %v3832 = vrot.slane %v3831, 2
  %v3833 = vmax.f32 %v3831, %v3832
  %v3834 = vrot.slane %v3833, 1
  %v3835 = vmax.f32 %v3833, %v3834
  %3836 = vst [vmem:[#allocation3 + $0x7] sm:$0x1] %v3835
  %v3837 = vrot.slane %v3829, 4
  %v3838 = vmax.f32 %v3829, %v3837
  %v3839 = vrot.slane %v3838, 2
  %v3840 = vmax.f32 %v3838, %v3839
  %v3841 = vrot.slane %v3840, 1
  %v3842 = vmax.f32 %v3840, %v3841
  %3843 = vst [vmem:[#allocation3 + $0x18] sm:$0x1] %v3842
  %v3844 = vld [vmem:[%s3661] sm:$0xff]
  %v3845 = vld [vmem:[%s3661 + $0x8] sm:$0xff]
  %v3846 = vld [vmem:[%s3661 + $0x10] sm:$0xff]
  %v3847 = vld [vmem:[%s3655 + $0x18] sm:$0xff]
  %v3848 = vld [vmem:[%s3655 + $0x20] sm:$0xff]
  %v3849 = vld [vmem:[%s3655 + $0x28] sm:$0xff]
  %v3850 = vpack.c.bf16 %v3809, %v3809
  %v3851 = vpack.c.bf16 %v3829, %v3829
  %3852 = vmatprep.subr.bf16.mxu0 %v2139
  %3853 = vmatpush1.bf16.msra.mxu0 %v2138
  %3854 = vmatprep.subr.bf16.mxu0 %v2145
  %3855 = vmatpush1.bf16.msra.mxu0 %v2144
  %3856 = vmatprep.subr.bf16.mxu0 %v2151
  %3857 = vmatpush1.bf16.msra.mxu0 %v2150
  %3858 = vmatprep.subr.bf16.mxu0 %v2157
  %3859 = vmatpush1.bf16.msra.mxu0 %v2156
  %3860 = vmatprep.subr.bf16.mxu0 %v2163
  %3861 = vmatpush1.bf16.msra.mxu0 %v2162
  %3862 = vmatprep.subr.bf16.mxu0 %v2169
  %3863 = vmatpush1.bf16.msra.mxu0 %v2168
  %3864 = vmatprep.subr.bf16.mxu0 %v2175
  %3865 = vmatpush1.bf16.msra.mxu0 %v2174
  %3866 = vmatprep.subr.bf16.mxu0 %v2181
  %3867 = vmatpush1.bf16.msra.mxu0 %v2180
  %3868 = vmatprep.subr.bf16.mxu0 %v2187
  %3869 = vmatpush1.bf16.msra.mxu0 %v2186
  %3870 = vmatprep.subr.bf16.mxu0 %v2193
  %3871 = vmatpush1.bf16.msra.mxu0 %v2192
  %3872 = vmatprep.subr.bf16.mxu0 %v2199
  %3873 = vmatpush1.bf16.msra.mxu0 %v2198
  %3874 = vmatprep.subr.bf16.mxu0 %v2205
  %3875 = vmatpush1.bf16.msra.mxu0 %v2204
  %3876 = vmatprep.subr.bf16.mxu0 %v2211
  %3877 = vmatpush1.bf16.msra.mxu0 %v2210
  %3878 = vmatprep.subr.bf16.mxu0 %v2217
  %3879 = vmatpush1.bf16.msra.mxu0 %v2216
  %3880 = vmatprep.subr.bf16.mxu0 %v2223
  %3881 = vmatpush1.bf16.msra.mxu0 %v2222
  %3882 = vmatprep.subr.bf16.mxu0 %v2229
  %3883 = vmatpush1.bf16.msra.mxu0 %v2228
  %3884 = vmatprep.mubr.bf16.mxu0 %v3851
  %3885 = vmatmul.mubr.bf16.gmra.mrb[0].mxu0 %v3850
  %v3886 = vpop.f32.mrb[0].mxu0
  %v3887 = vadd.f32 %v1823, %v3886
  %v3888 = vpop.f32.mrb[0].mxu0
  %v3889 = vadd.f32 %v1827, %v3888
  %v3890 = vpop.f32.mrb[0].mxu0
  %v3891 = vpop.f32.mrb[0].mxu0
  %3892 = vdwg.mxu0
  %3893 = vmatprep.subr.bf16.mxu0 %v2141
  %3894 = vmatpush1.bf16.msra.mxu0 %v2140
  %3895 = vmatprep.subr.bf16.mxu0 %v2147
  %3896 = vmatpush1.bf16.msra.mxu0 %v2146
  %3897 = vmatprep.subr.bf16.mxu0 %v2153
  %3898 = vmatpush1.bf16.msra.mxu0 %v2152
  %3899 = vmatprep.subr.bf16.mxu0 %v2159
  %3900 = vmatpush1.bf16.msra.mxu0 %v2158
  %3901 = vmatprep.subr.bf16.mxu0 %v2165
  %3902 = vmatpush1.bf16.msra.mxu0 %v2164
  %3903 = vmatprep.subr.bf16.mxu0 %v2171
  %3904 = vmatpush1.bf16.msra.mxu0 %v2170
  %3905 = vmatprep.subr.bf16.mxu0 %v2177
  %3906 = vmatpush1.bf16.msra.mxu0 %v2176
  %3907 = vmatprep.subr.bf16.mxu0 %v2183
  %3908 = vmatpush1.bf16.msra.mxu0 %v2182
  %3909 = vmatprep.subr.bf16.mxu0 %v2189
  %3910 = vmatpush1.bf16.msra.mxu0 %v2188
  %3911 = vmatprep.subr.bf16.mxu0 %v2195
  %3912 = vmatpush1.bf16.msra.mxu0 %v2194
  %3913 = vmatprep.subr.bf16.mxu0 %v2201
  %3914 = vmatpush1.bf16.msra.mxu0 %v2200
  %3915 = vmatprep.subr.bf16.mxu0 %v2207
  %3916 = vmatpush1.bf16.msra.mxu0 %v2206
  %3917 = vmatprep.subr.bf16.mxu0 %v2213
  %3918 = vmatpush1.bf16.msra.mxu0 %v2212
  %3919 = vmatprep.subr.bf16.mxu0 %v2219
  %3920 = vmatpush1.bf16.msra.mxu0 %v2218
  %3921 = vmatprep.subr.bf16.mxu0 %v2225
  %3922 = vmatpush1.bf16.msra.mxu0 %v2224
  %3923 = vmatprep.subr.bf16.mxu0 %v2231
  %3924 = vmatpush1.bf16.msra.mxu0 %v2230
  %3925 = vmatprep.mubr.bf16.mxu0 %v3851
  %3926 = vmatmul.mubr.bf16.gmra.mrb[0].mxu0 %v3850
  %v3927 = vpop.f32.mrb[0].mxu0
  %v3928 = vadd.f32 %v1831, %v3927
  %v3929 = vpop.f32.mrb[0].mxu0
  %v3930 = vadd.f32 %v1835, %v3929
  %v3931 = vpop.f32.mrb[0].mxu0
  %v3932 = vpop.f32.mrb[0].mxu0
  %3933 = vdwg.mxu0
  %3934 = vmatprep.subr.bf16.mxu0 %v2143
  %3935 = vmatpush1.bf16.msra.mxu0 %v2142
  %3936 = vmatprep.subr.bf16.mxu0 %v2149
  %3937 = vmatpush1.bf16.msra.mxu0 %v2148
  %3938 = vmatprep.subr.bf16.mxu0 %v2155
  %3939 = vmatpush1.bf16.msra.mxu0 %v2154
  %3940 = vmatprep.subr.bf16.mxu0 %v2161
  %3941 = vmatpush1.bf16.msra.mxu0 %v2160
  %3942 = vmatprep.subr.bf16.mxu0 %v2167
  %3943 = vmatpush1.bf16.msra.mxu0 %v2166
  %3944 = vmatprep.subr.bf16.mxu0 %v2173
  %3945 = vmatpush1.bf16.msra.mxu0 %v2172
  %3946 = vmatprep.subr.bf16.mxu0 %v2179
  %3947 = vmatpush1.bf16.msra.mxu0 %v2178
  %3948 = vmatprep.subr.bf16.mxu0 %v2185
  %3949 = vmatpush1.bf16.msra.mxu0 %v2184
  %3950 = vmatprep.subr.bf16.mxu0 %v2191
  %3951 = vmatpush1.bf16.msra.mxu0 %v2190
  %3952 = vmatprep.subr.bf16.mxu0 %v2197
  %3953 = vmatpush1.bf16.msra.mxu0 %v2196
  %3954 = vmatprep.subr.bf16.mxu0 %v2203
  %3955 = vmatpush1.bf16.msra.mxu0 %v2202
  %3956 = vmatprep.subr.bf16.mxu0 %v2209
  %3957 = vmatpush1.bf16.msra.mxu0 %v2208
  %3958 = vmatprep.subr.bf16.mxu0 %v2215
  %3959 = vmatpush1.bf16.msra.mxu0 %v2214
  %3960 = vmatprep.subr.bf16.mxu0 %v2221
  %3961 = vmatpush1.bf16.msra.mxu0 %v2220
  %3962 = vmatprep.subr.bf16.mxu0 %v2227
  %3963 = vmatpush1.bf16.msra.mxu0 %v2226
  %3964 = vmatprep.subr.bf16.mxu0 %v2233
  %3965 = vmatpush1.bf16.msra.mxu0 %v2232
  %3966 = vmatprep.mubr.bf16.mxu0 %v3851
  %3967 = vmatmul.mubr.bf16.gmra.mrb[0].mxu0 %v3850
  %v3968 = vpop.f32.mrb[0].mxu0
  %v3969 = vadd.f32 %v1839, %v3968
  %v3970 = vpop.f32.mrb[0].mxu0
  %v3971 = vadd.f32 %v1843, %v3970
  %v3972 = vpop.f32.mrb[0].mxu0
  %v3973 = vpop.f32.mrb[0].mxu0
  %3974 = vdwg.mxu0
  %v3975 = vadd.f32 %v3844, %v3887
  %v3976 = vxor.u32 %v3975, 2147483648
  %v3977 = vmul.f32 %v3976, 1.442695
  %v3978 = vpow.pop %v3977
  %v3979 = vadd.f32 %v3978, 1.0
  %v3980 = vrcp.pop %v3979
  %v3981 = vmul.f32 1.0, %v3980
  %v3982 = vadd.f32 %v3845, %v3889
  %v3983 = vxor.u32 %v3982, 2147483648
  %v3984 = vmul.f32 %v3983, 1.442695
  %v3985 = vpow.pop %v3984
  %v3986 = vadd.f32 %v3985, 1.0
  %v3987 = vrcp.pop %v3986
  %v3988 = vmul.f32 1.0, %v3987
  %v3989 = vmul.f32 %v3981, %v3928
  %v3990 = vadd.f32 %v3846, %v3989
  %v3991 = vtanh.pop %v3990
  %v3992 = vsub.f32 %v3809, %v3991
  %v3993 = vmul.f32 %v3988, %v3992
  %v3994 = vadd.f32 %v3991, %v3993
  %v3995 = vadd.f32 %v3847, %v3930
  %v3996 = vxor.u32 %v3995, 2147483648
  %v3997 = vmul.f32 %v3996, 1.442695
  %v3998 = vpow.pop %v3997
  %v3999 = vadd.f32 %v3998, 1.0
  %v4000 = vrcp.pop %v3999
  %v4001 = vmul.f32 1.0, %v4000
  %v4002 = vadd.f32 %v3848, %v3969
  %v4003 = vxor.u32 %v4002, 2147483648
  %v4004 = vmul.f32 %v4003, 1.442695
  %v4005 = vpow.pop %v4004
  %v4006 = vadd.f32 %v4005, 1.0
  %v4007 = vrcp.pop %v4006
  %v4008 = vmul.f32 1.0, %v4007
  %v4009 = vmul.f32 %v4001, %v3971
  %v4010 = vadd.f32 %v3849, %v4009
  %v4011 = vtanh.pop %v4010
  %v4012 = vsub.f32 %v3829, %v4011
  %v4013 = vmul.f32 %v4008, %v4012
  %v4014 = vadd.f32 %v4011, %v4013
  %v4015 = vrot.slane %v3994, 4
  %v4016 = vmax.f32 %v3994, %v4015
  %v4017 = vrot.slane %v4016, 2
  %v4018 = vmax.f32 %v4016, %v4017
  %v4019 = vrot.slane %v4018, 1
  %v4020 = vmax.f32 %v4018, %v4019
  %4021 = vst [vmem:[#allocation3 + $0x10] sm:$0x1] %v4020
  %v4022 = vrot.slane %v4014, 4
  %v4023 = vmax.f32 %v4014, %v4022
  %v4024 = vrot.slane %v4023, 2
  %v4025 = vmax.f32 %v4023, %v4024
  %v4026 = vrot.slane %v4025, 1
  %v4027 = vmax.f32 %v4025, %v4026
  %4028 = vst [vmem:[#allocation3 + $0xf] sm:$0x1] %v4027
  %v4029 = vld [vmem:[%s3470] sm:$0xff]
  %v4030 = vld [vmem:[%s3470 + $0x8] sm:$0xff]
  %v4031 = vld [vmem:[%s3470 + $0x10] sm:$0xff]
  %v4032 = vld [vmem:[%s3464 + $0x18] sm:$0xff]
  %v4033 = vld [vmem:[%s3464 + $0x20] sm:$0xff]
  %v4034 = vld [vmem:[%s3464 + $0x28] sm:$0xff]
  %v4035 = vpack.c.bf16 %v3994, %v3994
  %v4036 = vpack.c.bf16 %v4014, %v4014
  %4037 = vmatprep.subr.bf16.mxu0 %v2139
  %4038 = vmatpush1.bf16.msra.mxu0 %v2138
  %4039 = vmatprep.subr.bf16.mxu0 %v2145
  %4040 = vmatpush1.bf16.msra.mxu0 %v2144
  %4041 = vmatprep.subr.bf16.mxu0 %v2151
  %4042 = vmatpush1.bf16.msra.mxu0 %v2150
  %4043 = vmatprep.subr.bf16.mxu0 %v2157
  %4044 = vmatpush1.bf16.msra.mxu0 %v2156
  %4045 = vmatprep.subr.bf16.mxu0 %v2163
  %4046 = vmatpush1.bf16.msra.mxu0 %v2162
  %4047 = vmatprep.subr.bf16.mxu0 %v2169
  %4048 = vmatpush1.bf16.msra.mxu0 %v2168
  %4049 = vmatprep.subr.bf16.mxu0 %v2175
  %4050 = vmatpush1.bf16.msra.mxu0 %v2174
  %4051 = vmatprep.subr.bf16.mxu0 %v2181
  %4052 = vmatpush1.bf16.msra.mxu0 %v2180
  %4053 = vmatprep.subr.bf16.mxu0 %v2187
  %4054 = vmatpush1.bf16.msra.mxu0 %v2186
  %4055 = vmatprep.subr.bf16.mxu0 %v2193
  %4056 = vmatpush1.bf16.msra.mxu0 %v2192
  %4057 = vmatprep.subr.bf16.mxu0 %v2199
  %4058 = vmatpush1.bf16.msra.mxu0 %v2198
  %4059 = vmatprep.subr.bf16.mxu0 %v2205
  %4060 = vmatpush1.bf16.msra.mxu0 %v2204
  %4061 = vmatprep.subr.bf16.mxu0 %v2211
  %4062 = vmatpush1.bf16.msra.mxu0 %v2210
  %4063 = vmatprep.subr.bf16.mxu0 %v2217
  %4064 = vmatpush1.bf16.msra.mxu0 %v2216
  %4065 = vmatprep.subr.bf16.mxu0 %v2223
  %4066 = vmatpush1.bf16.msra.mxu0 %v2222
  %4067 = vmatprep.subr.bf16.mxu0 %v2229
  %4068 = vmatpush1.bf16.msra.mxu0 %v2228
  %4069 = vmatprep.mubr.bf16.mxu0 %v4036
  %4070 = vmatmul.mubr.bf16.gmra.mrb[0].mxu0 %v4035
  %v4071 = vpop.f32.mrb[0].mxu0
  %v4072 = vadd.f32 %v1823, %v4071
  %v4073 = vpop.f32.mrb[0].mxu0
  %v4074 = vadd.f32 %v1827, %v4073
  %v4075 = vpop.f32.mrb[0].mxu0
  %v4076 = vpop.f32.mrb[0].mxu0
  %4077 = vdwg.mxu0
  %4078 = vmatprep.subr.bf16.mxu0 %v2141
  %4079 = vmatpush1.bf16.msra.mxu0 %v2140
  %4080 = vmatprep.subr.bf16.mxu0 %v2147
  %4081 = vmatpush1.bf16.msra.mxu0 %v2146
  %4082 = vmatprep.subr.bf16.mxu0 %v2153
  %4083 = vmatpush1.bf16.msra.mxu0 %v2152
  %4084 = vmatprep.subr.bf16.mxu0 %v2159
  %4085 = vmatpush1.bf16.msra.mxu0 %v2158
  %4086 = vmatprep.subr.bf16.mxu0 %v2165
  %4087 = vmatpush1.bf16.msra.mxu0 %v2164
  %4088 = vmatprep.subr.bf16.mxu0 %v2171
  %4089 = vmatpush1.bf16.msra.mxu0 %v2170
  %4090 = vmatprep.subr.bf16.mxu0 %v2177
  %4091 = vmatpush1.bf16.msra.mxu0 %v2176
  %4092 = vmatprep.subr.bf16.mxu0 %v2183
  %4093 = vmatpush1.bf16.msra.mxu0 %v2182
  %4094 = vmatprep.subr.bf16.mxu0 %v2189
  %4095 = vmatpush1.bf16.msra.mxu0 %v2188
  %4096 = vmatprep.subr.bf16.mxu0 %v2195
  %4097 = vmatpush1.bf16.msra.mxu0 %v2194
  %4098 = vmatprep.subr.bf16.mxu0 %v2201
  %4099 = vmatpush1.bf16.msra.mxu0 %v2200
  %4100 = vmatprep.subr.bf16.mxu0 %v2207
  %4101 = vmatpush1.bf16.msra.mxu0 %v2206
  %4102 = vmatprep.subr.bf16.mxu0 %v2213
  %4103 = vmatpush1.bf16.msra.mxu0 %v2212
  %4104 = vmatprep.subr.bf16.mxu0 %v2219
  %4105 = vmatpush1.bf16.msra.mxu0 %v2218
  %4106 = vmatprep.subr.bf16.mxu0 %v2225
  %4107 = vmatpush1.bf16.msra.mxu0 %v2224
  %4108 = vmatprep.subr.bf16.mxu0 %v2231
  %4109 = vmatpush1.bf16.msra.mxu0 %v2230
  %4110 = vmatprep.mubr.bf16.mxu0 %v4036
  %4111 = vmatmul.mubr.bf16.gmra.mrb[0].mxu0 %v4035
  %v4112 = vpop.f32.mrb[0].mxu0
  %v4113 = vadd.f32 %v1831, %v4112
  %v4114 = vpop.f32.mrb[0].mxu0
  %v4115 = vadd.f32 %v1835, %v4114
  %v4116 = vpop.f32.mrb[0].mxu0
  %v4117 = vpop.f32.mrb[0].mxu0
  %4118 = vdwg.mxu0
  %4119 = vmatprep.subr.bf16.mxu0 %v2143
  %4120 = vmatpush1.bf16.msra.mxu0 %v2142
  %4121 = vmatprep.subr.bf16.mxu0 %v2149
  %4122 = vmatpush1.bf16.msra.mxu0 %v2148
  %4123 = vmatprep.subr.bf16.mxu0 %v2155
  %4124 = vmatpush1.bf16.msra.mxu0 %v2154
  %4125 = vmatprep.subr.bf16.mxu0 %v2161
  %4126 = vmatpush1.bf16.msra.mxu0 %v2160
  %4127 = vmatprep.subr.bf16.mxu0 %v2167
  %4128 = vmatpush1.bf16.msra.mxu0 %v2166
  %4129 = vmatprep.subr.bf16.mxu0 %v2173
  %4130 = vmatpush1.bf16.msra.mxu0 %v2172
  %4131 = vmatprep.subr.bf16.mxu0 %v2179
  %4132 = vmatpush1.bf16.msra.mxu0 %v2178
  %4133 = vmatprep.subr.bf16.mxu0 %v2185
  %4134 = vmatpush1.bf16.msra.mxu0 %v2184
  %4135 = vmatprep.subr.bf16.mxu0 %v2191
  %4136 = vmatpush1.bf16.msra.mxu0 %v2190
  %4137 = vmatprep.subr.bf16.mxu0 %v2197
  %4138 = vmatpush1.bf16.msra.mxu0 %v2196
  %4139 = vmatprep.subr.bf16.mxu0 %v2203
  %4140 = vmatpush1.bf16.msra.mxu0 %v2202
  %4141 = vmatprep.subr.bf16.mxu0 %v2209
  %4142 = vmatpush1.bf16.msra.mxu0 %v2208
  %4143 = vmatprep.subr.bf16.mxu0 %v2215
  %4144 = vmatpush1.bf16.msra.mxu0 %v2214
  %4145 = vmatprep.subr.bf16.mxu0 %v2221
  %4146 = vmatpush1.bf16.msra.mxu0 %v2220
  %4147 = vmatprep.subr.bf16.mxu0 %v2227
  %4148 = vmatpush1.bf16.msra.mxu0 %v2226
  %4149 = vmatprep.subr.bf16.mxu0 %v2233
  %4150 = vmatpush1.bf16.msra.mxu0 %v2232
  %4151 = vmatprep.mubr.bf16.mxu0 %v4036
  %4152 = vmatmul.mubr.bf16.gmra.mrb[0].mxu0 %v4035
  %v4153 = vpop.f32.mrb[0].mxu0
  %v4154 = vadd.f32 %v1839, %v4153
  %v4155 = vpop.f32.mrb[0].mxu0
  %v4156 = vadd.f32 %v1843, %v4155
  %v4157 = vpop.f32.mrb[0].mxu0
  %v4158 = vpop.f32.mrb[0].mxu0
  %4159 = vdwg.mxu0
  %v4160 = vadd.f32 %v4029, %v4072
  %v4161 = vxor.u32 %v4160, 2147483648
  %v4162 = vmul.f32 %v4161, 1.442695
  %v4163 = vpow.pop %v4162
  %v4164 = vadd.f32 %v4163, 1.0
  %v4165 = vrcp.pop %v4164
  %v4166 = vmul.f32 1.0, %v4165
  %v4167 = vadd.f32 %v4030, %v4074
  %v4168 = vxor.u32 %v4167, 2147483648
  %v4169 = vmul.f32 %v4168, 1.442695
  %v4170 = vpow.pop %v4169
  %v4171 = vadd.f32 %v4170, 1.0
  %v4172 = vrcp.pop %v4171
  %v4173 = vmul.f32 1.0, %v4172
  %v4174 = vmul.f32 %v4166, %v4113
  %v4175 = vadd.f32 %v4031, %v4174
  %v4176 = vtanh.pop %v4175
  %v4177 = vsub.f32 %v3994, %v4176
  %v4178 = vmul.f32 %v4173, %v4177
  %v4179 = vadd.f32 %v4176, %v4178
  %v4180 = vadd.f32 %v4032, %v4115
  %v4181 = vxor.u32 %v4180, 2147483648
  %v4182 = vmul.f32 %v4181, 1.442695
  %v4183 = vpow.pop %v4182
  %v4184 = vadd.f32 %v4183, 1.0
  %v4185 = vrcp.pop %v4184
  %v4186 = vmul.f32 1.0, %v4185
  %v4187 = vadd.f32 %v4033, %v4154
  %v4188 = vxor.u32 %v4187, 2147483648
  %v4189 = vmul.f32 %v4188, 1.442695
  %v4190 = vpow.pop %v4189
  %v4191 = vadd.f32 %v4190, 1.0
  %v4192 = vrcp.pop %v4191
  %v4193 = vmul.f32 1.0, %v4192
  %v4194 = vmul.f32 %v4186, %v4156
  %v4195 = vadd.f32 %v4034, %v4194
  %v4196 = vtanh.pop %v4195
  %v4197 = vsub.f32 %v4014, %v4196
  %v4198 = vmul.f32 %v4193, %v4197
  %v4199 = vadd.f32 %v4196, %v4198
  %v4200 = vrot.slane %v4179, 4
  %v4201 = vmax.f32 %v4179, %v4200
  %v4202 = vrot.slane %v4201, 2
  %v4203 = vmax.f32 %v4201, %v4202
  %v4204 = vrot.slane %v4203, 1
  %v4205 = vmax.f32 %v4203, %v4204
  %4206 = vst [vmem:[#allocation3 + $0x11] sm:$0x1] %v4205
  %v4207 = vrot.slane %v4199, 4
  %v4208 = vmax.f32 %v4199, %v4207
  %v4209 = vrot.slane %v4208, 2
  %v4210 = vmax.f32 %v4208, %v4209
  %v4211 = vrot.slane %v4210, 1
  %v4212 = vmax.f32 %v4210, %v4211
  %4213 = vst [vmem:[#allocation3 + $0xe] sm:$0x1] %v4212
  %v4214 = vld [vmem:[%s3279] sm:$0xff]
  %v4215 = vld [vmem:[%s3279 + $0x8] sm:$0xff]
  %v4216 = vld [vmem:[%s3279 + $0x10] sm:$0xff]
  %v4217 = vld [vmem:[%s3273 + $0x18] sm:$0xff]
  %v4218 = vld [vmem:[%s3273 + $0x20] sm:$0xff]
  %v4219 = vld [vmem:[%s3273 + $0x28] sm:$0xff]
  %v4220 = vpack.c.bf16 %v4179, %v4179
  %v4221 = vpack.c.bf16 %v4199, %v4199
  %4222 = vmatprep.subr.bf16.mxu0 %v2139
  %4223 = vmatpush1.bf16.msra.mxu0 %v2138
  %4224 = vmatprep.subr.bf16.mxu0 %v2145
  %4225 = vmatpush1.bf16.msra.mxu0 %v2144
  %4226 = vmatprep.subr.bf16.mxu0 %v2151
  %4227 = vmatpush1.bf16.msra.mxu0 %v2150
  %4228 = vmatprep.subr.bf16.mxu0 %v2157
  %4229 = vmatpush1.bf16.msra.mxu0 %v2156
  %4230 = vmatprep.subr.bf16.mxu0 %v2163
  %4231 = vmatpush1.bf16.msra.mxu0 %v2162
  %4232 = vmatprep.subr.bf16.mxu0 %v2169
  %4233 = vmatpush1.bf16.msra.mxu0 %v2168
  %4234 = vmatprep.subr.bf16.mxu0 %v2175
  %4235 = vmatpush1.bf16.msra.mxu0 %v2174
  %4236 = vmatprep.subr.bf16.mxu0 %v2181
  %4237 = vmatpush1.bf16.msra.mxu0 %v2180
  %4238 = vmatprep.subr.bf16.mxu0 %v2187
  %4239 = vmatpush1.bf16.msra.mxu0 %v2186
  %4240 = vmatprep.subr.bf16.mxu0 %v2193
  %4241 = vmatpush1.bf16.msra.mxu0 %v2192
  %4242 = vmatprep.subr.bf16.mxu0 %v2199
  %4243 = vmatpush1.bf16.msra.mxu0 %v2198
  %4244 = vmatprep.subr.bf16.mxu0 %v2205
  %4245 = vmatpush1.bf16.msra.mxu0 %v2204
  %4246 = vmatprep.subr.bf16.mxu0 %v2211
  %4247 = vmatpush1.bf16.msra.mxu0 %v2210
  %4248 = vmatprep.subr.bf16.mxu0 %v2217
  %4249 = vmatpush1.bf16.msra.mxu0 %v2216
  %4250 = vmatprep.subr.bf16.mxu0 %v2223
  %4251 = vmatpush1.bf16.msra.mxu0 %v2222
  %4252 = vmatprep.subr.bf16.mxu0 %v2229
  %4253 = vmatpush1.bf16.msra.mxu0 %v2228
  %4254 = vmatprep.mubr.bf16.mxu0 %v4221
  %4255 = vmatmul.mubr.bf16.gmra.mrb[0].mxu0 %v4220
  %v4256 = vpop.f32.mrb[0].mxu0
  %v4257 = vadd.f32 %v1823, %v4256
  %v4258 = vpop.f32.mrb[0].mxu0
  %v4259 = vadd.f32 %v1827, %v4258
  %v4260 = vpop.f32.mrb[0].mxu0
  %v4261 = vpop.f32.mrb[0].mxu0
  %4262 = vdwg.mxu0
  %4263 = vmatprep.subr.bf16.mxu0 %v2141
  %4264 = vmatpush1.bf16.msra.mxu0 %v2140
  %4265 = vmatprep.subr.bf16.mxu0 %v2147
  %4266 = vmatpush1.bf16.msra.mxu0 %v2146
  %4267 = vmatprep.subr.bf16.mxu0 %v2153
  %4268 = vmatpush1.bf16.msra.mxu0 %v2152
  %4269 = vmatprep.subr.bf16.mxu0 %v2159
  %4270 = vmatpush1.bf16.msra.mxu0 %v2158
  %4271 = vmatprep.subr.bf16.mxu0 %v2165
  %4272 = vmatpush1.bf16.msra.mxu0 %v2164
  %4273 = vmatprep.subr.bf16.mxu0 %v2171
  %4274 = vmatpush1.bf16.msra.mxu0 %v2170
  %4275 = vmatprep.subr.bf16.mxu0 %v2177
  %4276 = vmatpush1.bf16.msra.mxu0 %v2176
  %4277 = vmatprep.subr.bf16.mxu0 %v2183
  %4278 = vmatpush1.bf16.msra.mxu0 %v2182
  %4279 = vmatprep.subr.bf16.mxu0 %v2189
  %4280 = vmatpush1.bf16.msra.mxu0 %v2188
  %4281 = vmatprep.subr.bf16.mxu0 %v2195
  %4282 = vmatpush1.bf16.msra.mxu0 %v2194
  %4283 = vmatprep.subr.bf16.mxu0 %v2201
  %4284 = vmatpush1.bf16.msra.mxu0 %v2200
  %4285 = vmatprep.subr.bf16.mxu0 %v2207
  %4286 = vmatpush1.bf16.msra.mxu0 %v2206
  %4287 = vmatprep.subr.bf16.mxu0 %v2213
  %4288 = vmatpush1.bf16.msra.mxu0 %v2212
  %4289 = vmatprep.subr.bf16.mxu0 %v2219
  %4290 = vmatpush1.bf16.msra.mxu0 %v2218
  %4291 = vmatprep.subr.bf16.mxu0 %v2225
  %4292 = vmatpush1.bf16.msra.mxu0 %v2224
  %4293 = vmatprep.subr.bf16.mxu0 %v2231
  %4294 = vmatpush1.bf16.msra.mxu0 %v2230
  %4295 = vmatprep.mubr.bf16.mxu0 %v4221
  %4296 = vmatmul.mubr.bf16.gmra.mrb[0].mxu0 %v4220
  %v4297 = vpop.f32.mrb[0].mxu0
  %v4298 = vadd.f32 %v1831, %v4297
  %v4299 = vpop.f32.mrb[0].mxu0
  %v4300 = vadd.f32 %v1835, %v4299
  %v4301 = vpop.f32.mrb[0].mxu0
  %v4302 = vpop.f32.mrb[0].mxu0
  %4303 = vdwg.mxu0
  %4304 = vmatprep.subr.bf16.mxu0 %v2143
  %4305 = vmatpush1.bf16.msra.mxu0 %v2142
  %4306 = vmatprep.subr.bf16.mxu0 %v2149
  %4307 = vmatpush1.bf16.msra.mxu0 %v2148
  %4308 = vmatprep.subr.bf16.mxu0 %v2155
  %4309 = vmatpush1.bf16.msra.mxu0 %v2154
  %4310 = vmatprep.subr.bf16.mxu0 %v2161
  %4311 = vmatpush1.bf16.msra.mxu0 %v2160
  %4312 = vmatprep.subr.bf16.mxu0 %v2167
  %4313 = vmatpush1.bf16.msra.mxu0 %v2166
  %4314 = vmatprep.subr.bf16.mxu0 %v2173
  %4315 = vmatpush1.bf16.msra.mxu0 %v2172
  %4316 = vmatprep.subr.bf16.mxu0 %v2179
  %4317 = vmatpush1.bf16.msra.mxu0 %v2178
  %4318 = vmatprep.subr.bf16.mxu0 %v2185
  %4319 = vmatpush1.bf16.msra.mxu0 %v2184
  %4320 = vmatprep.subr.bf16.mxu0 %v2191
  %4321 = vmatpush1.bf16.msra.mxu0 %v2190
  %4322 = vmatprep.subr.bf16.mxu0 %v2197
  %4323 = vmatpush1.bf16.msra.mxu0 %v2196
  %4324 = vmatprep.subr.bf16.mxu0 %v2203
  %4325 = vmatpush1.bf16.msra.mxu0 %v2202
  %4326 = vmatprep.subr.bf16.mxu0 %v2209
  %4327 = vmatpush1.bf16.msra.mxu0 %v2208
  %4328 = vmatprep.subr.bf16.mxu0 %v2215
  %4329 = vmatpush1.bf16.msra.mxu0 %v2214
  %4330 = vmatprep.subr.bf16.mxu0 %v2221
  %4331 = vmatpush1.bf16.msra.mxu0 %v2220
  %4332 = vmatprep.subr.bf16.mxu0 %v2227
  %4333 = vmatpush1.bf16.msra.mxu0 %v2226
  %4334 = vmatprep.subr.bf16.mxu0 %v2233
  %4335 = vmatpush1.bf16.msra.mxu0 %v2232
  %4336 = vmatprep.mubr.bf16.mxu0 %v4221
  %4337 = vmatmul.mubr.bf16.gmra.mrb[0].mxu0 %v4220
  %v4338 = vpop.f32.mrb[0].mxu0
  %v4339 = vadd.f32 %v1839, %v4338
  %v4340 = vpop.f32.mrb[0].mxu0
  %v4341 = vadd.f32 %v1843, %v4340
  %v4342 = vpop.f32.mrb[0].mxu0
  %v4343 = vpop.f32.mrb[0].mxu0
  %4344 = vdwg.mxu0
  %v4345 = vadd.f32 %v4214, %v4257
  %v4346 = vxor.u32 %v4345, 2147483648
  %v4347 = vmul.f32 %v4346, 1.442695
  %v4348 = vpow.pop %v4347
  %v4349 = vadd.f32 %v4348, 1.0
  %v4350 = vrcp.pop %v4349
  %v4351 = vmul.f32 1.0, %v4350
  %v4352 = vadd.f32 %v4215, %v4259
  %v4353 = vxor.u32 %v4352, 2147483648
  %v4354 = vmul.f32 %v4353, 1.442695
  %v4355 = vpow.pop %v4354
  %v4356 = vadd.f32 %v4355, 1.0
  %v4357 = vrcp.pop %v4356
  %v4358 = vmul.f32 1.0, %v4357
  %v4359 = vmul.f32 %v4351, %v4298
  %v4360 = vadd.f32 %v4216, %v4359
  %v4361 = vtanh.pop %v4360
  %v4362 = vsub.f32 %v4179, %v4361
  %v4363 = vmul.f32 %v4358, %v4362
  %v4364 = vadd.f32 %v4361, %v4363
  %v4365 = vadd.f32 %v4217, %v4300
  %v4366 = vxor.u32 %v4365, 2147483648
  %v4367 = vmul.f32 %v4366, 1.442695
  %v4368 = vpow.pop %v4367
  %v4369 = vadd.f32 %v4368, 1.0
  %v4370 = vrcp.pop %v4369
  %v4371 = vmul.f32 1.0, %v4370
  %v4372 = vadd.f32 %v4218, %v4339
  %v4373 = vxor.u32 %v4372, 2147483648
  %v4374 = vmul.f32 %v4373, 1.442695
  %v4375 = vpow.pop %v4374
  %v4376 = vadd.f32 %v4375, 1.0
  %v4377 = vrcp.pop %v4376
  %v4378 = vmul.f32 1.0, %v4377
  %v4379 = vmul.f32 %v4371, %v4341
  %v4380 = vadd.f32 %v4219, %v4379
  %v4381 = vtanh.pop %v4380
  %v4382 = vsub.f32 %v4199, %v4381
  %v4383 = vmul.f32 %v4378, %v4382
  %v4384 = vadd.f32 %v4381, %v4383
  %v4385 = vrot.slane %v4364, 4
  %v4386 = vmax.f32 %v4364, %v4385
  %v4387 = vrot.slane %v4386, 2
  %v4388 = vmax.f32 %v4386, %v4387
  %v4389 = vrot.slane %v4388, 1
  %v4390 = vmax.f32 %v4388, %v4389
  %4391 = vst [vmem:[#allocation3 + $0x12] sm:$0x1] %v4390
  %v4392 = vrot.slane %v4384, 4
  %v4393 = vmax.f32 %v4384, %v4392
  %v4394 = vrot.slane %v4393, 2
  %v4395 = vmax.f32 %v4393, %v4394
  %v4396 = vrot.slane %v4395, 1
  %v4397 = vmax.f32 %v4395, %v4396
  %4398 = vst [vmem:[#allocation3 + $0xd] sm:$0x1] %v4397
  %v4399 = vld [vmem:[%s3088] sm:$0xff]
  %v4400 = vld [vmem:[%s3088 + $0x8] sm:$0xff]
  %v4401 = vld [vmem:[%s3088 + $0x10] sm:$0xff]
  %v4402 = vld [vmem:[%s3082 + $0x18] sm:$0xff]
  %v4403 = vld [vmem:[%s3082 + $0x20] sm:$0xff]
  %v4404 = vld [vmem:[%s3082 + $0x28] sm:$0xff]
  %v4405 = vpack.c.bf16 %v4364, %v4364
  %v4406 = vpack.c.bf16 %v4384, %v4384
  %4407 = vmatprep.subr.bf16.mxu0 %v2139
  %4408 = vmatpush1.bf16.msra.mxu0 %v2138
  %4409 = vmatprep.subr.bf16.mxu0 %v2145
  %4410 = vmatpush1.bf16.msra.mxu0 %v2144
  %4411 = vmatprep.subr.bf16.mxu0 %v2151
  %4412 = vmatpush1.bf16.msra.mxu0 %v2150
  %4413 = vmatprep.subr.bf16.mxu0 %v2157
  %4414 = vmatpush1.bf16.msra.mxu0 %v2156
  %4415 = vmatprep.subr.bf16.mxu0 %v2163
  %4416 = vmatpush1.bf16.msra.mxu0 %v2162
  %4417 = vmatprep.subr.bf16.mxu0 %v2169
  %4418 = vmatpush1.bf16.msra.mxu0 %v2168
  %4419 = vmatprep.subr.bf16.mxu0 %v2175
  %4420 = vmatpush1.bf16.msra.mxu0 %v2174
  %4421 = vmatprep.subr.bf16.mxu0 %v2181
  %4422 = vmatpush1.bf16.msra.mxu0 %v2180
  %4423 = vmatprep.subr.bf16.mxu0 %v2187
  %4424 = vmatpush1.bf16.msra.mxu0 %v2186
  %4425 = vmatprep.subr.bf16.mxu0 %v2193
  %4426 = vmatpush1.bf16.msra.mxu0 %v2192
  %4427 = vmatprep.subr.bf16.mxu0 %v2199
  %4428 = vmatpush1.bf16.msra.mxu0 %v2198
  %4429 = vmatprep.subr.bf16.mxu0 %v2205
  %4430 = vmatpush1.bf16.msra.mxu0 %v2204
  %4431 = vmatprep.subr.bf16.mxu0 %v2211
  %4432 = vmatpush1.bf16.msra.mxu0 %v2210
  %4433 = vmatprep.subr.bf16.mxu0 %v2217
  %4434 = vmatpush1.bf16.msra.mxu0 %v2216
  %4435 = vmatprep.subr.bf16.mxu0 %v2223
  %4436 = vmatpush1.bf16.msra.mxu0 %v2222
  %4437 = vmatprep.subr.bf16.mxu0 %v2229
  %4438 = vmatpush1.bf16.msra.mxu0 %v2228
  %4439 = vmatprep.mubr.bf16.mxu0 %v4406
  %4440 = vmatmul.mubr.bf16.gmra.mrb[0].mxu0 %v4405
  %v4441 = vpop.f32.mrb[0].mxu0
  %v4442 = vadd.f32 %v1823, %v4441
  %v4443 = vpop.f32.mrb[0].mxu0
  %v4444 = vadd.f32 %v1827, %v4443
  %v4445 = vpop.f32.mrb[0].mxu0
  %v4446 = vpop.f32.mrb[0].mxu0
  %4447 = vdwg.mxu0
  %4448 = vmatprep.subr.bf16.mxu0 %v2141
  %4449 = vmatpush1.bf16.msra.mxu0 %v2140
  %4450 = vmatprep.subr.bf16.mxu0 %v2147
  %4451 = vmatpush1.bf16.msra.mxu0 %v2146
  %4452 = vmatprep.subr.bf16.mxu0 %v2153
  %4453 = vmatpush1.bf16.msra.mxu0 %v2152
  %4454 = vmatprep.subr.bf16.mxu0 %v2159
  %4455 = vmatpush1.bf16.msra.mxu0 %v2158
  %4456 = vmatprep.subr.bf16.mxu0 %v2165
  %4457 = vmatpush1.bf16.msra.mxu0 %v2164
  %4458 = vmatprep.subr.bf16.mxu0 %v2171
  %4459 = vmatpush1.bf16.msra.mxu0 %v2170
  %4460 = vmatprep.subr.bf16.mxu0 %v2177
  %4461 = vmatpush1.bf16.msra.mxu0 %v2176
  %4462 = vmatprep.subr.bf16.mxu0 %v2183
  %4463 = vmatpush1.bf16.msra.mxu0 %v2182
  %4464 = vmatprep.subr.bf16.mxu0 %v2189
  %4465 = vmatpush1.bf16.msra.mxu0 %v2188
  %4466 = vmatprep.subr.bf16.mxu0 %v2195
  %4467 = vmatpush1.bf16.msra.mxu0 %v2194
  %4468 = vmatprep.subr.bf16.mxu0 %v2201
  %4469 = vmatpush1.bf16.msra.mxu0 %v2200
  %4470 = vmatprep.subr.bf16.mxu0 %v2207
  %4471 = vmatpush1.bf16.msra.mxu0 %v2206
  %4472 = vmatprep.subr.bf16.mxu0 %v2213
  %4473 = vmatpush1.bf16.msra.mxu0 %v2212
  %4474 = vmatprep.subr.bf16.mxu0 %v2219
  %4475 = vmatpush1.bf16.msra.mxu0 %v2218
  %4476 = vmatprep.subr.bf16.mxu0 %v2225
  %4477 = vmatpush1.bf16.msra.mxu0 %v2224
  %4478 = vmatprep.subr.bf16.mxu0 %v2231
  %4479 = vmatpush1.bf16.msra.mxu0 %v2230
  %4480 = vmatprep.mubr.bf16.mxu0 %v4406
  %4481 = vmatmul.mubr.bf16.gmra.mrb[0].mxu0 %v4405
  %v4482 = vpop.f32.mrb[0].mxu0
  %v4483 = vadd.f32 %v1831, %v4482
  %v4484 = vpop.f32.mrb[0].mxu0
  %v4485 = vadd.f32 %v1835, %v4484
  %v4486 = vpop.f32.mrb[0].mxu0
  %v4487 = vpop.f32.mrb[0].mxu0
  %4488 = vdwg.mxu0
  %4489 = vmatprep.subr.bf16.mxu0 %v2143
  %4490 = vmatpush1.bf16.msra.mxu0 %v2142
  %4491 = vmatprep.subr.bf16.mxu0 %v2149
  %4492 = vmatpush1.bf16.msra.mxu0 %v2148
  %4493 = vmatprep.subr.bf16.mxu0 %v2155
  %4494 = vmatpush1.bf16.msra.mxu0 %v2154
  %4495 = vmatprep.subr.bf16.mxu0 %v2161
  %4496 = vmatpush1.bf16.msra.mxu0 %v2160
  %4497 = vmatprep.subr.bf16.mxu0 %v2167
  %4498 = vmatpush1.bf16.msra.mxu0 %v2166
  %4499 = vmatprep.subr.bf16.mxu0 %v2173
  %4500 = vmatpush1.bf16.msra.mxu0 %v2172
  %4501 = vmatprep.subr.bf16.mxu0 %v2179
  %4502 = vmatpush1.bf16.msra.mxu0 %v2178
  %4503 = vmatprep.subr.bf16.mxu0 %v2185
  %4504 = vmatpush1.bf16.msra.mxu0 %v2184
  %4505 = vmatprep.subr.bf16.mxu0 %v2191
  %4506 = vmatpush1.bf16.msra.mxu0 %v2190
  %4507 = vmatprep.subr.bf16.mxu0 %v2197
  %4508 = vmatpush1.bf16.msra.mxu0 %v2196
  %4509 = vmatprep.subr.bf16.mxu0 %v2203
  %4510 = vmatpush1.bf16.msra.mxu0 %v2202
  %4511 = vmatprep.subr.bf16.mxu0 %v2209
  %4512 = vmatpush1.bf16.msra.mxu0 %v2208
  %4513 = vmatprep.subr.bf16.mxu0 %v2215
  %4514 = vmatpush1.bf16.msra.mxu0 %v2214
  %4515 = vmatprep.subr.bf16.mxu0 %v2221
  %4516 = vmatpush1.bf16.msra.mxu0 %v2220
  %4517 = vmatprep.subr.bf16.mxu0 %v2227
  %4518 = vmatpush1.bf16.msra.mxu0 %v2226
  %4519 = vmatprep.subr.bf16.mxu0 %v2233
  %4520 = vmatpush1.bf16.msra.mxu0 %v2232
  %4521 = vmatprep.mubr.bf16.mxu0 %v4406
  %4522 = vmatmul.mubr.bf16.gmra.mrb[0].mxu0 %v4405
  %v4523 = vpop.f32.mrb[0].mxu0
  %v4524 = vadd.f32 %v1839, %v4523
  %v4525 = vpop.f32.mrb[0].mxu0
  %v4526 = vadd.f32 %v1843, %v4525
  %v4527 = vpop.f32.mrb[0].mxu0
  %v4528 = vpop.f32.mrb[0].mxu0
  %4529 = vdwg.mxu0
  %v4530 = vadd.f32 %v4399, %v4442
  %v4531 = vxor.u32 %v4530, 2147483648
  %v4532 = vmul.f32 %v4531, 1.442695
  %v4533 = vpow.pop %v4532
  %v4534 = vadd.f32 %v4533, 1.0
  %v4535 = vrcp.pop %v4534
  %v4536 = vmul.f32 1.0, %v4535
  %v4537 = vadd.f32 %v4400, %v4444
  %v4538 = vxor.u32 %v4537, 2147483648
  %v4539 = vmul.f32 %v4538, 1.442695
  %v4540 = vpow.pop %v4539
  %v4541 = vadd.f32 %v4540, 1.0
  %v4542 = vrcp.pop %v4541
  %v4543 = vmul.f32 1.0, %v4542
  %v4544 = vmul.f32 %v4536, %v4483
  %v4545 = vadd.f32 %v4401, %v4544
  %v4546 = vtanh.pop %v4545
  %v4547 = vsub.f32 %v4364, %v4546
  %v4548 = vmul.f32 %v4543, %v4547
  %v4549 = vadd.f32 %v4546, %v4548
  %v4550 = vadd.f32 %v4402, %v4485
  %v4551 = vxor.u32 %v4550, 2147483648
  %v4552 = vmul.f32 %v4551, 1.442695
  %v4553 = vpow.pop %v4552
  %v4554 = vadd.f32 %v4553, 1.0
  %v4555 = vrcp.pop %v4554
  %v4556 = vmul.f32 1.0, %v4555
  %v4557 = vadd.f32 %v4403, %v4524
  %v4558 = vxor.u32 %v4557, 2147483648
  %v4559 = vmul.f32 %v4558, 1.442695
  %v4560 = vpow.pop %v4559
  %v4561 = vadd.f32 %v4560, 1.0
  %v4562 = vrcp.pop %v4561
  %v4563 = vmul.f32 1.0, %v4562
  %v4564 = vmul.f32 %v4556, %v4526
  %v4565 = vadd.f32 %v4404, %v4564
  %v4566 = vtanh.pop %v4565
  %v4567 = vsub.f32 %v4384, %v4566
  %v4568 = vmul.f32 %v4563, %v4567
  %v4569 = vadd.f32 %v4566, %v4568
  %v4570 = vrot.slane %v4549, 4
  %v4571 = vmax.f32 %v4549, %v4570
  %v4572 = vrot.slane %v4571, 2
  %v4573 = vmax.f32 %v4571, %v4572
  %v4574 = vrot.slane %v4573, 1
  %v4575 = vmax.f32 %v4573, %v4574
  %4576 = vst [vmem:[#allocation3 + $0x13] sm:$0x1] %v4575
  %v4577 = vrot.slane %v4569, 4
  %v4578 = vmax.f32 %v4569, %v4577
  %v4579 = vrot.slane %v4578, 2
  %v4580 = vmax.f32 %v4578, %v4579
  %v4581 = vrot.slane %v4580, 1
  %v4582 = vmax.f32 %v4580, %v4581
  %4583 = vst [vmem:[#allocation3 + $0xc] sm:$0x1] %v4582
  %v4584 = vld [vmem:[%s2897] sm:$0xff]
  %v4585 = vld [vmem:[%s2897 + $0x8] sm:$0xff]
  %v4586 = vld [vmem:[%s2897 + $0x10] sm:$0xff]
  %v4587 = vld [vmem:[%s2891 + $0x18] sm:$0xff]
  %v4588 = vld [vmem:[%s2891 + $0x20] sm:$0xff]
  %v4589 = vld [vmem:[%s2891 + $0x28] sm:$0xff]
  %v4590 = vpack.c.bf16 %v4549, %v4549
  %v4591 = vpack.c.bf16 %v4569, %v4569
  %4592 = vmatprep.subr.bf16.mxu0 %v2139
  %4593 = vmatpush1.bf16.msra.mxu0 %v2138
  %4594 = vmatprep.subr.bf16.mxu0 %v2145
  %4595 = vmatpush1.bf16.msra.mxu0 %v2144
  %4596 = vmatprep.subr.bf16.mxu0 %v2151
  %4597 = vmatpush1.bf16.msra.mxu0 %v2150
  %4598 = vmatprep.subr.bf16.mxu0 %v2157
  %4599 = vmatpush1.bf16.msra.mxu0 %v2156
  %4600 = vmatprep.subr.bf16.mxu0 %v2163
  %4601 = vmatpush1.bf16.msra.mxu0 %v2162
  %4602 = vmatprep.subr.bf16.mxu0 %v2169
  %4603 = vmatpush1.bf16.msra.mxu0 %v2168
  %4604 = vmatprep.subr.bf16.mxu0 %v2175
  %4605 = vmatpush1.bf16.msra.mxu0 %v2174
  %4606 = vmatprep.subr.bf16.mxu0 %v2181
  %4607 = vmatpush1.bf16.msra.mxu0 %v2180
  %4608 = vmatprep.subr.bf16.mxu0 %v2187
  %4609 = vmatpush1.bf16.msra.mxu0 %v2186
  %4610 = vmatprep.subr.bf16.mxu0 %v2193
  %4611 = vmatpush1.bf16.msra.mxu0 %v2192
  %4612 = vmatprep.subr.bf16.mxu0 %v2199
  %4613 = vmatpush1.bf16.msra.mxu0 %v2198
  %4614 = vmatprep.subr.bf16.mxu0 %v2205
  %4615 = vmatpush1.bf16.msra.mxu0 %v2204
  %4616 = vmatprep.subr.bf16.mxu0 %v2211
  %4617 = vmatpush1.bf16.msra.mxu0 %v2210
  %4618 = vmatprep.subr.bf16.mxu0 %v2217
  %4619 = vmatpush1.bf16.msra.mxu0 %v2216
  %4620 = vmatprep.subr.bf16.mxu0 %v2223
  %4621 = vmatpush1.bf16.msra.mxu0 %v2222
  %4622 = vmatprep.subr.bf16.mxu0 %v2229
  %4623 = vmatpush1.bf16.msra.mxu0 %v2228
  %4624 = vmatprep.mubr.bf16.mxu0 %v4591
  %4625 = vmatmul.mubr.bf16.gmra.mrb[0].mxu0 %v4590
  %v4626 = vpop.f32.mrb[0].mxu0
  %v4627 = vadd.f32 %v1823, %v4626
  %v4628 = vpop.f32.mrb[0].mxu0
  %v4629 = vadd.f32 %v1827, %v4628
  %v4630 = vpop.f32.mrb[0].mxu0
  %v4631 = vpop.f32.mrb[0].mxu0
  %4632 = vdwg.mxu0
  %4633 = vmatprep.subr.bf16.mxu0 %v2141
  %4634 = vmatpush1.bf16.msra.mxu0 %v2140
  %4635 = vmatprep.subr.bf16.mxu0 %v2147
  %4636 = vmatpush1.bf16.msra.mxu0 %v2146
  %4637 = vmatprep.subr.bf16.mxu0 %v2153
  %4638 = vmatpush1.bf16.msra.mxu0 %v2152
  %4639 = vmatprep.subr.bf16.mxu0 %v2159
  %4640 = vmatpush1.bf16.msra.mxu0 %v2158
  %4641 = vmatprep.subr.bf16.mxu0 %v2165
  %4642 = vmatpush1.bf16.msra.mxu0 %v2164
  %4643 = vmatprep.subr.bf16.mxu0 %v2171
  %4644 = vmatpush1.bf16.msra.mxu0 %v2170
  %4645 = vmatprep.subr.bf16.mxu0 %v2177
  %4646 = vmatpush1.bf16.msra.mxu0 %v2176
  %4647 = vmatprep.subr.bf16.mxu0 %v2183
  %4648 = vmatpush1.bf16.msra.mxu0 %v2182
  %4649 = vmatprep.subr.bf16.mxu0 %v2189
  %4650 = vmatpush1.bf16.msra.mxu0 %v2188
  %4651 = vmatprep.subr.bf16.mxu0 %v2195
  %4652 = vmatpush1.bf16.msra.mxu0 %v2194
  %4653 = vmatprep.subr.bf16.mxu0 %v2201
  %4654 = vmatpush1.bf16.msra.mxu0 %v2200
  %4655 = vmatprep.subr.bf16.mxu0 %v2207
  %4656 = vmatpush1.bf16.msra.mxu0 %v2206
  %4657 = vmatprep.subr.bf16.mxu0 %v2213
  %4658 = vmatpush1.bf16.msra.mxu0 %v2212
  %4659 = vmatprep.subr.bf16.mxu0 %v2219
  %4660 = vmatpush1.bf16.msra.mxu0 %v2218
  %4661 = vmatprep.subr.bf16.mxu0 %v2225
  %4662 = vmatpush1.bf16.msra.mxu0 %v2224
  %4663 = vmatprep.subr.bf16.mxu0 %v2231
  %4664 = vmatpush1.bf16.msra.mxu0 %v2230
  %4665 = vmatprep.mubr.bf16.mxu0 %v4591
  %4666 = vmatmul.mubr.bf16.gmra.mrb[0].mxu0 %v4590
  %v4667 = vpop.f32.mrb[0].mxu0
  %v4668 = vadd.f32 %v1831, %v4667
  %v4669 = vpop.f32.mrb[0].mxu0
  %v4670 = vadd.f32 %v1835, %v4669
  %v4671 = vpop.f32.mrb[0].mxu0
  %v4672 = vpop.f32.mrb[0].mxu0
  %4673 = vdwg.mxu0
  %4674 = vmatprep.subr.bf16.mxu0 %v2143
  %4675 = vmatpush1.bf16.msra.mxu0 %v2142
  %4676 = vmatprep.subr.bf16.mxu0 %v2149
  %4677 = vmatpush1.bf16.msra.mxu0 %v2148
  %4678 = vmatprep.subr.bf16.mxu0 %v2155
  %4679 = vmatpush1.bf16.msra.mxu0 %v2154
  %4680 = vmatprep.subr.bf16.mxu0 %v2161
  %4681 = vmatpush1.bf16.msra.mxu0 %v2160
  %4682 = vmatprep.subr.bf16.mxu0 %v2167
  %4683 = vmatpush1.bf16.msra.mxu0 %v2166
  %4684 = vmatprep.subr.bf16.mxu0 %v2173
  %4685 = vmatpush1.bf16.msra.mxu0 %v2172
  %4686 = vmatprep.subr.bf16.mxu0 %v2179
  %4687 = vmatpush1.bf16.msra.mxu0 %v2178
  %4688 = vmatprep.subr.bf16.mxu0 %v2185
  %4689 = vmatpush1.bf16.msra.mxu0 %v2184
  %4690 = vmatprep.subr.bf16.mxu0 %v2191
  %4691 = vmatpush1.bf16.msra.mxu0 %v2190
  %4692 = vmatprep.subr.bf16.mxu0 %v2197
  %4693 = vmatpush1.bf16.msra.mxu0 %v2196
  %4694 = vmatprep.subr.bf16.mxu0 %v2203
  %4695 = vmatpush1.bf16.msra.mxu0 %v2202
  %4696 = vmatprep.subr.bf16.mxu0 %v2209
  %4697 = vmatpush1.bf16.msra.mxu0 %v2208
  %4698 = vmatprep.subr.bf16.mxu0 %v2215
  %4699 = vmatpush1.bf16.msra.mxu0 %v2214
  %4700 = vmatprep.subr.bf16.mxu0 %v2221
  %4701 = vmatpush1.bf16.msra.mxu0 %v2220
  %4702 = vmatprep.subr.bf16.mxu0 %v2227
  %4703 = vmatpush1.bf16.msra.mxu0 %v2226
  %4704 = vmatprep.subr.bf16.mxu0 %v2233
  %4705 = vmatpush1.bf16.msra.mxu0 %v2232
  %4706 = vmatprep.mubr.bf16.mxu0 %v4591
  %4707 = vmatmul.mubr.bf16.gmra.mrb[0].mxu0 %v4590
  %v4708 = vpop.f32.mrb[0].mxu0
  %v4709 = vadd.f32 %v1839, %v4708
  %v4710 = vpop.f32.mrb[0].mxu0
  %v4711 = vadd.f32 %v1843, %v4710
  %v4712 = vpop.f32.mrb[0].mxu0
  %v4713 = vpop.f32.mrb[0].mxu0
  %4714 = vdwg.mxu0
  %v4715 = vadd.f32 %v4584, %v4627
  %v4716 = vxor.u32 %v4715, 2147483648
  %v4717 = vmul.f32 %v4716, 1.442695
  %v4718 = vpow.pop %v4717
  %v4719 = vadd.f32 %v4718, 1.0
  %v4720 = vrcp.pop %v4719
  %v4721 = vmul.f32 1.0, %v4720
  %v4722 = vadd.f32 %v4585, %v4629
  %v4723 = vxor.u32 %v4722, 2147483648
  %v4724 = vmul.f32 %v4723, 1.442695
  %v4725 = vpow.pop %v4724
  %v4726 = vadd.f32 %v4725, 1.0
  %v4727 = vrcp.pop %v4726
  %v4728 = vmul.f32 1.0, %v4727
  %v4729 = vmul.f32 %v4721, %v4668
  %v4730 = vadd.f32 %v4586, %v4729
  %v4731 = vtanh.pop %v4730
  %v4732 = vsub.f32 %v4549, %v4731
  %v4733 = vmul.f32 %v4728, %v4732
  %v4734 = vadd.f32 %v4731, %v4733
  %v4735 = vadd.f32 %v4587, %v4670
  %v4736 = vxor.u32 %v4735, 2147483648
  %v4737 = vmul.f32 %v4736, 1.442695
  %v4738 = vpow.pop %v4737
  %v4739 = vadd.f32 %v4738, 1.0
  %v4740 = vrcp.pop %v4739
  %v4741 = vmul.f32 1.0, %v4740
  %v4742 = vadd.f32 %v4588, %v4709
  %v4743 = vxor.u32 %v4742, 2147483648
  %v4744 = vmul.f32 %v4743, 1.442695
  %v4745 = vpow.pop %v4744
  %v4746 = vadd.f32 %v4745, 1.0
  %v4747 = vrcp.pop %v4746
  %v4748 = vmul.f32 1.0, %v4747
  %v4749 = vmul.f32 %v4741, %v4711
  %v4750 = vadd.f32 %v4589, %v4749
  %v4751 = vtanh.pop %v4750
  %v4752 = vsub.f32 %v4569, %v4751
  %v4753 = vmul.f32 %v4748, %v4752
  %v4754 = vadd.f32 %v4751, %v4753
  %v4755 = vrot.slane %v4734, 4
  %v4756 = vmax.f32 %v4734, %v4755
  %v4757 = vrot.slane %v4756, 2
  %v4758 = vmax.f32 %v4756, %v4757
  %v4759 = vrot.slane %v4758, 1
  %v4760 = vmax.f32 %v4758, %v4759
  %4761 = vst [vmem:[#allocation3 + $0x14] sm:$0x1] %v4760
  %v4762 = vrot.slane %v4754, 4
  %v4763 = vmax.f32 %v4754, %v4762
  %v4764 = vrot.slane %v4763, 2
  %v4765 = vmax.f32 %v4763, %v4764
  %v4766 = vrot.slane %v4765, 1
  %v4767 = vmax.f32 %v4765, %v4766
  %4768 = vst [vmem:[#allocation3 + $0xb] sm:$0x1] %v4767
  %v4769 = vld [vmem:[%s2706] sm:$0xff]
  %v4770 = vld [vmem:[%s2706 + $0x8] sm:$0xff]
  %v4771 = vld [vmem:[%s2706 + $0x10] sm:$0xff]
  %v4772 = vld [vmem:[%s2700 + $0x18] sm:$0xff]
  %v4773 = vld [vmem:[%s2700 + $0x20] sm:$0xff]
  %v4774 = vld [vmem:[%s2700 + $0x28] sm:$0xff]
  %v4775 = vpack.c.bf16 %v4734, %v4734
  %v4776 = vpack.c.bf16 %v4754, %v4754
  %4777 = vmatprep.subr.bf16.mxu0 %v2139
  %4778 = vmatpush1.bf16.msra.mxu0 %v2138
  %4779 = vmatprep.subr.bf16.mxu0 %v2145
  %4780 = vmatpush1.bf16.msra.mxu0 %v2144
  %4781 = vmatprep.subr.bf16.mxu0 %v2151
  %4782 = vmatpush1.bf16.msra.mxu0 %v2150
  %4783 = vmatprep.subr.bf16.mxu0 %v2157
  %4784 = vmatpush1.bf16.msra.mxu0 %v2156
  %4785 = vmatprep.subr.bf16.mxu0 %v2163
  %4786 = vmatpush1.bf16.msra.mxu0 %v2162
  %4787 = vmatprep.subr.bf16.mxu0 %v2169
  %4788 = vmatpush1.bf16.msra.mxu0 %v2168
  %4789 = vmatprep.subr.bf16.mxu0 %v2175
  %4790 = vmatpush1.bf16.msra.mxu0 %v2174
  %4791 = vmatprep.subr.bf16.mxu0 %v2181
  %4792 = vmatpush1.bf16.msra.mxu0 %v2180
  %4793 = vmatprep.subr.bf16.mxu0 %v2187
  %4794 = vmatpush1.bf16.msra.mxu0 %v2186
  %4795 = vmatprep.subr.bf16.mxu0 %v2193
  %4796 = vmatpush1.bf16.msra.mxu0 %v2192
  %4797 = vmatprep.subr.bf16.mxu0 %v2199
  %4798 = vmatpush1.bf16.msra.mxu0 %v2198
  %4799 = vmatprep.subr.bf16.mxu0 %v2205
  %4800 = vmatpush1.bf16.msra.mxu0 %v2204
  %4801 = vmatprep.subr.bf16.mxu0 %v2211
  %4802 = vmatpush1.bf16.msra.mxu0 %v2210
  %4803 = vmatprep.subr.bf16.mxu0 %v2217
  %4804 = vmatpush1.bf16.msra.mxu0 %v2216
  %4805 = vmatprep.subr.bf16.mxu0 %v2223
  %4806 = vmatpush1.bf16.msra.mxu0 %v2222
  %4807 = vmatprep.subr.bf16.mxu0 %v2229
  %4808 = vmatpush1.bf16.msra.mxu0 %v2228
  %4809 = vmatprep.mubr.bf16.mxu0 %v4776
  %4810 = vmatmul.mubr.bf16.gmra.mrb[0].mxu0 %v4775
  %v4811 = vpop.f32.mrb[0].mxu0
  %v4812 = vadd.f32 %v1823, %v4811
  %v4813 = vpop.f32.mrb[0].mxu0
  %v4814 = vadd.f32 %v1827, %v4813
  %v4815 = vpop.f32.mrb[0].mxu0
  %v4816 = vpop.f32.mrb[0].mxu0
  %4817 = vdwg.mxu0
  %4818 = vmatprep.subr.bf16.mxu0 %v2141
  %4819 = vmatpush1.bf16.msra.mxu0 %v2140
  %4820 = vmatprep.subr.bf16.mxu0 %v2147
  %4821 = vmatpush1.bf16.msra.mxu0 %v2146
  %4822 = vmatprep.subr.bf16.mxu0 %v2153
  %4823 = vmatpush1.bf16.msra.mxu0 %v2152
  %4824 = vmatprep.subr.bf16.mxu0 %v2159
  %4825 = vmatpush1.bf16.msra.mxu0 %v2158
  %4826 = vmatprep.subr.bf16.mxu0 %v2165
  %4827 = vmatpush1.bf16.msra.mxu0 %v2164
  %4828 = vmatprep.subr.bf16.mxu0 %v2171
  %4829 = vmatpush1.bf16.msra.mxu0 %v2170
  %4830 = vmatprep.subr.bf16.mxu0 %v2177
  %4831 = vmatpush1.bf16.msra.mxu0 %v2176
  %4832 = vmatprep.subr.bf16.mxu0 %v2183
  %4833 = vmatpush1.bf16.msra.mxu0 %v2182
  %4834 = vmatprep.subr.bf16.mxu0 %v2189
  %4835 = vmatpush1.bf16.msra.mxu0 %v2188
  %4836 = vmatprep.subr.bf16.mxu0 %v2195
  %4837 = vmatpush1.bf16.msra.mxu0 %v2194
  %4838 = vmatprep.subr.bf16.mxu0 %v2201
  %4839 = vmatpush1.bf16.msra.mxu0 %v2200
  %4840 = vmatprep.subr.bf16.mxu0 %v2207
  %4841 = vmatpush1.bf16.msra.mxu0 %v2206
  %4842 = vmatprep.subr.bf16.mxu0 %v2213
  %4843 = vmatpush1.bf16.msra.mxu0 %v2212
  %4844 = vmatprep.subr.bf16.mxu0 %v2219
  %4845 = vmatpush1.bf16.msra.mxu0 %v2218
  %4846 = vmatprep.subr.bf16.mxu0 %v2225
  %4847 = vmatpush1.bf16.msra.mxu0 %v2224
  %4848 = vmatprep.subr.bf16.mxu0 %v2231
  %4849 = vmatpush1.bf16.msra.mxu0 %v2230
  %4850 = vmatprep.mubr.bf16.mxu0 %v4776
  %4851 = vmatmul.mubr.bf16.gmra.mrb[0].mxu0 %v4775
  %v4852 = vpop.f32.mrb[0].mxu0
  %v4853 = vadd.f32 %v1831, %v4852
  %v4854 = vpop.f32.mrb[0].mxu0
  %v4855 = vadd.f32 %v1835, %v4854
  %v4856 = vpop.f32.mrb[0].mxu0
  %v4857 = vpop.f32.mrb[0].mxu0
  %4858 = vdwg.mxu0
  %4859 = vmatprep.subr.bf16.mxu0 %v2143
  %4860 = vmatpush1.bf16.msra.mxu0 %v2142
  %4861 = vmatprep.subr.bf16.mxu0 %v2149
  %4862 = vmatpush1.bf16.msra.mxu0 %v2148
  %4863 = vmatprep.subr.bf16.mxu0 %v2155
  %4864 = vmatpush1.bf16.msra.mxu0 %v2154
  %4865 = vmatprep.subr.bf16.mxu0 %v2161
  %4866 = vmatpush1.bf16.msra.mxu0 %v2160
  %4867 = vmatprep.subr.bf16.mxu0 %v2167
  %4868 = vmatpush1.bf16.msra.mxu0 %v2166
  %4869 = vmatprep.subr.bf16.mxu0 %v2173
  %4870 = vmatpush1.bf16.msra.mxu0 %v2172
  %4871 = vmatprep.subr.bf16.mxu0 %v2179
  %4872 = vmatpush1.bf16.msra.mxu0 %v2178
  %4873 = vmatprep.subr.bf16.mxu0 %v2185
  %4874 = vmatpush1.bf16.msra.mxu0 %v2184
  %4875 = vmatprep.subr.bf16.mxu0 %v2191
  %4876 = vmatpush1.bf16.msra.mxu0 %v2190
  %4877 = vmatprep.subr.bf16.mxu0 %v2197
  %4878 = vmatpush1.bf16.msra.mxu0 %v2196
  %4879 = vmatprep.subr.bf16.mxu0 %v2203
  %4880 = vmatpush1.bf16.msra.mxu0 %v2202
  %4881 = vmatprep.subr.bf16.mxu0 %v2209
  %4882 = vmatpush1.bf16.msra.mxu0 %v2208
  %4883 = vmatprep.subr.bf16.mxu0 %v2215
  %4884 = vmatpush1.bf16.msra.mxu0 %v2214
  %4885 = vmatprep.subr.bf16.mxu0 %v2221
  %4886 = vmatpush1.bf16.msra.mxu0 %v2220
  %4887 = vmatprep.subr.bf16.mxu0 %v2227
  %4888 = vmatpush1.bf16.msra.mxu0 %v2226
  %4889 = vmatprep.subr.bf16.mxu0 %v2233
  %4890 = vmatpush1.bf16.msra.mxu0 %v2232
  %4891 = vmatprep.mubr.bf16.mxu0 %v4776
  %4892 = vmatmul.mubr.bf16.gmra.mrb[0].mxu0 %v4775
  %v4893 = vpop.f32.mrb[0].mxu0
  %v4894 = vadd.f32 %v1839, %v4893
  %v4895 = vpop.f32.mrb[0].mxu0
  %v4896 = vadd.f32 %v1843, %v4895
  %v4897 = vpop.f32.mrb[0].mxu0
  %v4898 = vpop.f32.mrb[0].mxu0
  %4899 = vdwg.mxu0
  %v4900 = vadd.f32 %v4769, %v4812
  %v4901 = vxor.u32 %v4900, 2147483648
  %v4902 = vmul.f32 %v4901, 1.442695
  %v4903 = vpow.pop %v4902
  %v4904 = vadd.f32 %v4903, 1.0
  %v4905 = vrcp.pop %v4904
  %v4906 = vmul.f32 1.0, %v4905
  %v4907 = vadd.f32 %v4770, %v4814
  %v4908 = vxor.u32 %v4907, 2147483648
  %v4909 = vmul.f32 %v4908, 1.442695
  %v4910 = vpow.pop %v4909
  %v4911 = vadd.f32 %v4910, 1.0
  %v4912 = vrcp.pop %v4911
  %v4913 = vmul.f32 1.0, %v4912
  %v4914 = vmul.f32 %v4906, %v4853
  %v4915 = vadd.f32 %v4771, %v4914
  %v4916 = vtanh.pop %v4915
  %v4917 = vsub.f32 %v4734, %v4916
  %v4918 = vmul.f32 %v4913, %v4917
  %v4919 = vadd.f32 %v4916, %v4918
  %v4920 = vadd.f32 %v4772, %v4855
  %v4921 = vxor.u32 %v4920, 2147483648
  %v4922 = vmul.f32 %v4921, 1.442695
  %v4923 = vpow.pop %v4922
  %v4924 = vadd.f32 %v4923, 1.0
  %v4925 = vrcp.pop %v4924
  %v4926 = vmul.f32 1.0, %v4925
  %v4927 = vadd.f32 %v4773, %v4894
  %v4928 = vxor.u32 %v4927, 2147483648
  %v4929 = vmul.f32 %v4928, 1.442695
  %v4930 = vpow.pop %v4929
  %v4931 = vadd.f32 %v4930, 1.0
  %v4932 = vrcp.pop %v4931
  %v4933 = vmul.f32 1.0, %v4932
  %v4934 = vmul.f32 %v4926, %v4896
  %v4935 = vadd.f32 %v4774, %v4934
  %v4936 = vtanh.pop %v4935
  %v4937 = vsub.f32 %v4754, %v4936
  %v4938 = vmul.f32 %v4933, %v4937
  %v4939 = vadd.f32 %v4936, %v4938
  %v4940 = vrot.slane %v4919, 4
  %v4941 = vmax.f32 %v4919, %v4940
  %v4942 = vrot.slane %v4941, 2
  %v4943 = vmax.f32 %v4941, %v4942
  %v4944 = vrot.slane %v4943, 1
  %v4945 = vmax.f32 %v4943, %v4944
  %4946 = vst [vmem:[#allocation3 + $0x15] sm:$0x1] %v4945
  %v4947 = vrot.slane %v4939, 4
  %v4948 = vmax.f32 %v4939, %v4947
  %v4949 = vrot.slane %v4948, 2
  %v4950 = vmax.f32 %v4948, %v4949
  %v4951 = vrot.slane %v4950, 1
  %v4952 = vmax.f32 %v4950, %v4951
  %4953 = vst [vmem:[#allocation3 + $0xa] sm:$0x1] %v4952
  %v4954 = vld [vmem:[%s2515] sm:$0xff]
  %v4955 = vld [vmem:[%s2515 + $0x8] sm:$0xff]
  %v4956 = vld [vmem:[%s2515 + $0x10] sm:$0xff]
  %v4957 = vld [vmem:[%s2509 + $0x18] sm:$0xff]
  %v4958 = vld [vmem:[%s2509 + $0x20] sm:$0xff]
  %v4959 = vld [vmem:[%s2509 + $0x28] sm:$0xff]
  %v4960 = vpack.c.bf16 %v4919, %v4919
  %v4961 = vpack.c.bf16 %v4939, %v4939
  %4962 = vmatprep.subr.bf16.mxu0 %v2139
  %4963 = vmatpush1.bf16.msra.mxu0 %v2138
  %4964 = vmatprep.subr.bf16.mxu0 %v2145
  %4965 = vmatpush1.bf16.msra.mxu0 %v2144
  %4966 = vmatprep.subr.bf16.mxu0 %v2151
  %4967 = vmatpush1.bf16.msra.mxu0 %v2150
  %4968 = vmatprep.subr.bf16.mxu0 %v2157
  %4969 = vmatpush1.bf16.msra.mxu0 %v2156
  %4970 = vmatprep.subr.bf16.mxu0 %v2163
  %4971 = vmatpush1.bf16.msra.mxu0 %v2162
  %4972 = vmatprep.subr.bf16.mxu0 %v2169
  %4973 = vmatpush1.bf16.msra.mxu0 %v2168
  %4974 = vmatprep.subr.bf16.mxu0 %v2175
  %4975 = vmatpush1.bf16.msra.mxu0 %v2174
  %4976 = vmatprep.subr.bf16.mxu0 %v2181
  %4977 = vmatpush1.bf16.msra.mxu0 %v2180
  %4978 = vmatprep.subr.bf16.mxu0 %v2187
  %4979 = vmatpush1.bf16.msra.mxu0 %v2186
  %4980 = vmatprep.subr.bf16.mxu0 %v2193
  %4981 = vmatpush1.bf16.msra.mxu0 %v2192
  %4982 = vmatprep.subr.bf16.mxu0 %v2199
  %4983 = vmatpush1.bf16.msra.mxu0 %v2198
  %4984 = vmatprep.subr.bf16.mxu0 %v2205
  %4985 = vmatpush1.bf16.msra.mxu0 %v2204
  %4986 = vmatprep.subr.bf16.mxu0 %v2211
  %4987 = vmatpush1.bf16.msra.mxu0 %v2210
  %4988 = vmatprep.subr.bf16.mxu0 %v2217
  %4989 = vmatpush1.bf16.msra.mxu0 %v2216
  %4990 = vmatprep.subr.bf16.mxu0 %v2223
  %4991 = vmatpush1.bf16.msra.mxu0 %v2222
  %4992 = vmatprep.subr.bf16.mxu0 %v2229
  %4993 = vmatpush1.bf16.msra.mxu0 %v2228
  %4994 = vmatprep.mubr.bf16.mxu0 %v4961
  %4995 = vmatmul.mubr.bf16.gmra.mrb[0].mxu0 %v4960
  %v4996 = vpop.f32.mrb[0].mxu0
  %v4997 = vadd.f32 %v1823, %v4996
  %v4998 = vpop.f32.mrb[0].mxu0
  %v4999 = vadd.f32 %v1827, %v4998
  %v5000 = vpop.f32.mrb[0].mxu0
  %v5001 = vpop.f32.mrb[0].mxu0
  %5002 = vdwg.mxu0
  %5003 = vmatprep.subr.bf16.mxu0 %v2141
  %5004 = vmatpush1.bf16.msra.mxu0 %v2140
  %5005 = vmatprep.subr.bf16.mxu0 %v2147
  %5006 = vmatpush1.bf16.msra.mxu0 %v2146
  %5007 = vmatprep.subr.bf16.mxu0 %v2153
  %5008 = vmatpush1.bf16.msra.mxu0 %v2152
  %5009 = vmatprep.subr.bf16.mxu0 %v2159
  %5010 = vmatpush1.bf16.msra.mxu0 %v2158
  %5011 = vmatprep.subr.bf16.mxu0 %v2165
  %5012 = vmatpush1.bf16.msra.mxu0 %v2164
  %5013 = vmatprep.subr.bf16.mxu0 %v2171
  %5014 = vmatpush1.bf16.msra.mxu0 %v2170
  %5015 = vmatprep.subr.bf16.mxu0 %v2177
  %5016 = vmatpush1.bf16.msra.mxu0 %v2176
  %5017 = vmatprep.subr.bf16.mxu0 %v2183
  %5018 = vmatpush1.bf16.msra.mxu0 %v2182
  %5019 = vmatprep.subr.bf16.mxu0 %v2189
  %5020 = vmatpush1.bf16.msra.mxu0 %v2188
  %5021 = vmatprep.subr.bf16.mxu0 %v2195
  %5022 = vmatpush1.bf16.msra.mxu0 %v2194
  %5023 = vmatprep.subr.bf16.mxu0 %v2201
  %5024 = vmatpush1.bf16.msra.mxu0 %v2200
  %5025 = vmatprep.subr.bf16.mxu0 %v2207
  %5026 = vmatpush1.bf16.msra.mxu0 %v2206
  %5027 = vmatprep.subr.bf16.mxu0 %v2213
  %5028 = vmatpush1.bf16.msra.mxu0 %v2212
  %5029 = vmatprep.subr.bf16.mxu0 %v2219
  %5030 = vmatpush1.bf16.msra.mxu0 %v2218
  %5031 = vmatprep.subr.bf16.mxu0 %v2225
  %5032 = vmatpush1.bf16.msra.mxu0 %v2224
  %5033 = vmatprep.subr.bf16.mxu0 %v2231
  %5034 = vmatpush1.bf16.msra.mxu0 %v2230
  %5035 = vmatprep.mubr.bf16.mxu0 %v4961
  %5036 = vmatmul.mubr.bf16.gmra.mrb[0].mxu0 %v4960
  %v5037 = vpop.f32.mrb[0].mxu0
  %v5038 = vadd.f32 %v1831, %v5037
  %v5039 = vpop.f32.mrb[0].mxu0
  %v5040 = vadd.f32 %v1835, %v5039
  %v5041 = vpop.f32.mrb[0].mxu0
  %v5042 = vpop.f32.mrb[0].mxu0
  %5043 = vdwg.mxu0
  %5044 = vmatprep.subr.bf16.mxu0 %v2143
  %5045 = vmatpush1.bf16.msra.mxu0 %v2142
  %5046 = vmatprep.subr.bf16.mxu0 %v2149
  %5047 = vmatpush1.bf16.msra.mxu0 %v2148
  %5048 = vmatprep.subr.bf16.mxu0 %v2155
  %5049 = vmatpush1.bf16.msra.mxu0 %v2154
  %5050 = vmatprep.subr.bf16.mxu0 %v2161
  %5051 = vmatpush1.bf16.msra.mxu0 %v2160
  %5052 = vmatprep.subr.bf16.mxu0 %v2167
  %5053 = vmatpush1.bf16.msra.mxu0 %v2166
  %5054 = vmatprep.subr.bf16.mxu0 %v2173
  %5055 = vmatpush1.bf16.msra.mxu0 %v2172
  %5056 = vmatprep.subr.bf16.mxu0 %v2179
  %5057 = vmatpush1.bf16.msra.mxu0 %v2178
  %5058 = vmatprep.subr.bf16.mxu0 %v2185
  %5059 = vmatpush1.bf16.msra.mxu0 %v2184
  %5060 = vmatprep.subr.bf16.mxu0 %v2191
  %5061 = vmatpush1.bf16.msra.mxu0 %v2190
  %5062 = vmatprep.subr.bf16.mxu0 %v2197
  %5063 = vmatpush1.bf16.msra.mxu0 %v2196
  %5064 = vmatprep.subr.bf16.mxu0 %v2203
  %5065 = vmatpush1.bf16.msra.mxu0 %v2202
  %5066 = vmatprep.subr.bf16.mxu0 %v2209
  %5067 = vmatpush1.bf16.msra.mxu0 %v2208
  %5068 = vmatprep.subr.bf16.mxu0 %v2215
  %5069 = vmatpush1.bf16.msra.mxu0 %v2214
  %5070 = vmatprep.subr.bf16.mxu0 %v2221
  %5071 = vmatpush1.bf16.msra.mxu0 %v2220
  %5072 = vmatprep.subr.bf16.mxu0 %v2227
  %5073 = vmatpush1.bf16.msra.mxu0 %v2226
  %5074 = vmatprep.subr.bf16.mxu0 %v2233
  %5075 = vmatpush1.bf16.msra.mxu0 %v2232
  %5076 = vmatprep.mubr.bf16.mxu0 %v4961
  %5077 = vmatmul.mubr.bf16.gmra.mrb[0].mxu0 %v4960
  %v5078 = vpop.f32.mrb[0].mxu0
  %v5079 = vadd.f32 %v1839, %v5078
  %v5080 = vpop.f32.mrb[0].mxu0
  %v5081 = vadd.f32 %v1843, %v5080
  %v5082 = vpop.f32.mrb[0].mxu0
  %v5083 = vpop.f32.mrb[0].mxu0
  %5084 = vdwg.mxu0
  %v5085 = vadd.f32 %v4954, %v4997
  %v5086 = vxor.u32 %v5085, 2147483648
  %v5087 = vmul.f32 %v5086, 1.442695
  %v5088 = vpow.pop %v5087
  %v5089 = vadd.f32 %v5088, 1.0
  %v5090 = vrcp.pop %v5089
  %v5091 = vmul.f32 1.0, %v5090
  %v5092 = vadd.f32 %v4955, %v4999
  %v5093 = vxor.u32 %v5092, 2147483648
  %v5094 = vmul.f32 %v5093, 1.442695
  %v5095 = vpow.pop %v5094
  %v5096 = vadd.f32 %v5095, 1.0
  %v5097 = vrcp.pop %v5096
  %v5098 = vmul.f32 1.0, %v5097
  %v5099 = vmul.f32 %v5091, %v5038
  %v5100 = vadd.f32 %v4956, %v5099
  %v5101 = vtanh.pop %v5100
  %v5102 = vsub.f32 %v4919, %v5101
  %v5103 = vmul.f32 %v5098, %v5102
  %v5104 = vadd.f32 %v5101, %v5103
  %v5105 = vadd.f32 %v4957, %v5040
  %v5106 = vxor.u32 %v5105, 2147483648
  %v5107 = vmul.f32 %v5106, 1.442695
  %v5108 = vpow.pop %v5107
  %v5109 = vadd.f32 %v5108, 1.0
  %v5110 = vrcp.pop %v5109
  %v5111 = vmul.f32 1.0, %v5110
  %v5112 = vadd.f32 %v4958, %v5079
  %v5113 = vxor.u32 %v5112, 2147483648
  %v5114 = vmul.f32 %v5113, 1.442695
  %v5115 = vpow.pop %v5114
  %v5116 = vadd.f32 %v5115, 1.0
  %v5117 = vrcp.pop %v5116
  %v5118 = vmul.f32 1.0, %v5117
  %v5119 = vmul.f32 %v5111, %v5081
  %v5120 = vadd.f32 %v4959, %v5119
  %v5121 = vtanh.pop %v5120
  %v5122 = vsub.f32 %v4939, %v5121
  %v5123 = vmul.f32 %v5118, %v5122
  %v5124 = vadd.f32 %v5121, %v5123
  %v5125 = vrot.slane %v5104, 4
  %v5126 = vmax.f32 %v5104, %v5125
  %v5127 = vrot.slane %v5126, 2
  %v5128 = vmax.f32 %v5126, %v5127
  %v5129 = vrot.slane %v5128, 1
  %v5130 = vmax.f32 %v5128, %v5129
  %5131 = vst [vmem:[#allocation3 + $0x16] sm:$0x1] %v5130
  %v5132 = vrot.slane %v5124, 4
  %v5133 = vmax.f32 %v5124, %v5132
  %v5134 = vrot.slane %v5133, 2
  %v5135 = vmax.f32 %v5133, %v5134
  %v5136 = vrot.slane %v5135, 1
  %v5137 = vmax.f32 %v5135, %v5136
  %5138 = vst [vmem:[#allocation3 + $0x9] sm:$0x1] %v5137
  %v5139 = vld [vmem:[%s1814] sm:$0xff]
  %v5140 = vld [vmem:[%s1814 + $0x8] sm:$0xff]
  %v5141 = vld [vmem:[%s1814 + $0x10] sm:$0xff]
  %v5142 = vld [vmem:[%s1808 + $0x18] sm:$0xff]
  %v5143 = vld [vmem:[%s1808 + $0x20] sm:$0xff]
  %v5144 = vld [vmem:[%s1808 + $0x28] sm:$0xff]
  %v5145 = vpack.c.bf16 %v5104, %v5104
  %v5146 = vpack.c.bf16 %v5124, %v5124
  %5147 = vmatprep.subr.bf16.mxu0 %v2139
  %5148 = vmatpush1.bf16.msra.mxu0 %v2138
  %5149 = vmatprep.subr.bf16.mxu0 %v2145
  %5150 = vmatpush1.bf16.msra.mxu0 %v2144
  %5151 = vmatprep.subr.bf16.mxu0 %v2151
  %5152 = vmatpush1.bf16.msra.mxu0 %v2150
  %5153 = vmatprep.subr.bf16.mxu0 %v2157
  %5154 = vmatpush1.bf16.msra.mxu0 %v2156
  %5155 = vmatprep.subr.bf16.mxu0 %v2163
  %5156 = vmatpush1.bf16.msra.mxu0 %v2162
  %5157 = vmatprep.subr.bf16.mxu0 %v2169
  %5158 = vmatpush1.bf16.msra.mxu0 %v2168
  %5159 = vmatprep.subr.bf16.mxu0 %v2175
  %5160 = vmatpush1.bf16.msra.mxu0 %v2174
  %5161 = vmatprep.subr.bf16.mxu0 %v2181
  %5162 = vmatpush1.bf16.msra.mxu0 %v2180
  %5163 = vmatprep.subr.bf16.mxu0 %v2187
  %5164 = vmatpush1.bf16.msra.mxu0 %v2186
  %5165 = vmatprep.subr.bf16.mxu0 %v2193
  %5166 = vmatpush1.bf16.msra.mxu0 %v2192
  %5167 = vmatprep.subr.bf16.mxu0 %v2199
  %5168 = vmatpush1.bf16.msra.mxu0 %v2198
  %5169 = vmatprep.subr.bf16.mxu0 %v2205
  %5170 = vmatpush1.bf16.msra.mxu0 %v2204
  %5171 = vmatprep.subr.bf16.mxu0 %v2211
  %5172 = vmatpush1.bf16.msra.mxu0 %v2210
  %5173 = vmatprep.subr.bf16.mxu0 %v2217
  %5174 = vmatpush1.bf16.msra.mxu0 %v2216
  %5175 = vmatprep.subr.bf16.mxu0 %v2223
  %5176 = vmatpush1.bf16.msra.mxu0 %v2222
  %5177 = vmatprep.subr.bf16.mxu0 %v2229
  %5178 = vmatpush1.bf16.msra.mxu0 %v2228
  %5179 = vmatprep.mubr.bf16.mxu0 %v5146
  %5180 = vmatmul.mubr.bf16.gmra.mrb[0].mxu0 %v5145
  %v5181 = vpop.f32.mrb[0].mxu0
  %v5182 = vadd.f32 %v1823, %v5181
  %v5183 = vpop.f32.mrb[0].mxu0
  %v5184 = vadd.f32 %v1827, %v5183
  %v5185 = vpop.f32.mrb[0].mxu0
  %v5186 = vpop.f32.mrb[0].mxu0
  %5187 = vdwg.mxu0
  %5188 = vmatprep.subr.bf16.mxu0 %v2141
  %5189 = vmatpush1.bf16.msra.mxu0 %v2140
  %5190 = vmatprep.subr.bf16.mxu0 %v2147
  %5191 = vmatpush1.bf16.msra.mxu0 %v2146
  %5192 = vmatprep.subr.bf16.mxu0 %v2153
  %5193 = vmatpush1.bf16.msra.mxu0 %v2152
  %5194 = vmatprep.subr.bf16.mxu0 %v2159
  %5195 = vmatpush1.bf16.msra.mxu0 %v2158
  %5196 = vmatprep.subr.bf16.mxu0 %v2165
  %5197 = vmatpush1.bf16.msra.mxu0 %v2164
  %5198 = vmatprep.subr.bf16.mxu0 %v2171
  %5199 = vmatpush1.bf16.msra.mxu0 %v2170
  %5200 = vmatprep.subr.bf16.mxu0 %v2177
  %5201 = vmatpush1.bf16.msra.mxu0 %v2176
  %5202 = vmatprep.subr.bf16.mxu0 %v2183
  %5203 = vmatpush1.bf16.msra.mxu0 %v2182
  %5204 = vmatprep.subr.bf16.mxu0 %v2189
  %5205 = vmatpush1.bf16.msra.mxu0 %v2188
  %5206 = vmatprep.subr.bf16.mxu0 %v2195
  %5207 = vmatpush1.bf16.msra.mxu0 %v2194
  %5208 = vmatprep.subr.bf16.mxu0 %v2201
  %5209 = vmatpush1.bf16.msra.mxu0 %v2200
  %5210 = vmatprep.subr.bf16.mxu0 %v2207
  %5211 = vmatpush1.bf16.msra.mxu0 %v2206
  %5212 = vmatprep.subr.bf16.mxu0 %v2213
  %5213 = vmatpush1.bf16.msra.mxu0 %v2212
  %5214 = vmatprep.subr.bf16.mxu0 %v2219
  %5215 = vmatpush1.bf16.msra.mxu0 %v2218
  %5216 = vmatprep.subr.bf16.mxu0 %v2225
  %5217 = vmatpush1.bf16.msra.mxu0 %v2224
  %5218 = vmatprep.subr.bf16.mxu0 %v2231
  %5219 = vmatpush1.bf16.msra.mxu0 %v2230
  %5220 = vmatprep.mubr.bf16.mxu0 %v5146
  %5221 = vmatmul.mubr.bf16.gmra.mrb[0].mxu0 %v5145
  %v5222 = vpop.f32.mrb[0].mxu0
  %v5223 = vadd.f32 %v1831, %v5222
  %v5224 = vpop.f32.mrb[0].mxu0
  %v5225 = vadd.f32 %v1835, %v5224
  %v5226 = vpop.f32.mrb[0].mxu0
  %v5227 = vpop.f32.mrb[0].mxu0
  %5228 = vdwg.mxu0
  %5229 = vmatprep.subr.bf16.mxu0 %v2143
  %5230 = vmatpush1.bf16.msra.mxu0 %v2142
  %5231 = vmatprep.subr.bf16.mxu0 %v2149
  %5232 = vmatpush1.bf16.msra.mxu0 %v2148
  %5233 = vmatprep.subr.bf16.mxu0 %v2155
  %5234 = vmatpush1.bf16.msra.mxu0 %v2154
  %5235 = vmatprep.subr.bf16.mxu0 %v2161
  %5236 = vmatpush1.bf16.msra.mxu0 %v2160
  %5237 = vmatprep.subr.bf16.mxu0 %v2167
  %5238 = vmatpush1.bf16.msra.mxu0 %v2166
  %5239 = vmatprep.subr.bf16.mxu0 %v2173
  %5240 = vmatpush1.bf16.msra.mxu0 %v2172
  %5241 = vmatprep.subr.bf16.mxu0 %v2179
  %5242 = vmatpush1.bf16.msra.mxu0 %v2178
  %5243 = vmatprep.subr.bf16.mxu0 %v2185
  %5244 = vmatpush1.bf16.msra.mxu0 %v2184
  %5245 = vmatprep.subr.bf16.mxu0 %v2191
  %5246 = vmatpush1.bf16.msra.mxu0 %v2190
  %5247 = vmatprep.subr.bf16.mxu0 %v2197
  %5248 = vmatpush1.bf16.msra.mxu0 %v2196
  %5249 = vmatprep.subr.bf16.mxu0 %v2203
  %5250 = vmatpush1.bf16.msra.mxu0 %v2202
  %5251 = vmatprep.subr.bf16.mxu0 %v2209
  %5252 = vmatpush1.bf16.msra.mxu0 %v2208
  %5253 = vmatprep.subr.bf16.mxu0 %v2215
  %5254 = vmatpush1.bf16.msra.mxu0 %v2214
  %5255 = vmatprep.subr.bf16.mxu0 %v2221
  %5256 = vmatpush1.bf16.msra.mxu0 %v2220
  %5257 = vmatprep.subr.bf16.mxu0 %v2227
  %5258 = vmatpush1.bf16.msra.mxu0 %v2226
  %5259 = vmatprep.subr.bf16.mxu0 %v2233
  %5260 = vmatpush1.bf16.msra.mxu0 %v2232
  %5261 = vmatprep.mubr.bf16.mxu0 %v5146
  %5262 = vmatmul.mubr.bf16.gmra.mrb[0].mxu0 %v5145
  %v5263 = vpop.f32.mrb[0].mxu0
  %v5264 = vadd.f32 %v1839, %v5263
  %v5265 = vpop.f32.mrb[0].mxu0
  %v5266 = vadd.f32 %v1843, %v5265
  %v5267 = vpop.f32.mrb[0].mxu0
  %v5268 = vpop.f32.mrb[0].mxu0
  %5269 = vdwg.mxu0
  %v5270 = vadd.f32 %v5139, %v5182
  %v5271 = vxor.u32 %v5270, 2147483648
  %v5272 = vmul.f32 %v5271, 1.442695
  %v5273 = vpow.pop %v5272
  %v5274 = vadd.f32 %v5273, 1.0
  %v5275 = vrcp.pop %v5274
  %v5276 = vmul.f32 1.0, %v5275
  %v5277 = vadd.f32 %v5140, %v5184
  %v5278 = vxor.u32 %v5277, 2147483648
  %v5279 = vmul.f32 %v5278, 1.442695
  %v5280 = vpow.pop %v5279
  %v5281 = vadd.f32 %v5280, 1.0
  %v5282 = vrcp.pop %v5281
  %v5283 = vmul.f32 1.0, %v5282
  %v5284 = vmul.f32 %v5276, %v5223
  %v5285 = vadd.f32 %v5141, %v5284
  %v5286 = vtanh.pop %v5285
  %v5287 = vsub.f32 %v5104, %v5286
  %v5288 = vmul.f32 %v5283, %v5287
  %v5289 = vadd.f32 %v5286, %v5288
  %v5290 = vadd.f32 %v5142, %v5225
  %v5291 = vxor.u32 %v5290, 2147483648
  %v5292 = vmul.f32 %v5291, 1.442695
  %v5293 = vpow.pop %v5292
  %v5294 = vadd.f32 %v5293, 1.0
  %v5295 = vrcp.pop %v5294
  %v5296 = vmul.f32 1.0, %v5295
  %v5297 = vadd.f32 %v5143, %v5264
  %v5298 = vxor.u32 %v5297, 2147483648
  %v5299 = vmul.f32 %v5298, 1.442695
  %v5300 = vpow.pop %v5299
  %v5301 = vadd.f32 %v5300, 1.0
  %v5302 = vrcp.pop %v5301
  %v5303 = vmul.f32 1.0, %v5302
  %v5304 = vmul.f32 %v5296, %v5266
  %v5305 = vadd.f32 %v5144, %v5304
  %v5306 = vtanh.pop %v5305
  %v5307 = vsub.f32 %v5124, %v5306
  %v5308 = vmul.f32 %v5303, %v5307
  %v5309 = vadd.f32 %v5306, %v5308
  %v5310 = vrot.slane %v5289, 4
  %v5311 = vmax.f32 %v5289, %v5310
  %v5312 = vrot.slane %v5311, 2
  %v5313 = vmax.f32 %v5311, %v5312
  %v5314 = vrot.slane %v5313, 1
  %v5315 = vmax.f32 %v5313, %v5314
  %5316 = vst [vmem:[#allocation3 + $0x17] sm:$0x1] %v5315
  %v5317 = vrot.slane %v5309, 4
  %v5318 = vmax.f32 %v5309, %v5317
  %v5319 = vrot.slane %v5318, 2
  %v5320 = vmax.f32 %v5318, %v5319
  %v5321 = vrot.slane %v5320, 1
  %v5322 = vmax.f32 %v5320, %v5321
  %5323 = vst [vmem:[#allocation3 + $0x8] sm:$0x1] %v5322
  %v5324 = vld [vmem:[#allocation3] sm:$0xff]
  %v5325 = vld [vmem:[#allocation3 + $0x8] sm:$0xff]
  %v5326 = vld [vmem:[#allocation3 + $0x10] sm:$0xff]
  %v5327 = vld [vmem:[#allocation3 + $0x18] sm:$0xff]
  %v5328 = vld [vmem:[%s5] sm:$0x3]
  %v5330 = vlaneseq
  %v5331 = vshrl.u32 %v5330, 7
  %v5332 = vsub.s32 0, %v5331
  %v5333 = vrot.slane %v5328, %v5332
  %v5334 = vlaneseq
  %v5335 = vshrl.u32 %v5334, 7
  %v5336 = vsub.s32 1, %v5335
  %v5337 = vrot.slane %v5328, %v5336
  %v5340 = vmul.f32 %v5324, %v5333
  %v5341 = vmul.f32 %v5325, %v5337
  %v5342 = vmul.f32 %v5326, %v5333
  %v5343 = vmul.f32 %v5327, %v5337
  %v5344 = vadd.f32 %v5340, %v5341
  %5345 = vadd.xlane.f32.xlu0 %v5344
  %v5346 = vpop.xlane.xlu0 %5345
  %v5347 = vadd.f32 %v5342, %v5343
  %5348 = vadd.xlane.f32.xlu0 %v5347
  %v5349 = vpop.xlane.xlu0 %5348
  %v5350 = vld [vmem:[#allocation4] sm:$0x1]
  %v5352 = vlaneseq
  %v5353 = vshrl.u32 %v5352, 7
  %v5354 = vsub.s32 0, %v5353
  %v5355 = vrot.slane %v5350, %v5354
  %v5357 = vadd.f32 %v5346, %v5355
  %v5358 = vadd.f32 %v5349, %v5355
  %vm5359 = vcmask 7168
  %5360 = vst.msk [vmem:[%s7] sm:$0xff] %vm5359, %v5357
  %5361 = vst.msk [vmem:[%s7 + $0x8] sm:$0xff] %vm5359, %v5358
  // Predicated region
  $region30: #{gmp_forward.1} parent=0 // pred_check
    _
  $region31: #{gmp_forward.1} parent=0 // pred_check_branch
    %5363 = sbr.rel (0) target = $region33
  $region32: #{gmp_forward.1} parent=0 // pred_region
    _
  $region33: #{gmp_forward.1} parent=0 // pred_fallthru
    _
  // Predicated region
  $region34: #{gmp_forward.1} parent=0 // pred_check
    _
  $region35: #{gmp_forward.1} parent=0 // pred_check_branch
    %5365 = sbr.rel (0) target = $region37
  $region36: #{gmp_forward.1} parent=0 // pred_region
    _
  $region37: #{gmp_forward.1} parent=0 // pred_fallthru
    _

</llo_original>
